<compile_context>
chip_gen: v7x
topology: tpu7x:2x2x1
jax: 0.10.0
libtpu: 0.0.40
codegen_flags: <defaults>
</compile_context>

<pallas_src>
import math

import jax
import jax.numpy as jnp
from jax.experimental import pallas as pl
from jax.experimental.pallas import tpu as pltpu

INPUT_SIZE = 12
HIDDEN_SIZE = 64
NUM_LAYERS = 2        # nn.LSTM(..., num_layers=2) per the module __init__ default
FC1_SIZE = 128
OUTPUT_SIZE = 2

HP = 128              # hidden size padded to one full lane tile (per gate block)
IN_PAD = HP           # layer-0 input padded to the same width (12 -> 128)
OUT_PAD = 128         # fc2 output padded to a full lane tile
COMPUTE_DTYPE = jnp.bfloat16   # MXU operand dtype; accumulation stays f32

assert INPUT_SIZE <= IN_PAD and HIDDEN_SIZE <= HP and OUTPUT_SIZE <= OUT_PAD


# ---------------------------------------------------------------------------
# Fused Pallas kernel: L stacked LSTM layers + MLP head
# ---------------------------------------------------------------------------
def fused_lstm_mlp_kernel(
    x_ref,      # (T*Bp, IN_PAD)    time-major, batch-padded, bf16
    wih_ref,    # (L, HP, 4*HP)     input->gates weights (transposed, padded), bf16
    whh_ref,    # (L, HP, 4*HP)     hidden->gates weights (transposed, padded), bf16
    bg_ref,     # (L, 1, 4*HP)      combined bias b_ih + b_hh (padded), f32
    w1_ref,     # (HP, FC1)         fc1 weights (transposed, padded), bf16
    b1_ref,     # (1, FC1)          f32
    w2_ref,     # (FC1, OUT_PAD)    fc2 weights (transposed, padded), bf16
    b2_ref,     # (1, OUT_PAD)      f32
    out_ref,    # (Bp, OUT_PAD)     f32
    gx_scr,     # (T*Bp, 4*HP) f32  hoisted input->gates projection (reused per layer)
    hseq_scr,   # (T*Bp, HP)   f32  per-timestep hidden states of the current layer
    h_scr,      # (Bp, HP)     f32
    c_scr,      # (Bp, HP)     f32
):
    num_layers = wih_ref.shape[0]
    bp, hp = h_scr.shape
    seq_len = x_ref.shape[0] // bp

    def run_layer(layer_in, layer, keep_seq):
        # Hoisted projection: one big matmul for all timesteps + single bias add.
        gx_scr[...] = (
            jnp.dot(layer_in, wih_ref[layer], preferred_element_type=jnp.float32)
            + bg_ref[layer]
        )
        h_scr[...] = jnp.zeros_like(h_scr)
        c_scr[...] = jnp.zeros_like(c_scr)

        # Fully-unrolled recurrence (seq_len is static & small): one MXU dot per step.
        for t in range(seq_len):
            row = t * bp  # static, sublane-aligned (bp is a multiple of 8)
            gates = gx_scr[pl.ds(row, bp), :] + jnp.dot(
                h_scr[...].astype(whh_ref.dtype), whh_ref[layer],
                preferred_element_type=jnp.float32,
            )  # (bp, 4*hp)
            # Gate order matches PyTorch: [i, f, g, o]; slices are 128-lane aligned.
            i_g = jax.nn.sigmoid(gates[:, 0 * hp:1 * hp])
            f_g = jax.nn.sigmoid(gates[:, 1 * hp:2 * hp])
            g_g = jnp.tanh(gates[:, 2 * hp:3 * hp])
            o_g = jax.nn.sigmoid(gates[:, 3 * hp:4 * hp])

            c_new = f_g * c_scr[...] + i_g * g_g
            h_new = o_g * jnp.tanh(c_new)
            c_scr[...] = c_new
            h_scr[...] = h_new
            if keep_seq:  # only needed if another LSTM layer consumes the sequence
                hseq_scr[pl.ds(row, bp), :] = h_new

    # Layer 0 consumes the padded input; layers >0 consume the previous hidden seq.
    run_layer(x_ref[...], 0, keep_seq=(num_layers > 1))
    for layer in range(1, num_layers):
        run_layer(hseq_scr[...].astype(wih_ref.dtype), layer,
                  keep_seq=(layer < num_layers - 1))

    # MLP head on the last-timestep hidden state (fc1 + ReLU + fc2), lane-padded output.
    z1 = jnp.dot(h_scr[...].astype(w1_ref.dtype), w1_ref[...],
                 preferred_element_type=jnp.float32) + b1_ref[...]
    z1 = jnp.maximum(z1, 0.0)
    out = jnp.dot(z1.astype(w2_ref.dtype), w2_ref[...],
                  preferred_element_type=jnp.float32) + b2_ref[...]
    out_ref[...] = out.astype(out_ref.dtype)


# ---------------------------------------------------------------------------
# Wrapper
# ---------------------------------------------------------------------------
def lstm_model_forward(x, params):
    """x: (B, T, input_size), batch_first — same contract as the PyTorch module."""
    batch, seq_len, d_in = x.shape
    bp = ((batch + 7) // 8) * 8  # pad batch to whole sublane tiles

    # (B, T, D) -> time-major, zero-padded (T, Bp, IN_PAD) -> flat (T*Bp, IN_PAD)
    x_tm = jnp.transpose(x, (1, 0, 2)).astype(jnp.float32)
    x_pad = jnp.zeros((seq_len, bp, IN_PAD), jnp.float32)
    x_pad = x_pad.at[:, :batch, :d_in].set(x_tm)
    x2d = x_pad.reshape(seq_len * bp, IN_PAD).astype(COMPUTE_DTYPE)

    vmem = pl.BlockSpec(memory_space=pltpu.MemorySpace.VMEM)
    out_pad = pl.pallas_call(
        fused_lstm_mlp_kernel,
        out_shape=jax.ShapeDtypeStruct((bp, OUT_PAD), jnp.float32),
        in_specs=[vmem] * 8,
        out_specs=vmem,
        scratch_shapes=[
            pltpu.VMEM((seq_len * bp, 4 * HP), jnp.float32),  # hoisted gate projection
            pltpu.VMEM((seq_len * bp, HP), jnp.float32),      # layer hidden sequence
            pltpu.VMEM((bp, HP), jnp.float32),                # h state
            pltpu.VMEM((bp, HP), jnp.float32),                # c state
        ],
    )(
        x2d,
        params["wih"], params["whh"], params["bg"],
        params["w1"], params["b1"], params["w2"], params["b2"],
    )
    return out_pad[:batch, :OUTPUT_SIZE]


# ---------------------------------------------------------------------------
# Deterministic parameter initialization (PyTorch-style uniform ranges),
# then pad / transpose / stack / cast into the kernel layout.
# ---------------------------------------------------------------------------
def init_params(key):
    k_lstm = 1.0 / math.sqrt(HIDDEN_SIZE)
    wih_l, whh_l, bg_l = [], [], []
    for layer in range(NUM_LAYERS):
        d_in = INPUT_SIZE if layer == 0 else HIDDEN_SIZE
        key, k1, k2, k3, k4 = jax.random.split(key, 5)
        w_ih = jax.random.uniform(k1, (4 * HIDDEN_SIZE, d_in), jnp.float32, -k_lstm, k_lstm)
        w_hh = jax.random.uniform(k2, (4 * HIDDEN_SIZE, HIDDEN_SIZE), jnp.float32, -k_lstm, k_lstm)
        b_ih = jax.random.uniform(k3, (4 * HIDDEN_SIZE,), jnp.float32, -k_lstm, k_lstm)
        b_hh = jax.random.uniform(k4, (4 * HIDDEN_SIZE,), jnp.float32, -k_lstm, k_lstm)

        # transpose to (d_in, 4H) and zero-pad each gate block from H=64 to HP=128 lanes
        wih_p = jnp.zeros((IN_PAD, 4, HP), jnp.float32)
        wih_p = wih_p.at[:d_in, :, :HIDDEN_SIZE].set(w_ih.T.reshape(d_in, 4, HIDDEN_SIZE))
        whh_p = jnp.zeros((HP, 4, HP), jnp.float32)
        whh_p = whh_p.at[:HIDDEN_SIZE, :, :HIDDEN_SIZE].set(
            w_hh.T.reshape(HIDDEN_SIZE, 4, HIDDEN_SIZE))
        bg_p = jnp.zeros((4, HP), jnp.float32)
        bg_p = bg_p.at[:, :HIDDEN_SIZE].set((b_ih + b_hh).reshape(4, HIDDEN_SIZE))

        wih_l.append(wih_p.reshape(IN_PAD, 4 * HP))
        whh_l.append(whh_p.reshape(HP, 4 * HP))
        bg_l.append(bg_p.reshape(1, 4 * HP))

    k_fc1 = 1.0 / math.sqrt(HIDDEN_SIZE)
    key, k1, k2 = jax.random.split(key, 3)
    w1 = jax.random.uniform(k1, (FC1_SIZE, HIDDEN_SIZE), jnp.float32, -k_fc1, k_fc1)
    b1 = jax.random.uniform(k2, (FC1_SIZE,), jnp.float32, -k_fc1, k_fc1)

    k_fc2 = 1.0 / math.sqrt(FC1_SIZE)
    key, k1, k2 = jax.random.split(key, 3)
    w2 = jax.random.uniform(k1, (OUTPUT_SIZE, FC1_SIZE), jnp.float32, -k_fc2, k_fc2)
    b2 = jax.random.uniform(k2, (OUTPUT_SIZE,), jnp.float32, -k_fc2, k_fc2)

    w1_p = jnp.zeros((HP, FC1_SIZE), jnp.float32).at[:HIDDEN_SIZE, :].set(w1.T)
    w2_p = jnp.zeros((FC1_SIZE, OUT_PAD), jnp.float32).at[:, :OUTPUT_SIZE].set(w2.T)
    b2_p = jnp.zeros((1, OUT_PAD), jnp.float32).at[0, :OUTPUT_SIZE].set(b2)

    return {
        "wih": jnp.stack(wih_l).astype(COMPUTE_DTYPE),   # (L, 128, 512) bf16
        "whh": jnp.stack(whh_l).astype(COMPUTE_DTYPE),   # (L, 128, 512) bf16
        "bg": jnp.stack(bg_l),                           # (L, 1, 512) f32
        "w1": w1_p.astype(COMPUTE_DTYPE),                # (128, 128) bf16
        "b1": b1.reshape(1, -1),                         # (1, 128) f32
        "w2": w2_p.astype(COMPUTE_DTYPE),                # (128, 128) bf16
        "b2": b2_p,                                      # (1, 128) f32
    }


if __name__ == "__main__":
    key = jax.random.PRNGKey(0)
    key, pkey, xkey = jax.random.split(key, 3)

    params = init_params(pkey)

    batch, seq_len = 2, 8
    x = jax.random.normal(xkey, (batch, seq_len, INPUT_SIZE), jnp.float32)

    out = jax.jit(lstm_model_forward)(x, params)
    out = jax.block_until_ready(out)

    assert out.shape == (batch, OUTPUT_SIZE), out.shape
    assert jnp.all(jnp.isfinite(out))
    print("KERNEL_OK")
</pallas_src>

<mosaic_0001>
module attributes {stable_mosaic.version = 11 : i64} {
  func.func @fused_lstm_mlp_kernel(%arg0: memref<64x128xbf16, #tpu.memory_space<vmem>>, %arg1: memref<2x128x512xbf16, #tpu.memory_space<vmem>>, %arg2: memref<2x128x512xbf16, #tpu.memory_space<vmem>>, %arg3: memref<2x1x512xf32, #tpu.memory_space<vmem>>, %arg4: memref<128x128xbf16, #tpu.memory_space<vmem>>, %arg5: memref<1x128xf32, #tpu.memory_space<vmem>>, %arg6: memref<128x128xbf16, #tpu.memory_space<vmem>>, %arg7: memref<1x128xf32, #tpu.memory_space<vmem>>, %arg8: memref<8x128xf32, #tpu.memory_space<vmem>>, %arg9: memref<64x512xf32, #tpu.memory_space<vmem>>, %arg10: memref<64x128xf32, #tpu.memory_space<vmem>>, %arg11: memref<8x128xf32, #tpu.memory_space<vmem>>, %arg12: memref<8x128xf32, #tpu.memory_space<vmem>>) attributes {dimension_semantics = [], scalar_prefetch = 0 : i64, scratch_operands = 4 : i64, tpu.core_type = #tpu.core_type<tc>} {
    %c0 = arith.constant 0 : index
    %c0_0 = arith.constant 0 : index
    %0 = vector.load %arg0[%c0, %c0_0] : memref<64x128xbf16, #tpu.memory_space<vmem>>, vector<64x128xbf16>
    %c0_1 = arith.constant 0 : index
    %c0_2 = arith.constant 0 : index
    %c0_3 = arith.constant 0 : index
    %1 = vector.load %arg1[%c0_1, %c0_2, %c0_3] : memref<2x128x512xbf16, #tpu.memory_space<vmem>>, vector<1x128x512xbf16>
    %2 = vector.shape_cast %1 : vector<1x128x512xbf16> to vector<128x512xbf16>
    %cst = arith.constant dense<0.000000e+00> : vector<64x512xf32>
    %3 = tpu.matmul %0, %2, %cst {dimension_numbers = #tpu.dot_dimension_numbers<[1], [0], [0], [1], [0, 0, 1, 1], [], []>} : vector<64x128xbf16>, vector<128x512xbf16>, vector<64x512xf32> -> vector<64x512xf32>
    %c0_4 = arith.constant 0 : index
    %c0_5 = arith.constant 0 : index
    %c0_6 = arith.constant 0 : index
    %4 = vector.load %arg3[%c0_4, %c0_5, %c0_6] : memref<2x1x512xf32, #tpu.memory_space<vmem>>, vector<1x1x512xf32>
    %5 = vector.shape_cast %4 : vector<1x1x512xf32> to vector<1x512xf32>
    %6 = vector.broadcast %5 : vector<1x512xf32> to vector<64x512xf32>
    %7 = arith.addf %3, %6 : vector<64x512xf32>
    %c0_7 = arith.constant 0 : index
    %c0_8 = arith.constant 0 : index
    %8 = vector.load %arg9[%c0_7, %c0_8] : memref<64x512xf32, #tpu.memory_space<vmem>>, vector<64x512xf32>
    tpu.vector_store %arg9[%c0_7, %c0_8], %7 {strides = array<i32>} : memref<64x512xf32, #tpu.memory_space<vmem>>, vector<64x512xf32>,
    %cst_9 = arith.constant 0.000000e+00 : f32
    %9 = vector.broadcast %cst_9 : f32 to vector<8x128xf32>
    %c0_10 = arith.constant 0 : index
    %c0_11 = arith.constant 0 : index
    %10 = vector.load %arg11[%c0_10, %c0_11] : memref<8x128xf32, #tpu.memory_space<vmem>>, vector<8x128xf32>
    tpu.vector_store %arg11[%c0_10, %c0_11], %9 {strides = array<i32>} : memref<8x128xf32, #tpu.memory_space<vmem>>, vector<8x128xf32>,
    %cst_12 = arith.constant 0.000000e+00 : f32
    %11 = vector.broadcast %cst_12 : f32 to vector<8x128xf32>
    %c0_13 = arith.constant 0 : index
    %c0_14 = arith.constant 0 : index
    %12 = vector.load %arg12[%c0_13, %c0_14] : memref<8x128xf32, #tpu.memory_space<vmem>>, vector<8x128xf32>
    tpu.vector_store %arg12[%c0_13, %c0_14], %11 {strides = array<i32>} : memref<8x128xf32, #tpu.memory_space<vmem>>, vector<8x128xf32>,
    %c0_15 = arith.constant 0 : index
    %c0_16 = arith.constant 0 : index
    %13 = vector.load %arg9[%c0_15, %c0_16] : memref<64x512xf32, #tpu.memory_space<vmem>>, vector<8x512xf32>
    %c0_17 = arith.constant 0 : index
    %c0_18 = arith.constant 0 : index
    %14 = vector.load %arg11[%c0_17, %c0_18] : memref<8x128xf32, #tpu.memory_space<vmem>>, vector<8x128xf32>
    %15 = arith.truncf %14 : vector<8x128xf32> to vector<8x128xbf16>
    %c0_19 = arith.constant 0 : index
    %c0_20 = arith.constant 0 : index
    %c0_21 = arith.constant 0 : index
    %16 = vector.load %arg2[%c0_19, %c0_20, %c0_21] : memref<2x128x512xbf16, #tpu.memory_space<vmem>>, vector<1x128x512xbf16>
    %17 = vector.shape_cast %16 : vector<1x128x512xbf16> to vector<128x512xbf16>
    %cst_22 = arith.constant dense<0.000000e+00> : vector<8x512xf32>
    %18 = tpu.matmul %15, %17, %cst_22 {dimension_numbers = #tpu.dot_dimension_numbers<[1], [0], [0], [1], [0, 0, 1, 1], [], []>} : vector<8x128xbf16>, vector<128x512xbf16>, vector<8x512xf32> -> vector<8x512xf32>
    %19 = arith.addf %13, %18 : vector<8x512xf32>
    %20 = vector.extract_strided_slice %19 {offsets = [0, 0], sizes = [8, 128], strides = [1, 1]} : vector<8x512xf32> to vector<8x128xf32>
    %21 = arith.negf %20 : vector<8x128xf32>
    %22 = math.exp %21 : vector<8x128xf32>
    %cst_23 = arith.constant 1.000000e+00 : f32
    %23 = vector.broadcast %cst_23 : f32 to vector<8x128xf32>
    %24 = arith.addf %23, %22 : vector<8x128xf32>
    %25 = arith.divf %23, %24 : vector<8x128xf32>
    %26 = vector.extract_strided_slice %19 {offsets = [0, 128], sizes = [8, 128], strides = [1, 1]} : vector<8x512xf32> to vector<8x128xf32>
    %27 = arith.negf %26 : vector<8x128xf32>
    %28 = math.exp %27 : vector<8x128xf32>
    %cst_24 = arith.constant 1.000000e+00 : f32
    %29 = vector.broadcast %cst_24 : f32 to vector<8x128xf32>
    %30 = arith.addf %29, %28 : vector<8x128xf32>
    %31 = arith.divf %29, %30 : vector<8x128xf32>
    %32 = vector.extract_strided_slice %19 {offsets = [0, 256], sizes = [8, 128], strides = [1, 1]} : vector<8x512xf32> to vector<8x128xf32>
    %33 = math.tanh %32 : vector<8x128xf32>
    %34 = vector.extract_strided_slice %19 {offsets = [0, 384], sizes = [8, 128], strides = [1, 1]} : vector<8x512xf32> to vector<8x128xf32>
    %35 = arith.negf %34 : vector<8x128xf32>
    %36 = math.exp %35 : vector<8x128xf32>
    %cst_25 = arith.constant 1.000000e+00 : f32
    %37 = vector.broadcast %cst_25 : f32 to vector<8x128xf32>
    %38 = arith.addf %37, %36 : vector<8x128xf32>
    %39 = arith.divf %37, %38 : vector<8x128xf32>
    %c0_26 = arith.constant 0 : index
    %c0_27 = arith.constant 0 : index
    %40 = vector.load %arg12[%c0_26, %c0_27] : memref<8x128xf32, #tpu.memory_space<vmem>>, vector<8x128xf32>
    %41 = arith.mulf %31, %40 : vector<8x128xf32>
    %42 = arith.mulf %25, %33 : vector<8x128xf32>
    %43 = arith.addf %41, %42 : vector<8x128xf32>
    %44 = math.tanh %43 : vector<8x128xf32>
    %45 = arith.mulf %39, %44 : vector<8x128xf32>
    %c0_28 = arith.constant 0 : index
    %c0_29 = arith.constant 0 : index
    %46 = vector.load %arg12[%c0_28, %c0_29] : memref<8x128xf32, #tpu.memory_space<vmem>>, vector<8x128xf32>
    tpu.vector_store %arg12[%c0_28, %c0_29], %43 {strides = array<i32>} : memref<8x128xf32, #tpu.memory_space<vmem>>, vector<8x128xf32>,
    %c0_30 = arith.constant 0 : index
    %c0_31 = arith.constant 0 : index
    %47 = vector.load %arg11[%c0_30, %c0_31] : memref<8x128xf32, #tpu.memory_space<vmem>>, vector<8x128xf32>
    tpu.vector_store %arg11[%c0_30, %c0_31], %45 {strides = array<i32>} : memref<8x128xf32, #tpu.memory_space<vmem>>, vector<8x128xf32>,
    %c0_32 = arith.constant 0 : index
    %c0_33 = arith.constant 0 : index
    %48 = vector.load %arg10[%c0_32, %c0_33] : memref<64x128xf32, #tpu.memory_space<vmem>>, vector<8x128xf32>
    tpu.vector_store %arg10[%c0_32, %c0_33], %45 {strides = array<i32>} : memref<64x128xf32, #tpu.memory_space<vmem>>, vector<8x128xf32>,
    %c8 = arith.constant 8 : index
    %c0_34 = arith.constant 0 : index
    %49 = vector.load %arg9[%c8, %c0_34] : memref<64x512xf32, #tpu.memory_space<vmem>>, vector<8x512xf32>
    %c0_35 = arith.constant 0 : index
    %c0_36 = arith.constant 0 : index
    %50 = vector.load %arg11[%c0_35, %c0_36] : memref<8x128xf32, #tpu.memory_space<vmem>>, vector<8x128xf32>
    %51 = arith.truncf %50 : vector<8x128xf32> to vector<8x128xbf16>
    %c0_37 = arith.constant 0 : index
    %c0_38 = arith.constant 0 : index
    %c0_39 = arith.constant 0 : index
    %52 = vector.load %arg2[%c0_37, %c0_38, %c0_39] : memref<2x128x512xbf16, #tpu.memory_space<vmem>>, vector<1x128x512xbf16>
    %53 = vector.shape_cast %52 : vector<1x128x512xbf16> to vector<128x512xbf16>
    %cst_40 = arith.constant dense<0.000000e+00> : vector<8x512xf32>
    %54 = tpu.matmul %51, %53, %cst_40 {dimension_numbers = #tpu.dot_dimension_numbers<[1], [0], [0], [1], [0, 0, 1, 1], [], []>} : vector<8x128xbf16>, vector<128x512xbf16>, vector<8x512xf32> -> vector<8x512xf32>
    %55 = arith.addf %49, %54 : vector<8x512xf32>
    %56 = vector.extract_strided_slice %55 {offsets = [0, 0], sizes = [8, 128], strides = [1, 1]} : vector<8x512xf32> to vector<8x128xf32>
    %57 = arith.negf %56 : vector<8x128xf32>
    %58 = math.exp %57 : vector<8x128xf32>
    %cst_41 = arith.constant 1.000000e+00 : f32
    %59 = vector.broadcast %cst_41 : f32 to vector<8x128xf32>
    %60 = arith.addf %59, %58 : vector<8x128xf32>
    %61 = arith.divf %59, %60 : vector<8x128xf32>
    %62 = vector.extract_strided_slice %55 {offsets = [0, 128], sizes = [8, 128], strides = [1, 1]} : vector<8x512xf32> to vector<8x128xf32>
    %63 = arith.negf %62 : vector<8x128xf32>
    %64 = math.exp %63 : vector<8x128xf32>
    %cst_42 = arith.constant 1.000000e+00 : f32
    %65 = vector.broadcast %cst_42 : f32 to vector<8x128xf32>
    %66 = arith.addf %65, %64 : vector<8x128xf32>
    %67 = arith.divf %65, %66 : vector<8x128xf32>
    %68 = vector.extract_strided_slice %55 {offsets = [0, 256], sizes = [8, 128], strides = [1, 1]} : vector<8x512xf32> to vector<8x128xf32>
    %69 = math.tanh %68 : vector<8x128xf32>
    %70 = vector.extract_strided_slice %55 {offsets = [0, 384], sizes = [8, 128], strides = [1, 1]} : vector<8x512xf32> to vector<8x128xf32>
    %71 = arith.negf %70 : vector<8x128xf32>
    %72 = math.exp %71 : vector<8x128xf32>
    %cst_43 = arith.constant 1.000000e+00 : f32
    %73 = vector.broadcast %cst_43 : f32 to vector<8x128xf32>
    %74 = arith.addf %73, %72 : vector<8x128xf32>
    %75 = arith.divf %73, %74 : vector<8x128xf32>
    %c0_44 = arith.constant 0 : index
    %c0_45 = arith.constant 0 : index
    %76 = vector.load %arg12[%c0_44, %c0_45] : memref<8x128xf32, #tpu.memory_space<vmem>>, vector<8x128xf32>
    %77 = arith.mulf %67, %76 : vector<8x128xf32>
    %78 = arith.mulf %61, %69 : vector<8x128xf32>
    %79 = arith.addf %77, %78 : vector<8x128xf32>
    %80 = math.tanh %79 : vector<8x128xf32>
    %81 = arith.mulf %75, %80 : vector<8x128xf32>
    %c0_46 = arith.constant 0 : index
    %c0_47 = arith.constant 0 : index
    %82 = vector.load %arg12[%c0_46, %c0_47] : memref<8x128xf32, #tpu.memory_space<vmem>>, vector<8x128xf32>
    tpu.vector_store %arg12[%c0_46, %c0_47], %79 {strides = array<i32>} : memref<8x128xf32, #tpu.memory_space<vmem>>, vector<8x128xf32>,
    %c0_48 = arith.constant 0 : index
    %c0_49 = arith.constant 0 : index
    %83 = vector.load %arg11[%c0_48, %c0_49] : memref<8x128xf32, #tpu.memory_space<vmem>>, vector<8x128xf32>
    tpu.vector_store %arg11[%c0_48, %c0_49], %81 {strides = array<i32>} : memref<8x128xf32, #tpu.memory_space<vmem>>, vector<8x128xf32>,
    %c8_50 = arith.constant 8 : index
    %c0_51 = arith.constant 0 : index
    %84 = vector.load %arg10[%c8_50, %c0_51] : memref<64x128xf32, #tpu.memory_space<vmem>>, vector<8x128xf32>
    tpu.vector_store %arg10[%c8_50, %c0_51], %81 {strides = array<i32>} : memref<64x128xf32, #tpu.memory_space<vmem>>, vector<8x128xf32>,
    %c16 = arith.constant 16 : index
    %c0_52 = arith.constant 0 : index
    %85 = vector.load %arg9[%c16, %c0_52] : memref<64x512xf32, #tpu.memory_space<vmem>>, vector<8x512xf32>
    %c0_53 = arith.constant 0 : index
    %c0_54 = arith.constant 0 : index
    %86 = vector.load %arg11[%c0_53, %c0_54] : memref<8x128xf32, #tpu.memory_space<vmem>>, vector<8x128xf32>
    %87 = arith.truncf %86 : vector<8x128xf32> to vector<8x128xbf16>
    %c0_55 = arith.constant 0 : index
    %c0_56 = arith.constant 0 : index
    %c0_57 = arith.constant 0 : index
    %88 = vector.load %arg2[%c0_55, %c0_56, %c0_57] : memref<2x128x512xbf16, #tpu.memory_space<vmem>>, vector<1x128x512xbf16>
    %89 = vector.shape_cast %88 : vector<1x128x512xbf16> to vector<128x512xbf16>
    %cst_58 = arith.constant dense<0.000000e+00> : vector<8x512xf32>
    %90 = tpu.matmul %87, %89, %cst_58 {dimension_numbers = #tpu.dot_dimension_numbers<[1], [0], [0], [1], [0, 0, 1, 1], [], []>} : vector<8x128xbf16>, vector<128x512xbf16>, vector<8x512xf32> -> vector<8x512xf32>
    %91 = arith.addf %85, %90 : vector<8x512xf32>
    %92 = vector.extract_strided_slice %91 {offsets = [0, 0], sizes = [8, 128], strides = [1, 1]} : vector<8x512xf32> to vector<8x128xf32>
    %93 = arith.negf %92 : vector<8x128xf32>
    %94 = math.exp %93 : vector<8x128xf32>
    %cst_59 = arith.constant 1.000000e+00 : f32
    %95 = vector.broadcast %cst_59 : f32 to vector<8x128xf32>
    %96 = arith.addf %95, %94 : vector<8x128xf32>
    %97 = arith.divf %95, %96 : vector<8x128xf32>
    %98 = vector.extract_strided_slice %91 {offsets = [0, 128], sizes = [8, 128], strides = [1, 1]} : vector<8x512xf32> to vector<8x128xf32>
    %99 = arith.negf %98 : vector<8x128xf32>
    %100 = math.exp %99 : vector<8x128xf32>
    %cst_60 = arith.constant 1.000000e+00 : f32
    %101 = vector.broadcast %cst_60 : f32 to vector<8x128xf32>
    %102 = arith.addf %101, %100 : vector<8x128xf32>
    %103 = arith.divf %101, %102 : vector<8x128xf32>
    %104 = vector.extract_strided_slice %91 {offsets = [0, 256], sizes = [8, 128], strides = [1, 1]} : vector<8x512xf32> to vector<8x128xf32>
    %105 = math.tanh %104 : vector<8x128xf32>
    %106 = vector.extract_strided_slice %91 {offsets = [0, 384], sizes = [8, 128], strides = [1, 1]} : vector<8x512xf32> to vector<8x128xf32>
    %107 = arith.negf %106 : vector<8x128xf32>
    %108 = math.exp %107 : vector<8x128xf32>
    %cst_61 = arith.constant 1.000000e+00 : f32
    %109 = vector.broadcast %cst_61 : f32 to vector<8x128xf32>
    %110 = arith.addf %109, %108 : vector<8x128xf32>
    %111 = arith.divf %109, %110 : vector<8x128xf32>
    %c0_62 = arith.constant 0 : index
    %c0_63 = arith.constant 0 : index
    %112 = vector.load %arg12[%c0_62, %c0_63] : memref<8x128xf32, #tpu.memory_space<vmem>>, vector<8x128xf32>
    %113 = arith.mulf %103, %112 : vector<8x128xf32>
    %114 = arith.mulf %97, %105 : vector<8x128xf32>
    %115 = arith.addf %113, %114 : vector<8x128xf32>
    %116 = math.tanh %115 : vector<8x128xf32>
    %117 = arith.mulf %111, %116 : vector<8x128xf32>
    %c0_64 = arith.constant 0 : index
    %c0_65 = arith.constant 0 : index
    %118 = vector.load %arg12[%c0_64, %c0_65] : memref<8x128xf32, #tpu.memory_space<vmem>>, vector<8x128xf32>
    tpu.vector_store %arg12[%c0_64, %c0_65], %115 {strides = array<i32>} : memref<8x128xf32, #tpu.memory_space<vmem>>, vector<8x128xf32>,
    %c0_66 = arith.constant 0 : index
    %c0_67 = arith.constant 0 : index
    %119 = vector.load %arg11[%c0_66, %c0_67] : memref<8x128xf32, #tpu.memory_space<vmem>>, vector<8x128xf32>
    tpu.vector_store %arg11[%c0_66, %c0_67], %117 {strides = array<i32>} : memref<8x128xf32, #tpu.memory_space<vmem>>, vector<8x128xf32>,
    %c16_68 = arith.constant 16 : index
    %c0_69 = arith.constant 0 : index
    %120 = vector.load %arg10[%c16_68, %c0_69] : memref<64x128xf32, #tpu.memory_space<vmem>>, vector<8x128xf32>
    tpu.vector_store %arg10[%c16_68, %c0_69], %117 {strides = array<i32>} : memref<64x128xf32, #tpu.memory_space<vmem>>, vector<8x128xf32>,
    %c24 = arith.constant 24 : index
    %c0_70 = arith.constant 0 : index
    %121 = vector.load %arg9[%c24, %c0_70] : memref<64x512xf32, #tpu.memory_space<vmem>>, vector<8x512xf32>
    %c0_71 = arith.constant 0 : index
    %c0_72 = arith.constant 0 : index
    %122 = vector.load %arg11[%c0_71, %c0_72] : memref<8x128xf32, #tpu.memory_space<vmem>>, vector<8x128xf32>
    %123 = arith.truncf %122 : vector<8x128xf32> to vector<8x128xbf16>
    %c0_73 = arith.constant 0 : index
    %c0_74 = arith.constant 0 : index
    %c0_75 = arith.constant 0 : index
    %124 = vector.load %arg2[%c0_73, %c0_74, %c0_75] : memref<2x128x512xbf16, #tpu.memory_space<vmem>>, vector<1x128x512xbf16>
    %125 = vector.shape_cast %124 : vector<1x128x512xbf16> to vector<128x512xbf16>
    %cst_76 = arith.constant dense<0.000000e+00> : vector<8x512xf32>
    %126 = tpu.matmul %123, %125, %cst_76 {dimension_numbers = #tpu.dot_dimension_numbers<[1], [0], [0], [1], [0, 0, 1, 1], [], []>} : vector<8x128xbf16>, vector<128x512xbf16>, vector<8x512xf32> -> vector<8x512xf32>
    %127 = arith.addf %121, %126 : vector<8x512xf32>
    %128 = vector.extract_strided_slice %127 {offsets = [0, 0], sizes = [8, 128], strides = [1, 1]} : vector<8x512xf32> to vector<8x128xf32>
    %129 = arith.negf %128 : vector<8x128xf32>
    %130 = math.exp %129 : vector<8x128xf32>
    %cst_77 = arith.constant 1.000000e+00 : f32
    %131 = vector.broadcast %cst_77 : f32 to vector<8x128xf32>
    %132 = arith.addf %131, %130 : vector<8x128xf32>
    %133 = arith.divf %131, %132 : vector<8x128xf32>
    %134 = vector.extract_strided_slice %127 {offsets = [0, 128], sizes = [8, 128], strides = [1, 1]} : vector<8x512xf32> to vector<8x128xf32>
    %135 = arith.negf %134 : vector<8x128xf32>
    %136 = math.exp %135 : vector<8x128xf32>
    %cst_78 = arith.constant 1.000000e+00 : f32
    %137 = vector.broadcast %cst_78 : f32 to vector<8x128xf32>
    %138 = arith.addf %137, %136 : vector<8x128xf32>
    %139 = arith.divf %137, %138 : vector<8x128xf32>
    %140 = vector.extract_strided_slice %127 {offsets = [0, 256], sizes = [8, 128], strides = [1, 1]} : vector<8x512xf32> to vector<8x128xf32>
    %141 = math.tanh %140 : vector<8x128xf32>
    %142 = vector.extract_strided_slice %127 {offsets = [0, 384], sizes = [8, 128], strides = [1, 1]} : vector<8x512xf32> to vector<8x128xf32>
    %143 = arith.negf %142 : vector<8x128xf32>
    %144 = math.exp %143 : vector<8x128xf32>
    %cst_79 = arith.constant 1.000000e+00 : f32
    %145 = vector.broadcast %cst_79 : f32 to vector<8x128xf32>
    %146 = arith.addf %145, %144 : vector<8x128xf32>
    %147 = arith.divf %145, %146 : vector<8x128xf32>
    %c0_80 = arith.constant 0 : index
    %c0_81 = arith.constant 0 : index
    %148 = vector.load %arg12[%c0_80, %c0_81] : memref<8x128xf32, #tpu.memory_space<vmem>>, vector<8x128xf32>
    %149 = arith.mulf %139, %148 : vector<8x128xf32>
    %150 = arith.mulf %133, %141 : vector<8x128xf32>
    %151 = arith.addf %149, %150 : vector<8x128xf32>
    %152 = math.tanh %151 : vector<8x128xf32>
    %153 = arith.mulf %147, %152 : vector<8x128xf32>
    %c0_82 = arith.constant 0 : index
    %c0_83 = arith.constant 0 : index
    %154 = vector.load %arg12[%c0_82, %c0_83] : memref<8x128xf32, #tpu.memory_space<vmem>>, vector<8x128xf32>
    tpu.vector_store %arg12[%c0_82, %c0_83], %151 {strides = array<i32>} : memref<8x128xf32, #tpu.memory_space<vmem>>, vector<8x128xf32>,
    %c0_84 = arith.constant 0 : index
    %c0_85 = arith.constant 0 : index
    %155 = vector.load %arg11[%c0_84, %c0_85] : memref<8x128xf32, #tpu.memory_space<vmem>>, vector<8x128xf32>
    tpu.vector_store %arg11[%c0_84, %c0_85], %153 {strides = array<i32>} : memref<8x128xf32, #tpu.memory_space<vmem>>, vector<8x128xf32>,
    %c24_86 = arith.constant 24 : index
    %c0_87 = arith.constant 0 : index
    %156 = vector.load %arg10[%c24_86, %c0_87] : memref<64x128xf32, #tpu.memory_space<vmem>>, vector<8x128xf32>
    tpu.vector_store %arg10[%c24_86, %c0_87], %153 {strides = array<i32>} : memref<64x128xf32, #tpu.memory_space<vmem>>, vector<8x128xf32>,
    %c32 = arith.constant 32 : index
    %c0_88 = arith.constant 0 : index
    %157 = vector.load %arg9[%c32, %c0_88] : memref<64x512xf32, #tpu.memory_space<vmem>>, vector<8x512xf32>
    %c0_89 = arith.constant 0 : index
    %c0_90 = arith.constant 0 : index
    %158 = vector.load %arg11[%c0_89, %c0_90] : memref<8x128xf32, #tpu.memory_space<vmem>>, vector<8x128xf32>
    %159 = arith.truncf %158 : vector<8x128xf32> to vector<8x128xbf16>
    %c0_91 = arith.constant 0 : index
    %c0_92 = arith.constant 0 : index
    %c0_93 = arith.constant 0 : index
    %160 = vector.load %arg2[%c0_91, %c0_92, %c0_93] : memref<2x128x512xbf16, #tpu.memory_space<vmem>>, vector<1x128x512xbf16>
    %161 = vector.shape_cast %160 : vector<1x128x512xbf16> to vector<128x512xbf16>
    %cst_94 = arith.constant dense<0.000000e+00> : vector<8x512xf32>
    %162 = tpu.matmul %159, %161, %cst_94 {dimension_numbers = #tpu.dot_dimension_numbers<[1], [0], [0], [1], [0, 0, 1, 1], [], []>} : vector<8x128xbf16>, vector<128x512xbf16>, vector<8x512xf32> -> vector<8x512xf32>
    %163 = arith.addf %157, %162 : vector<8x512xf32>
    %164 = vector.extract_strided_slice %163 {offsets = [0, 0], sizes = [8, 128], strides = [1, 1]} : vector<8x512xf32> to vector<8x128xf32>
    %165 = arith.negf %164 : vector<8x128xf32>
    %166 = math.exp %165 : vector<8x128xf32>
    %cst_95 = arith.constant 1.000000e+00 : f32
    %167 = vector.broadcast %cst_95 : f32 to vector<8x128xf32>
    %168 = arith.addf %167, %166 : vector<8x128xf32>
    %169 = arith.divf %167, %168 : vector<8x128xf32>
    %170 = vector.extract_strided_slice %163 {offsets = [0, 128], sizes = [8, 128], strides = [1, 1]} : vector<8x512xf32> to vector<8x128xf32>
    %171 = arith.negf %170 : vector<8x128xf32>
    %172 = math.exp %171 : vector<8x128xf32>
    %cst_96 = arith.constant 1.000000e+00 : f32
    %173 = vector.broadcast %cst_96 : f32 to vector<8x128xf32>
    %174 = arith.addf %173, %172 : vector<8x128xf32>
    %175 = arith.divf %173, %174 : vector<8x128xf32>
    %176 = vector.extract_strided_slice %163 {offsets = [0, 256], sizes = [8, 128], strides = [1, 1]} : vector<8x512xf32> to vector<8x128xf32>
    %177 = math.tanh %176 : vector<8x128xf32>
    %178 = vector.extract_strided_slice %163 {offsets = [0, 384], sizes = [8, 128], strides = [1, 1]} : vector<8x512xf32> to vector<8x128xf32>
    %179 = arith.negf %178 : vector<8x128xf32>
    %180 = math.exp %179 : vector<8x128xf32>
    %cst_97 = arith.constant 1.000000e+00 : f32
    %181 = vector.broadcast %cst_97 : f32 to vector<8x128xf32>
    %182 = arith.addf %181, %180 : vector<8x128xf32>
    %183 = arith.divf %181, %182 : vector<8x128xf32>
    %c0_98 = arith.constant 0 : index
    %c0_99 = arith.constant 0 : index
    %184 = vector.load %arg12[%c0_98, %c0_99] : memref<8x128xf32, #tpu.memory_space<vmem>>, vector<8x128xf32>
    %185 = arith.mulf %175, %184 : vector<8x128xf32>
    %186 = arith.mulf %169, %177 : vector<8x128xf32>
    %187 = arith.addf %185, %186 : vector<8x128xf32>
    %188 = math.tanh %187 : vector<8x128xf32>
    %189 = arith.mulf %183, %188 : vector<8x128xf32>
    %c0_100 = arith.constant 0 : index
    %c0_101 = arith.constant 0 : index
    %190 = vector.load %arg12[%c0_100, %c0_101] : memref<8x128xf32, #tpu.memory_space<vmem>>, vector<8x128xf32>
    tpu.vector_store %arg12[%c0_100, %c0_101], %187 {strides = array<i32>} : memref<8x128xf32, #tpu.memory_space<vmem>>, vector<8x128xf32>,
    %c0_102 = arith.constant 0 : index
    %c0_103 = arith.constant 0 : index
    %191 = vector.load %arg11[%c0_102, %c0_103] : memref<8x128xf32, #tpu.memory_space<vmem>>, vector<8x128xf32>
    tpu.vector_store %arg11[%c0_102, %c0_103], %189 {strides = array<i32>} : memref<8x128xf32, #tpu.memory_space<vmem>>, vector<8x128xf32>,
    %c32_104 = arith.constant 32 : index
    %c0_105 = arith.constant 0 : index
    %192 = vector.load %arg10[%c32_104, %c0_105] : memref<64x128xf32, #tpu.memory_space<vmem>>, vector<8x128xf32>
    tpu.vector_store %arg10[%c32_104, %c0_105], %189 {strides = array<i32>} : memref<64x128xf32, #tpu.memory_space<vmem>>, vector<8x128xf32>,
    %c40 = arith.constant 40 : index
    %c0_106 = arith.constant 0 : index
    %193 = vector.load %arg9[%c40, %c0_106] : memref<64x512xf32, #tpu.memory_space<vmem>>, vector<8x512xf32>
    %c0_107 = arith.constant 0 : index
    %c0_108 = arith.constant 0 : index
    %194 = vector.load %arg11[%c0_107, %c0_108] : memref<8x128xf32, #tpu.memory_space<vmem>>, vector<8x128xf32>
    %195 = arith.truncf %194 : vector<8x128xf32> to vector<8x128xbf16>
    %c0_109 = arith.constant 0 : index
    %c0_110 = arith.constant 0 : index
    %c0_111 = arith.constant 0 : index
    %196 = vector.load %arg2[%c0_109, %c0_110, %c0_111] : memref<2x128x512xbf16, #tpu.memory_space<vmem>>, vector<1x128x512xbf16>
    %197 = vector.shape_cast %196 : vector<1x128x512xbf16> to vector<128x512xbf16>
    %cst_112 = arith.constant dense<0.000000e+00> : vector<8x512xf32>
    %198 = tpu.matmul %195, %197, %cst_112 {dimension_numbers = #tpu.dot_dimension_numbers<[1], [0], [0], [1], [0, 0, 1, 1], [], []>} : vector<8x128xbf16>, vector<128x512xbf16>, vector<8x512xf32> -> vector<8x512xf32>
    %199 = arith.addf %193, %198 : vector<8x512xf32>
    %200 = vector.extract_strided_slice %199 {offsets = [0, 0], sizes = [8, 128], strides = [1, 1]} : vector<8x512xf32> to vector<8x128xf32>
    %201 = arith.negf %200 : vector<8x128xf32>
    %202 = math.exp %201 : vector<8x128xf32>
    %cst_113 = arith.constant 1.000000e+00 : f32
    %203 = vector.broadcast %cst_113 : f32 to vector<8x128xf32>
    %204 = arith.addf %203, %202 : vector<8x128xf32>
    %205 = arith.divf %203, %204 : vector<8x128xf32>
    %206 = vector.extract_strided_slice %199 {offsets = [0, 128], sizes = [8, 128], strides = [1, 1]} : vector<8x512xf32> to vector<8x128xf32>
    %207 = arith.negf %206 : vector<8x128xf32>
    %208 = math.exp %207 : vector<8x128xf32>
    %cst_114 = arith.constant 1.000000e+00 : f32
    %209 = vector.broadcast %cst_114 : f32 to vector<8x128xf32>
    %210 = arith.addf %209, %208 : vector<8x128xf32>
    %211 = arith.divf %209, %210 : vector<8x128xf32>
    %212 = vector.extract_strided_slice %199 {offsets = [0, 256], sizes = [8, 128], strides = [1, 1]} : vector<8x512xf32> to vector<8x128xf32>
    %213 = math.tanh %212 : vector<8x128xf32>
    %214 = vector.extract_strided_slice %199 {offsets = [0, 384], sizes = [8, 128], strides = [1, 1]} : vector<8x512xf32> to vector<8x128xf32>
    %215 = arith.negf %214 : vector<8x128xf32>
    %216 = math.exp %215 : vector<8x128xf32>
    %cst_115 = arith.constant 1.000000e+00 : f32
    %217 = vector.broadcast %cst_115 : f32 to vector<8x128xf32>
    %218 = arith.addf %217, %216 : vector<8x128xf32>
    %219 = arith.divf %217, %218 : vector<8x128xf32>
    %c0_116 = arith.constant 0 : index
    %c0_117 = arith.constant 0 : index
    %220 = vector.load %arg12[%c0_116, %c0_117] : memref<8x128xf32, #tpu.memory_space<vmem>>, vector<8x128xf32>
    %221 = arith.mulf %211, %220 : vector<8x128xf32>
    %222 = arith.mulf %205, %213 : vector<8x128xf32>
    %223 = arith.addf %221, %222 : vector<8x128xf32>
    %224 = math.tanh %223 : vector<8x128xf32>
    %225 = arith.mulf %219, %224 : vector<8x128xf32>
    %c0_118 = arith.constant 0 : index
    %c0_119 = arith.constant 0 : index
    %226 = vector.load %arg12[%c0_118, %c0_119] : memref<8x128xf32, #tpu.memory_space<vmem>>, vector<8x128xf32>
    tpu.vector_store %arg12[%c0_118, %c0_119], %223 {strides = array<i32>} : memref<8x128xf32, #tpu.memory_space<vmem>>, vector<8x128xf32>,
    %c0_120 = arith.constant 0 : index
    %c0_121 = arith.constant 0 : index
    %227 = vector.load %arg11[%c0_120, %c0_121] : memref<8x128xf32, #tpu.memory_space<vmem>>, vector<8x128xf32>
    tpu.vector_store %arg11[%c0_120, %c0_121], %225 {strides = array<i32>} : memref<8x128xf32, #tpu.memory_space<vmem>>, vector<8x128xf32>,
    %c40_122 = arith.constant 40 : index
    %c0_123 = arith.constant 0 : index
    %228 = vector.load %arg10[%c40_122, %c0_123] : memref<64x128xf32, #tpu.memory_space<vmem>>, vector<8x128xf32>
    tpu.vector_store %arg10[%c40_122, %c0_123], %225 {strides = array<i32>} : memref<64x128xf32, #tpu.memory_space<vmem>>, vector<8x128xf32>,
    %c48 = arith.constant 48 : index
    %c0_124 = arith.constant 0 : index
    %229 = vector.load %arg9[%c48, %c0_124] : memref<64x512xf32, #tpu.memory_space<vmem>>, vector<8x512xf32>
    %c0_125 = arith.constant 0 : index
    %c0_126 = arith.constant 0 : index
    %230 = vector.load %arg11[%c0_125, %c0_126] : memref<8x128xf32, #tpu.memory_space<vmem>>, vector<8x128xf32>
    %231 = arith.truncf %230 : vector<8x128xf32> to vector<8x128xbf16>
    %c0_127 = arith.constant 0 : index
    %c0_128 = arith.constant 0 : index
    %c0_129 = arith.constant 0 : index
    %232 = vector.load %arg2[%c0_127, %c0_128, %c0_129] : memref<2x128x512xbf16, #tpu.memory_space<vmem>>, vector<1x128x512xbf16>
    %233 = vector.shape_cast %232 : vector<1x128x512xbf16> to vector<128x512xbf16>
    %cst_130 = arith.constant dense<0.000000e+00> : vector<8x512xf32>
    %234 = tpu.matmul %231, %233, %cst_130 {dimension_numbers = #tpu.dot_dimension_numbers<[1], [0], [0], [1], [0, 0, 1, 1], [], []>} : vector<8x128xbf16>, vector<128x512xbf16>, vector<8x512xf32> -> vector<8x512xf32>
    %235 = arith.addf %229, %234 : vector<8x512xf32>
    %236 = vector.extract_strided_slice %235 {offsets = [0, 0], sizes = [8, 128], strides = [1, 1]} : vector<8x512xf32> to vector<8x128xf32>
    %237 = arith.negf %236 : vector<8x128xf32>
    %238 = math.exp %237 : vector<8x128xf32>
    %cst_131 = arith.constant 1.000000e+00 : f32
    %239 = vector.broadcast %cst_131 : f32 to vector<8x128xf32>
    %240 = arith.addf %239, %238 : vector<8x128xf32>
    %241 = arith.divf %239, %240 : vector<8x128xf32>
    %242 = vector.extract_strided_slice %235 {offsets = [0, 128], sizes = [8, 128], strides = [1, 1]} : vector<8x512xf32> to vector<8x128xf32>
    %243 = arith.negf %242 : vector<8x128xf32>
    %244 = math.exp %243 : vector<8x128xf32>
    %cst_132 = arith.constant 1.000000e+00 : f32
    %245 = vector.broadcast %cst_132 : f32 to vector<8x128xf32>
    %246 = arith.addf %245, %244 : vector<8x128xf32>
    %247 = arith.divf %245, %246 : vector<8x128xf32>
    %248 = vector.extract_strided_slice %235 {offsets = [0, 256], sizes = [8, 128], strides = [1, 1]} : vector<8x512xf32> to vector<8x128xf32>
    %249 = math.tanh %248 : vector<8x128xf32>
    %250 = vector.extract_strided_slice %235 {offsets = [0, 384], sizes = [8, 128], strides = [1, 1]} : vector<8x512xf32> to vector<8x128xf32>
    %251 = arith.negf %250 : vector<8x128xf32>
    %252 = math.exp %251 : vector<8x128xf32>
    %cst_133 = arith.constant 1.000000e+00 : f32
    %253 = vector.broadcast %cst_133 : f32 to vector<8x128xf32>
    %254 = arith.addf %253, %252 : vector<8x128xf32>
    %255 = arith.divf %253, %254 : vector<8x128xf32>
    %c0_134 = arith.constant 0 : index
    %c0_135 = arith.constant 0 : index
    %256 = vector.load %arg12[%c0_134, %c0_135] : memref<8x128xf32, #tpu.memory_space<vmem>>, vector<8x128xf32>
    %257 = arith.mulf %247, %256 : vector<8x128xf32>
    %258 = arith.mulf %241, %249 : vector<8x128xf32>
    %259 = arith.addf %257, %258 : vector<8x128xf32>
    %260 = math.tanh %259 : vector<8x128xf32>
    %261 = arith.mulf %255, %260 : vector<8x128xf32>
    %c0_136 = arith.constant 0 : index
    %c0_137 = arith.constant 0 : index
    %262 = vector.load %arg12[%c0_136, %c0_137] : memref<8x128xf32, #tpu.memory_space<vmem>>, vector<8x128xf32>
    tpu.vector_store %arg12[%c0_136, %c0_137], %259 {strides = array<i32>} : memref<8x128xf32, #tpu.memory_space<vmem>>, vector<8x128xf32>,
    %c0_138 = arith.constant 0 : index
    %c0_139 = arith.constant 0 : index
    %263 = vector.load %arg11[%c0_138, %c0_139] : memref<8x128xf32, #tpu.memory_space<vmem>>, vector<8x128xf32>
    tpu.vector_store %arg11[%c0_138, %c0_139], %261 {strides = array<i32>} : memref<8x128xf32, #tpu.memory_space<vmem>>, vector<8x128xf32>,
    %c48_140 = arith.constant 48 : index
    %c0_141 = arith.constant 0 : index
    %264 = vector.load %arg10[%c48_140, %c0_141] : memref<64x128xf32, #tpu.memory_space<vmem>>, vector<8x128xf32>
    tpu.vector_store %arg10[%c48_140, %c0_141], %261 {strides = array<i32>} : memref<64x128xf32, #tpu.memory_space<vmem>>, vector<8x128xf32>,
    %c56 = arith.constant 56 : index
    %c0_142 = arith.constant 0 : index
    %265 = vector.load %arg9[%c56, %c0_142] : memref<64x512xf32, #tpu.memory_space<vmem>>, vector<8x512xf32>
    %c0_143 = arith.constant 0 : index
    %c0_144 = arith.constant 0 : index
    %266 = vector.load %arg11[%c0_143, %c0_144] : memref<8x128xf32, #tpu.memory_space<vmem>>, vector<8x128xf32>
    %267 = arith.truncf %266 : vector<8x128xf32> to vector<8x128xbf16>
    %c0_145 = arith.constant 0 : index
    %c0_146 = arith.constant 0 : index
    %c0_147 = arith.constant 0 : index
    %268 = vector.load %arg2[%c0_145, %c0_146, %c0_147] : memref<2x128x512xbf16, #tpu.memory_space<vmem>>, vector<1x128x512xbf16>
    %269 = vector.shape_cast %268 : vector<1x128x512xbf16> to vector<128x512xbf16>
    %cst_148 = arith.constant dense<0.000000e+00> : vector<8x512xf32>
    %270 = tpu.matmul %267, %269, %cst_148 {dimension_numbers = #tpu.dot_dimension_numbers<[1], [0], [0], [1], [0, 0, 1, 1], [], []>} : vector<8x128xbf16>, vector<128x512xbf16>, vector<8x512xf32> -> vector<8x512xf32>
    %271 = arith.addf %265, %270 : vector<8x512xf32>
    %272 = vector.extract_strided_slice %271 {offsets = [0, 0], sizes = [8, 128], strides = [1, 1]} : vector<8x512xf32> to vector<8x128xf32>
    %273 = arith.negf %272 : vector<8x128xf32>
    %274 = math.exp %273 : vector<8x128xf32>
    %cst_149 = arith.constant 1.000000e+00 : f32
    %275 = vector.broadcast %cst_149 : f32 to vector<8x128xf32>
    %276 = arith.addf %275, %274 : vector<8x128xf32>
    %277 = arith.divf %275, %276 : vector<8x128xf32>
    %278 = vector.extract_strided_slice %271 {offsets = [0, 128], sizes = [8, 128], strides = [1, 1]} : vector<8x512xf32> to vector<8x128xf32>
    %279 = arith.negf %278 : vector<8x128xf32>
    %280 = math.exp %279 : vector<8x128xf32>
    %cst_150 = arith.constant 1.000000e+00 : f32
    %281 = vector.broadcast %cst_150 : f32 to vector<8x128xf32>
    %282 = arith.addf %281, %280 : vector<8x128xf32>
    %283 = arith.divf %281, %282 : vector<8x128xf32>
    %284 = vector.extract_strided_slice %271 {offsets = [0, 256], sizes = [8, 128], strides = [1, 1]} : vector<8x512xf32> to vector<8x128xf32>
    %285 = math.tanh %284 : vector<8x128xf32>
    %286 = vector.extract_strided_slice %271 {offsets = [0, 384], sizes = [8, 128], strides = [1, 1]} : vector<8x512xf32> to vector<8x128xf32>
    %287 = arith.negf %286 : vector<8x128xf32>
    %288 = math.exp %287 : vector<8x128xf32>
    %cst_151 = arith.constant 1.000000e+00 : f32
    %289 = vector.broadcast %cst_151 : f32 to vector<8x128xf32>
    %290 = arith.addf %289, %288 : vector<8x128xf32>
    %291 = arith.divf %289, %290 : vector<8x128xf32>
    %c0_152 = arith.constant 0 : index
    %c0_153 = arith.constant 0 : index
    %292 = vector.load %arg12[%c0_152, %c0_153] : memref<8x128xf32, #tpu.memory_space<vmem>>, vector<8x128xf32>
    %293 = arith.mulf %283, %292 : vector<8x128xf32>
    %294 = arith.mulf %277, %285 : vector<8x128xf32>
    %295 = arith.addf %293, %294 : vector<8x128xf32>
    %296 = math.tanh %295 : vector<8x128xf32>
    %297 = arith.mulf %291, %296 : vector<8x128xf32>
    %c0_154 = arith.constant 0 : index
    %c0_155 = arith.constant 0 : index
    %298 = vector.load %arg12[%c0_154, %c0_155] : memref<8x128xf32, #tpu.memory_space<vmem>>, vector<8x128xf32>
    tpu.vector_store %arg12[%c0_154, %c0_155], %295 {strides = array<i32>} : memref<8x128xf32, #tpu.memory_space<vmem>>, vector<8x128xf32>,
    %c0_156 = arith.constant 0 : index
    %c0_157 = arith.constant 0 : index
    %299 = vector.load %arg11[%c0_156, %c0_157] : memref<8x128xf32, #tpu.memory_space<vmem>>, vector<8x128xf32>
    tpu.vector_store %arg11[%c0_156, %c0_157], %297 {strides = array<i32>} : memref<8x128xf32, #tpu.memory_space<vmem>>, vector<8x128xf32>,
    %c56_158 = arith.constant 56 : index
    %c0_159 = arith.constant 0 : index
    %300 = vector.load %arg10[%c56_158, %c0_159] : memref<64x128xf32, #tpu.memory_space<vmem>>, vector<8x128xf32>
    tpu.vector_store %arg10[%c56_158, %c0_159], %297 {strides = array<i32>} : memref<64x128xf32, #tpu.memory_space<vmem>>, vector<8x128xf32>,
    %c0_160 = arith.constant 0 : index
    %c0_161 = arith.constant 0 : index
    %301 = vector.load %arg10[%c0_160, %c0_161] : memref<64x128xf32, #tpu.memory_space<vmem>>, vector<64x128xf32>
    %302 = arith.truncf %301 : vector<64x128xf32> to vector<64x128xbf16>
    %c1 = arith.constant 1 : index
    %c0_162 = arith.constant 0 : index
    %c0_163 = arith.constant 0 : index
    %303 = vector.load %arg1[%c1, %c0_162, %c0_163] : memref<2x128x512xbf16, #tpu.memory_space<vmem>>, vector<1x128x512xbf16>
    %304 = vector.shape_cast %303 : vector<1x128x512xbf16> to vector<128x512xbf16>
    %cst_164 = arith.constant dense<0.000000e+00> : vector<64x512xf32>
    %305 = tpu.matmul %302, %304, %cst_164 {dimension_numbers = #tpu.dot_dimension_numbers<[1], [0], [0], [1], [0, 0, 1, 1], [], []>} : vector<64x128xbf16>, vector<128x512xbf16>, vector<64x512xf32> -> vector<64x512xf32>
    %c1_165 = arith.constant 1 : index
    %c0_166 = arith.constant 0 : index
    %c0_167 = arith.constant 0 : index
    %306 = vector.load %arg3[%c1_165, %c0_166, %c0_167] : memref<2x1x512xf32, #tpu.memory_space<vmem>>, vector<1x1x512xf32>
    %307 = vector.shape_cast %306 : vector<1x1x512xf32> to vector<1x512xf32>
    %308 = vector.broadcast %307 : vector<1x512xf32> to vector<64x512xf32>
    %309 = arith.addf %305, %308 : vector<64x512xf32>
    %c0_168 = arith.constant 0 : index
    %c0_169 = arith.constant 0 : index
    %310 = vector.load %arg9[%c0_168, %c0_169] : memref<64x512xf32, #tpu.memory_space<vmem>>, vector<64x512xf32>
    tpu.vector_store %arg9[%c0_168, %c0_169], %309 {strides = array<i32>} : memref<64x512xf32, #tpu.memory_space<vmem>>, vector<64x512xf32>,
    %cst_170 = arith.constant 0.000000e+00 : f32
    %311 = vector.broadcast %cst_170 : f32 to vector<8x128xf32>
    %c0_171 = arith.constant 0 : index
    %c0_172 = arith.constant 0 : index
    %312 = vector.load %arg11[%c0_171, %c0_172] : memref<8x128xf32, #tpu.memory_space<vmem>>, vector<8x128xf32>
    tpu.vector_store %arg11[%c0_171, %c0_172], %311 {strides = array<i32>} : memref<8x128xf32, #tpu.memory_space<vmem>>, vector<8x128xf32>,
    %cst_173 = arith.constant 0.000000e+00 : f32
    %313 = vector.broadcast %cst_173 : f32 to vector<8x128xf32>
    %c0_174 = arith.constant 0 : index
    %c0_175 = arith.constant 0 : index
    %314 = vector.load %arg12[%c0_174, %c0_175] : memref<8x128xf32, #tpu.memory_space<vmem>>, vector<8x128xf32>
    tpu.vector_store %arg12[%c0_174, %c0_175], %313 {strides = array<i32>} : memref<8x128xf32, #tpu.memory_space<vmem>>, vector<8x128xf32>,
    %c0_176 = arith.constant 0 : index
    %c0_177 = arith.constant 0 : index
    %315 = vector.load %arg9[%c0_176, %c0_177] : memref<64x512xf32, #tpu.memory_space<vmem>>, vector<8x512xf32>
    %c0_178 = arith.constant 0 : index
    %c0_179 = arith.constant 0 : index
    %316 = vector.load %arg11[%c0_178, %c0_179] : memref<8x128xf32, #tpu.memory_space<vmem>>, vector<8x128xf32>
    %317 = arith.truncf %316 : vector<8x128xf32> to vector<8x128xbf16>
    %c1_180 = arith.constant 1 : index
    %c0_181 = arith.constant 0 : index
    %c0_182 = arith.constant 0 : index
    %318 = vector.load %arg2[%c1_180, %c0_181, %c0_182] : memref<2x128x512xbf16, #tpu.memory_space<vmem>>, vector<1x128x512xbf16>
    %319 = vector.shape_cast %318 : vector<1x128x512xbf16> to vector<128x512xbf16>
    %cst_183 = arith.constant dense<0.000000e+00> : vector<8x512xf32>
    %320 = tpu.matmul %317, %319, %cst_183 {dimension_numbers = #tpu.dot_dimension_numbers<[1], [0], [0], [1], [0, 0, 1, 1], [], []>} : vector<8x128xbf16>, vector<128x512xbf16>, vector<8x512xf32> -> vector<8x512xf32>
    %321 = arith.addf %315, %320 : vector<8x512xf32>
    %322 = vector.extract_strided_slice %321 {offsets = [0, 0], sizes = [8, 128], strides = [1, 1]} : vector<8x512xf32> to vector<8x128xf32>
    %323 = arith.negf %322 : vector<8x128xf32>
    %324 = math.exp %323 : vector<8x128xf32>
    %cst_184 = arith.constant 1.000000e+00 : f32
    %325 = vector.broadcast %cst_184 : f32 to vector<8x128xf32>
    %326 = arith.addf %325, %324 : vector<8x128xf32>
    %327 = arith.divf %325, %326 : vector<8x128xf32>
    %328 = vector.extract_strided_slice %321 {offsets = [0, 128], sizes = [8, 128], strides = [1, 1]} : vector<8x512xf32> to vector<8x128xf32>
    %329 = arith.negf %328 : vector<8x128xf32>
    %330 = math.exp %329 : vector<8x128xf32>
    %cst_185 = arith.constant 1.000000e+00 : f32
    %331 = vector.broadcast %cst_185 : f32 to vector<8x128xf32>
    %332 = arith.addf %331, %330 : vector<8x128xf32>
    %333 = arith.divf %331, %332 : vector<8x128xf32>
    %334 = vector.extract_strided_slice %321 {offsets = [0, 256], sizes = [8, 128], strides = [1, 1]} : vector<8x512xf32> to vector<8x128xf32>
    %335 = math.tanh %334 : vector<8x128xf32>
    %336 = vector.extract_strided_slice %321 {offsets = [0, 384], sizes = [8, 128], strides = [1, 1]} : vector<8x512xf32> to vector<8x128xf32>
    %337 = arith.negf %336 : vector<8x128xf32>
    %338 = math.exp %337 : vector<8x128xf32>
    %cst_186 = arith.constant 1.000000e+00 : f32
    %339 = vector.broadcast %cst_186 : f32 to vector<8x128xf32>
    %340 = arith.addf %339, %338 : vector<8x128xf32>
    %341 = arith.divf %339, %340 : vector<8x128xf32>
    %c0_187 = arith.constant 0 : index
    %c0_188 = arith.constant 0 : index
    %342 = vector.load %arg12[%c0_187, %c0_188] : memref<8x128xf32, #tpu.memory_space<vmem>>, vector<8x128xf32>
    %343 = arith.mulf %333, %342 : vector<8x128xf32>
    %344 = arith.mulf %327, %335 : vector<8x128xf32>
    %345 = arith.addf %343, %344 : vector<8x128xf32>
    %346 = math.tanh %345 : vector<8x128xf32>
    %347 = arith.mulf %341, %346 : vector<8x128xf32>
    %c0_189 = arith.constant 0 : index
    %c0_190 = arith.constant 0 : index
    %348 = vector.load %arg12[%c0_189, %c0_190] : memref<8x128xf32, #tpu.memory_space<vmem>>, vector<8x128xf32>
    tpu.vector_store %arg12[%c0_189, %c0_190], %345 {strides = array<i32>} : memref<8x128xf32, #tpu.memory_space<vmem>>, vector<8x128xf32>,
    %c0_191 = arith.constant 0 : index
    %c0_192 = arith.constant 0 : index
    %349 = vector.load %arg11[%c0_191, %c0_192] : memref<8x128xf32, #tpu.memory_space<vmem>>, vector<8x128xf32>
    tpu.vector_store %arg11[%c0_191, %c0_192], %347 {strides = array<i32>} : memref<8x128xf32, #tpu.memory_space<vmem>>, vector<8x128xf32>,
    %c8_193 = arith.constant 8 : index
    %c0_194 = arith.constant 0 : index
    %350 = vector.load %arg9[%c8_193, %c0_194] : memref<64x512xf32, #tpu.memory_space<vmem>>, vector<8x512xf32>
    %c0_195 = arith.constant 0 : index
    %c0_196 = arith.constant 0 : index
    %351 = vector.load %arg11[%c0_195, %c0_196] : memref<8x128xf32, #tpu.memory_space<vmem>>, vector<8x128xf32>
    %352 = arith.truncf %351 : vector<8x128xf32> to vector<8x128xbf16>
    %c1_197 = arith.constant 1 : index
    %c0_198 = arith.constant 0 : index
    %c0_199 = arith.constant 0 : index
    %353 = vector.load %arg2[%c1_197, %c0_198, %c0_199] : memref<2x128x512xbf16, #tpu.memory_space<vmem>>, vector<1x128x512xbf16>
    %354 = vector.shape_cast %353 : vector<1x128x512xbf16> to vector<128x512xbf16>
    %cst_200 = arith.constant dense<0.000000e+00> : vector<8x512xf32>
    %355 = tpu.matmul %352, %354, %cst_200 {dimension_numbers = #tpu.dot_dimension_numbers<[1], [0], [0], [1], [0, 0, 1, 1], [], []>} : vector<8x128xbf16>, vector<128x512xbf16>, vector<8x512xf32> -> vector<8x512xf32>
    %356 = arith.addf %350, %355 : vector<8x512xf32>
    %357 = vector.extract_strided_slice %356 {offsets = [0, 0], sizes = [8, 128], strides = [1, 1]} : vector<8x512xf32> to vector<8x128xf32>
    %358 = arith.negf %357 : vector<8x128xf32>
    %359 = math.exp %358 : vector<8x128xf32>
    %cst_201 = arith.constant 1.000000e+00 : f32
    %360 = vector.broadcast %cst_201 : f32 to vector<8x128xf32>
    %361 = arith.addf %360, %359 : vector<8x128xf32>
    %362 = arith.divf %360, %361 : vector<8x128xf32>
    %363 = vector.extract_strided_slice %356 {offsets = [0, 128], sizes = [8, 128], strides = [1, 1]} : vector<8x512xf32> to vector<8x128xf32>
    %364 = arith.negf %363 : vector<8x128xf32>
    %365 = math.exp %364 : vector<8x128xf32>
    %cst_202 = arith.constant 1.000000e+00 : f32
    %366 = vector.broadcast %cst_202 : f32 to vector<8x128xf32>
    %367 = arith.addf %366, %365 : vector<8x128xf32>
    %368 = arith.divf %366, %367 : vector<8x128xf32>
    %369 = vector.extract_strided_slice %356 {offsets = [0, 256], sizes = [8, 128], strides = [1, 1]} : vector<8x512xf32> to vector<8x128xf32>
    %370 = math.tanh %369 : vector<8x128xf32>
    %371 = vector.extract_strided_slice %356 {offsets = [0, 384], sizes = [8, 128], strides = [1, 1]} : vector<8x512xf32> to vector<8x128xf32>
    %372 = arith.negf %371 : vector<8x128xf32>
    %373 = math.exp %372 : vector<8x128xf32>
    %cst_203 = arith.constant 1.000000e+00 : f32
    %374 = vector.broadcast %cst_203 : f32 to vector<8x128xf32>
    %375 = arith.addf %374, %373 : vector<8x128xf32>
    %376 = arith.divf %374, %375 : vector<8x128xf32>
    %c0_204 = arith.constant 0 : index
    %c0_205 = arith.constant 0 : index
    %377 = vector.load %arg12[%c0_204, %c0_205] : memref<8x128xf32, #tpu.memory_space<vmem>>, vector<8x128xf32>
    %378 = arith.mulf %368, %377 : vector<8x128xf32>
    %379 = arith.mulf %362, %370 : vector<8x128xf32>
    %380 = arith.addf %378, %379 : vector<8x128xf32>
    %381 = math.tanh %380 : vector<8x128xf32>
    %382 = arith.mulf %376, %381 : vector<8x128xf32>
    %c0_206 = arith.constant 0 : index
    %c0_207 = arith.constant 0 : index
    %383 = vector.load %arg12[%c0_206, %c0_207] : memref<8x128xf32, #tpu.memory_space<vmem>>, vector<8x128xf32>
    tpu.vector_store %arg12[%c0_206, %c0_207], %380 {strides = array<i32>} : memref<8x128xf32, #tpu.memory_space<vmem>>, vector<8x128xf32>,
    %c0_208 = arith.constant 0 : index
    %c0_209 = arith.constant 0 : index
    %384 = vector.load %arg11[%c0_208, %c0_209] : memref<8x128xf32, #tpu.memory_space<vmem>>, vector<8x128xf32>
    tpu.vector_store %arg11[%c0_208, %c0_209], %382 {strides = array<i32>} : memref<8x128xf32, #tpu.memory_space<vmem>>, vector<8x128xf32>,
    %c16_210 = arith.constant 16 : index
    %c0_211 = arith.constant 0 : index
    %385 = vector.load %arg9[%c16_210, %c0_211] : memref<64x512xf32, #tpu.memory_space<vmem>>, vector<8x512xf32>
    %c0_212 = arith.constant 0 : index
    %c0_213 = arith.constant 0 : index
    %386 = vector.load %arg11[%c0_212, %c0_213] : memref<8x128xf32, #tpu.memory_space<vmem>>, vector<8x128xf32>
    %387 = arith.truncf %386 : vector<8x128xf32> to vector<8x128xbf16>
    %c1_214 = arith.constant 1 : index
    %c0_215 = arith.constant 0 : index
    %c0_216 = arith.constant 0 : index
    %388 = vector.load %arg2[%c1_214, %c0_215, %c0_216] : memref<2x128x512xbf16, #tpu.memory_space<vmem>>, vector<1x128x512xbf16>
    %389 = vector.shape_cast %388 : vector<1x128x512xbf16> to vector<128x512xbf16>
    %cst_217 = arith.constant dense<0.000000e+00> : vector<8x512xf32>
    %390 = tpu.matmul %387, %389, %cst_217 {dimension_numbers = #tpu.dot_dimension_numbers<[1], [0], [0], [1], [0, 0, 1, 1], [], []>} : vector<8x128xbf16>, vector<128x512xbf16>, vector<8x512xf32> -> vector<8x512xf32>
    %391 = arith.addf %385, %390 : vector<8x512xf32>
    %392 = vector.extract_strided_slice %391 {offsets = [0, 0], sizes = [8, 128], strides = [1, 1]} : vector<8x512xf32> to vector<8x128xf32>
    %393 = arith.negf %392 : vector<8x128xf32>
    %394 = math.exp %393 : vector<8x128xf32>
    %cst_218 = arith.constant 1.000000e+00 : f32
    %395 = vector.broadcast %cst_218 : f32 to vector<8x128xf32>
    %396 = arith.addf %395, %394 : vector<8x128xf32>
    %397 = arith.divf %395, %396 : vector<8x128xf32>
    %398 = vector.extract_strided_slice %391 {offsets = [0, 128], sizes = [8, 128], strides = [1, 1]} : vector<8x512xf32> to vector<8x128xf32>
    %399 = arith.negf %398 : vector<8x128xf32>
    %400 = math.exp %399 : vector<8x128xf32>
    %cst_219 = arith.constant 1.000000e+00 : f32
    %401 = vector.broadcast %cst_219 : f32 to vector<8x128xf32>
    %402 = arith.addf %401, %400 : vector<8x128xf32>
    %403 = arith.divf %401, %402 : vector<8x128xf32>
    %404 = vector.extract_strided_slice %391 {offsets = [0, 256], sizes = [8, 128], strides = [1, 1]} : vector<8x512xf32> to vector<8x128xf32>
    %405 = math.tanh %404 : vector<8x128xf32>
    %406 = vector.extract_strided_slice %391 {offsets = [0, 384], sizes = [8, 128], strides = [1, 1]} : vector<8x512xf32> to vector<8x128xf32>
    %407 = arith.negf %406 : vector<8x128xf32>
    %408 = math.exp %407 : vector<8x128xf32>
    %cst_220 = arith.constant 1.000000e+00 : f32
    %409 = vector.broadcast %cst_220 : f32 to vector<8x128xf32>
    %410 = arith.addf %409, %408 : vector<8x128xf32>
    %411 = arith.divf %409, %410 : vector<8x128xf32>
    %c0_221 = arith.constant 0 : index
    %c0_222 = arith.constant 0 : index
    %412 = vector.load %arg12[%c0_221, %c0_222] : memref<8x128xf32, #tpu.memory_space<vmem>>, vector<8x128xf32>
    %413 = arith.mulf %403, %412 : vector<8x128xf32>
    %414 = arith.mulf %397, %405 : vector<8x128xf32>
    %415 = arith.addf %413, %414 : vector<8x128xf32>
    %416 = math.tanh %415 : vector<8x128xf32>
    %417 = arith.mulf %411, %416 : vector<8x128xf32>
    %c0_223 = arith.constant 0 : index
    %c0_224 = arith.constant 0 : index
    %418 = vector.load %arg12[%c0_223, %c0_224] : memref<8x128xf32, #tpu.memory_space<vmem>>, vector<8x128xf32>
    tpu.vector_store %arg12[%c0_223, %c0_224], %415 {strides = array<i32>} : memref<8x128xf32, #tpu.memory_space<vmem>>, vector<8x128xf32>,
    %c0_225 = arith.constant 0 : index
    %c0_226 = arith.constant 0 : index
    %419 = vector.load %arg11[%c0_225, %c0_226] : memref<8x128xf32, #tpu.memory_space<vmem>>, vector<8x128xf32>
    tpu.vector_store %arg11[%c0_225, %c0_226], %417 {strides = array<i32>} : memref<8x128xf32, #tpu.memory_space<vmem>>, vector<8x128xf32>,
    %c24_227 = arith.constant 24 : index
    %c0_228 = arith.constant 0 : index
    %420 = vector.load %arg9[%c24_227, %c0_228] : memref<64x512xf32, #tpu.memory_space<vmem>>, vector<8x512xf32>
    %c0_229 = arith.constant 0 : index
    %c0_230 = arith.constant 0 : index
    %421 = vector.load %arg11[%c0_229, %c0_230] : memref<8x128xf32, #tpu.memory_space<vmem>>, vector<8x128xf32>
    %422 = arith.truncf %421 : vector<8x128xf32> to vector<8x128xbf16>
    %c1_231 = arith.constant 1 : index
    %c0_232 = arith.constant 0 : index
    %c0_233 = arith.constant 0 : index
    %423 = vector.load %arg2[%c1_231, %c0_232, %c0_233] : memref<2x128x512xbf16, #tpu.memory_space<vmem>>, vector<1x128x512xbf16>
    %424 = vector.shape_cast %423 : vector<1x128x512xbf16> to vector<128x512xbf16>
    %cst_234 = arith.constant dense<0.000000e+00> : vector<8x512xf32>
    %425 = tpu.matmul %422, %424, %cst_234 {dimension_numbers = #tpu.dot_dimension_numbers<[1], [0], [0], [1], [0, 0, 1, 1], [], []>} : vector<8x128xbf16>, vector<128x512xbf16>, vector<8x512xf32> -> vector<8x512xf32>
    %426 = arith.addf %420, %425 : vector<8x512xf32>
    %427 = vector.extract_strided_slice %426 {offsets = [0, 0], sizes = [8, 128], strides = [1, 1]} : vector<8x512xf32> to vector<8x128xf32>
    %428 = arith.negf %427 : vector<8x128xf32>
    %429 = math.exp %428 : vector<8x128xf32>
    %cst_235 = arith.constant 1.000000e+00 : f32
    %430 = vector.broadcast %cst_235 : f32 to vector<8x128xf32>
    %431 = arith.addf %430, %429 : vector<8x128xf32>
    %432 = arith.divf %430, %431 : vector<8x128xf32>
    %433 = vector.extract_strided_slice %426 {offsets = [0, 128], sizes = [8, 128], strides = [1, 1]} : vector<8x512xf32> to vector<8x128xf32>
    %434 = arith.negf %433 : vector<8x128xf32>
    %435 = math.exp %434 : vector<8x128xf32>
    %cst_236 = arith.constant 1.000000e+00 : f32
    %436 = vector.broadcast %cst_236 : f32 to vector<8x128xf32>
    %437 = arith.addf %436, %435 : vector<8x128xf32>
    %438 = arith.divf %436, %437 : vector<8x128xf32>
    %439 = vector.extract_strided_slice %426 {offsets = [0, 256], sizes = [8, 128], strides = [1, 1]} : vector<8x512xf32> to vector<8x128xf32>
    %440 = math.tanh %439 : vector<8x128xf32>
    %441 = vector.extract_strided_slice %426 {offsets = [0, 384], sizes = [8, 128], strides = [1, 1]} : vector<8x512xf32> to vector<8x128xf32>
    %442 = arith.negf %441 : vector<8x128xf32>
    %443 = math.exp %442 : vector<8x128xf32>
    %cst_237 = arith.constant 1.000000e+00 : f32
    %444 = vector.broadcast %cst_237 : f32 to vector<8x128xf32>
    %445 = arith.addf %444, %443 : vector<8x128xf32>
    %446 = arith.divf %444, %445 : vector<8x128xf32>
    %c0_238 = arith.constant 0 : index
    %c0_239 = arith.constant 0 : index
    %447 = vector.load %arg12[%c0_238, %c0_239] : memref<8x128xf32, #tpu.memory_space<vmem>>, vector<8x128xf32>
    %448 = arith.mulf %438, %447 : vector<8x128xf32>
    %449 = arith.mulf %432, %440 : vector<8x128xf32>
    %450 = arith.addf %448, %449 : vector<8x128xf32>
    %451 = math.tanh %450 : vector<8x128xf32>
    %452 = arith.mulf %446, %451 : vector<8x128xf32>
    %c0_240 = arith.constant 0 : index
    %c0_241 = arith.constant 0 : index
    %453 = vector.load %arg12[%c0_240, %c0_241] : memref<8x128xf32, #tpu.memory_space<vmem>>, vector<8x128xf32>
    tpu.vector_store %arg12[%c0_240, %c0_241], %450 {strides = array<i32>} : memref<8x128xf32, #tpu.memory_space<vmem>>, vector<8x128xf32>,
    %c0_242 = arith.constant 0 : index
    %c0_243 = arith.constant 0 : index
    %454 = vector.load %arg11[%c0_242, %c0_243] : memref<8x128xf32, #tpu.memory_space<vmem>>, vector<8x128xf32>
    tpu.vector_store %arg11[%c0_242, %c0_243], %452 {strides = array<i32>} : memref<8x128xf32, #tpu.memory_space<vmem>>, vector<8x128xf32>,
    %c32_244 = arith.constant 32 : index
    %c0_245 = arith.constant 0 : index
    %455 = vector.load %arg9[%c32_244, %c0_245] : memref<64x512xf32, #tpu.memory_space<vmem>>, vector<8x512xf32>
    %c0_246 = arith.constant 0 : index
    %c0_247 = arith.constant 0 : index
    %456 = vector.load %arg11[%c0_246, %c0_247] : memref<8x128xf32, #tpu.memory_space<vmem>>, vector<8x128xf32>
    %457 = arith.truncf %456 : vector<8x128xf32> to vector<8x128xbf16>
    %c1_248 = arith.constant 1 : index
    %c0_249 = arith.constant 0 : index
    %c0_250 = arith.constant 0 : index
    %458 = vector.load %arg2[%c1_248, %c0_249, %c0_250] : memref<2x128x512xbf16, #tpu.memory_space<vmem>>, vector<1x128x512xbf16>
    %459 = vector.shape_cast %458 : vector<1x128x512xbf16> to vector<128x512xbf16>
    %cst_251 = arith.constant dense<0.000000e+00> : vector<8x512xf32>
    %460 = tpu.matmul %457, %459, %cst_251 {dimension_numbers = #tpu.dot_dimension_numbers<[1], [0], [0], [1], [0, 0, 1, 1], [], []>} : vector<8x128xbf16>, vector<128x512xbf16>, vector<8x512xf32> -> vector<8x512xf32>
    %461 = arith.addf %455, %460 : vector<8x512xf32>
    %462 = vector.extract_strided_slice %461 {offsets = [0, 0], sizes = [8, 128], strides = [1, 1]} : vector<8x512xf32> to vector<8x128xf32>
    %463 = arith.negf %462 : vector<8x128xf32>
    %464 = math.exp %463 : vector<8x128xf32>
    %cst_252 = arith.constant 1.000000e+00 : f32
    %465 = vector.broadcast %cst_252 : f32 to vector<8x128xf32>
    %466 = arith.addf %465, %464 : vector<8x128xf32>
    %467 = arith.divf %465, %466 : vector<8x128xf32>
    %468 = vector.extract_strided_slice %461 {offsets = [0, 128], sizes = [8, 128], strides = [1, 1]} : vector<8x512xf32> to vector<8x128xf32>
    %469 = arith.negf %468 : vector<8x128xf32>
    %470 = math.exp %469 : vector<8x128xf32>
    %cst_253 = arith.constant 1.000000e+00 : f32
    %471 = vector.broadcast %cst_253 : f32 to vector<8x128xf32>
    %472 = arith.addf %471, %470 : vector<8x128xf32>
    %473 = arith.divf %471, %472 : vector<8x128xf32>
    %474 = vector.extract_strided_slice %461 {offsets = [0, 256], sizes = [8, 128], strides = [1, 1]} : vector<8x512xf32> to vector<8x128xf32>
    %475 = math.tanh %474 : vector<8x128xf32>
    %476 = vector.extract_strided_slice %461 {offsets = [0, 384], sizes = [8, 128], strides = [1, 1]} : vector<8x512xf32> to vector<8x128xf32>
    %477 = arith.negf %476 : vector<8x128xf32>
    %478 = math.exp %477 : vector<8x128xf32>
    %cst_254 = arith.constant 1.000000e+00 : f32
    %479 = vector.broadcast %cst_254 : f32 to vector<8x128xf32>
    %480 = arith.addf %479, %478 : vector<8x128xf32>
    %481 = arith.divf %479, %480 : vector<8x128xf32>
    %c0_255 = arith.constant 0 : index
    %c0_256 = arith.constant 0 : index
    %482 = vector.load %arg12[%c0_255, %c0_256] : memref<8x128xf32, #tpu.memory_space<vmem>>, vector<8x128xf32>
    %483 = arith.mulf %473, %482 : vector<8x128xf32>
    %484 = arith.mulf %467, %475 : vector<8x128xf32>
    %485 = arith.addf %483, %484 : vector<8x128xf32>
    %486 = math.tanh %485 : vector<8x128xf32>
    %487 = arith.mulf %481, %486 : vector<8x128xf32>
    %c0_257 = arith.constant 0 : index
    %c0_258 = arith.constant 0 : index
    %488 = vector.load %arg12[%c0_257, %c0_258] : memref<8x128xf32, #tpu.memory_space<vmem>>, vector<8x128xf32>
    tpu.vector_store %arg12[%c0_257, %c0_258], %485 {strides = array<i32>} : memref<8x128xf32, #tpu.memory_space<vmem>>, vector<8x128xf32>,
    %c0_259 = arith.constant 0 : index
    %c0_260 = arith.constant 0 : index
    %489 = vector.load %arg11[%c0_259, %c0_260] : memref<8x128xf32, #tpu.memory_space<vmem>>, vector<8x128xf32>
    tpu.vector_store %arg11[%c0_259, %c0_260], %487 {strides = array<i32>} : memref<8x128xf32, #tpu.memory_space<vmem>>, vector<8x128xf32>,
    %c40_261 = arith.constant 40 : index
    %c0_262 = arith.constant 0 : index
    %490 = vector.load %arg9[%c40_261, %c0_262] : memref<64x512xf32, #tpu.memory_space<vmem>>, vector<8x512xf32>
    %c0_263 = arith.constant 0 : index
    %c0_264 = arith.constant 0 : index
    %491 = vector.load %arg11[%c0_263, %c0_264] : memref<8x128xf32, #tpu.memory_space<vmem>>, vector<8x128xf32>
    %492 = arith.truncf %491 : vector<8x128xf32> to vector<8x128xbf16>
    %c1_265 = arith.constant 1 : index
    %c0_266 = arith.constant 0 : index
    %c0_267 = arith.constant 0 : index
    %493 = vector.load %arg2[%c1_265, %c0_266, %c0_267] : memref<2x128x512xbf16, #tpu.memory_space<vmem>>, vector<1x128x512xbf16>
    %494 = vector.shape_cast %493 : vector<1x128x512xbf16> to vector<128x512xbf16>
    %cst_268 = arith.constant dense<0.000000e+00> : vector<8x512xf32>
    %495 = tpu.matmul %492, %494, %cst_268 {dimension_numbers = #tpu.dot_dimension_numbers<[1], [0], [0], [1], [0, 0, 1, 1], [], []>} : vector<8x128xbf16>, vector<128x512xbf16>, vector<8x512xf32> -> vector<8x512xf32>
    %496 = arith.addf %490, %495 : vector<8x512xf32>
    %497 = vector.extract_strided_slice %496 {offsets = [0, 0], sizes = [8, 128], strides = [1, 1]} : vector<8x512xf32> to vector<8x128xf32>
    %498 = arith.negf %497 : vector<8x128xf32>
    %499 = math.exp %498 : vector<8x128xf32>
    %cst_269 = arith.constant 1.000000e+00 : f32
    %500 = vector.broadcast %cst_269 : f32 to vector<8x128xf32>
    %501 = arith.addf %500, %499 : vector<8x128xf32>
    %502 = arith.divf %500, %501 : vector<8x128xf32>
    %503 = vector.extract_strided_slice %496 {offsets = [0, 128], sizes = [8, 128], strides = [1, 1]} : vector<8x512xf32> to vector<8x128xf32>
    %504 = arith.negf %503 : vector<8x128xf32>
    %505 = math.exp %504 : vector<8x128xf32>
    %cst_270 = arith.constant 1.000000e+00 : f32
    %506 = vector.broadcast %cst_270 : f32 to vector<8x128xf32>
    %507 = arith.addf %506, %505 : vector<8x128xf32>
    %508 = arith.divf %506, %507 : vector<8x128xf32>
    %509 = vector.extract_strided_slice %496 {offsets = [0, 256], sizes = [8, 128], strides = [1, 1]} : vector<8x512xf32> to vector<8x128xf32>
    %510 = math.tanh %509 : vector<8x128xf32>
    %511 = vector.extract_strided_slice %496 {offsets = [0, 384], sizes = [8, 128], strides = [1, 1]} : vector<8x512xf32> to vector<8x128xf32>
    %512 = arith.negf %511 : vector<8x128xf32>
    %513 = math.exp %512 : vector<8x128xf32>
    %cst_271 = arith.constant 1.000000e+00 : f32
    %514 = vector.broadcast %cst_271 : f32 to vector<8x128xf32>
    %515 = arith.addf %514, %513 : vector<8x128xf32>
    %516 = arith.divf %514, %515 : vector<8x128xf32>
    %c0_272 = arith.constant 0 : index
    %c0_273 = arith.constant 0 : index
    %517 = vector.load %arg12[%c0_272, %c0_273] : memref<8x128xf32, #tpu.memory_space<vmem>>, vector<8x128xf32>
    %518 = arith.mulf %508, %517 : vector<8x128xf32>
    %519 = arith.mulf %502, %510 : vector<8x128xf32>
    %520 = arith.addf %518, %519 : vector<8x128xf32>
    %521 = math.tanh %520 : vector<8x128xf32>
    %522 = arith.mulf %516, %521 : vector<8x128xf32>
    %c0_274 = arith.constant 0 : index
    %c0_275 = arith.constant 0 : index
    %523 = vector.load %arg12[%c0_274, %c0_275] : memref<8x128xf32, #tpu.memory_space<vmem>>, vector<8x128xf32>
    tpu.vector_store %arg12[%c0_274, %c0_275], %520 {strides = array<i32>} : memref<8x128xf32, #tpu.memory_space<vmem>>, vector<8x128xf32>,
    %c0_276 = arith.constant 0 : index
    %c0_277 = arith.constant 0 : index
    %524 = vector.load %arg11[%c0_276, %c0_277] : memref<8x128xf32, #tpu.memory_space<vmem>>, vector<8x128xf32>
    tpu.vector_store %arg11[%c0_276, %c0_277], %522 {strides = array<i32>} : memref<8x128xf32, #tpu.memory_space<vmem>>, vector<8x128xf32>,
    %c48_278 = arith.constant 48 : index
    %c0_279 = arith.constant 0 : index
    %525 = vector.load %arg9[%c48_278, %c0_279] : memref<64x512xf32, #tpu.memory_space<vmem>>, vector<8x512xf32>
    %c0_280 = arith.constant 0 : index
    %c0_281 = arith.constant 0 : index
    %526 = vector.load %arg11[%c0_280, %c0_281] : memref<8x128xf32, #tpu.memory_space<vmem>>, vector<8x128xf32>
    %527 = arith.truncf %526 : vector<8x128xf32> to vector<8x128xbf16>
    %c1_282 = arith.constant 1 : index
    %c0_283 = arith.constant 0 : index
    %c0_284 = arith.constant 0 : index
    %528 = vector.load %arg2[%c1_282, %c0_283, %c0_284] : memref<2x128x512xbf16, #tpu.memory_space<vmem>>, vector<1x128x512xbf16>
    %529 = vector.shape_cast %528 : vector<1x128x512xbf16> to vector<128x512xbf16>
    %cst_285 = arith.constant dense<0.000000e+00> : vector<8x512xf32>
    %530 = tpu.matmul %527, %529, %cst_285 {dimension_numbers = #tpu.dot_dimension_numbers<[1], [0], [0], [1], [0, 0, 1, 1], [], []>} : vector<8x128xbf16>, vector<128x512xbf16>, vector<8x512xf32> -> vector<8x512xf32>
    %531 = arith.addf %525, %530 : vector<8x512xf32>
    %532 = vector.extract_strided_slice %531 {offsets = [0, 0], sizes = [8, 128], strides = [1, 1]} : vector<8x512xf32> to vector<8x128xf32>
    %533 = arith.negf %532 : vector<8x128xf32>
    %534 = math.exp %533 : vector<8x128xf32>
    %cst_286 = arith.constant 1.000000e+00 : f32
    %535 = vector.broadcast %cst_286 : f32 to vector<8x128xf32>
    %536 = arith.addf %535, %534 : vector<8x128xf32>
    %537 = arith.divf %535, %536 : vector<8x128xf32>
    %538 = vector.extract_strided_slice %531 {offsets = [0, 128], sizes = [8, 128], strides = [1, 1]} : vector<8x512xf32> to vector<8x128xf32>
    %539 = arith.negf %538 : vector<8x128xf32>
    %540 = math.exp %539 : vector<8x128xf32>
    %cst_287 = arith.constant 1.000000e+00 : f32
    %541 = vector.broadcast %cst_287 : f32 to vector<8x128xf32>
    %542 = arith.addf %541, %540 : vector<8x128xf32>
    %543 = arith.divf %541, %542 : vector<8x128xf32>
    %544 = vector.extract_strided_slice %531 {offsets = [0, 256], sizes = [8, 128], strides = [1, 1]} : vector<8x512xf32> to vector<8x128xf32>
    %545 = math.tanh %544 : vector<8x128xf32>
    %546 = vector.extract_strided_slice %531 {offsets = [0, 384], sizes = [8, 128], strides = [1, 1]} : vector<8x512xf32> to vector<8x128xf32>
    %547 = arith.negf %546 : vector<8x128xf32>
    %548 = math.exp %547 : vector<8x128xf32>
    %cst_288 = arith.constant 1.000000e+00 : f32
    %549 = vector.broadcast %cst_288 : f32 to vector<8x128xf32>
    %550 = arith.addf %549, %548 : vector<8x128xf32>
    %551 = arith.divf %549, %550 : vector<8x128xf32>
    %c0_289 = arith.constant 0 : index
    %c0_290 = arith.constant 0 : index
    %552 = vector.load %arg12[%c0_289, %c0_290] : memref<8x128xf32, #tpu.memory_space<vmem>>, vector<8x128xf32>
    %553 = arith.mulf %543, %552 : vector<8x128xf32>
    %554 = arith.mulf %537, %545 : vector<8x128xf32>
    %555 = arith.addf %553, %554 : vector<8x128xf32>
    %556 = math.tanh %555 : vector<8x128xf32>
    %557 = arith.mulf %551, %556 : vector<8x128xf32>
    %c0_291 = arith.constant 0 : index
    %c0_292 = arith.constant 0 : index
    %558 = vector.load %arg12[%c0_291, %c0_292] : memref<8x128xf32, #tpu.memory_space<vmem>>, vector<8x128xf32>
    tpu.vector_store %arg12[%c0_291, %c0_292], %555 {strides = array<i32>} : memref<8x128xf32, #tpu.memory_space<vmem>>, vector<8x128xf32>,
    %c0_293 = arith.constant 0 : index
    %c0_294 = arith.constant 0 : index
    %559 = vector.load %arg11[%c0_293, %c0_294] : memref<8x128xf32, #tpu.memory_space<vmem>>, vector<8x128xf32>
    tpu.vector_store %arg11[%c0_293, %c0_294], %557 {strides = array<i32>} : memref<8x128xf32, #tpu.memory_space<vmem>>, vector<8x128xf32>,
    %c56_295 = arith.constant 56 : index
    %c0_296 = arith.constant 0 : index
    %560 = vector.load %arg9[%c56_295, %c0_296] : memref<64x512xf32, #tpu.memory_space<vmem>>, vector<8x512xf32>
    %c0_297 = arith.constant 0 : index
    %c0_298 = arith.constant 0 : index
    %561 = vector.load %arg11[%c0_297, %c0_298] : memref<8x128xf32, #tpu.memory_space<vmem>>, vector<8x128xf32>
    %562 = arith.truncf %561 : vector<8x128xf32> to vector<8x128xbf16>
    %c1_299 = arith.constant 1 : index
    %c0_300 = arith.constant 0 : index
    %c0_301 = arith.constant 0 : index
    %563 = vector.load %arg2[%c1_299, %c0_300, %c0_301] : memref<2x128x512xbf16, #tpu.memory_space<vmem>>, vector<1x128x512xbf16>
    %564 = vector.shape_cast %563 : vector<1x128x512xbf16> to vector<128x512xbf16>
    %cst_302 = arith.constant dense<0.000000e+00> : vector<8x512xf32>
    %565 = tpu.matmul %562, %564, %cst_302 {dimension_numbers = #tpu.dot_dimension_numbers<[1], [0], [0], [1], [0, 0, 1, 1], [], []>} : vector<8x128xbf16>, vector<128x512xbf16>, vector<8x512xf32> -> vector<8x512xf32>
    %566 = arith.addf %560, %565 : vector<8x512xf32>
    %567 = vector.extract_strided_slice %566 {offsets = [0, 0], sizes = [8, 128], strides = [1, 1]} : vector<8x512xf32> to vector<8x128xf32>
    %568 = arith.negf %567 : vector<8x128xf32>
    %569 = math.exp %568 : vector<8x128xf32>
    %cst_303 = arith.constant 1.000000e+00 : f32
    %570 = vector.broadcast %cst_303 : f32 to vector<8x128xf32>
    %571 = arith.addf %570, %569 : vector<8x128xf32>
    %572 = arith.divf %570, %571 : vector<8x128xf32>
    %573 = vector.extract_strided_slice %566 {offsets = [0, 128], sizes = [8, 128], strides = [1, 1]} : vector<8x512xf32> to vector<8x128xf32>
    %574 = arith.negf %573 : vector<8x128xf32>
    %575 = math.exp %574 : vector<8x128xf32>
    %cst_304 = arith.constant 1.000000e+00 : f32
    %576 = vector.broadcast %cst_304 : f32 to vector<8x128xf32>
    %577 = arith.addf %576, %575 : vector<8x128xf32>
    %578 = arith.divf %576, %577 : vector<8x128xf32>
    %579 = vector.extract_strided_slice %566 {offsets = [0, 256], sizes = [8, 128], strides = [1, 1]} : vector<8x512xf32> to vector<8x128xf32>
    %580 = math.tanh %579 : vector<8x128xf32>
    %581 = vector.extract_strided_slice %566 {offsets = [0, 384], sizes = [8, 128], strides = [1, 1]} : vector<8x512xf32> to vector<8x128xf32>
    %582 = arith.negf %581 : vector<8x128xf32>
    %583 = math.exp %582 : vector<8x128xf32>
    %cst_305 = arith.constant 1.000000e+00 : f32
    %584 = vector.broadcast %cst_305 : f32 to vector<8x128xf32>
    %585 = arith.addf %584, %583 : vector<8x128xf32>
    %586 = arith.divf %584, %585 : vector<8x128xf32>
    %c0_306 = arith.constant 0 : index
    %c0_307 = arith.constant 0 : index
    %587 = vector.load %arg12[%c0_306, %c0_307] : memref<8x128xf32, #tpu.memory_space<vmem>>, vector<8x128xf32>
    %588 = arith.mulf %578, %587 : vector<8x128xf32>
    %589 = arith.mulf %572, %580 : vector<8x128xf32>
    %590 = arith.addf %588, %589 : vector<8x128xf32>
    %591 = math.tanh %590 : vector<8x128xf32>
    %592 = arith.mulf %586, %591 : vector<8x128xf32>
    %c0_308 = arith.constant 0 : index
    %c0_309 = arith.constant 0 : index
    %593 = vector.load %arg12[%c0_308, %c0_309] : memref<8x128xf32, #tpu.memory_space<vmem>>, vector<8x128xf32>
    tpu.vector_store %arg12[%c0_308, %c0_309], %590 {strides = array<i32>} : memref<8x128xf32, #tpu.memory_space<vmem>>, vector<8x128xf32>,
    %c0_310 = arith.constant 0 : index
    %c0_311 = arith.constant 0 : index
    %594 = vector.load %arg11[%c0_310, %c0_311] : memref<8x128xf32, #tpu.memory_space<vmem>>, vector<8x128xf32>
    tpu.vector_store %arg11[%c0_310, %c0_311], %592 {strides = array<i32>} : memref<8x128xf32, #tpu.memory_space<vmem>>, vector<8x128xf32>,
    %c0_312 = arith.constant 0 : index
    %c0_313 = arith.constant 0 : index
    %595 = vector.load %arg11[%c0_312, %c0_313] : memref<8x128xf32, #tpu.memory_space<vmem>>, vector<8x128xf32>
    %596 = arith.truncf %595 : vector<8x128xf32> to vector<8x128xbf16>
    %c0_314 = arith.constant 0 : index
    %c0_315 = arith.constant 0 : index
    %597 = vector.load %arg4[%c0_314, %c0_315] : memref<128x128xbf16, #tpu.memory_space<vmem>>, vector<128x128xbf16>
    %cst_316 = arith.constant dense<0.000000e+00> : vector<8x128xf32>
    %598 = tpu.matmul %596, %597, %cst_316 {dimension_numbers = #tpu.dot_dimension_numbers<[1], [0], [0], [1], [0, 0, 1, 1], [], []>} : vector<8x128xbf16>, vector<128x128xbf16>, vector<8x128xf32> -> vector<8x128xf32>
    %c0_317 = arith.constant 0 : index
    %c0_318 = arith.constant 0 : index
    %599 = vector.load %arg5[%c0_317, %c0_318] : memref<1x128xf32, #tpu.memory_space<vmem>>, vector<1x128xf32>
    %600 = vector.broadcast %599 : vector<1x128xf32> to vector<8x128xf32>
    %601 = arith.addf %598, %600 : vector<8x128xf32>
    %cst_319 = arith.constant 0.000000e+00 : f32
    %602 = vector.broadcast %cst_319 : f32 to vector<8x128xf32>
    %603 = arith.maximumf %601, %602 : vector<8x128xf32>
    %604 = arith.truncf %603 : vector<8x128xf32> to vector<8x128xbf16>
    %c0_320 = arith.constant 0 : index
    %c0_321 = arith.constant 0 : index
    %605 = vector.load %arg6[%c0_320, %c0_321] : memref<128x128xbf16, #tpu.memory_space<vmem>>, vector<128x128xbf16>
    %cst_322 = arith.constant dense<0.000000e+00> : vector<8x128xf32>
    %606 = tpu.matmul %604, %605, %cst_322 {dimension_numbers = #tpu.dot_dimension_numbers<[1], [0], [0], [1], [0, 0, 1, 1], [], []>} : vector<8x128xbf16>, vector<128x128xbf16>, vector<8x128xf32> -> vector<8x128xf32>
    %c0_323 = arith.constant 0 : index
    %c0_324 = arith.constant 0 : index
    %607 = vector.load %arg7[%c0_323, %c0_324] : memref<1x128xf32, #tpu.memory_space<vmem>>, vector<1x128xf32>
    %608 = vector.broadcast %607 : vector<1x128xf32> to vector<8x128xf32>
    %609 = arith.addf %606, %608 : vector<8x128xf32>
    %c0_325 = arith.constant 0 : index
    %c0_326 = arith.constant 0 : index
    %610 = vector.load %arg8[%c0_325, %c0_326] : memref<8x128xf32, #tpu.memory_space<vmem>>, vector<8x128xf32>
    tpu.vector_store %arg8[%c0_325, %c0_326], %609 {strides = array<i32>} : memref<8x128xf32, #tpu.memory_space<vmem>>, vector<8x128xf32>,
    return
  }
}

</mosaic_0001>

<llo_original>
// kernel: lstm_model_forward.1
$region0: #{lstm_model_forward.1}
  #allocation0 [shape = 'u32[]', space=smem, size = 0x4, offset = 0x4, fixed_abs, tag = 'smem constant byte address 0x4 - core index']
  #allocation1 [shape = 'u32[144,128]{1,0:T(1,128)}', space=vmem, size = 0x12000, scoped, tag = 'internal scratch']
  #allocation2 [shape = 'f32[64,512]{1,0:T(8,128)}', space=vmem, size = 0x20000, scoped, tag = 'scratch operand']
  #allocation3 [shape = 'f32[64,128]{1,0:T(8,128)}', space=vmem, size = 0x8000, scoped, tag = 'scratch operand']
  #allocation4 [shape = 'f32[8,128]{1,0:T(8,128)}', space=vmem, size = 0x1000, scoped, tag = 'scratch operand']
  #allocation5 [shape = 'f32[8,128]{1,0:T(8,128)}', space=vmem, size = 0x1000, scoped, tag = 'scratch operand']
  %s0 = inlined_call_operand.vmem [shape: bf16[64,128], index: 0, kind: input, shape index: {}]
  %s1 = inlined_call_operand.hbm [shape: bf16[2,128,512], index: 1, kind: input, shape index: {}]
  %s2 = inlined_call_operand.hbm [shape: bf16[2,128,512], index: 2, kind: input, shape index: {}]
  %s3 = inlined_call_operand.vmem [shape: f32[2,1,512], index: 3, kind: input, shape index: {}]
  %s4 = inlined_call_operand.vmem [shape: bf16[128,128], index: 4, kind: input, shape index: {}]
  %s5 = inlined_call_operand.vmem [shape: f32[1,128], index: 5, kind: input, shape index: {}]
  %s6 = inlined_call_operand.hbm [shape: bf16[128,128], index: 6, kind: input, shape index: {}]
  %s7 = inlined_call_operand.vmem [shape: f32[1,128], index: 7, kind: input, shape index: {}]
  %s8 = inlined_call_operand.vmem [shape: f32[8,128], index: 8, kind: output, shape index: {}]
  %s9 = sld [smem:[#allocation0]]
  $region54: #{lstm_model_forward.1} parent=0
    _
  %s11 = ssub.s32 1, %s9
  %s12 = scalar_select 0, %s11, %s9
  $region1: #{lstm_model_forward.1} parent=0
    #allocation6 [shape = 'u8[262144]{0}', space=vmem, size = 0x40000, scoped, tag = 'input window, operand 1, single buffered']
    #allocation7 [shape = 's32[1]{0}', space=sflag, size = 0x4, scoped, tag = 'scoped memory for lstm_model_forward.1']
    #allocation8 [shape = 'u8[262144]{0}', space=vmem, size = 0x40000, scoped, tag = 'input window, operand 2, single buffered']
    #allocation9 [shape = 's32[1]{0}', space=sflag, size = 0x4, scoped, tag = 'scoped memory for lstm_model_forward.1']
    #allocation10 [shape = 'u8[32768]{0}', space=vmem, size = 0x8000, scoped, tag = 'input window, operand 6, single buffered']
    %13 = vsyncpa [#allocation7], 0
    %14 = vsyncpa [#allocation9], 0
    // Predicated region
    $region2: #{lstm_model_forward.1} parent=1 // pred_check
      _
    $region3: #{lstm_model_forward.1} parent=1 // pred_check_branch
      %16 = sbr.rel (0) target = $region5
    $region4: #{lstm_model_forward.1} parent=1 // pred_region
      _
    $region5: #{lstm_model_forward.1} parent=1 // pred_fallthru
      _
    // Predicated region
    $region6: #{lstm_model_forward.1} parent=1 // pred_check
      _
    $region7: #{lstm_model_forward.1} parent=1 // pred_check_branch
      %18 = sbr.rel (0) target = $region9
    $region8: #{lstm_model_forward.1} parent=1 // pred_region
      %s20 = ssub.s32 8192, 8192
      %21 = vsyncadd [#allocation7], %s20
      %s22 = sshll.u32 [#allocation6], 4
      %s23 = int_to_ptr.vmem [resolvable:$true] %s22
      %28 = dma.hbm_to_vmem [thread:$0]  %s1, 8192, %s23, [#allocation7], 256, 256, 16
    $region9: #{lstm_model_forward.1} parent=1 // pred_fallthru
      _
    // Predicated region
    $region10: #{lstm_model_forward.1} parent=1 // pred_check
      _
    $region11: #{lstm_model_forward.1} parent=1 // pred_check_branch
      %30 = sbr.rel (0) target = $region13
    $region12: #{lstm_model_forward.1} parent=1 // pred_region
      %s32 = ssub.s32 8192, 8192
      %33 = vsyncadd [#allocation9], %s32
      %s34 = sshll.u32 [#allocation8], 4
      %s35 = int_to_ptr.vmem [resolvable:$true] %s34
      %40 = dma.hbm_to_vmem [thread:$0]  %s2, 8192, %s35, [#allocation9], 256, 256, 16
    $region13: #{lstm_model_forward.1} parent=1 // pred_fallthru
      _
    // Predicated region
    $region14: #{lstm_model_forward.1} parent=1 // pred_check
      _
    $region15: #{lstm_model_forward.1} parent=1 // pred_check_branch
      %42 = sbr.rel (0) target = $region17
    $region16: #{lstm_model_forward.1} parent=1 // pred_region
      _
    $region17: #{lstm_model_forward.1} parent=1 // pred_fallthru
      _
    // Predicated region
    $region18: #{lstm_model_forward.1} parent=1 // pred_check
      _
    $region19: #{lstm_model_forward.1} parent=1 // pred_check_branch
      %44 = sbr.rel (0) target = $region21
    $region20: #{lstm_model_forward.1} parent=1 // pred_region
      _
    $region21: #{lstm_model_forward.1} parent=1 // pred_fallthru
      _
    // Predicated region
    $region22: #{lstm_model_forward.1} parent=1 // pred_check
      _
    $region23: #{lstm_model_forward.1} parent=1 // pred_check_branch
      %46 = sbr.rel (0) target = $region25
    $region24: #{lstm_model_forward.1} parent=1 // pred_region
      _
    $region25: #{lstm_model_forward.1} parent=1 // pred_fallthru
      _
    // Predicated region
    $region26: #{lstm_model_forward.1} parent=1 // pred_check
      _
    $region27: #{lstm_model_forward.1} parent=1 // pred_check_branch
      %48 = sbr.rel (0) target = $region29
    $region28: #{lstm_model_forward.1} parent=1 // pred_region
      %s50 = ssub.s32 1024, 1024
      %51 = vsyncadd [#allocation9], %s50
      %s52 = sshll.u32 [#allocation10], 4
      %s53 = int_to_ptr.vmem [resolvable:$true] %s52
      %58 = dma.hbm_to_vmem [thread:$0]  %s6, 1024, %s53, [#allocation9], 64, 64, 4
    $region29: #{lstm_model_forward.1} parent=1 // pred_fallthru
      _
    // Predicated region
    $region30: #{lstm_model_forward.1} parent=1 // pred_check
      _
    $region31: #{lstm_model_forward.1} parent=1 // pred_check_branch
      %60 = sbr.rel (0) target = $region33
    $region32: #{lstm_model_forward.1} parent=1 // pred_region
      _
    $region33: #{lstm_model_forward.1} parent=1 // pred_fallthru
      _
    // Predicated region
    $region34: #{lstm_model_forward.1} parent=1 // pred_check
      _
    $region35: #{lstm_model_forward.1} parent=1 // pred_check_branch
      %62 = sbr.rel (0) target = $region37
    $region36: #{lstm_model_forward.1} parent=1 // pred_region
      %63 = dma.done [#allocation7], 8192
    $region37: #{lstm_model_forward.1} parent=1 // pred_fallthru
      _
    // Predicated region
    $region38: #{lstm_model_forward.1} parent=1 // pred_check
      _
    $region39: #{lstm_model_forward.1} parent=1 // pred_check_branch
      %65 = sbr.rel (0) target = $region41
    $region40: #{lstm_model_forward.1} parent=1 // pred_region
      %66 = dma.done [#allocation9], 8192
    $region41: #{lstm_model_forward.1} parent=1 // pred_fallthru
      _
    // Predicated region
    $region42: #{lstm_model_forward.1} parent=1 // pred_check
      _
    $region43: #{lstm_model_forward.1} parent=1 // pred_check_branch
      %68 = sbr.rel (0) target = $region45
    $region44: #{lstm_model_forward.1} parent=1 // pred_region
      %69 = dma.done [#allocation9], 1024
    $region45: #{lstm_model_forward.1} parent=1 // pred_fallthru
      _
    %v71 = vld [vmem:[%s0] sm:$0xf]
    %v72 = vld [vmem:[%s0 + $0x4] sm:$0xf]
    %v73 = vld [vmem:[%s0 + $0x8] sm:$0xf]
    %v74 = vld [vmem:[%s0 + $0xc] sm:$0xf]
    %v75 = vld [vmem:[%s0 + $0x10] sm:$0xf]
    %v76 = vld [vmem:[%s0 + $0x14] sm:$0xf]
    %v77 = vld [vmem:[%s0 + $0x18] sm:$0xf]
    %v78 = vld [vmem:[%s0 + $0x1c] sm:$0xf]
    %v79 = vld [vmem:[#allocation6] sm:$0xff]
    %v80 = vld [vmem:[#allocation6 + $0x8] sm:$0xff]
    %v81 = vld [vmem:[#allocation6 + $0x10] sm:$0xff]
    %v82 = vld [vmem:[#allocation6 + $0x18] sm:$0xff]
    %v83 = vld [vmem:[#allocation6 + $0x20] sm:$0xff]
    %v84 = vld [vmem:[#allocation6 + $0x28] sm:$0xff]
    %v85 = vld [vmem:[#allocation6 + $0x30] sm:$0xff]
    %v86 = vld [vmem:[#allocation6 + $0x38] sm:$0xff]
    %v87 = vld [vmem:[#allocation6 + $0x40] sm:$0xff]
    %v88 = vld [vmem:[#allocation6 + $0x48] sm:$0xff]
    %v89 = vld [vmem:[#allocation6 + $0x50] sm:$0xff]
    %v90 = vld [vmem:[#allocation6 + $0x58] sm:$0xff]
    %v91 = vld [vmem:[#allocation6 + $0x60] sm:$0xff]
    %v92 = vld [vmem:[#allocation6 + $0x68] sm:$0xff]
    %v93 = vld [vmem:[#allocation6 + $0x70] sm:$0xff]
    %v94 = vld [vmem:[#allocation6 + $0x78] sm:$0xff]
    %v95 = vld [vmem:[#allocation6 + $0x80] sm:$0xff]
    %v96 = vld [vmem:[#allocation6 + $0x88] sm:$0xff]
    %v97 = vld [vmem:[#allocation6 + $0x90] sm:$0xff]
    %v98 = vld [vmem:[#allocation6 + $0x98] sm:$0xff]
    %v99 = vld [vmem:[#allocation6 + $0xa0] sm:$0xff]
    %v100 = vld [vmem:[#allocation6 + $0xa8] sm:$0xff]
    %v101 = vld [vmem:[#allocation6 + $0xb0] sm:$0xff]
    %v102 = vld [vmem:[#allocation6 + $0xb8] sm:$0xff]
    %v103 = vld [vmem:[#allocation6 + $0xc0] sm:$0xff]
    %v104 = vld [vmem:[#allocation6 + $0xc8] sm:$0xff]
    %v105 = vld [vmem:[#allocation6 + $0xd0] sm:$0xff]
    %v106 = vld [vmem:[#allocation6 + $0xd8] sm:$0xff]
    %v107 = vld [vmem:[#allocation6 + $0xe0] sm:$0xff]
    %v108 = vld [vmem:[#allocation6 + $0xe8] sm:$0xff]
    %v109 = vld [vmem:[#allocation6 + $0xf0] sm:$0xff]
    %v110 = vld [vmem:[#allocation6 + $0xf8] sm:$0xff]
    %v111 = vld [vmem:[%s3] sm:$0xf]
    %v113 = vlaneseq
    %v114 = vshrl.u32 %v113, 7
    %v115 = vsub.s32 0, %v114
    %v116 = vrot.slane %v111, %v115
    %v117 = vlaneseq
    %v118 = vshrl.u32 %v117, 7
    %v119 = vsub.s32 1, %v118
    %v120 = vrot.slane %v111, %v119
    %v121 = vlaneseq
    %v122 = vshrl.u32 %v121, 7
    %v123 = vsub.s32 2, %v122
    %v124 = vrot.slane %v111, %v123
    %v125 = vlaneseq
    %v126 = vshrl.u32 %v125, 7
    %v127 = vsub.s32 3, %v126
    %v128 = vrot.slane %v111, %v127
    %v141 = vunpack.c.l.b16 %v71
    %v142 = vunpack.c.l.b16 %v72
    %v143 = vunpack.c.l.b16 %v73
    %v144 = vunpack.c.l.b16 %v74
    %v145 = vunpack.c.l.b16 %v75
    %v146 = vunpack.c.l.b16 %v76
    %v147 = vunpack.c.l.b16 %v77
    %v148 = vunpack.c.l.b16 %v78
    %v149 = vpack.c.b16 %v142, %v141
    %v150 = vpack.c.b16 %v144, %v143
    %v151 = vpack.c.b16 %v146, %v145
    %v152 = vpack.c.b16 %v148, %v147
    %v189 = vunpack.c.l.b16 %v79
    %v190 = vunpack.c.h.b16 %v79
    %v191 = vunpack.c.l.b16 %v80
    %v192 = vunpack.c.h.b16 %v80
    %v193 = vunpack.c.l.b16 %v81
    %v194 = vunpack.c.h.b16 %v81
    %v195 = vunpack.c.l.b16 %v82
    %v196 = vunpack.c.h.b16 %v82
    %v197 = vunpack.c.l.b16 %v83
    %v198 = vunpack.c.h.b16 %v83
    %v199 = vunpack.c.l.b16 %v84
    %v200 = vunpack.c.h.b16 %v84
    %v201 = vunpack.c.l.b16 %v85
    %v202 = vunpack.c.h.b16 %v85
    %v203 = vunpack.c.l.b16 %v86
    %v204 = vunpack.c.h.b16 %v86
    %v205 = vunpack.c.l.b16 %v87
    %v206 = vunpack.c.h.b16 %v87
    %v207 = vunpack.c.l.b16 %v88
    %v208 = vunpack.c.h.b16 %v88
    %v209 = vunpack.c.l.b16 %v89
    %v210 = vunpack.c.h.b16 %v89
    %v211 = vunpack.c.l.b16 %v90
    %v212 = vunpack.c.h.b16 %v90
    %v213 = vunpack.c.l.b16 %v91
    %v214 = vunpack.c.h.b16 %v91
    %v215 = vunpack.c.l.b16 %v92
    %v216 = vunpack.c.h.b16 %v92
    %v217 = vunpack.c.l.b16 %v93
    %v218 = vunpack.c.h.b16 %v93
    %v219 = vunpack.c.l.b16 %v94
    %v220 = vunpack.c.h.b16 %v94
    %v221 = vunpack.c.l.b16 %v95
    %v222 = vunpack.c.h.b16 %v95
    %v223 = vunpack.c.l.b16 %v96
    %v224 = vunpack.c.h.b16 %v96
    %v225 = vunpack.c.l.b16 %v97
    %v226 = vunpack.c.h.b16 %v97
    %v227 = vunpack.c.l.b16 %v98
    %v228 = vunpack.c.h.b16 %v98
    %v229 = vunpack.c.l.b16 %v99
    %v230 = vunpack.c.h.b16 %v99
    %v231 = vunpack.c.l.b16 %v100
    %v232 = vunpack.c.h.b16 %v100
    %v233 = vunpack.c.l.b16 %v101
    %v234 = vunpack.c.h.b16 %v101
    %v235 = vunpack.c.l.b16 %v102
    %v236 = vunpack.c.h.b16 %v102
    %v237 = vunpack.c.l.b16 %v103
    %v238 = vunpack.c.h.b16 %v103
    %v239 = vunpack.c.l.b16 %v104
    %v240 = vunpack.c.h.b16 %v104
    %v241 = vunpack.c.l.b16 %v105
    %v242 = vunpack.c.h.b16 %v105
    %v243 = vunpack.c.l.b16 %v106
    %v244 = vunpack.c.h.b16 %v106
    %v245 = vunpack.c.l.b16 %v107
    %v246 = vunpack.c.h.b16 %v107
    %v247 = vunpack.c.l.b16 %v108
    %v248 = vunpack.c.h.b16 %v108
    %v249 = vunpack.c.l.b16 %v109
    %v250 = vunpack.c.h.b16 %v109
    %v251 = vunpack.c.l.b16 %v110
    %v252 = vunpack.c.h.b16 %v110
    %v253 = vpack.c.b16 %v193, %v189
    %v254 = vpack.c.b16 %v194, %v190
    %v255 = vpack.c.b16 %v195, %v191
    %v256 = vpack.c.b16 %v196, %v192
    %v257 = vpack.c.b16 %v201, %v197
    %v258 = vpack.c.b16 %v202, %v198
    %v259 = vpack.c.b16 %v203, %v199
    %v260 = vpack.c.b16 %v204, %v200
    %v261 = vpack.c.b16 %v209, %v205
    %v262 = vpack.c.b16 %v210, %v206
    %v263 = vpack.c.b16 %v211, %v207
    %v264 = vpack.c.b16 %v212, %v208
    %v265 = vpack.c.b16 %v217, %v213
    %v266 = vpack.c.b16 %v218, %v214
    %v267 = vpack.c.b16 %v219, %v215
    %v268 = vpack.c.b16 %v220, %v216
    %v269 = vpack.c.b16 %v225, %v221
    %v270 = vpack.c.b16 %v226, %v222
    %v271 = vpack.c.b16 %v227, %v223
    %v272 = vpack.c.b16 %v228, %v224
    %v273 = vpack.c.b16 %v233, %v229
    %v274 = vpack.c.b16 %v234, %v230
    %v275 = vpack.c.b16 %v235, %v231
    %v276 = vpack.c.b16 %v236, %v232
    %v277 = vpack.c.b16 %v241, %v237
    %v278 = vpack.c.b16 %v242, %v238
    %v279 = vpack.c.b16 %v243, %v239
    %v280 = vpack.c.b16 %v244, %v240
    %v281 = vpack.c.b16 %v249, %v245
    %v282 = vpack.c.b16 %v250, %v246
    %v283 = vpack.c.b16 %v251, %v247
    %v284 = vpack.c.b16 %v252, %v248
    %317 = vmatprep.subr.bf16.mxu0 %v254
    %318 = vmatpush1.bf16.msra.mxu0 %v253
    %319 = vmatprep.subr.bf16.mxu0 %v258
    %320 = vmatpush1.bf16.msra.mxu0 %v257
    %321 = vmatprep.subr.bf16.mxu0 %v262
    %322 = vmatpush1.bf16.msra.mxu0 %v261
    %323 = vmatprep.subr.bf16.mxu0 %v266
    %324 = vmatpush1.bf16.msra.mxu0 %v265
    %325 = vmatprep.subr.bf16.mxu0 %v270
    %326 = vmatpush1.bf16.msra.mxu0 %v269
    %327 = vmatprep.subr.bf16.mxu0 %v274
    %328 = vmatpush1.bf16.msra.mxu0 %v273
    %329 = vmatprep.subr.bf16.mxu0 %v278
    %330 = vmatpush1.bf16.msra.mxu0 %v277
    %331 = vmatprep.subr.bf16.mxu0 %v282
    %332 = vmatpush1.bf16.msra.mxu0 %v281
    %333 = vmatprep.subr.bf16.mxu0 0
    %334 = vmatpush1.bf16.msra.mxu0 0
    %335 = vmatprep.subr.bf16.mxu0 0
    %336 = vmatpush1.bf16.msra.mxu0 0
    %337 = vmatprep.subr.bf16.mxu0 0
    %338 = vmatpush1.bf16.msra.mxu0 0
    %339 = vmatprep.subr.bf16.mxu0 0
    %340 = vmatpush1.bf16.msra.mxu0 0
    %341 = vmatprep.subr.bf16.mxu0 0
    %342 = vmatpush1.bf16.msra.mxu0 0
    %343 = vmatprep.subr.bf16.mxu0 0
    %344 = vmatpush1.bf16.msra.mxu0 0
    %345 = vmatprep.subr.bf16.mxu0 0
    %346 = vmatpush1.bf16.msra.mxu0 0
    %347 = vmatprep.subr.bf16.mxu0 0
    %348 = vmatpush1.bf16.msra.mxu0 0
    %349 = vmatprep.mubr.bf16.mxu0 0
    %350 = vmatmul.mubr.bf16.gmra.mrb[0].mxu0 %v149
    %v351 = vpop.f32.mrb[0].mxu0
    %v352 = vadd.f32 %v116, %v351
    %v353 = vpop.f32.mrb[0].mxu0
    %v354 = vadd.f32 %v120, %v353
    %v355 = vpop.f32.mrb[0].mxu0
    %v356 = vadd.f32 %v116, %v355
    %v357 = vpop.f32.mrb[0].mxu0
    %v358 = vadd.f32 %v120, %v357
    %359 = vmatprep.mubr.bf16.mxu0 0
    %360 = vmatmul.mubr.bf16.gmra.mrb[0].mxu0 %v150
    %v361 = vpop.f32.mrb[0].mxu0
    %v362 = vadd.f32 %v116, %v361
    %v363 = vpop.f32.mrb[0].mxu0
    %v364 = vadd.f32 %v120, %v363
    %v365 = vpop.f32.mrb[0].mxu0
    %v366 = vadd.f32 %v116, %v365
    %v367 = vpop.f32.mrb[0].mxu0
    %v368 = vadd.f32 %v120, %v367
    %369 = vmatprep.mubr.bf16.mxu0 0
    %370 = vmatmul.mubr.bf16.gmra.mrb[0].mxu0 %v151
    %v371 = vpop.f32.mrb[0].mxu0
    %v372 = vadd.f32 %v116, %v371
    %v373 = vpop.f32.mrb[0].mxu0
    %v374 = vadd.f32 %v120, %v373
    %v375 = vpop.f32.mrb[0].mxu0
    %v376 = vadd.f32 %v116, %v375
    %v377 = vpop.f32.mrb[0].mxu0
    %v378 = vadd.f32 %v120, %v377
    %379 = vmatprep.mubr.bf16.mxu0 0
    %380 = vmatmul.mubr.bf16.gmra.mrb[0].mxu0 %v152
    %v381 = vpop.f32.mrb[0].mxu0
    %v382 = vadd.f32 %v116, %v381
    %v383 = vpop.f32.mrb[0].mxu0
    %v384 = vadd.f32 %v120, %v383
    %v385 = vpop.f32.mrb[0].mxu0
    %v386 = vadd.f32 %v116, %v385
    %v387 = vpop.f32.mrb[0].mxu0
    %v388 = vadd.f32 %v120, %v387
    %389 = vdwg.mxu0
    %390 = vmatprep.subr.bf16.mxu0 %v256
    %391 = vmatpush1.bf16.msra.mxu0 %v255
    %392 = vmatprep.subr.bf16.mxu0 %v260
    %393 = vmatpush1.bf16.msra.mxu0 %v259
    %394 = vmatprep.subr.bf16.mxu0 %v264
    %395 = vmatpush1.bf16.msra.mxu0 %v263
    %396 = vmatprep.subr.bf16.mxu0 %v268
    %397 = vmatpush1.bf16.msra.mxu0 %v267
    %398 = vmatprep.subr.bf16.mxu0 %v272
    %399 = vmatpush1.bf16.msra.mxu0 %v271
    %400 = vmatprep.subr.bf16.mxu0 %v276
    %401 = vmatpush1.bf16.msra.mxu0 %v275
    %402 = vmatprep.subr.bf16.mxu0 %v280
    %403 = vmatpush1.bf16.msra.mxu0 %v279
    %404 = vmatprep.subr.bf16.mxu0 %v284
    %405 = vmatpush1.bf16.msra.mxu0 %v283
    %406 = vmatprep.subr.bf16.mxu0 0
    %407 = vmatpush1.bf16.msra.mxu0 0
    %408 = vmatprep.subr.bf16.mxu0 0
    %409 = vmatpush1.bf16.msra.mxu0 0
    %410 = vmatprep.subr.bf16.mxu0 0
    %411 = vmatpush1.bf16.msra.mxu0 0
    %412 = vmatprep.subr.bf16.mxu0 0
    %413 = vmatpush1.bf16.msra.mxu0 0
    %414 = vmatprep.subr.bf16.mxu0 0
    %415 = vmatpush1.bf16.msra.mxu0 0
    %416 = vmatprep.subr.bf16.mxu0 0
    %417 = vmatpush1.bf16.msra.mxu0 0
    %418 = vmatprep.subr.bf16.mxu0 0
    %419 = vmatpush1.bf16.msra.mxu0 0
    %420 = vmatprep.subr.bf16.mxu0 0
    %421 = vmatpush1.bf16.msra.mxu0 0
    %422 = vmatprep.mubr.bf16.mxu0 0
    %423 = vmatmul.mubr.bf16.gmra.mrb[0].mxu0 %v149
    %v424 = vpop.f32.mrb[0].mxu0
    %v425 = vadd.f32 %v124, %v424
    %v426 = vpop.f32.mrb[0].mxu0
    %v427 = vadd.f32 %v128, %v426
    %v428 = vpop.f32.mrb[0].mxu0
    %v429 = vadd.f32 %v124, %v428
    %v430 = vpop.f32.mrb[0].mxu0
    %v431 = vadd.f32 %v128, %v430
    %432 = vmatprep.mubr.bf16.mxu0 0
    %433 = vmatmul.mubr.bf16.gmra.mrb[0].mxu0 %v150
    %v434 = vpop.f32.mrb[0].mxu0
    %v435 = vadd.f32 %v124, %v434
    %v436 = vpop.f32.mrb[0].mxu0
    %v437 = vadd.f32 %v128, %v436
    %v438 = vpop.f32.mrb[0].mxu0
    %v439 = vadd.f32 %v124, %v438
    %v440 = vpop.f32.mrb[0].mxu0
    %v441 = vadd.f32 %v128, %v440
    %442 = vmatprep.mubr.bf16.mxu0 0
    %443 = vmatmul.mubr.bf16.gmra.mrb[0].mxu0 %v151
    %v444 = vpop.f32.mrb[0].mxu0
    %v445 = vadd.f32 %v124, %v444
    %v446 = vpop.f32.mrb[0].mxu0
    %v447 = vadd.f32 %v128, %v446
    %v448 = vpop.f32.mrb[0].mxu0
    %v449 = vadd.f32 %v124, %v448
    %v450 = vpop.f32.mrb[0].mxu0
    %v451 = vadd.f32 %v128, %v450
    %452 = vmatprep.mubr.bf16.mxu0 0
    %453 = vmatmul.mubr.bf16.gmra.mrb[0].mxu0 %v152
    %v454 = vpop.f32.mrb[0].mxu0
    %v455 = vadd.f32 %v124, %v454
    %v456 = vpop.f32.mrb[0].mxu0
    %v457 = vadd.f32 %v128, %v456
    %v458 = vpop.f32.mrb[0].mxu0
    %v459 = vadd.f32 %v124, %v458
    %v460 = vpop.f32.mrb[0].mxu0
    %v461 = vadd.f32 %v128, %v460
    %462 = vdwg.mxu0
    %463 = vst [vmem:[#allocation2] sm:$0xff] %v352
    %464 = vst [vmem:[#allocation2 + $0x8] sm:$0xff] %v354
    %465 = vst [vmem:[#allocation2 + $0x10] sm:$0xff] %v425
    %466 = vst [vmem:[#allocation2 + $0x18] sm:$0xff] %v427
    %467 = vst [vmem:[#allocation2 + $0x20] sm:$0xff] %v356
    %468 = vst [vmem:[#allocation2 + $0x28] sm:$0xff] %v358
    %469 = vst [vmem:[#allocation2 + $0x30] sm:$0xff] %v429
    %470 = vst [vmem:[#allocation2 + $0x38] sm:$0xff] %v431
    %471 = vst [vmem:[#allocation2 + $0x40] sm:$0xff] %v362
    %472 = vst [vmem:[#allocation2 + $0x48] sm:$0xff] %v364
    %473 = vst [vmem:[#allocation2 + $0x50] sm:$0xff] %v435
    %474 = vst [vmem:[#allocation2 + $0x58] sm:$0xff] %v437
    %475 = vst [vmem:[#allocation2 + $0x60] sm:$0xff] %v366
    %476 = vst [vmem:[#allocation2 + $0x68] sm:$0xff] %v368
    %477 = vst [vmem:[#allocation2 + $0x70] sm:$0xff] %v439
    %478 = vst [vmem:[#allocation2 + $0x78] sm:$0xff] %v441
    %479 = vst [vmem:[#allocation2 + $0x80] sm:$0xff] %v372
    %480 = vst [vmem:[#allocation2 + $0x88] sm:$0xff] %v374
    %481 = vst [vmem:[#allocation2 + $0x90] sm:$0xff] %v445
    %482 = vst [vmem:[#allocation2 + $0x98] sm:$0xff] %v447
    %483 = vst [vmem:[#allocation2 + $0xa0] sm:$0xff] %v376
    %484 = vst [vmem:[#allocation2 + $0xa8] sm:$0xff] %v378
    %485 = vst [vmem:[#allocation2 + $0xb0] sm:$0xff] %v449
    %486 = vst [vmem:[#allocation2 + $0xb8] sm:$0xff] %v451
    %487 = vst [vmem:[#allocation2 + $0xc0] sm:$0xff] %v382
    %488 = vst [vmem:[#allocation2 + $0xc8] sm:$0xff] %v384
    %489 = vst [vmem:[#allocation2 + $0xd0] sm:$0xff] %v455
    %490 = vst [vmem:[#allocation2 + $0xd8] sm:$0xff] %v457
    %491 = vst [vmem:[#allocation2 + $0xe0] sm:$0xff] %v386
    %492 = vst [vmem:[#allocation2 + $0xe8] sm:$0xff] %v388
    %493 = vst [vmem:[#allocation2 + $0xf0] sm:$0xff] %v459
    %494 = vst [vmem:[#allocation2 + $0xf8] sm:$0xff] %v461
    %495 = vst [vmem:[#allocation4] sm:$0xff] 0.0
    %496 = vst [vmem:[#allocation5] sm:$0xff] 0.0
    %v497 = vld [vmem:[#allocation2] sm:$0xff]
    %v498 = vld [vmem:[#allocation2 + $0x8] sm:$0xff]
    %v499 = vld [vmem:[#allocation2 + $0x10] sm:$0xff]
    %v500 = vld [vmem:[#allocation2 + $0x18] sm:$0xff]
    %v501 = vld [vmem:[#allocation4] sm:$0xff]
    %v502 = vpack.c.bf16 %v501, %v501
    %v503 = vld [vmem:[#allocation8] sm:$0xff]
    %v504 = vld [vmem:[#allocation8 + $0x8] sm:$0xff]
    %v505 = vld [vmem:[#allocation8 + $0x10] sm:$0xff]
    %v506 = vld [vmem:[#allocation8 + $0x18] sm:$0xff]
    %v507 = vld [vmem:[#allocation8 + $0x20] sm:$0xff]
    %v508 = vld [vmem:[#allocation8 + $0x28] sm:$0xff]
    %v509 = vld [vmem:[#allocation8 + $0x30] sm:$0xff]
    %v510 = vld [vmem:[#allocation8 + $0x38] sm:$0xff]
    %v511 = vld [vmem:[#allocation8 + $0x40] sm:$0xff]
    %v512 = vld [vmem:[#allocation8 + $0x48] sm:$0xff]
    %v513 = vld [vmem:[#allocation8 + $0x50] sm:$0xff]
    %v514 = vld [vmem:[#allocation8 + $0x58] sm:$0xff]
    %v515 = vld [vmem:[#allocation8 + $0x60] sm:$0xff]
    %v516 = vld [vmem:[#allocation8 + $0x68] sm:$0xff]
    %v517 = vld [vmem:[#allocation8 + $0x70] sm:$0xff]
    %v518 = vld [vmem:[#allocation8 + $0x78] sm:$0xff]
    %v519 = vld [vmem:[#allocation8 + $0x80] sm:$0xff]
    %v520 = vld [vmem:[#allocation8 + $0x88] sm:$0xff]
    %v521 = vld [vmem:[#allocation8 + $0x90] sm:$0xff]
    %v522 = vld [vmem:[#allocation8 + $0x98] sm:$0xff]
    %v523 = vld [vmem:[#allocation8 + $0xa0] sm:$0xff]
    %v524 = vld [vmem:[#allocation8 + $0xa8] sm:$0xff]
    %v525 = vld [vmem:[#allocation8 + $0xb0] sm:$0xff]
    %v526 = vld [vmem:[#allocation8 + $0xb8] sm:$0xff]
    %v527 = vld [vmem:[#allocation8 + $0xc0] sm:$0xff]
    %v528 = vld [vmem:[#allocation8 + $0xc8] sm:$0xff]
    %v529 = vld [vmem:[#allocation8 + $0xd0] sm:$0xff]
    %v530 = vld [vmem:[#allocation8 + $0xd8] sm:$0xff]
    %v531 = vld [vmem:[#allocation8 + $0xe0] sm:$0xff]
    %v532 = vld [vmem:[#allocation8 + $0xe8] sm:$0xff]
    %v533 = vld [vmem:[#allocation8 + $0xf0] sm:$0xff]
    %v534 = vld [vmem:[#allocation8 + $0xf8] sm:$0xff]
    %v567 = vunpack.c.l.b16 %v503
    %v568 = vunpack.c.h.b16 %v503
    %v569 = vunpack.c.l.b16 %v504
    %v570 = vunpack.c.h.b16 %v504
    %v571 = vunpack.c.l.b16 %v505
    %v572 = vunpack.c.h.b16 %v505
    %v573 = vunpack.c.l.b16 %v506
    %v574 = vunpack.c.h.b16 %v506
    %v575 = vunpack.c.l.b16 %v507
    %v576 = vunpack.c.h.b16 %v507
    %v577 = vunpack.c.l.b16 %v508
    %v578 = vunpack.c.h.b16 %v508
    %v579 = vunpack.c.l.b16 %v509
    %v580 = vunpack.c.h.b16 %v509
    %v581 = vunpack.c.l.b16 %v510
    %v582 = vunpack.c.h.b16 %v510
    %v583 = vunpack.c.l.b16 %v511
    %v584 = vunpack.c.h.b16 %v511
    %v585 = vunpack.c.l.b16 %v512
    %v586 = vunpack.c.h.b16 %v512
    %v587 = vunpack.c.l.b16 %v513
    %v588 = vunpack.c.h.b16 %v513
    %v589 = vunpack.c.l.b16 %v514
    %v590 = vunpack.c.h.b16 %v514
    %v591 = vunpack.c.l.b16 %v515
    %v592 = vunpack.c.h.b16 %v515
    %v593 = vunpack.c.l.b16 %v516
    %v594 = vunpack.c.h.b16 %v516
    %v595 = vunpack.c.l.b16 %v517
    %v596 = vunpack.c.h.b16 %v517
    %v597 = vunpack.c.l.b16 %v518
    %v598 = vunpack.c.h.b16 %v518
    %v599 = vunpack.c.l.b16 %v519
    %v600 = vunpack.c.h.b16 %v519
    %v601 = vunpack.c.l.b16 %v520
    %v602 = vunpack.c.h.b16 %v520
    %v603 = vunpack.c.l.b16 %v521
    %v604 = vunpack.c.h.b16 %v521
    %v605 = vunpack.c.l.b16 %v522
    %v606 = vunpack.c.h.b16 %v522
    %v607 = vunpack.c.l.b16 %v523
    %v608 = vunpack.c.h.b16 %v523
    %v609 = vunpack.c.l.b16 %v524
    %v610 = vunpack.c.h.b16 %v524
    %v611 = vunpack.c.l.b16 %v525
    %v612 = vunpack.c.h.b16 %v525
    %v613 = vunpack.c.l.b16 %v526
    %v614 = vunpack.c.h.b16 %v526
    %v615 = vunpack.c.l.b16 %v527
    %v616 = vunpack.c.h.b16 %v527
    %v617 = vunpack.c.l.b16 %v528
    %v618 = vunpack.c.h.b16 %v528
    %v619 = vunpack.c.l.b16 %v529
    %v620 = vunpack.c.h.b16 %v529
    %v621 = vunpack.c.l.b16 %v530
    %v622 = vunpack.c.h.b16 %v530
    %v623 = vunpack.c.l.b16 %v531
    %v624 = vunpack.c.h.b16 %v531
    %v625 = vunpack.c.l.b16 %v532
    %v626 = vunpack.c.h.b16 %v532
    %v627 = vunpack.c.l.b16 %v533
    %v628 = vunpack.c.h.b16 %v533
    %v629 = vunpack.c.l.b16 %v534
    %v630 = vunpack.c.h.b16 %v534
    %v631 = vpack.c.b16 %v571, %v567
    %v632 = vpack.c.b16 %v572, %v568
    %v633 = vpack.c.b16 %v573, %v569
    %v634 = vpack.c.b16 %v574, %v570
    %v635 = vpack.c.b16 %v579, %v575
    %v636 = vpack.c.b16 %v580, %v576
    %v637 = vpack.c.b16 %v581, %v577
    %v638 = vpack.c.b16 %v582, %v578
    %v639 = vpack.c.b16 %v587, %v583
    %v640 = vpack.c.b16 %v588, %v584
    %v641 = vpack.c.b16 %v589, %v585
    %v642 = vpack.c.b16 %v590, %v586
    %v643 = vpack.c.b16 %v595, %v591
    %v644 = vpack.c.b16 %v596, %v592
    %v645 = vpack.c.b16 %v597, %v593
    %v646 = vpack.c.b16 %v598, %v594
    %v647 = vpack.c.b16 %v603, %v599
    %v648 = vpack.c.b16 %v604, %v600
    %v649 = vpack.c.b16 %v605, %v601
    %v650 = vpack.c.b16 %v606, %v602
    %v651 = vpack.c.b16 %v611, %v607
    %v652 = vpack.c.b16 %v612, %v608
    %v653 = vpack.c.b16 %v613, %v609
    %v654 = vpack.c.b16 %v614, %v610
    %v655 = vpack.c.b16 %v619, %v615
    %v656 = vpack.c.b16 %v620, %v616
    %v657 = vpack.c.b16 %v621, %v617
    %v658 = vpack.c.b16 %v622, %v618
    %v659 = vpack.c.b16 %v627, %v623
    %v660 = vpack.c.b16 %v628, %v624
    %v661 = vpack.c.b16 %v629, %v625
    %v662 = vpack.c.b16 %v630, %v626
    %695 = vmatprep.subr.bf16.mxu0 %v632
    %696 = vmatpush1.bf16.msra.mxu0 %v631
    %697 = vmatprep.subr.bf16.mxu0 %v636
    %698 = vmatpush1.bf16.msra.mxu0 %v635
    %699 = vmatprep.subr.bf16.mxu0 %v640
    %700 = vmatpush1.bf16.msra.mxu0 %v639
    %701 = vmatprep.subr.bf16.mxu0 %v644
    %702 = vmatpush1.bf16.msra.mxu0 %v643
    %703 = vmatprep.subr.bf16.mxu0 %v648
    %704 = vmatpush1.bf16.msra.mxu0 %v647
    %705 = vmatprep.subr.bf16.mxu0 %v652
    %706 = vmatpush1.bf16.msra.mxu0 %v651
    %707 = vmatprep.subr.bf16.mxu0 %v656
    %708 = vmatpush1.bf16.msra.mxu0 %v655
    %709 = vmatprep.subr.bf16.mxu0 %v660
    %710 = vmatpush1.bf16.msra.mxu0 %v659
    %711 = vmatprep.subr.bf16.mxu0 0
    %712 = vmatpush1.bf16.msra.mxu0 0
    %713 = vmatprep.subr.bf16.mxu0 0
    %714 = vmatpush1.bf16.msra.mxu0 0
    %715 = vmatprep.subr.bf16.mxu0 0
    %716 = vmatpush1.bf16.msra.mxu0 0
    %717 = vmatprep.subr.bf16.mxu0 0
    %718 = vmatpush1.bf16.msra.mxu0 0
    %719 = vmatprep.subr.bf16.mxu0 0
    %720 = vmatpush1.bf16.msra.mxu0 0
    %721 = vmatprep.subr.bf16.mxu0 0
    %722 = vmatpush1.bf16.msra.mxu0 0
    %723 = vmatprep.subr.bf16.mxu0 0
    %724 = vmatpush1.bf16.msra.mxu0 0
    %725 = vmatprep.subr.bf16.mxu0 0
    %726 = vmatpush1.bf16.msra.mxu0 0
    %727 = vmatprep.mubr.bf16.mxu0 0
    %728 = vmatmul.mubr.bf16.gmra.mrb[0].mxu0 %v502
    %v729 = vpop.f32.mrb[0].mxu0
    %v730 = vadd.f32 0.0, %v729
    %v731 = vpop.f32.mrb[0].mxu0
    %v732 = vadd.f32 0.0, %v731
    %v733 = vpop.f32.mrb[0].mxu0
    %v734 = vpop.f32.mrb[0].mxu0
    %735 = vdwg.mxu0
    %736 = vmatprep.subr.bf16.mxu0 %v634
    %737 = vmatpush1.bf16.msra.mxu0 %v633
    %738 = vmatprep.subr.bf16.mxu0 %v638
    %739 = vmatpush1.bf16.msra.mxu0 %v637
    %740 = vmatprep.subr.bf16.mxu0 %v642
    %741 = vmatpush1.bf16.msra.mxu0 %v641
    %742 = vmatprep.subr.bf16.mxu0 %v646
    %743 = vmatpush1.bf16.msra.mxu0 %v645
    %744 = vmatprep.subr.bf16.mxu0 %v650
    %745 = vmatpush1.bf16.msra.mxu0 %v649
    %746 = vmatprep.subr.bf16.mxu0 %v654
    %747 = vmatpush1.bf16.msra.mxu0 %v653
    %748 = vmatprep.subr.bf16.mxu0 %v658
    %749 = vmatpush1.bf16.msra.mxu0 %v657
    %750 = vmatprep.subr.bf16.mxu0 %v662
    %751 = vmatpush1.bf16.msra.mxu0 %v661
    %752 = vmatprep.subr.bf16.mxu0 0
    %753 = vmatpush1.bf16.msra.mxu0 0
    %754 = vmatprep.subr.bf16.mxu0 0
    %755 = vmatpush1.bf16.msra.mxu0 0
    %756 = vmatprep.subr.bf16.mxu0 0
    %757 = vmatpush1.bf16.msra.mxu0 0
    %758 = vmatprep.subr.bf16.mxu0 0
    %759 = vmatpush1.bf16.msra.mxu0 0
    %760 = vmatprep.subr.bf16.mxu0 0
    %761 = vmatpush1.bf16.msra.mxu0 0
    %762 = vmatprep.subr.bf16.mxu0 0
    %763 = vmatpush1.bf16.msra.mxu0 0
    %764 = vmatprep.subr.bf16.mxu0 0
    %765 = vmatpush1.bf16.msra.mxu0 0
    %766 = vmatprep.subr.bf16.mxu0 0
    %767 = vmatpush1.bf16.msra.mxu0 0
    %768 = vmatprep.mubr.bf16.mxu0 0
    %769 = vmatmul.mubr.bf16.gmra.mrb[0].mxu0 %v502
    %v770 = vpop.f32.mrb[0].mxu0
    %v771 = vadd.f32 0.0, %v770
    %v772 = vpop.f32.mrb[0].mxu0
    %v773 = vadd.f32 0.0, %v772
    %v774 = vpop.f32.mrb[0].mxu0
    %v775 = vpop.f32.mrb[0].mxu0
    %776 = vdwg.mxu0
    %v777 = vadd.f32 %v497, %v730
    %v778 = vadd.f32 %v498, %v732
    %v779 = vadd.f32 %v499, %v771
    %v780 = vadd.f32 %v500, %v773
    %v781 = vxor.u32 %v777, 2147483648
    %v782 = vmul.f32 %v781, 1.442695
    %v783 = vpow.pop %v782
    %v784 = vadd.f32 %v783, 1.0
    %v785 = vrcp.pop %v784
    %v786 = vmul.f32 1.0, %v785
    %v787 = vxor.u32 %v778, 2147483648
    %v788 = vmul.f32 %v787, 1.442695
    %v789 = vpow.pop %v788
    %v790 = vadd.f32 %v789, 1.0
    %v791 = vrcp.pop %v790
    %v792 = vmul.f32 1.0, %v791
    %v793 = vtanh.pop %v779
    %v794 = vxor.u32 %v780, 2147483648
    %v795 = vmul.f32 %v794, 1.442695
    %v796 = vpow.pop %v795
    %v797 = vadd.f32 %v796, 1.0
    %v798 = vrcp.pop %v797
    %v799 = vmul.f32 1.0, %v798
    %v800 = vld [vmem:[#allocation5] sm:$0xff]
    %v801 = vmul.f32 %v792, %v800
    %v802 = vmul.f32 %v786, %v793
    %v803 = vadd.f32 %v801, %v802
    %v804 = vtanh.pop %v803
    %v805 = vmul.f32 %v799, %v804
    %806 = vst [vmem:[#allocation5] sm:$0xff] %v803
    %807 = vst [vmem:[#allocation4] sm:$0xff] %v805
    %808 = vst [vmem:[#allocation3] sm:$0xff] %v805
    %v809 = vld [vmem:[#allocation2 + $0x20] sm:$0xff]
    %v810 = vld [vmem:[#allocation2 + $0x28] sm:$0xff]
    %v811 = vld [vmem:[#allocation2 + $0x30] sm:$0xff]
    %v812 = vld [vmem:[#allocation2 + $0x38] sm:$0xff]
    %v813 = vld [vmem:[#allocation4] sm:$0xff]
    %v814 = vpack.c.bf16 %v813, %v813
    %v815 = vld [vmem:[#allocation8] sm:$0xff]
    %v816 = vld [vmem:[#allocation8 + $0x8] sm:$0xff]
    %v817 = vld [vmem:[#allocation8 + $0x10] sm:$0xff]
    %v818 = vld [vmem:[#allocation8 + $0x18] sm:$0xff]
    %v819 = vld [vmem:[#allocation8 + $0x20] sm:$0xff]
    %v820 = vld [vmem:[#allocation8 + $0x28] sm:$0xff]
    %v821 = vld [vmem:[#allocation8 + $0x30] sm:$0xff]
    %v822 = vld [vmem:[#allocation8 + $0x38] sm:$0xff]
    %v823 = vld [vmem:[#allocation8 + $0x40] sm:$0xff]
    %v824 = vld [vmem:[#allocation8 + $0x48] sm:$0xff]
    %v825 = vld [vmem:[#allocation8 + $0x50] sm:$0xff]
    %v826 = vld [vmem:[#allocation8 + $0x58] sm:$0xff]
    %v827 = vld [vmem:[#allocation8 + $0x60] sm:$0xff]
    %v828 = vld [vmem:[#allocation8 + $0x68] sm:$0xff]
    %v829 = vld [vmem:[#allocation8 + $0x70] sm:$0xff]
    %v830 = vld [vmem:[#allocation8 + $0x78] sm:$0xff]
    %v831 = vld [vmem:[#allocation8 + $0x80] sm:$0xff]
    %v832 = vld [vmem:[#allocation8 + $0x88] sm:$0xff]
    %v833 = vld [vmem:[#allocation8 + $0x90] sm:$0xff]
    %v834 = vld [vmem:[#allocation8 + $0x98] sm:$0xff]
    %v835 = vld [vmem:[#allocation8 + $0xa0] sm:$0xff]
    %v836 = vld [vmem:[#allocation8 + $0xa8] sm:$0xff]
    %v837 = vld [vmem:[#allocation8 + $0xb0] sm:$0xff]
    %v838 = vld [vmem:[#allocation8 + $0xb8] sm:$0xff]
    %v839 = vld [vmem:[#allocation8 + $0xc0] sm:$0xff]
    %v840 = vld [vmem:[#allocation8 + $0xc8] sm:$0xff]
    %v841 = vld [vmem:[#allocation8 + $0xd0] sm:$0xff]
    %v842 = vld [vmem:[#allocation8 + $0xd8] sm:$0xff]
    %v843 = vld [vmem:[#allocation8 + $0xe0] sm:$0xff]
    %v844 = vld [vmem:[#allocation8 + $0xe8] sm:$0xff]
    %v845 = vld [vmem:[#allocation8 + $0xf0] sm:$0xff]
    %v846 = vld [vmem:[#allocation8 + $0xf8] sm:$0xff]
    %v879 = vunpack.c.l.b16 %v815
    %v880 = vunpack.c.h.b16 %v815
    %v881 = vunpack.c.l.b16 %v816
    %v882 = vunpack.c.h.b16 %v816
    %v883 = vunpack.c.l.b16 %v817
    %v884 = vunpack.c.h.b16 %v817
    %v885 = vunpack.c.l.b16 %v818
    %v886 = vunpack.c.h.b16 %v818
    %v887 = vunpack.c.l.b16 %v819
    %v888 = vunpack.c.h.b16 %v819
    %v889 = vunpack.c.l.b16 %v820
    %v890 = vunpack.c.h.b16 %v820
    %v891 = vunpack.c.l.b16 %v821
    %v892 = vunpack.c.h.b16 %v821
    %v893 = vunpack.c.l.b16 %v822
    %v894 = vunpack.c.h.b16 %v822
    %v895 = vunpack.c.l.b16 %v823
    %v896 = vunpack.c.h.b16 %v823
    %v897 = vunpack.c.l.b16 %v824
    %v898 = vunpack.c.h.b16 %v824
    %v899 = vunpack.c.l.b16 %v825
    %v900 = vunpack.c.h.b16 %v825
    %v901 = vunpack.c.l.b16 %v826
    %v902 = vunpack.c.h.b16 %v826
    %v903 = vunpack.c.l.b16 %v827
    %v904 = vunpack.c.h.b16 %v827
    %v905 = vunpack.c.l.b16 %v828
    %v906 = vunpack.c.h.b16 %v828
    %v907 = vunpack.c.l.b16 %v829
    %v908 = vunpack.c.h.b16 %v829
    %v909 = vunpack.c.l.b16 %v830
    %v910 = vunpack.c.h.b16 %v830
    %v911 = vunpack.c.l.b16 %v831
    %v912 = vunpack.c.h.b16 %v831
    %v913 = vunpack.c.l.b16 %v832
    %v914 = vunpack.c.h.b16 %v832
    %v915 = vunpack.c.l.b16 %v833
    %v916 = vunpack.c.h.b16 %v833
    %v917 = vunpack.c.l.b16 %v834
    %v918 = vunpack.c.h.b16 %v834
    %v919 = vunpack.c.l.b16 %v835
    %v920 = vunpack.c.h.b16 %v835
    %v921 = vunpack.c.l.b16 %v836
    %v922 = vunpack.c.h.b16 %v836
    %v923 = vunpack.c.l.b16 %v837
    %v924 = vunpack.c.h.b16 %v837
    %v925 = vunpack.c.l.b16 %v838
    %v926 = vunpack.c.h.b16 %v838
    %v927 = vunpack.c.l.b16 %v839
    %v928 = vunpack.c.h.b16 %v839
    %v929 = vunpack.c.l.b16 %v840
    %v930 = vunpack.c.h.b16 %v840
    %v931 = vunpack.c.l.b16 %v841
    %v932 = vunpack.c.h.b16 %v841
    %v933 = vunpack.c.l.b16 %v842
    %v934 = vunpack.c.h.b16 %v842
    %v935 = vunpack.c.l.b16 %v843
    %v936 = vunpack.c.h.b16 %v843
    %v937 = vunpack.c.l.b16 %v844
    %v938 = vunpack.c.h.b16 %v844
    %v939 = vunpack.c.l.b16 %v845
    %v940 = vunpack.c.h.b16 %v845
    %v941 = vunpack.c.l.b16 %v846
    %v942 = vunpack.c.h.b16 %v846
    %v943 = vpack.c.b16 %v883, %v879
    %v944 = vpack.c.b16 %v884, %v880
    %v945 = vpack.c.b16 %v885, %v881
    %v946 = vpack.c.b16 %v886, %v882
    %v947 = vpack.c.b16 %v891, %v887
    %v948 = vpack.c.b16 %v892, %v888
    %v949 = vpack.c.b16 %v893, %v889
    %v950 = vpack.c.b16 %v894, %v890
    %v951 = vpack.c.b16 %v899, %v895
    %v952 = vpack.c.b16 %v900, %v896
    %v953 = vpack.c.b16 %v901, %v897
    %v954 = vpack.c.b16 %v902, %v898
    %v955 = vpack.c.b16 %v907, %v903
    %v956 = vpack.c.b16 %v908, %v904
    %v957 = vpack.c.b16 %v909, %v905
    %v958 = vpack.c.b16 %v910, %v906
    %v959 = vpack.c.b16 %v915, %v911
    %v960 = vpack.c.b16 %v916, %v912
    %v961 = vpack.c.b16 %v917, %v913
    %v962 = vpack.c.b16 %v918, %v914
    %v963 = vpack.c.b16 %v923, %v919
    %v964 = vpack.c.b16 %v924, %v920
    %v965 = vpack.c.b16 %v925, %v921
    %v966 = vpack.c.b16 %v926, %v922
    %v967 = vpack.c.b16 %v931, %v927
    %v968 = vpack.c.b16 %v932, %v928
    %v969 = vpack.c.b16 %v933, %v929
    %v970 = vpack.c.b16 %v934, %v930
    %v971 = vpack.c.b16 %v939, %v935
    %v972 = vpack.c.b16 %v940, %v936
    %v973 = vpack.c.b16 %v941, %v937
    %v974 = vpack.c.b16 %v942, %v938
    %1007 = vmatprep.subr.bf16.mxu0 %v944
    %1008 = vmatpush1.bf16.msra.mxu0 %v943
    %1009 = vmatprep.subr.bf16.mxu0 %v948
    %1010 = vmatpush1.bf16.msra.mxu0 %v947
    %1011 = vmatprep.subr.bf16.mxu0 %v952
    %1012 = vmatpush1.bf16.msra.mxu0 %v951
    %1013 = vmatprep.subr.bf16.mxu0 %v956
    %1014 = vmatpush1.bf16.msra.mxu0 %v955
    %1015 = vmatprep.subr.bf16.mxu0 %v960
    %1016 = vmatpush1.bf16.msra.mxu0 %v959
    %1017 = vmatprep.subr.bf16.mxu0 %v964
    %1018 = vmatpush1.bf16.msra.mxu0 %v963
    %1019 = vmatprep.subr.bf16.mxu0 %v968
    %1020 = vmatpush1.bf16.msra.mxu0 %v967
    %1021 = vmatprep.subr.bf16.mxu0 %v972
    %1022 = vmatpush1.bf16.msra.mxu0 %v971
    %1023 = vmatprep.subr.bf16.mxu0 0
    %1024 = vmatpush1.bf16.msra.mxu0 0
    %1025 = vmatprep.subr.bf16.mxu0 0
    %1026 = vmatpush1.bf16.msra.mxu0 0
    %1027 = vmatprep.subr.bf16.mxu0 0
    %1028 = vmatpush1.bf16.msra.mxu0 0
    %1029 = vmatprep.subr.bf16.mxu0 0
    %1030 = vmatpush1.bf16.msra.mxu0 0
    %1031 = vmatprep.subr.bf16.mxu0 0
    %1032 = vmatpush1.bf16.msra.mxu0 0
    %1033 = vmatprep.subr.bf16.mxu0 0
    %1034 = vmatpush1.bf16.msra.mxu0 0
    %1035 = vmatprep.subr.bf16.mxu0 0
    %1036 = vmatpush1.bf16.msra.mxu0 0
    %1037 = vmatprep.subr.bf16.mxu0 0
    %1038 = vmatpush1.bf16.msra.mxu0 0
    %1039 = vmatprep.mubr.bf16.mxu0 0
    %1040 = vmatmul.mubr.bf16.gmra.mrb[0].mxu0 %v814
    %v1041 = vpop.f32.mrb[0].mxu0
    %v1042 = vadd.f32 0.0, %v1041
    %v1043 = vpop.f32.mrb[0].mxu0
    %v1044 = vadd.f32 0.0, %v1043
    %v1045 = vpop.f32.mrb[0].mxu0
    %v1046 = vpop.f32.mrb[0].mxu0
    %1047 = vdwg.mxu0
    %1048 = vmatprep.subr.bf16.mxu0 %v946
    %1049 = vmatpush1.bf16.msra.mxu0 %v945
    %1050 = vmatprep.subr.bf16.mxu0 %v950
    %1051 = vmatpush1.bf16.msra.mxu0 %v949
    %1052 = vmatprep.subr.bf16.mxu0 %v954
    %1053 = vmatpush1.bf16.msra.mxu0 %v953
    %1054 = vmatprep.subr.bf16.mxu0 %v958
    %1055 = vmatpush1.bf16.msra.mxu0 %v957
    %1056 = vmatprep.subr.bf16.mxu0 %v962
    %1057 = vmatpush1.bf16.msra.mxu0 %v961
    %1058 = vmatprep.subr.bf16.mxu0 %v966
    %1059 = vmatpush1.bf16.msra.mxu0 %v965
    %1060 = vmatprep.subr.bf16.mxu0 %v970
    %1061 = vmatpush1.bf16.msra.mxu0 %v969
    %1062 = vmatprep.subr.bf16.mxu0 %v974
    %1063 = vmatpush1.bf16.msra.mxu0 %v973
    %1064 = vmatprep.subr.bf16.mxu0 0
    %1065 = vmatpush1.bf16.msra.mxu0 0
    %1066 = vmatprep.subr.bf16.mxu0 0
    %1067 = vmatpush1.bf16.msra.mxu0 0
    %1068 = vmatprep.subr.bf16.mxu0 0
    %1069 = vmatpush1.bf16.msra.mxu0 0
    %1070 = vmatprep.subr.bf16.mxu0 0
    %1071 = vmatpush1.bf16.msra.mxu0 0
    %1072 = vmatprep.subr.bf16.mxu0 0
    %1073 = vmatpush1.bf16.msra.mxu0 0
    %1074 = vmatprep.subr.bf16.mxu0 0
    %1075 = vmatpush1.bf16.msra.mxu0 0
    %1076 = vmatprep.subr.bf16.mxu0 0
    %1077 = vmatpush1.bf16.msra.mxu0 0
    %1078 = vmatprep.subr.bf16.mxu0 0
    %1079 = vmatpush1.bf16.msra.mxu0 0
    %1080 = vmatprep.mubr.bf16.mxu0 0
    %1081 = vmatmul.mubr.bf16.gmra.mrb[0].mxu0 %v814
    %v1082 = vpop.f32.mrb[0].mxu0
    %v1083 = vadd.f32 0.0, %v1082
    %v1084 = vpop.f32.mrb[0].mxu0
    %v1085 = vadd.f32 0.0, %v1084
    %v1086 = vpop.f32.mrb[0].mxu0
    %v1087 = vpop.f32.mrb[0].mxu0
    %1088 = vdwg.mxu0
    %v1089 = vadd.f32 %v809, %v1042
    %v1090 = vadd.f32 %v810, %v1044
    %v1091 = vadd.f32 %v811, %v1083
    %v1092 = vadd.f32 %v812, %v1085
    %v1093 = vxor.u32 %v1089, 2147483648
    %v1094 = vmul.f32 %v1093, 1.442695
    %v1095 = vpow.pop %v1094
    %v1096 = vadd.f32 %v1095, 1.0
    %v1097 = vrcp.pop %v1096
    %v1098 = vmul.f32 1.0, %v1097
    %v1099 = vxor.u32 %v1090, 2147483648
    %v1100 = vmul.f32 %v1099, 1.442695
    %v1101 = vpow.pop %v1100
    %v1102 = vadd.f32 %v1101, 1.0
    %v1103 = vrcp.pop %v1102
    %v1104 = vmul.f32 1.0, %v1103
    %v1105 = vtanh.pop %v1091
    %v1106 = vxor.u32 %v1092, 2147483648
    %v1107 = vmul.f32 %v1106, 1.442695
    %v1108 = vpow.pop %v1107
    %v1109 = vadd.f32 %v1108, 1.0
    %v1110 = vrcp.pop %v1109
    %v1111 = vmul.f32 1.0, %v1110
    %v1112 = vld [vmem:[#allocation5] sm:$0xff]
    %v1113 = vmul.f32 %v1104, %v1112
    %v1114 = vmul.f32 %v1098, %v1105
    %v1115 = vadd.f32 %v1113, %v1114
    %v1116 = vtanh.pop %v1115
    %v1117 = vmul.f32 %v1111, %v1116
    %1118 = vst [vmem:[#allocation5] sm:$0xff] %v1115
    %1119 = vst [vmem:[#allocation4] sm:$0xff] %v1117
    %1120 = vst [vmem:[#allocation3 + $0x8] sm:$0xff] %v1117
    %v1121 = vld [vmem:[#allocation2 + $0x40] sm:$0xff]
    %v1122 = vld [vmem:[#allocation2 + $0x48] sm:$0xff]
    %v1123 = vld [vmem:[#allocation2 + $0x50] sm:$0xff]
    %v1124 = vld [vmem:[#allocation2 + $0x58] sm:$0xff]
    %v1125 = vld [vmem:[#allocation4] sm:$0xff]
    %v1126 = vpack.c.bf16 %v1125, %v1125
    %v1127 = vld [vmem:[#allocation8] sm:$0xff]
    %v1128 = vld [vmem:[#allocation8 + $0x8] sm:$0xff]
    %v1129 = vld [vmem:[#allocation8 + $0x10] sm:$0xff]
    %v1130 = vld [vmem:[#allocation8 + $0x18] sm:$0xff]
    %v1131 = vld [vmem:[#allocation8 + $0x20] sm:$0xff]
    %v1132 = vld [vmem:[#allocation8 + $0x28] sm:$0xff]
    %v1133 = vld [vmem:[#allocation8 + $0x30] sm:$0xff]
    %v1134 = vld [vmem:[#allocation8 + $0x38] sm:$0xff]
    %v1135 = vld [vmem:[#allocation8 + $0x40] sm:$0xff]
    %v1136 = vld [vmem:[#allocation8 + $0x48] sm:$0xff]
    %v1137 = vld [vmem:[#allocation8 + $0x50] sm:$0xff]
    %v1138 = vld [vmem:[#allocation8 + $0x58] sm:$0xff]
    %v1139 = vld [vmem:[#allocation8 + $0x60] sm:$0xff]
    %v1140 = vld [vmem:[#allocation8 + $0x68] sm:$0xff]
    %v1141 = vld [vmem:[#allocation8 + $0x70] sm:$0xff]
    %v1142 = vld [vmem:[#allocation8 + $0x78] sm:$0xff]
    %v1143 = vld [vmem:[#allocation8 + $0x80] sm:$0xff]
    %v1144 = vld [vmem:[#allocation8 + $0x88] sm:$0xff]
    %v1145 = vld [vmem:[#allocation8 + $0x90] sm:$0xff]
    %v1146 = vld [vmem:[#allocation8 + $0x98] sm:$0xff]
    %v1147 = vld [vmem:[#allocation8 + $0xa0] sm:$0xff]
    %v1148 = vld [vmem:[#allocation8 + $0xa8] sm:$0xff]
    %v1149 = vld [vmem:[#allocation8 + $0xb0] sm:$0xff]
    %v1150 = vld [vmem:[#allocation8 + $0xb8] sm:$0xff]
    %v1151 = vld [vmem:[#allocation8 + $0xc0] sm:$0xff]
    %v1152 = vld [vmem:[#allocation8 + $0xc8] sm:$0xff]
    %v1153 = vld [vmem:[#allocation8 + $0xd0] sm:$0xff]
    %v1154 = vld [vmem:[#allocation8 + $0xd8] sm:$0xff]
    %v1155 = vld [vmem:[#allocation8 + $0xe0] sm:$0xff]
    %v1156 = vld [vmem:[#allocation8 + $0xe8] sm:$0xff]
    %v1157 = vld [vmem:[#allocation8 + $0xf0] sm:$0xff]
    %v1158 = vld [vmem:[#allocation8 + $0xf8] sm:$0xff]
    %v1191 = vunpack.c.l.b16 %v1127
    %v1192 = vunpack.c.h.b16 %v1127
    %v1193 = vunpack.c.l.b16 %v1128
    %v1194 = vunpack.c.h.b16 %v1128
    %v1195 = vunpack.c.l.b16 %v1129
    %v1196 = vunpack.c.h.b16 %v1129
    %v1197 = vunpack.c.l.b16 %v1130
    %v1198 = vunpack.c.h.b16 %v1130
    %v1199 = vunpack.c.l.b16 %v1131
    %v1200 = vunpack.c.h.b16 %v1131
    %v1201 = vunpack.c.l.b16 %v1132
    %v1202 = vunpack.c.h.b16 %v1132
    %v1203 = vunpack.c.l.b16 %v1133
    %v1204 = vunpack.c.h.b16 %v1133
    %v1205 = vunpack.c.l.b16 %v1134
    %v1206 = vunpack.c.h.b16 %v1134
    %v1207 = vunpack.c.l.b16 %v1135
    %v1208 = vunpack.c.h.b16 %v1135
    %v1209 = vunpack.c.l.b16 %v1136
    %v1210 = vunpack.c.h.b16 %v1136
    %v1211 = vunpack.c.l.b16 %v1137
    %v1212 = vunpack.c.h.b16 %v1137
    %v1213 = vunpack.c.l.b16 %v1138
    %v1214 = vunpack.c.h.b16 %v1138
    %v1215 = vunpack.c.l.b16 %v1139
    %v1216 = vunpack.c.h.b16 %v1139
    %v1217 = vunpack.c.l.b16 %v1140
    %v1218 = vunpack.c.h.b16 %v1140
    %v1219 = vunpack.c.l.b16 %v1141
    %v1220 = vunpack.c.h.b16 %v1141
    %v1221 = vunpack.c.l.b16 %v1142
    %v1222 = vunpack.c.h.b16 %v1142
    %v1223 = vunpack.c.l.b16 %v1143
    %v1224 = vunpack.c.h.b16 %v1143
    %v1225 = vunpack.c.l.b16 %v1144
    %v1226 = vunpack.c.h.b16 %v1144
    %v1227 = vunpack.c.l.b16 %v1145
    %v1228 = vunpack.c.h.b16 %v1145
    %v1229 = vunpack.c.l.b16 %v1146
    %v1230 = vunpack.c.h.b16 %v1146
    %v1231 = vunpack.c.l.b16 %v1147
    %v1232 = vunpack.c.h.b16 %v1147
    %v1233 = vunpack.c.l.b16 %v1148
    %v1234 = vunpack.c.h.b16 %v1148
    %v1235 = vunpack.c.l.b16 %v1149
    %v1236 = vunpack.c.h.b16 %v1149
    %v1237 = vunpack.c.l.b16 %v1150
    %v1238 = vunpack.c.h.b16 %v1150
    %v1239 = vunpack.c.l.b16 %v1151
    %v1240 = vunpack.c.h.b16 %v1151
    %v1241 = vunpack.c.l.b16 %v1152
    %v1242 = vunpack.c.h.b16 %v1152
    %v1243 = vunpack.c.l.b16 %v1153
    %v1244 = vunpack.c.h.b16 %v1153
    %v1245 = vunpack.c.l.b16 %v1154
    %v1246 = vunpack.c.h.b16 %v1154
    %v1247 = vunpack.c.l.b16 %v1155
    %v1248 = vunpack.c.h.b16 %v1155
    %v1249 = vunpack.c.l.b16 %v1156
    %v1250 = vunpack.c.h.b16 %v1156
    %v1251 = vunpack.c.l.b16 %v1157
    %v1252 = vunpack.c.h.b16 %v1157
    %v1253 = vunpack.c.l.b16 %v1158
    %v1254 = vunpack.c.h.b16 %v1158
    %v1255 = vpack.c.b16 %v1195, %v1191
    %v1256 = vpack.c.b16 %v1196, %v1192
    %v1257 = vpack.c.b16 %v1197, %v1193
    %v1258 = vpack.c.b16 %v1198, %v1194
    %v1259 = vpack.c.b16 %v1203, %v1199
    %v1260 = vpack.c.b16 %v1204, %v1200
    %v1261 = vpack.c.b16 %v1205, %v1201
    %v1262 = vpack.c.b16 %v1206, %v1202
    %v1263 = vpack.c.b16 %v1211, %v1207
    %v1264 = vpack.c.b16 %v1212, %v1208
    %v1265 = vpack.c.b16 %v1213, %v1209
    %v1266 = vpack.c.b16 %v1214, %v1210
    %v1267 = vpack.c.b16 %v1219, %v1215
    %v1268 = vpack.c.b16 %v1220, %v1216
    %v1269 = vpack.c.b16 %v1221, %v1217
    %v1270 = vpack.c.b16 %v1222, %v1218
    %v1271 = vpack.c.b16 %v1227, %v1223
    %v1272 = vpack.c.b16 %v1228, %v1224
    %v1273 = vpack.c.b16 %v1229, %v1225
    %v1274 = vpack.c.b16 %v1230, %v1226
    %v1275 = vpack.c.b16 %v1235, %v1231
    %v1276 = vpack.c.b16 %v1236, %v1232
    %v1277 = vpack.c.b16 %v1237, %v1233
    %v1278 = vpack.c.b16 %v1238, %v1234
    %v1279 = vpack.c.b16 %v1243, %v1239
    %v1280 = vpack.c.b16 %v1244, %v1240
    %v1281 = vpack.c.b16 %v1245, %v1241
    %v1282 = vpack.c.b16 %v1246, %v1242
    %v1283 = vpack.c.b16 %v1251, %v1247
    %v1284 = vpack.c.b16 %v1252, %v1248
    %v1285 = vpack.c.b16 %v1253, %v1249
    %v1286 = vpack.c.b16 %v1254, %v1250
    %1319 = vmatprep.subr.bf16.mxu0 %v1256
    %1320 = vmatpush1.bf16.msra.mxu0 %v1255
    %1321 = vmatprep.subr.bf16.mxu0 %v1260
    %1322 = vmatpush1.bf16.msra.mxu0 %v1259
    %1323 = vmatprep.subr.bf16.mxu0 %v1264
    %1324 = vmatpush1.bf16.msra.mxu0 %v1263
    %1325 = vmatprep.subr.bf16.mxu0 %v1268
    %1326 = vmatpush1.bf16.msra.mxu0 %v1267
    %1327 = vmatprep.subr.bf16.mxu0 %v1272
    %1328 = vmatpush1.bf16.msra.mxu0 %v1271
    %1329 = vmatprep.subr.bf16.mxu0 %v1276
    %1330 = vmatpush1.bf16.msra.mxu0 %v1275
    %1331 = vmatprep.subr.bf16.mxu0 %v1280
    %1332 = vmatpush1.bf16.msra.mxu0 %v1279
    %1333 = vmatprep.subr.bf16.mxu0 %v1284
    %1334 = vmatpush1.bf16.msra.mxu0 %v1283
    %1335 = vmatprep.subr.bf16.mxu0 0
    %1336 = vmatpush1.bf16.msra.mxu0 0
    %1337 = vmatprep.subr.bf16.mxu0 0
    %1338 = vmatpush1.bf16.msra.mxu0 0
    %1339 = vmatprep.subr.bf16.mxu0 0
    %1340 = vmatpush1.bf16.msra.mxu0 0
    %1341 = vmatprep.subr.bf16.mxu0 0
    %1342 = vmatpush1.bf16.msra.mxu0 0
    %1343 = vmatprep.subr.bf16.mxu0 0
    %1344 = vmatpush1.bf16.msra.mxu0 0
    %1345 = vmatprep.subr.bf16.mxu0 0
    %1346 = vmatpush1.bf16.msra.mxu0 0
    %1347 = vmatprep.subr.bf16.mxu0 0
    %1348 = vmatpush1.bf16.msra.mxu0 0
    %1349 = vmatprep.subr.bf16.mxu0 0
    %1350 = vmatpush1.bf16.msra.mxu0 0
    %1351 = vmatprep.mubr.bf16.mxu0 0
    %1352 = vmatmul.mubr.bf16.gmra.mrb[0].mxu0 %v1126
    %v1353 = vpop.f32.mrb[0].mxu0
    %v1354 = vadd.f32 0.0, %v1353
    %v1355 = vpop.f32.mrb[0].mxu0
    %v1356 = vadd.f32 0.0, %v1355
    %v1357 = vpop.f32.mrb[0].mxu0
    %v1358 = vpop.f32.mrb[0].mxu0
    %1359 = vdwg.mxu0
    %1360 = vmatprep.subr.bf16.mxu0 %v1258
    %1361 = vmatpush1.bf16.msra.mxu0 %v1257
    %1362 = vmatprep.subr.bf16.mxu0 %v1262
    %1363 = vmatpush1.bf16.msra.mxu0 %v1261
    %1364 = vmatprep.subr.bf16.mxu0 %v1266
    %1365 = vmatpush1.bf16.msra.mxu0 %v1265
    %1366 = vmatprep.subr.bf16.mxu0 %v1270
    %1367 = vmatpush1.bf16.msra.mxu0 %v1269
    %1368 = vmatprep.subr.bf16.mxu0 %v1274
    %1369 = vmatpush1.bf16.msra.mxu0 %v1273
    %1370 = vmatprep.subr.bf16.mxu0 %v1278
    %1371 = vmatpush1.bf16.msra.mxu0 %v1277
    %1372 = vmatprep.subr.bf16.mxu0 %v1282
    %1373 = vmatpush1.bf16.msra.mxu0 %v1281
    %1374 = vmatprep.subr.bf16.mxu0 %v1286
    %1375 = vmatpush1.bf16.msra.mxu0 %v1285
    %1376 = vmatprep.subr.bf16.mxu0 0
    %1377 = vmatpush1.bf16.msra.mxu0 0
    %1378 = vmatprep.subr.bf16.mxu0 0
    %1379 = vmatpush1.bf16.msra.mxu0 0
    %1380 = vmatprep.subr.bf16.mxu0 0
    %1381 = vmatpush1.bf16.msra.mxu0 0
    %1382 = vmatprep.subr.bf16.mxu0 0
    %1383 = vmatpush1.bf16.msra.mxu0 0
    %1384 = vmatprep.subr.bf16.mxu0 0
    %1385 = vmatpush1.bf16.msra.mxu0 0
    %1386 = vmatprep.subr.bf16.mxu0 0
    %1387 = vmatpush1.bf16.msra.mxu0 0
    %1388 = vmatprep.subr.bf16.mxu0 0
    %1389 = vmatpush1.bf16.msra.mxu0 0
    %1390 = vmatprep.subr.bf16.mxu0 0
    %1391 = vmatpush1.bf16.msra.mxu0 0
    %1392 = vmatprep.mubr.bf16.mxu0 0
    %1393 = vmatmul.mubr.bf16.gmra.mrb[0].mxu0 %v1126
    %v1394 = vpop.f32.mrb[0].mxu0
    %v1395 = vadd.f32 0.0, %v1394
    %v1396 = vpop.f32.mrb[0].mxu0
    %v1397 = vadd.f32 0.0, %v1396
    %v1398 = vpop.f32.mrb[0].mxu0
    %v1399 = vpop.f32.mrb[0].mxu0
    %1400 = vdwg.mxu0
    %v1401 = vadd.f32 %v1121, %v1354
    %v1402 = vadd.f32 %v1122, %v1356
    %v1403 = vadd.f32 %v1123, %v1395
    %v1404 = vadd.f32 %v1124, %v1397
    %v1405 = vxor.u32 %v1401, 2147483648
    %v1406 = vmul.f32 %v1405, 1.442695
    %v1407 = vpow.pop %v1406
    %v1408 = vadd.f32 %v1407, 1.0
    %v1409 = vrcp.pop %v1408
    %v1410 = vmul.f32 1.0, %v1409
    %v1411 = vxor.u32 %v1402, 2147483648
    %v1412 = vmul.f32 %v1411, 1.442695
    %v1413 = vpow.pop %v1412
    %v1414 = vadd.f32 %v1413, 1.0
    %v1415 = vrcp.pop %v1414
    %v1416 = vmul.f32 1.0, %v1415
    %v1417 = vtanh.pop %v1403
    %v1418 = vxor.u32 %v1404, 2147483648
    %v1419 = vmul.f32 %v1418, 1.442695
    %v1420 = vpow.pop %v1419
    %v1421 = vadd.f32 %v1420, 1.0
    %v1422 = vrcp.pop %v1421
    %v1423 = vmul.f32 1.0, %v1422
    %v1424 = vld [vmem:[#allocation5] sm:$0xff]
    %v1425 = vmul.f32 %v1416, %v1424
    %v1426 = vmul.f32 %v1410, %v1417
    %v1427 = vadd.f32 %v1425, %v1426
    %v1428 = vtanh.pop %v1427
    %v1429 = vmul.f32 %v1423, %v1428
    %1430 = vst [vmem:[#allocation5] sm:$0xff] %v1427
    %1431 = vst [vmem:[#allocation4] sm:$0xff] %v1429
    %1432 = vst [vmem:[#allocation3 + $0x10] sm:$0xff] %v1429
    %v1433 = vld [vmem:[#allocation2 + $0x60] sm:$0xff]
    %v1434 = vld [vmem:[#allocation2 + $0x68] sm:$0xff]
    %v1435 = vld [vmem:[#allocation2 + $0x70] sm:$0xff]
    %v1436 = vld [vmem:[#allocation2 + $0x78] sm:$0xff]
    %v1437 = vld [vmem:[#allocation4] sm:$0xff]
    %v1438 = vpack.c.bf16 %v1437, %v1437
    %v1439 = vld [vmem:[#allocation8] sm:$0xff]
    %v1440 = vld [vmem:[#allocation8 + $0x8] sm:$0xff]
    %v1441 = vld [vmem:[#allocation8 + $0x10] sm:$0xff]
    %v1442 = vld [vmem:[#allocation8 + $0x18] sm:$0xff]
    %v1443 = vld [vmem:[#allocation8 + $0x20] sm:$0xff]
    %v1444 = vld [vmem:[#allocation8 + $0x28] sm:$0xff]
    %v1445 = vld [vmem:[#allocation8 + $0x30] sm:$0xff]
    %v1446 = vld [vmem:[#allocation8 + $0x38] sm:$0xff]
    %v1447 = vld [vmem:[#allocation8 + $0x40] sm:$0xff]
    %v1448 = vld [vmem:[#allocation8 + $0x48] sm:$0xff]
    %v1449 = vld [vmem:[#allocation8 + $0x50] sm:$0xff]
    %v1450 = vld [vmem:[#allocation8 + $0x58] sm:$0xff]
    %v1451 = vld [vmem:[#allocation8 + $0x60] sm:$0xff]
    %v1452 = vld [vmem:[#allocation8 + $0x68] sm:$0xff]
    %v1453 = vld [vmem:[#allocation8 + $0x70] sm:$0xff]
    %v1454 = vld [vmem:[#allocation8 + $0x78] sm:$0xff]
    %v1455 = vld [vmem:[#allocation8 + $0x80] sm:$0xff]
    %v1456 = vld [vmem:[#allocation8 + $0x88] sm:$0xff]
    %v1457 = vld [vmem:[#allocation8 + $0x90] sm:$0xff]
    %v1458 = vld [vmem:[#allocation8 + $0x98] sm:$0xff]
    %v1459 = vld [vmem:[#allocation8 + $0xa0] sm:$0xff]
    %v1460 = vld [vmem:[#allocation8 + $0xa8] sm:$0xff]
    %v1461 = vld [vmem:[#allocation8 + $0xb0] sm:$0xff]
    %v1462 = vld [vmem:[#allocation8 + $0xb8] sm:$0xff]
    %v1463 = vld [vmem:[#allocation8 + $0xc0] sm:$0xff]
    %v1464 = vld [vmem:[#allocation8 + $0xc8] sm:$0xff]
    %v1465 = vld [vmem:[#allocation8 + $0xd0] sm:$0xff]
    %v1466 = vld [vmem:[#allocation8 + $0xd8] sm:$0xff]
    %v1467 = vld [vmem:[#allocation8 + $0xe0] sm:$0xff]
    %v1468 = vld [vmem:[#allocation8 + $0xe8] sm:$0xff]
    %v1469 = vld [vmem:[#allocation8 + $0xf0] sm:$0xff]
    %v1470 = vld [vmem:[#allocation8 + $0xf8] sm:$0xff]
    %v1503 = vunpack.c.l.b16 %v1439
    %v1504 = vunpack.c.h.b16 %v1439
    %v1505 = vunpack.c.l.b16 %v1440
    %v1506 = vunpack.c.h.b16 %v1440
    %v1507 = vunpack.c.l.b16 %v1441
    %v1508 = vunpack.c.h.b16 %v1441
    %v1509 = vunpack.c.l.b16 %v1442
    %v1510 = vunpack.c.h.b16 %v1442
    %v1511 = vunpack.c.l.b16 %v1443
    %v1512 = vunpack.c.h.b16 %v1443
    %v1513 = vunpack.c.l.b16 %v1444
    %v1514 = vunpack.c.h.b16 %v1444
    %v1515 = vunpack.c.l.b16 %v1445
    %v1516 = vunpack.c.h.b16 %v1445
    %v1517 = vunpack.c.l.b16 %v1446
    %v1518 = vunpack.c.h.b16 %v1446
    %v1519 = vunpack.c.l.b16 %v1447
    %v1520 = vunpack.c.h.b16 %v1447
    %v1521 = vunpack.c.l.b16 %v1448
    %v1522 = vunpack.c.h.b16 %v1448
    %v1523 = vunpack.c.l.b16 %v1449
    %v1524 = vunpack.c.h.b16 %v1449
    %v1525 = vunpack.c.l.b16 %v1450
    %v1526 = vunpack.c.h.b16 %v1450
    %v1527 = vunpack.c.l.b16 %v1451
    %v1528 = vunpack.c.h.b16 %v1451
    %v1529 = vunpack.c.l.b16 %v1452
    %v1530 = vunpack.c.h.b16 %v1452
    %v1531 = vunpack.c.l.b16 %v1453
    %v1532 = vunpack.c.h.b16 %v1453
    %v1533 = vunpack.c.l.b16 %v1454
    %v1534 = vunpack.c.h.b16 %v1454
    %v1535 = vunpack.c.l.b16 %v1455
    %v1536 = vunpack.c.h.b16 %v1455
    %v1537 = vunpack.c.l.b16 %v1456
    %v1538 = vunpack.c.h.b16 %v1456
    %v1539 = vunpack.c.l.b16 %v1457
    %v1540 = vunpack.c.h.b16 %v1457
    %v1541 = vunpack.c.l.b16 %v1458
    %v1542 = vunpack.c.h.b16 %v1458
    %v1543 = vunpack.c.l.b16 %v1459
    %v1544 = vunpack.c.h.b16 %v1459
    %v1545 = vunpack.c.l.b16 %v1460
    %v1546 = vunpack.c.h.b16 %v1460
    %v1547 = vunpack.c.l.b16 %v1461
    %v1548 = vunpack.c.h.b16 %v1461
    %v1549 = vunpack.c.l.b16 %v1462
    %v1550 = vunpack.c.h.b16 %v1462
    %v1551 = vunpack.c.l.b16 %v1463
    %v1552 = vunpack.c.h.b16 %v1463
    %v1553 = vunpack.c.l.b16 %v1464
    %v1554 = vunpack.c.h.b16 %v1464
    %v1555 = vunpack.c.l.b16 %v1465
    %v1556 = vunpack.c.h.b16 %v1465
    %v1557 = vunpack.c.l.b16 %v1466
    %v1558 = vunpack.c.h.b16 %v1466
    %v1559 = vunpack.c.l.b16 %v1467
    %v1560 = vunpack.c.h.b16 %v1467
    %v1561 = vunpack.c.l.b16 %v1468
    %v1562 = vunpack.c.h.b16 %v1468
    %v1563 = vunpack.c.l.b16 %v1469
    %v1564 = vunpack.c.h.b16 %v1469
    %v1565 = vunpack.c.l.b16 %v1470
    %v1566 = vunpack.c.h.b16 %v1470
    %v1567 = vpack.c.b16 %v1507, %v1503
    %v1568 = vpack.c.b16 %v1508, %v1504
    %v1569 = vpack.c.b16 %v1509, %v1505
    %v1570 = vpack.c.b16 %v1510, %v1506
    %v1571 = vpack.c.b16 %v1515, %v1511
    %v1572 = vpack.c.b16 %v1516, %v1512
    %v1573 = vpack.c.b16 %v1517, %v1513
    %v1574 = vpack.c.b16 %v1518, %v1514
    %v1575 = vpack.c.b16 %v1523, %v1519
    %v1576 = vpack.c.b16 %v1524, %v1520
    %v1577 = vpack.c.b16 %v1525, %v1521
    %v1578 = vpack.c.b16 %v1526, %v1522
    %v1579 = vpack.c.b16 %v1531, %v1527
    %v1580 = vpack.c.b16 %v1532, %v1528
    %v1581 = vpack.c.b16 %v1533, %v1529
    %v1582 = vpack.c.b16 %v1534, %v1530
    %v1583 = vpack.c.b16 %v1539, %v1535
    %v1584 = vpack.c.b16 %v1540, %v1536
    %v1585 = vpack.c.b16 %v1541, %v1537
    %v1586 = vpack.c.b16 %v1542, %v1538
    %v1587 = vpack.c.b16 %v1547, %v1543
    %v1588 = vpack.c.b16 %v1548, %v1544
    %v1589 = vpack.c.b16 %v1549, %v1545
    %v1590 = vpack.c.b16 %v1550, %v1546
    %v1591 = vpack.c.b16 %v1555, %v1551
    %v1592 = vpack.c.b16 %v1556, %v1552
    %v1593 = vpack.c.b16 %v1557, %v1553
    %v1594 = vpack.c.b16 %v1558, %v1554
    %v1595 = vpack.c.b16 %v1563, %v1559
    %v1596 = vpack.c.b16 %v1564, %v1560
    %v1597 = vpack.c.b16 %v1565, %v1561
    %v1598 = vpack.c.b16 %v1566, %v1562
    %1631 = vmatprep.subr.bf16.mxu0 %v1568
    %1632 = vmatpush1.bf16.msra.mxu0 %v1567
    %1633 = vmatprep.subr.bf16.mxu0 %v1572
    %1634 = vmatpush1.bf16.msra.mxu0 %v1571
    %1635 = vmatprep.subr.bf16.mxu0 %v1576
    %1636 = vmatpush1.bf16.msra.mxu0 %v1575
    %1637 = vmatprep.subr.bf16.mxu0 %v1580
    %1638 = vmatpush1.bf16.msra.mxu0 %v1579
    %1639 = vmatprep.subr.bf16.mxu0 %v1584
    %1640 = vmatpush1.bf16.msra.mxu0 %v1583
    %1641 = vmatprep.subr.bf16.mxu0 %v1588
    %1642 = vmatpush1.bf16.msra.mxu0 %v1587
    %1643 = vmatprep.subr.bf16.mxu0 %v1592
    %1644 = vmatpush1.bf16.msra.mxu0 %v1591
    %1645 = vmatprep.subr.bf16.mxu0 %v1596
    %1646 = vmatpush1.bf16.msra.mxu0 %v1595
    %1647 = vmatprep.subr.bf16.mxu0 0
    %1648 = vmatpush1.bf16.msra.mxu0 0
    %1649 = vmatprep.subr.bf16.mxu0 0
    %1650 = vmatpush1.bf16.msra.mxu0 0
    %1651 = vmatprep.subr.bf16.mxu0 0
    %1652 = vmatpush1.bf16.msra.mxu0 0
    %1653 = vmatprep.subr.bf16.mxu0 0
    %1654 = vmatpush1.bf16.msra.mxu0 0
    %1655 = vmatprep.subr.bf16.mxu0 0
    %1656 = vmatpush1.bf16.msra.mxu0 0
    %1657 = vmatprep.subr.bf16.mxu0 0
    %1658 = vmatpush1.bf16.msra.mxu0 0
    %1659 = vmatprep.subr.bf16.mxu0 0
    %1660 = vmatpush1.bf16.msra.mxu0 0
    %1661 = vmatprep.subr.bf16.mxu0 0
    %1662 = vmatpush1.bf16.msra.mxu0 0
    %1663 = vmatprep.mubr.bf16.mxu0 0
    %1664 = vmatmul.mubr.bf16.gmra.mrb[0].mxu0 %v1438
    %v1665 = vpop.f32.mrb[0].mxu0
    %v1666 = vadd.f32 0.0, %v1665
    %v1667 = vpop.f32.mrb[0].mxu0
    %v1668 = vadd.f32 0.0, %v1667
    %v1669 = vpop.f32.mrb[0].mxu0
    %v1670 = vpop.f32.mrb[0].mxu0
    %1671 = vdwg.mxu0
    %1672 = vmatprep.subr.bf16.mxu0 %v1570
    %1673 = vmatpush1.bf16.msra.mxu0 %v1569
    %1674 = vmatprep.subr.bf16.mxu0 %v1574
    %1675 = vmatpush1.bf16.msra.mxu0 %v1573
    %1676 = vmatprep.subr.bf16.mxu0 %v1578
    %1677 = vmatpush1.bf16.msra.mxu0 %v1577
    %1678 = vmatprep.subr.bf16.mxu0 %v1582
    %1679 = vmatpush1.bf16.msra.mxu0 %v1581
    %1680 = vmatprep.subr.bf16.mxu0 %v1586
    %1681 = vmatpush1.bf16.msra.mxu0 %v1585
    %1682 = vmatprep.subr.bf16.mxu0 %v1590
    %1683 = vmatpush1.bf16.msra.mxu0 %v1589
    %1684 = vmatprep.subr.bf16.mxu0 %v1594
    %1685 = vmatpush1.bf16.msra.mxu0 %v1593
    %1686 = vmatprep.subr.bf16.mxu0 %v1598
    %1687 = vmatpush1.bf16.msra.mxu0 %v1597
    %1688 = vmatprep.subr.bf16.mxu0 0
    %1689 = vmatpush1.bf16.msra.mxu0 0
    %1690 = vmatprep.subr.bf16.mxu0 0
    %1691 = vmatpush1.bf16.msra.mxu0 0
    %1692 = vmatprep.subr.bf16.mxu0 0
    %1693 = vmatpush1.bf16.msra.mxu0 0
    %1694 = vmatprep.subr.bf16.mxu0 0
    %1695 = vmatpush1.bf16.msra.mxu0 0
    %1696 = vmatprep.subr.bf16.mxu0 0
    %1697 = vmatpush1.bf16.msra.mxu0 0
    %1698 = vmatprep.subr.bf16.mxu0 0
    %1699 = vmatpush1.bf16.msra.mxu0 0
    %1700 = vmatprep.subr.bf16.mxu0 0
    %1701 = vmatpush1.bf16.msra.mxu0 0
    %1702 = vmatprep.subr.bf16.mxu0 0
    %1703 = vmatpush1.bf16.msra.mxu0 0
    %1704 = vmatprep.mubr.bf16.mxu0 0
    %1705 = vmatmul.mubr.bf16.gmra.mrb[0].mxu0 %v1438
    %v1706 = vpop.f32.mrb[0].mxu0
    %v1707 = vadd.f32 0.0, %v1706
    %v1708 = vpop.f32.mrb[0].mxu0
    %v1709 = vadd.f32 0.0, %v1708
    %v1710 = vpop.f32.mrb[0].mxu0
    %v1711 = vpop.f32.mrb[0].mxu0
    %1712 = vdwg.mxu0
    %v1713 = vadd.f32 %v1433, %v1666
    %v1714 = vadd.f32 %v1434, %v1668
    %v1715 = vadd.f32 %v1435, %v1707
    %v1716 = vadd.f32 %v1436, %v1709
    %v1717 = vxor.u32 %v1713, 2147483648
    %v1718 = vmul.f32 %v1717, 1.442695
    %v1719 = vpow.pop %v1718
    %v1720 = vadd.f32 %v1719, 1.0
    %v1721 = vrcp.pop %v1720
    %v1722 = vmul.f32 1.0, %v1721
    %v1723 = vxor.u32 %v1714, 2147483648
    %v1724 = vmul.f32 %v1723, 1.442695
    %v1725 = vpow.pop %v1724
    %v1726 = vadd.f32 %v1725, 1.0
    %v1727 = vrcp.pop %v1726
    %v1728 = vmul.f32 1.0, %v1727
    %v1729 = vtanh.pop %v1715
    %v1730 = vxor.u32 %v1716, 2147483648
    %v1731 = vmul.f32 %v1730, 1.442695
    %v1732 = vpow.pop %v1731
    %v1733 = vadd.f32 %v1732, 1.0
    %v1734 = vrcp.pop %v1733
    %v1735 = vmul.f32 1.0, %v1734
    %v1736 = vld [vmem:[#allocation5] sm:$0xff]
    %v1737 = vmul.f32 %v1728, %v1736
    %v1738 = vmul.f32 %v1722, %v1729
    %v1739 = vadd.f32 %v1737, %v1738
    %v1740 = vtanh.pop %v1739
    %v1741 = vmul.f32 %v1735, %v1740
    %1742 = vst [vmem:[#allocation5] sm:$0xff] %v1739
    %1743 = vst [vmem:[#allocation4] sm:$0xff] %v1741
    %1744 = vst [vmem:[#allocation3 + $0x18] sm:$0xff] %v1741
    %v1745 = vld [vmem:[#allocation2 + $0x80] sm:$0xff]
    %v1746 = vld [vmem:[#allocation2 + $0x88] sm:$0xff]
    %v1747 = vld [vmem:[#allocation2 + $0x90] sm:$0xff]
    %v1748 = vld [vmem:[#allocation2 + $0x98] sm:$0xff]
    %v1749 = vld [vmem:[#allocation4] sm:$0xff]
    %v1750 = vpack.c.bf16 %v1749, %v1749
    %v1751 = vld [vmem:[#allocation8] sm:$0xff]
    %v1752 = vld [vmem:[#allocation8 + $0x8] sm:$0xff]
    %v1753 = vld [vmem:[#allocation8 + $0x10] sm:$0xff]
    %v1754 = vld [vmem:[#allocation8 + $0x18] sm:$0xff]
    %v1755 = vld [vmem:[#allocation8 + $0x20] sm:$0xff]
    %v1756 = vld [vmem:[#allocation8 + $0x28] sm:$0xff]
    %v1757 = vld [vmem:[#allocation8 + $0x30] sm:$0xff]
    %v1758 = vld [vmem:[#allocation8 + $0x38] sm:$0xff]
    %v1759 = vld [vmem:[#allocation8 + $0x40] sm:$0xff]
    %v1760 = vld [vmem:[#allocation8 + $0x48] sm:$0xff]
    %v1761 = vld [vmem:[#allocation8 + $0x50] sm:$0xff]
    %v1762 = vld [vmem:[#allocation8 + $0x58] sm:$0xff]
    %v1763 = vld [vmem:[#allocation8 + $0x60] sm:$0xff]
    %v1764 = vld [vmem:[#allocation8 + $0x68] sm:$0xff]
    %v1765 = vld [vmem:[#allocation8 + $0x70] sm:$0xff]
    %v1766 = vld [vmem:[#allocation8 + $0x78] sm:$0xff]
    %v1767 = vld [vmem:[#allocation8 + $0x80] sm:$0xff]
    %v1768 = vld [vmem:[#allocation8 + $0x88] sm:$0xff]
    %v1769 = vld [vmem:[#allocation8 + $0x90] sm:$0xff]
    %v1770 = vld [vmem:[#allocation8 + $0x98] sm:$0xff]
    %v1771 = vld [vmem:[#allocation8 + $0xa0] sm:$0xff]
    %v1772 = vld [vmem:[#allocation8 + $0xa8] sm:$0xff]
    %v1773 = vld [vmem:[#allocation8 + $0xb0] sm:$0xff]
    %v1774 = vld [vmem:[#allocation8 + $0xb8] sm:$0xff]
    %v1775 = vld [vmem:[#allocation8 + $0xc0] sm:$0xff]
    %v1776 = vld [vmem:[#allocation8 + $0xc8] sm:$0xff]
    %v1777 = vld [vmem:[#allocation8 + $0xd0] sm:$0xff]
    %v1778 = vld [vmem:[#allocation8 + $0xd8] sm:$0xff]
    %v1779 = vld [vmem:[#allocation8 + $0xe0] sm:$0xff]
    %v1780 = vld [vmem:[#allocation8 + $0xe8] sm:$0xff]
    %v1781 = vld [vmem:[#allocation8 + $0xf0] sm:$0xff]
    %v1782 = vld [vmem:[#allocation8 + $0xf8] sm:$0xff]
    %v1815 = vunpack.c.l.b16 %v1751
    %v1816 = vunpack.c.h.b16 %v1751
    %v1817 = vunpack.c.l.b16 %v1752
    %v1818 = vunpack.c.h.b16 %v1752
    %v1819 = vunpack.c.l.b16 %v1753
    %v1820 = vunpack.c.h.b16 %v1753
    %v1821 = vunpack.c.l.b16 %v1754
    %v1822 = vunpack.c.h.b16 %v1754
    %v1823 = vunpack.c.l.b16 %v1755
    %v1824 = vunpack.c.h.b16 %v1755
    %v1825 = vunpack.c.l.b16 %v1756
    %v1826 = vunpack.c.h.b16 %v1756
    %v1827 = vunpack.c.l.b16 %v1757
    %v1828 = vunpack.c.h.b16 %v1757
    %v1829 = vunpack.c.l.b16 %v1758
    %v1830 = vunpack.c.h.b16 %v1758
    %v1831 = vunpack.c.l.b16 %v1759
    %v1832 = vunpack.c.h.b16 %v1759
    %v1833 = vunpack.c.l.b16 %v1760
    %v1834 = vunpack.c.h.b16 %v1760
    %v1835 = vunpack.c.l.b16 %v1761
    %v1836 = vunpack.c.h.b16 %v1761
    %v1837 = vunpack.c.l.b16 %v1762
    %v1838 = vunpack.c.h.b16 %v1762
    %v1839 = vunpack.c.l.b16 %v1763
    %v1840 = vunpack.c.h.b16 %v1763
    %v1841 = vunpack.c.l.b16 %v1764
    %v1842 = vunpack.c.h.b16 %v1764
    %v1843 = vunpack.c.l.b16 %v1765
    %v1844 = vunpack.c.h.b16 %v1765
    %v1845 = vunpack.c.l.b16 %v1766
    %v1846 = vunpack.c.h.b16 %v1766
    %v1847 = vunpack.c.l.b16 %v1767
    %v1848 = vunpack.c.h.b16 %v1767
    %v1849 = vunpack.c.l.b16 %v1768
    %v1850 = vunpack.c.h.b16 %v1768
    %v1851 = vunpack.c.l.b16 %v1769
    %v1852 = vunpack.c.h.b16 %v1769
    %v1853 = vunpack.c.l.b16 %v1770
    %v1854 = vunpack.c.h.b16 %v1770
    %v1855 = vunpack.c.l.b16 %v1771
    %v1856 = vunpack.c.h.b16 %v1771
    %v1857 = vunpack.c.l.b16 %v1772
    %v1858 = vunpack.c.h.b16 %v1772
    %v1859 = vunpack.c.l.b16 %v1773
    %v1860 = vunpack.c.h.b16 %v1773
    %v1861 = vunpack.c.l.b16 %v1774
    %v1862 = vunpack.c.h.b16 %v1774
    %v1863 = vunpack.c.l.b16 %v1775
    %v1864 = vunpack.c.h.b16 %v1775
    %v1865 = vunpack.c.l.b16 %v1776
    %v1866 = vunpack.c.h.b16 %v1776
    %v1867 = vunpack.c.l.b16 %v1777
    %v1868 = vunpack.c.h.b16 %v1777
    %v1869 = vunpack.c.l.b16 %v1778
    %v1870 = vunpack.c.h.b16 %v1778
    %v1871 = vunpack.c.l.b16 %v1779
    %v1872 = vunpack.c.h.b16 %v1779
    %v1873 = vunpack.c.l.b16 %v1780
    %v1874 = vunpack.c.h.b16 %v1780
    %v1875 = vunpack.c.l.b16 %v1781
    %v1876 = vunpack.c.h.b16 %v1781
    %v1877 = vunpack.c.l.b16 %v1782
    %v1878 = vunpack.c.h.b16 %v1782
    %v1879 = vpack.c.b16 %v1819, %v1815
    %v1880 = vpack.c.b16 %v1820, %v1816
    %v1881 = vpack.c.b16 %v1821, %v1817
    %v1882 = vpack.c.b16 %v1822, %v1818
    %v1883 = vpack.c.b16 %v1827, %v1823
    %v1884 = vpack.c.b16 %v1828, %v1824
    %v1885 = vpack.c.b16 %v1829, %v1825
    %v1886 = vpack.c.b16 %v1830, %v1826
    %v1887 = vpack.c.b16 %v1835, %v1831
    %v1888 = vpack.c.b16 %v1836, %v1832
    %v1889 = vpack.c.b16 %v1837, %v1833
    %v1890 = vpack.c.b16 %v1838, %v1834
    %v1891 = vpack.c.b16 %v1843, %v1839
    %v1892 = vpack.c.b16 %v1844, %v1840
    %v1893 = vpack.c.b16 %v1845, %v1841
    %v1894 = vpack.c.b16 %v1846, %v1842
    %v1895 = vpack.c.b16 %v1851, %v1847
    %v1896 = vpack.c.b16 %v1852, %v1848
    %v1897 = vpack.c.b16 %v1853, %v1849
    %v1898 = vpack.c.b16 %v1854, %v1850
    %v1899 = vpack.c.b16 %v1859, %v1855
    %v1900 = vpack.c.b16 %v1860, %v1856
    %v1901 = vpack.c.b16 %v1861, %v1857
    %v1902 = vpack.c.b16 %v1862, %v1858
    %v1903 = vpack.c.b16 %v1867, %v1863
    %v1904 = vpack.c.b16 %v1868, %v1864
    %v1905 = vpack.c.b16 %v1869, %v1865
    %v1906 = vpack.c.b16 %v1870, %v1866
    %v1907 = vpack.c.b16 %v1875, %v1871
    %v1908 = vpack.c.b16 %v1876, %v1872
    %v1909 = vpack.c.b16 %v1877, %v1873
    %v1910 = vpack.c.b16 %v1878, %v1874
    %1943 = vmatprep.subr.bf16.mxu0 %v1880
    %1944 = vmatpush1.bf16.msra.mxu0 %v1879
    %1945 = vmatprep.subr.bf16.mxu0 %v1884
    %1946 = vmatpush1.bf16.msra.mxu0 %v1883
    %1947 = vmatprep.subr.bf16.mxu0 %v1888
    %1948 = vmatpush1.bf16.msra.mxu0 %v1887
    %1949 = vmatprep.subr.bf16.mxu0 %v1892
    %1950 = vmatpush1.bf16.msra.mxu0 %v1891
    %1951 = vmatprep.subr.bf16.mxu0 %v1896
    %1952 = vmatpush1.bf16.msra.mxu0 %v1895
    %1953 = vmatprep.subr.bf16.mxu0 %v1900
    %1954 = vmatpush1.bf16.msra.mxu0 %v1899
    %1955 = vmatprep.subr.bf16.mxu0 %v1904
    %1956 = vmatpush1.bf16.msra.mxu0 %v1903
    %1957 = vmatprep.subr.bf16.mxu0 %v1908
    %1958 = vmatpush1.bf16.msra.mxu0 %v1907
    %1959 = vmatprep.subr.bf16.mxu0 0
    %1960 = vmatpush1.bf16.msra.mxu0 0
    %1961 = vmatprep.subr.bf16.mxu0 0
    %1962 = vmatpush1.bf16.msra.mxu0 0
    %1963 = vmatprep.subr.bf16.mxu0 0
    %1964 = vmatpush1.bf16.msra.mxu0 0
    %1965 = vmatprep.subr.bf16.mxu0 0
    %1966 = vmatpush1.bf16.msra.mxu0 0
    %1967 = vmatprep.subr.bf16.mxu0 0
    %1968 = vmatpush1.bf16.msra.mxu0 0
    %1969 = vmatprep.subr.bf16.mxu0 0
    %1970 = vmatpush1.bf16.msra.mxu0 0
    %1971 = vmatprep.subr.bf16.mxu0 0
    %1972 = vmatpush1.bf16.msra.mxu0 0
    %1973 = vmatprep.subr.bf16.mxu0 0
    %1974 = vmatpush1.bf16.msra.mxu0 0
    %1975 = vmatprep.mubr.bf16.mxu0 0
    %1976 = vmatmul.mubr.bf16.gmra.mrb[0].mxu0 %v1750
    %v1977 = vpop.f32.mrb[0].mxu0
    %v1978 = vadd.f32 0.0, %v1977
    %v1979 = vpop.f32.mrb[0].mxu0
    %v1980 = vadd.f32 0.0, %v1979
    %v1981 = vpop.f32.mrb[0].mxu0
    %v1982 = vpop.f32.mrb[0].mxu0
    %1983 = vdwg.mxu0
    %1984 = vmatprep.subr.bf16.mxu0 %v1882
    %1985 = vmatpush1.bf16.msra.mxu0 %v1881
    %1986 = vmatprep.subr.bf16.mxu0 %v1886
    %1987 = vmatpush1.bf16.msra.mxu0 %v1885
    %1988 = vmatprep.subr.bf16.mxu0 %v1890
    %1989 = vmatpush1.bf16.msra.mxu0 %v1889
    %1990 = vmatprep.subr.bf16.mxu0 %v1894
    %1991 = vmatpush1.bf16.msra.mxu0 %v1893
    %1992 = vmatprep.subr.bf16.mxu0 %v1898
    %1993 = vmatpush1.bf16.msra.mxu0 %v1897
    %1994 = vmatprep.subr.bf16.mxu0 %v1902
    %1995 = vmatpush1.bf16.msra.mxu0 %v1901
    %1996 = vmatprep.subr.bf16.mxu0 %v1906
    %1997 = vmatpush1.bf16.msra.mxu0 %v1905
    %1998 = vmatprep.subr.bf16.mxu0 %v1910
    %1999 = vmatpush1.bf16.msra.mxu0 %v1909
    %2000 = vmatprep.subr.bf16.mxu0 0
    %2001 = vmatpush1.bf16.msra.mxu0 0
    %2002 = vmatprep.subr.bf16.mxu0 0
    %2003 = vmatpush1.bf16.msra.mxu0 0
    %2004 = vmatprep.subr.bf16.mxu0 0
    %2005 = vmatpush1.bf16.msra.mxu0 0
    %2006 = vmatprep.subr.bf16.mxu0 0
    %2007 = vmatpush1.bf16.msra.mxu0 0
    %2008 = vmatprep.subr.bf16.mxu0 0
    %2009 = vmatpush1.bf16.msra.mxu0 0
    %2010 = vmatprep.subr.bf16.mxu0 0
    %2011 = vmatpush1.bf16.msra.mxu0 0
    %2012 = vmatprep.subr.bf16.mxu0 0
    %2013 = vmatpush1.bf16.msra.mxu0 0
    %2014 = vmatprep.subr.bf16.mxu0 0
    %2015 = vmatpush1.bf16.msra.mxu0 0
    %2016 = vmatprep.mubr.bf16.mxu0 0
    %2017 = vmatmul.mubr.bf16.gmra.mrb[0].mxu0 %v1750
    %v2018 = vpop.f32.mrb[0].mxu0
    %v2019 = vadd.f32 0.0, %v2018
    %v2020 = vpop.f32.mrb[0].mxu0
    %v2021 = vadd.f32 0.0, %v2020
    %v2022 = vpop.f32.mrb[0].mxu0
    %v2023 = vpop.f32.mrb[0].mxu0
    %2024 = vdwg.mxu0
    %v2025 = vadd.f32 %v1745, %v1978
    %v2026 = vadd.f32 %v1746, %v1980
    %v2027 = vadd.f32 %v1747, %v2019
    %v2028 = vadd.f32 %v1748, %v2021
    %v2029 = vxor.u32 %v2025, 2147483648
    %v2030 = vmul.f32 %v2029, 1.442695
    %v2031 = vpow.pop %v2030
    %v2032 = vadd.f32 %v2031, 1.0
    %v2033 = vrcp.pop %v2032
    %v2034 = vmul.f32 1.0, %v2033
    %v2035 = vxor.u32 %v2026, 2147483648
    %v2036 = vmul.f32 %v2035, 1.442695
    %v2037 = vpow.pop %v2036
    %v2038 = vadd.f32 %v2037, 1.0
    %v2039 = vrcp.pop %v2038
    %v2040 = vmul.f32 1.0, %v2039
    %v2041 = vtanh.pop %v2027
    %v2042 = vxor.u32 %v2028, 2147483648
    %v2043 = vmul.f32 %v2042, 1.442695
    %v2044 = vpow.pop %v2043
    %v2045 = vadd.f32 %v2044, 1.0
    %v2046 = vrcp.pop %v2045
    %v2047 = vmul.f32 1.0, %v2046
    %v2048 = vld [vmem:[#allocation5] sm:$0xff]
    %v2049 = vmul.f32 %v2040, %v2048
    %v2050 = vmul.f32 %v2034, %v2041
    %v2051 = vadd.f32 %v2049, %v2050
    %v2052 = vtanh.pop %v2051
    %v2053 = vmul.f32 %v2047, %v2052
    %2054 = vst [vmem:[#allocation5] sm:$0xff] %v2051
    %2055 = vst [vmem:[#allocation4] sm:$0xff] %v2053
    %2056 = vst [vmem:[#allocation3 + $0x20] sm:$0xff] %v2053
    %v2057 = vld [vmem:[#allocation2 + $0xa0] sm:$0xff]
    %v2058 = vld [vmem:[#allocation2 + $0xa8] sm:$0xff]
    %v2059 = vld [vmem:[#allocation2 + $0xb0] sm:$0xff]
    %v2060 = vld [vmem:[#allocation2 + $0xb8] sm:$0xff]
    %v2061 = vld [vmem:[#allocation4] sm:$0xff]
    %v2062 = vpack.c.bf16 %v2061, %v2061
    %v2063 = vld [vmem:[#allocation8] sm:$0xff]
    %v2064 = vld [vmem:[#allocation8 + $0x8] sm:$0xff]
    %v2065 = vld [vmem:[#allocation8 + $0x10] sm:$0xff]
    %v2066 = vld [vmem:[#allocation8 + $0x18] sm:$0xff]
    %v2067 = vld [vmem:[#allocation8 + $0x20] sm:$0xff]
    %v2068 = vld [vmem:[#allocation8 + $0x28] sm:$0xff]
    %v2069 = vld [vmem:[#allocation8 + $0x30] sm:$0xff]
    %v2070 = vld [vmem:[#allocation8 + $0x38] sm:$0xff]
    %v2071 = vld [vmem:[#allocation8 + $0x40] sm:$0xff]
    %v2072 = vld [vmem:[#allocation8 + $0x48] sm:$0xff]
    %v2073 = vld [vmem:[#allocation8 + $0x50] sm:$0xff]
    %v2074 = vld [vmem:[#allocation8 + $0x58] sm:$0xff]
    %v2075 = vld [vmem:[#allocation8 + $0x60] sm:$0xff]
    %v2076 = vld [vmem:[#allocation8 + $0x68] sm:$0xff]
    %v2077 = vld [vmem:[#allocation8 + $0x70] sm:$0xff]
    %v2078 = vld [vmem:[#allocation8 + $0x78] sm:$0xff]
    %v2079 = vld [vmem:[#allocation8 + $0x80] sm:$0xff]
    %v2080 = vld [vmem:[#allocation8 + $0x88] sm:$0xff]
    %v2081 = vld [vmem:[#allocation8 + $0x90] sm:$0xff]
    %v2082 = vld [vmem:[#allocation8 + $0x98] sm:$0xff]
    %v2083 = vld [vmem:[#allocation8 + $0xa0] sm:$0xff]
    %v2084 = vld [vmem:[#allocation8 + $0xa8] sm:$0xff]
    %v2085 = vld [vmem:[#allocation8 + $0xb0] sm:$0xff]
    %v2086 = vld [vmem:[#allocation8 + $0xb8] sm:$0xff]
    %v2087 = vld [vmem:[#allocation8 + $0xc0] sm:$0xff]
    %v2088 = vld [vmem:[#allocation8 + $0xc8] sm:$0xff]
    %v2089 = vld [vmem:[#allocation8 + $0xd0] sm:$0xff]
    %v2090 = vld [vmem:[#allocation8 + $0xd8] sm:$0xff]
    %v2091 = vld [vmem:[#allocation8 + $0xe0] sm:$0xff]
    %v2092 = vld [vmem:[#allocation8 + $0xe8] sm:$0xff]
    %v2093 = vld [vmem:[#allocation8 + $0xf0] sm:$0xff]
    %v2094 = vld [vmem:[#allocation8 + $0xf8] sm:$0xff]
    %v2127 = vunpack.c.l.b16 %v2063
    %v2128 = vunpack.c.h.b16 %v2063
    %v2129 = vunpack.c.l.b16 %v2064
    %v2130 = vunpack.c.h.b16 %v2064
    %v2131 = vunpack.c.l.b16 %v2065
    %v2132 = vunpack.c.h.b16 %v2065
    %v2133 = vunpack.c.l.b16 %v2066
    %v2134 = vunpack.c.h.b16 %v2066
    %v2135 = vunpack.c.l.b16 %v2067
    %v2136 = vunpack.c.h.b16 %v2067
    %v2137 = vunpack.c.l.b16 %v2068
    %v2138 = vunpack.c.h.b16 %v2068
    %v2139 = vunpack.c.l.b16 %v2069
    %v2140 = vunpack.c.h.b16 %v2069
    %v2141 = vunpack.c.l.b16 %v2070
    %v2142 = vunpack.c.h.b16 %v2070
    %v2143 = vunpack.c.l.b16 %v2071
    %v2144 = vunpack.c.h.b16 %v2071
    %v2145 = vunpack.c.l.b16 %v2072
    %v2146 = vunpack.c.h.b16 %v2072
    %v2147 = vunpack.c.l.b16 %v2073
    %v2148 = vunpack.c.h.b16 %v2073
    %v2149 = vunpack.c.l.b16 %v2074
    %v2150 = vunpack.c.h.b16 %v2074
    %v2151 = vunpack.c.l.b16 %v2075
    %v2152 = vunpack.c.h.b16 %v2075
    %v2153 = vunpack.c.l.b16 %v2076
    %v2154 = vunpack.c.h.b16 %v2076
    %v2155 = vunpack.c.l.b16 %v2077
    %v2156 = vunpack.c.h.b16 %v2077
    %v2157 = vunpack.c.l.b16 %v2078
    %v2158 = vunpack.c.h.b16 %v2078
    %v2159 = vunpack.c.l.b16 %v2079
    %v2160 = vunpack.c.h.b16 %v2079
    %v2161 = vunpack.c.l.b16 %v2080
    %v2162 = vunpack.c.h.b16 %v2080
    %v2163 = vunpack.c.l.b16 %v2081
    %v2164 = vunpack.c.h.b16 %v2081
    %v2165 = vunpack.c.l.b16 %v2082
    %v2166 = vunpack.c.h.b16 %v2082
    %v2167 = vunpack.c.l.b16 %v2083
    %v2168 = vunpack.c.h.b16 %v2083
    %v2169 = vunpack.c.l.b16 %v2084
    %v2170 = vunpack.c.h.b16 %v2084
    %v2171 = vunpack.c.l.b16 %v2085
    %v2172 = vunpack.c.h.b16 %v2085
    %v2173 = vunpack.c.l.b16 %v2086
    %v2174 = vunpack.c.h.b16 %v2086
    %v2175 = vunpack.c.l.b16 %v2087
    %v2176 = vunpack.c.h.b16 %v2087
    %v2177 = vunpack.c.l.b16 %v2088
    %v2178 = vunpack.c.h.b16 %v2088
    %v2179 = vunpack.c.l.b16 %v2089
    %v2180 = vunpack.c.h.b16 %v2089
    %v2181 = vunpack.c.l.b16 %v2090
    %v2182 = vunpack.c.h.b16 %v2090
    %v2183 = vunpack.c.l.b16 %v2091
    %v2184 = vunpack.c.h.b16 %v2091
    %v2185 = vunpack.c.l.b16 %v2092
    %v2186 = vunpack.c.h.b16 %v2092
    %v2187 = vunpack.c.l.b16 %v2093
    %v2188 = vunpack.c.h.b16 %v2093
    %v2189 = vunpack.c.l.b16 %v2094
    %v2190 = vunpack.c.h.b16 %v2094
    %v2191 = vpack.c.b16 %v2131, %v2127
    %v2192 = vpack.c.b16 %v2132, %v2128
    %v2193 = vpack.c.b16 %v2133, %v2129
    %v2194 = vpack.c.b16 %v2134, %v2130
    %v2195 = vpack.c.b16 %v2139, %v2135
    %v2196 = vpack.c.b16 %v2140, %v2136
    %v2197 = vpack.c.b16 %v2141, %v2137
    %v2198 = vpack.c.b16 %v2142, %v2138
    %v2199 = vpack.c.b16 %v2147, %v2143
    %v2200 = vpack.c.b16 %v2148, %v2144
    %v2201 = vpack.c.b16 %v2149, %v2145
    %v2202 = vpack.c.b16 %v2150, %v2146
    %v2203 = vpack.c.b16 %v2155, %v2151
    %v2204 = vpack.c.b16 %v2156, %v2152
    %v2205 = vpack.c.b16 %v2157, %v2153
    %v2206 = vpack.c.b16 %v2158, %v2154
    %v2207 = vpack.c.b16 %v2163, %v2159
    %v2208 = vpack.c.b16 %v2164, %v2160
    %v2209 = vpack.c.b16 %v2165, %v2161
    %v2210 = vpack.c.b16 %v2166, %v2162
    %v2211 = vpack.c.b16 %v2171, %v2167
    %v2212 = vpack.c.b16 %v2172, %v2168
    %v2213 = vpack.c.b16 %v2173, %v2169
    %v2214 = vpack.c.b16 %v2174, %v2170
    %v2215 = vpack.c.b16 %v2179, %v2175
    %v2216 = vpack.c.b16 %v2180, %v2176
    %v2217 = vpack.c.b16 %v2181, %v2177
    %v2218 = vpack.c.b16 %v2182, %v2178
    %v2219 = vpack.c.b16 %v2187, %v2183
    %v2220 = vpack.c.b16 %v2188, %v2184
    %v2221 = vpack.c.b16 %v2189, %v2185
    %v2222 = vpack.c.b16 %v2190, %v2186
    %2255 = vmatprep.subr.bf16.mxu0 %v2192
    %2256 = vmatpush1.bf16.msra.mxu0 %v2191
    %2257 = vmatprep.subr.bf16.mxu0 %v2196
    %2258 = vmatpush1.bf16.msra.mxu0 %v2195
    %2259 = vmatprep.subr.bf16.mxu0 %v2200
    %2260 = vmatpush1.bf16.msra.mxu0 %v2199
    %2261 = vmatprep.subr.bf16.mxu0 %v2204
    %2262 = vmatpush1.bf16.msra.mxu0 %v2203
    %2263 = vmatprep.subr.bf16.mxu0 %v2208
    %2264 = vmatpush1.bf16.msra.mxu0 %v2207
    %2265 = vmatprep.subr.bf16.mxu0 %v2212
    %2266 = vmatpush1.bf16.msra.mxu0 %v2211
    %2267 = vmatprep.subr.bf16.mxu0 %v2216
    %2268 = vmatpush1.bf16.msra.mxu0 %v2215
    %2269 = vmatprep.subr.bf16.mxu0 %v2220
    %2270 = vmatpush1.bf16.msra.mxu0 %v2219
    %2271 = vmatprep.subr.bf16.mxu0 0
    %2272 = vmatpush1.bf16.msra.mxu0 0
    %2273 = vmatprep.subr.bf16.mxu0 0
    %2274 = vmatpush1.bf16.msra.mxu0 0
    %2275 = vmatprep.subr.bf16.mxu0 0
    %2276 = vmatpush1.bf16.msra.mxu0 0
    %2277 = vmatprep.subr.bf16.mxu0 0
    %2278 = vmatpush1.bf16.msra.mxu0 0
    %2279 = vmatprep.subr.bf16.mxu0 0
    %2280 = vmatpush1.bf16.msra.mxu0 0
    %2281 = vmatprep.subr.bf16.mxu0 0
    %2282 = vmatpush1.bf16.msra.mxu0 0
    %2283 = vmatprep.subr.bf16.mxu0 0
    %2284 = vmatpush1.bf16.msra.mxu0 0
    %2285 = vmatprep.subr.bf16.mxu0 0
    %2286 = vmatpush1.bf16.msra.mxu0 0
    %2287 = vmatprep.mubr.bf16.mxu0 0
    %2288 = vmatmul.mubr.bf16.gmra.mrb[0].mxu0 %v2062
    %v2289 = vpop.f32.mrb[0].mxu0
    %v2290 = vadd.f32 0.0, %v2289
    %v2291 = vpop.f32.mrb[0].mxu0
    %v2292 = vadd.f32 0.0, %v2291
    %v2293 = vpop.f32.mrb[0].mxu0
    %v2294 = vpop.f32.mrb[0].mxu0
    %2295 = vdwg.mxu0
    %2296 = vmatprep.subr.bf16.mxu0 %v2194
    %2297 = vmatpush1.bf16.msra.mxu0 %v2193
    %2298 = vmatprep.subr.bf16.mxu0 %v2198
    %2299 = vmatpush1.bf16.msra.mxu0 %v2197
    %2300 = vmatprep.subr.bf16.mxu0 %v2202
    %2301 = vmatpush1.bf16.msra.mxu0 %v2201
    %2302 = vmatprep.subr.bf16.mxu0 %v2206
    %2303 = vmatpush1.bf16.msra.mxu0 %v2205
    %2304 = vmatprep.subr.bf16.mxu0 %v2210
    %2305 = vmatpush1.bf16.msra.mxu0 %v2209
    %2306 = vmatprep.subr.bf16.mxu0 %v2214
    %2307 = vmatpush1.bf16.msra.mxu0 %v2213
    %2308 = vmatprep.subr.bf16.mxu0 %v2218
    %2309 = vmatpush1.bf16.msra.mxu0 %v2217
    %2310 = vmatprep.subr.bf16.mxu0 %v2222
    %2311 = vmatpush1.bf16.msra.mxu0 %v2221
    %2312 = vmatprep.subr.bf16.mxu0 0
    %2313 = vmatpush1.bf16.msra.mxu0 0
    %2314 = vmatprep.subr.bf16.mxu0 0
    %2315 = vmatpush1.bf16.msra.mxu0 0
    %2316 = vmatprep.subr.bf16.mxu0 0
    %2317 = vmatpush1.bf16.msra.mxu0 0
    %2318 = vmatprep.subr.bf16.mxu0 0
    %2319 = vmatpush1.bf16.msra.mxu0 0
    %2320 = vmatprep.subr.bf16.mxu0 0
    %2321 = vmatpush1.bf16.msra.mxu0 0
    %2322 = vmatprep.subr.bf16.mxu0 0
    %2323 = vmatpush1.bf16.msra.mxu0 0
    %2324 = vmatprep.subr.bf16.mxu0 0
    %2325 = vmatpush1.bf16.msra.mxu0 0
    %2326 = vmatprep.subr.bf16.mxu0 0
    %2327 = vmatpush1.bf16.msra.mxu0 0
    %2328 = vmatprep.mubr.bf16.mxu0 0
    %2329 = vmatmul.mubr.bf16.gmra.mrb[0].mxu0 %v2062
    %v2330 = vpop.f32.mrb[0].mxu0
    %v2331 = vadd.f32 0.0, %v2330
    %v2332 = vpop.f32.mrb[0].mxu0
    %v2333 = vadd.f32 0.0, %v2332
    %v2334 = vpop.f32.mrb[0].mxu0
    %v2335 = vpop.f32.mrb[0].mxu0
    %2336 = vdwg.mxu0
    %v2337 = vadd.f32 %v2057, %v2290
    %v2338 = vadd.f32 %v2058, %v2292
    %v2339 = vadd.f32 %v2059, %v2331
    %v2340 = vadd.f32 %v2060, %v2333
    %v2341 = vxor.u32 %v2337, 2147483648
    %v2342 = vmul.f32 %v2341, 1.442695
    %v2343 = vpow.pop %v2342
    %v2344 = vadd.f32 %v2343, 1.0
    %v2345 = vrcp.pop %v2344
    %v2346 = vmul.f32 1.0, %v2345
    %v2347 = vxor.u32 %v2338, 2147483648
    %v2348 = vmul.f32 %v2347, 1.442695
    %v2349 = vpow.pop %v2348
    %v2350 = vadd.f32 %v2349, 1.0
    %v2351 = vrcp.pop %v2350
    %v2352 = vmul.f32 1.0, %v2351
    %v2353 = vtanh.pop %v2339
    %v2354 = vxor.u32 %v2340, 2147483648
    %v2355 = vmul.f32 %v2354, 1.442695
    %v2356 = vpow.pop %v2355
    %v2357 = vadd.f32 %v2356, 1.0
    %v2358 = vrcp.pop %v2357
    %v2359 = vmul.f32 1.0, %v2358
    %v2360 = vld [vmem:[#allocation5] sm:$0xff]
    %v2361 = vmul.f32 %v2352, %v2360
    %v2362 = vmul.f32 %v2346, %v2353
    %v2363 = vadd.f32 %v2361, %v2362
    %v2364 = vtanh.pop %v2363
    %v2365 = vmul.f32 %v2359, %v2364
    %2366 = vst [vmem:[#allocation5] sm:$0xff] %v2363
    %2367 = vst [vmem:[#allocation4] sm:$0xff] %v2365
    %2368 = vst [vmem:[#allocation3 + $0x28] sm:$0xff] %v2365
    %v2369 = vld [vmem:[#allocation2 + $0xc0] sm:$0xff]
    %v2370 = vld [vmem:[#allocation2 + $0xc8] sm:$0xff]
    %v2371 = vld [vmem:[#allocation2 + $0xd0] sm:$0xff]
    %v2372 = vld [vmem:[#allocation2 + $0xd8] sm:$0xff]
    %v2373 = vld [vmem:[#allocation4] sm:$0xff]
    %v2374 = vpack.c.bf16 %v2373, %v2373
    %v2375 = vld [vmem:[#allocation8] sm:$0xff]
    %v2376 = vld [vmem:[#allocation8 + $0x8] sm:$0xff]
    %v2377 = vld [vmem:[#allocation8 + $0x10] sm:$0xff]
    %v2378 = vld [vmem:[#allocation8 + $0x18] sm:$0xff]
    %v2379 = vld [vmem:[#allocation8 + $0x20] sm:$0xff]
    %v2380 = vld [vmem:[#allocation8 + $0x28] sm:$0xff]
    %v2381 = vld [vmem:[#allocation8 + $0x30] sm:$0xff]
    %v2382 = vld [vmem:[#allocation8 + $0x38] sm:$0xff]
    %v2383 = vld [vmem:[#allocation8 + $0x40] sm:$0xff]
    %v2384 = vld [vmem:[#allocation8 + $0x48] sm:$0xff]
    %v2385 = vld [vmem:[#allocation8 + $0x50] sm:$0xff]
    %v2386 = vld [vmem:[#allocation8 + $0x58] sm:$0xff]
    %v2387 = vld [vmem:[#allocation8 + $0x60] sm:$0xff]
    %v2388 = vld [vmem:[#allocation8 + $0x68] sm:$0xff]
    %v2389 = vld [vmem:[#allocation8 + $0x70] sm:$0xff]
    %v2390 = vld [vmem:[#allocation8 + $0x78] sm:$0xff]
    %v2391 = vld [vmem:[#allocation8 + $0x80] sm:$0xff]
    %v2392 = vld [vmem:[#allocation8 + $0x88] sm:$0xff]
    %v2393 = vld [vmem:[#allocation8 + $0x90] sm:$0xff]
    %v2394 = vld [vmem:[#allocation8 + $0x98] sm:$0xff]
    %v2395 = vld [vmem:[#allocation8 + $0xa0] sm:$0xff]
    %v2396 = vld [vmem:[#allocation8 + $0xa8] sm:$0xff]
    %v2397 = vld [vmem:[#allocation8 + $0xb0] sm:$0xff]
    %v2398 = vld [vmem:[#allocation8 + $0xb8] sm:$0xff]
    %v2399 = vld [vmem:[#allocation8 + $0xc0] sm:$0xff]
    %v2400 = vld [vmem:[#allocation8 + $0xc8] sm:$0xff]
    %v2401 = vld [vmem:[#allocation8 + $0xd0] sm:$0xff]
    %v2402 = vld [vmem:[#allocation8 + $0xd8] sm:$0xff]
    %v2403 = vld [vmem:[#allocation8 + $0xe0] sm:$0xff]
    %v2404 = vld [vmem:[#allocation8 + $0xe8] sm:$0xff]
    %v2405 = vld [vmem:[#allocation8 + $0xf0] sm:$0xff]
    %v2406 = vld [vmem:[#allocation8 + $0xf8] sm:$0xff]
    %v2439 = vunpack.c.l.b16 %v2375
    %v2440 = vunpack.c.h.b16 %v2375
    %v2441 = vunpack.c.l.b16 %v2376
    %v2442 = vunpack.c.h.b16 %v2376
    %v2443 = vunpack.c.l.b16 %v2377
    %v2444 = vunpack.c.h.b16 %v2377
    %v2445 = vunpack.c.l.b16 %v2378
    %v2446 = vunpack.c.h.b16 %v2378
    %v2447 = vunpack.c.l.b16 %v2379
    %v2448 = vunpack.c.h.b16 %v2379
    %v2449 = vunpack.c.l.b16 %v2380
    %v2450 = vunpack.c.h.b16 %v2380
    %v2451 = vunpack.c.l.b16 %v2381
    %v2452 = vunpack.c.h.b16 %v2381
    %v2453 = vunpack.c.l.b16 %v2382
    %v2454 = vunpack.c.h.b16 %v2382
    %v2455 = vunpack.c.l.b16 %v2383
    %v2456 = vunpack.c.h.b16 %v2383
    %v2457 = vunpack.c.l.b16 %v2384
    %v2458 = vunpack.c.h.b16 %v2384
    %v2459 = vunpack.c.l.b16 %v2385
    %v2460 = vunpack.c.h.b16 %v2385
    %v2461 = vunpack.c.l.b16 %v2386
    %v2462 = vunpack.c.h.b16 %v2386
    %v2463 = vunpack.c.l.b16 %v2387
    %v2464 = vunpack.c.h.b16 %v2387
    %v2465 = vunpack.c.l.b16 %v2388
    %v2466 = vunpack.c.h.b16 %v2388
    %v2467 = vunpack.c.l.b16 %v2389
    %v2468 = vunpack.c.h.b16 %v2389
    %v2469 = vunpack.c.l.b16 %v2390
    %v2470 = vunpack.c.h.b16 %v2390
    %v2471 = vunpack.c.l.b16 %v2391
    %v2472 = vunpack.c.h.b16 %v2391
    %v2473 = vunpack.c.l.b16 %v2392
    %v2474 = vunpack.c.h.b16 %v2392
    %v2475 = vunpack.c.l.b16 %v2393
    %v2476 = vunpack.c.h.b16 %v2393
    %v2477 = vunpack.c.l.b16 %v2394
    %v2478 = vunpack.c.h.b16 %v2394
    %v2479 = vunpack.c.l.b16 %v2395
    %v2480 = vunpack.c.h.b16 %v2395
    %v2481 = vunpack.c.l.b16 %v2396
    %v2482 = vunpack.c.h.b16 %v2396
    %v2483 = vunpack.c.l.b16 %v2397
    %v2484 = vunpack.c.h.b16 %v2397
    %v2485 = vunpack.c.l.b16 %v2398
    %v2486 = vunpack.c.h.b16 %v2398
    %v2487 = vunpack.c.l.b16 %v2399
    %v2488 = vunpack.c.h.b16 %v2399
    %v2489 = vunpack.c.l.b16 %v2400
    %v2490 = vunpack.c.h.b16 %v2400
    %v2491 = vunpack.c.l.b16 %v2401
    %v2492 = vunpack.c.h.b16 %v2401
    %v2493 = vunpack.c.l.b16 %v2402
    %v2494 = vunpack.c.h.b16 %v2402
    %v2495 = vunpack.c.l.b16 %v2403
    %v2496 = vunpack.c.h.b16 %v2403
    %v2497 = vunpack.c.l.b16 %v2404
    %v2498 = vunpack.c.h.b16 %v2404
    %v2499 = vunpack.c.l.b16 %v2405
    %v2500 = vunpack.c.h.b16 %v2405
    %v2501 = vunpack.c.l.b16 %v2406
    %v2502 = vunpack.c.h.b16 %v2406
    %v2503 = vpack.c.b16 %v2443, %v2439
    %v2504 = vpack.c.b16 %v2444, %v2440
    %v2505 = vpack.c.b16 %v2445, %v2441
    %v2506 = vpack.c.b16 %v2446, %v2442
    %v2507 = vpack.c.b16 %v2451, %v2447
    %v2508 = vpack.c.b16 %v2452, %v2448
    %v2509 = vpack.c.b16 %v2453, %v2449
    %v2510 = vpack.c.b16 %v2454, %v2450
    %v2511 = vpack.c.b16 %v2459, %v2455
    %v2512 = vpack.c.b16 %v2460, %v2456
    %v2513 = vpack.c.b16 %v2461, %v2457
    %v2514 = vpack.c.b16 %v2462, %v2458
    %v2515 = vpack.c.b16 %v2467, %v2463
    %v2516 = vpack.c.b16 %v2468, %v2464
    %v2517 = vpack.c.b16 %v2469, %v2465
    %v2518 = vpack.c.b16 %v2470, %v2466
    %v2519 = vpack.c.b16 %v2475, %v2471
    %v2520 = vpack.c.b16 %v2476, %v2472
    %v2521 = vpack.c.b16 %v2477, %v2473
    %v2522 = vpack.c.b16 %v2478, %v2474
    %v2523 = vpack.c.b16 %v2483, %v2479
    %v2524 = vpack.c.b16 %v2484, %v2480
    %v2525 = vpack.c.b16 %v2485, %v2481
    %v2526 = vpack.c.b16 %v2486, %v2482
    %v2527 = vpack.c.b16 %v2491, %v2487
    %v2528 = vpack.c.b16 %v2492, %v2488
    %v2529 = vpack.c.b16 %v2493, %v2489
    %v2530 = vpack.c.b16 %v2494, %v2490
    %v2531 = vpack.c.b16 %v2499, %v2495
    %v2532 = vpack.c.b16 %v2500, %v2496
    %v2533 = vpack.c.b16 %v2501, %v2497
    %v2534 = vpack.c.b16 %v2502, %v2498
    %2567 = vmatprep.subr.bf16.mxu0 %v2504
    %2568 = vmatpush1.bf16.msra.mxu0 %v2503
    %2569 = vmatprep.subr.bf16.mxu0 %v2508
    %2570 = vmatpush1.bf16.msra.mxu0 %v2507
    %2571 = vmatprep.subr.bf16.mxu0 %v2512
    %2572 = vmatpush1.bf16.msra.mxu0 %v2511
    %2573 = vmatprep.subr.bf16.mxu0 %v2516
    %2574 = vmatpush1.bf16.msra.mxu0 %v2515
    %2575 = vmatprep.subr.bf16.mxu0 %v2520
    %2576 = vmatpush1.bf16.msra.mxu0 %v2519
    %2577 = vmatprep.subr.bf16.mxu0 %v2524
    %2578 = vmatpush1.bf16.msra.mxu0 %v2523
    %2579 = vmatprep.subr.bf16.mxu0 %v2528
    %2580 = vmatpush1.bf16.msra.mxu0 %v2527
    %2581 = vmatprep.subr.bf16.mxu0 %v2532
    %2582 = vmatpush1.bf16.msra.mxu0 %v2531
    %2583 = vmatprep.subr.bf16.mxu0 0
    %2584 = vmatpush1.bf16.msra.mxu0 0
    %2585 = vmatprep.subr.bf16.mxu0 0
    %2586 = vmatpush1.bf16.msra.mxu0 0
    %2587 = vmatprep.subr.bf16.mxu0 0
    %2588 = vmatpush1.bf16.msra.mxu0 0
    %2589 = vmatprep.subr.bf16.mxu0 0
    %2590 = vmatpush1.bf16.msra.mxu0 0
    %2591 = vmatprep.subr.bf16.mxu0 0
    %2592 = vmatpush1.bf16.msra.mxu0 0
    %2593 = vmatprep.subr.bf16.mxu0 0
    %2594 = vmatpush1.bf16.msra.mxu0 0
    %2595 = vmatprep.subr.bf16.mxu0 0
    %2596 = vmatpush1.bf16.msra.mxu0 0
    %2597 = vmatprep.subr.bf16.mxu0 0
    %2598 = vmatpush1.bf16.msra.mxu0 0
    %2599 = vmatprep.mubr.bf16.mxu0 0
    %2600 = vmatmul.mubr.bf16.gmra.mrb[0].mxu0 %v2374
    %v2601 = vpop.f32.mrb[0].mxu0
    %v2602 = vadd.f32 0.0, %v2601
    %v2603 = vpop.f32.mrb[0].mxu0
    %v2604 = vadd.f32 0.0, %v2603
    %v2605 = vpop.f32.mrb[0].mxu0
    %v2606 = vpop.f32.mrb[0].mxu0
    %2607 = vdwg.mxu0
    %2608 = vmatprep.subr.bf16.mxu0 %v2506
    %2609 = vmatpush1.bf16.msra.mxu0 %v2505
    %2610 = vmatprep.subr.bf16.mxu0 %v2510
    %2611 = vmatpush1.bf16.msra.mxu0 %v2509
    %2612 = vmatprep.subr.bf16.mxu0 %v2514
    %2613 = vmatpush1.bf16.msra.mxu0 %v2513
    %2614 = vmatprep.subr.bf16.mxu0 %v2518
    %2615 = vmatpush1.bf16.msra.mxu0 %v2517
    %2616 = vmatprep.subr.bf16.mxu0 %v2522
    %2617 = vmatpush1.bf16.msra.mxu0 %v2521
    %2618 = vmatprep.subr.bf16.mxu0 %v2526
    %2619 = vmatpush1.bf16.msra.mxu0 %v2525
    %2620 = vmatprep.subr.bf16.mxu0 %v2530
    %2621 = vmatpush1.bf16.msra.mxu0 %v2529
    %2622 = vmatprep.subr.bf16.mxu0 %v2534
    %2623 = vmatpush1.bf16.msra.mxu0 %v2533
    %2624 = vmatprep.subr.bf16.mxu0 0
    %2625 = vmatpush1.bf16.msra.mxu0 0
    %2626 = vmatprep.subr.bf16.mxu0 0
    %2627 = vmatpush1.bf16.msra.mxu0 0
    %2628 = vmatprep.subr.bf16.mxu0 0
    %2629 = vmatpush1.bf16.msra.mxu0 0
    %2630 = vmatprep.subr.bf16.mxu0 0
    %2631 = vmatpush1.bf16.msra.mxu0 0
    %2632 = vmatprep.subr.bf16.mxu0 0
    %2633 = vmatpush1.bf16.msra.mxu0 0
    %2634 = vmatprep.subr.bf16.mxu0 0
    %2635 = vmatpush1.bf16.msra.mxu0 0
    %2636 = vmatprep.subr.bf16.mxu0 0
    %2637 = vmatpush1.bf16.msra.mxu0 0
    %2638 = vmatprep.subr.bf16.mxu0 0
    %2639 = vmatpush1.bf16.msra.mxu0 0
    %2640 = vmatprep.mubr.bf16.mxu0 0
    %2641 = vmatmul.mubr.bf16.gmra.mrb[0].mxu0 %v2374
    %v2642 = vpop.f32.mrb[0].mxu0
    %v2643 = vadd.f32 0.0, %v2642
    %v2644 = vpop.f32.mrb[0].mxu0
    %v2645 = vadd.f32 0.0, %v2644
    %v2646 = vpop.f32.mrb[0].mxu0
    %v2647 = vpop.f32.mrb[0].mxu0
    %2648 = vdwg.mxu0
    %v2649 = vadd.f32 %v2369, %v2602
    %v2650 = vadd.f32 %v2370, %v2604
    %v2651 = vadd.f32 %v2371, %v2643
    %v2652 = vadd.f32 %v2372, %v2645
    %v2653 = vxor.u32 %v2649, 2147483648
    %v2654 = vmul.f32 %v2653, 1.442695
    %v2655 = vpow.pop %v2654
    %v2656 = vadd.f32 %v2655, 1.0
    %v2657 = vrcp.pop %v2656
    %v2658 = vmul.f32 1.0, %v2657
    %v2659 = vxor.u32 %v2650, 2147483648
    %v2660 = vmul.f32 %v2659, 1.442695
    %v2661 = vpow.pop %v2660
    %v2662 = vadd.f32 %v2661, 1.0
    %v2663 = vrcp.pop %v2662
    %v2664 = vmul.f32 1.0, %v2663
    %v2665 = vtanh.pop %v2651
    %v2666 = vxor.u32 %v2652, 2147483648
    %v2667 = vmul.f32 %v2666, 1.442695
    %v2668 = vpow.pop %v2667
    %v2669 = vadd.f32 %v2668, 1.0
    %v2670 = vrcp.pop %v2669
    %v2671 = vmul.f32 1.0, %v2670
    %v2672 = vld [vmem:[#allocation5] sm:$0xff]
    %v2673 = vmul.f32 %v2664, %v2672
    %v2674 = vmul.f32 %v2658, %v2665
    %v2675 = vadd.f32 %v2673, %v2674
    %v2676 = vtanh.pop %v2675
    %v2677 = vmul.f32 %v2671, %v2676
    %2678 = vst [vmem:[#allocation5] sm:$0xff] %v2675
    %2679 = vst [vmem:[#allocation4] sm:$0xff] %v2677
    %2680 = vst [vmem:[#allocation3 + $0x30] sm:$0xff] %v2677
    %v2681 = vld [vmem:[#allocation2 + $0xe0] sm:$0xff]
    %v2682 = vld [vmem:[#allocation2 + $0xe8] sm:$0xff]
    %v2683 = vld [vmem:[#allocation2 + $0xf0] sm:$0xff]
    %v2684 = vld [vmem:[#allocation2 + $0xf8] sm:$0xff]
    %v2685 = vld [vmem:[#allocation4] sm:$0xff]
    %v2686 = vpack.c.bf16 %v2685, %v2685
    %v2687 = vld [vmem:[#allocation8] sm:$0xff]
    %v2688 = vld [vmem:[#allocation8 + $0x8] sm:$0xff]
    %v2689 = vld [vmem:[#allocation8 + $0x10] sm:$0xff]
    %v2690 = vld [vmem:[#allocation8 + $0x18] sm:$0xff]
    %v2691 = vld [vmem:[#allocation8 + $0x20] sm:$0xff]
    %v2692 = vld [vmem:[#allocation8 + $0x28] sm:$0xff]
    %v2693 = vld [vmem:[#allocation8 + $0x30] sm:$0xff]
    %v2694 = vld [vmem:[#allocation8 + $0x38] sm:$0xff]
    %v2695 = vld [vmem:[#allocation8 + $0x40] sm:$0xff]
    %v2696 = vld [vmem:[#allocation8 + $0x48] sm:$0xff]
    %v2697 = vld [vmem:[#allocation8 + $0x50] sm:$0xff]
    %v2698 = vld [vmem:[#allocation8 + $0x58] sm:$0xff]
    %v2699 = vld [vmem:[#allocation8 + $0x60] sm:$0xff]
    %v2700 = vld [vmem:[#allocation8 + $0x68] sm:$0xff]
    %v2701 = vld [vmem:[#allocation8 + $0x70] sm:$0xff]
    %v2702 = vld [vmem:[#allocation8 + $0x78] sm:$0xff]
    %v2703 = vld [vmem:[#allocation8 + $0x80] sm:$0xff]
    %v2704 = vld [vmem:[#allocation8 + $0x88] sm:$0xff]
    %v2705 = vld [vmem:[#allocation8 + $0x90] sm:$0xff]
    %v2706 = vld [vmem:[#allocation8 + $0x98] sm:$0xff]
    %v2707 = vld [vmem:[#allocation8 + $0xa0] sm:$0xff]
    %v2708 = vld [vmem:[#allocation8 + $0xa8] sm:$0xff]
    %v2709 = vld [vmem:[#allocation8 + $0xb0] sm:$0xff]
    %v2710 = vld [vmem:[#allocation8 + $0xb8] sm:$0xff]
    %v2711 = vld [vmem:[#allocation8 + $0xc0] sm:$0xff]
    %v2712 = vld [vmem:[#allocation8 + $0xc8] sm:$0xff]
    %v2713 = vld [vmem:[#allocation8 + $0xd0] sm:$0xff]
    %v2714 = vld [vmem:[#allocation8 + $0xd8] sm:$0xff]
    %v2715 = vld [vmem:[#allocation8 + $0xe0] sm:$0xff]
    %v2716 = vld [vmem:[#allocation8 + $0xe8] sm:$0xff]
    %v2717 = vld [vmem:[#allocation8 + $0xf0] sm:$0xff]
    %v2718 = vld [vmem:[#allocation8 + $0xf8] sm:$0xff]
    %v2751 = vunpack.c.l.b16 %v2687
    %v2752 = vunpack.c.h.b16 %v2687
    %v2753 = vunpack.c.l.b16 %v2688
    %v2754 = vunpack.c.h.b16 %v2688
    %v2755 = vunpack.c.l.b16 %v2689
    %v2756 = vunpack.c.h.b16 %v2689
    %v2757 = vunpack.c.l.b16 %v2690
    %v2758 = vunpack.c.h.b16 %v2690
    %v2759 = vunpack.c.l.b16 %v2691
    %v2760 = vunpack.c.h.b16 %v2691
    %v2761 = vunpack.c.l.b16 %v2692
    %v2762 = vunpack.c.h.b16 %v2692
    %v2763 = vunpack.c.l.b16 %v2693
    %v2764 = vunpack.c.h.b16 %v2693
    %v2765 = vunpack.c.l.b16 %v2694
    %v2766 = vunpack.c.h.b16 %v2694
    %v2767 = vunpack.c.l.b16 %v2695
    %v2768 = vunpack.c.h.b16 %v2695
    %v2769 = vunpack.c.l.b16 %v2696
    %v2770 = vunpack.c.h.b16 %v2696
    %v2771 = vunpack.c.l.b16 %v2697
    %v2772 = vunpack.c.h.b16 %v2697
    %v2773 = vunpack.c.l.b16 %v2698
    %v2774 = vunpack.c.h.b16 %v2698
    %v2775 = vunpack.c.l.b16 %v2699
    %v2776 = vunpack.c.h.b16 %v2699
    %v2777 = vunpack.c.l.b16 %v2700
    %v2778 = vunpack.c.h.b16 %v2700
    %v2779 = vunpack.c.l.b16 %v2701
    %v2780 = vunpack.c.h.b16 %v2701
    %v2781 = vunpack.c.l.b16 %v2702
    %v2782 = vunpack.c.h.b16 %v2702
    %v2783 = vunpack.c.l.b16 %v2703
    %v2784 = vunpack.c.h.b16 %v2703
    %v2785 = vunpack.c.l.b16 %v2704
    %v2786 = vunpack.c.h.b16 %v2704
    %v2787 = vunpack.c.l.b16 %v2705
    %v2788 = vunpack.c.h.b16 %v2705
    %v2789 = vunpack.c.l.b16 %v2706
    %v2790 = vunpack.c.h.b16 %v2706
    %v2791 = vunpack.c.l.b16 %v2707
    %v2792 = vunpack.c.h.b16 %v2707
    %v2793 = vunpack.c.l.b16 %v2708
    %v2794 = vunpack.c.h.b16 %v2708
    %v2795 = vunpack.c.l.b16 %v2709
    %v2796 = vunpack.c.h.b16 %v2709
    %v2797 = vunpack.c.l.b16 %v2710
    %v2798 = vunpack.c.h.b16 %v2710
    %v2799 = vunpack.c.l.b16 %v2711
    %v2800 = vunpack.c.h.b16 %v2711
    %v2801 = vunpack.c.l.b16 %v2712
    %v2802 = vunpack.c.h.b16 %v2712
    %v2803 = vunpack.c.l.b16 %v2713
    %v2804 = vunpack.c.h.b16 %v2713
    %v2805 = vunpack.c.l.b16 %v2714
    %v2806 = vunpack.c.h.b16 %v2714
    %v2807 = vunpack.c.l.b16 %v2715
    %v2808 = vunpack.c.h.b16 %v2715
    %v2809 = vunpack.c.l.b16 %v2716
    %v2810 = vunpack.c.h.b16 %v2716
    %v2811 = vunpack.c.l.b16 %v2717
    %v2812 = vunpack.c.h.b16 %v2717
    %v2813 = vunpack.c.l.b16 %v2718
    %v2814 = vunpack.c.h.b16 %v2718
    %v2815 = vpack.c.b16 %v2755, %v2751
    %v2816 = vpack.c.b16 %v2756, %v2752
    %v2817 = vpack.c.b16 %v2757, %v2753
    %v2818 = vpack.c.b16 %v2758, %v2754
    %v2819 = vpack.c.b16 %v2763, %v2759
    %v2820 = vpack.c.b16 %v2764, %v2760
    %v2821 = vpack.c.b16 %v2765, %v2761
    %v2822 = vpack.c.b16 %v2766, %v2762
    %v2823 = vpack.c.b16 %v2771, %v2767
    %v2824 = vpack.c.b16 %v2772, %v2768
    %v2825 = vpack.c.b16 %v2773, %v2769
    %v2826 = vpack.c.b16 %v2774, %v2770
    %v2827 = vpack.c.b16 %v2779, %v2775
    %v2828 = vpack.c.b16 %v2780, %v2776
    %v2829 = vpack.c.b16 %v2781, %v2777
    %v2830 = vpack.c.b16 %v2782, %v2778
    %v2831 = vpack.c.b16 %v2787, %v2783
    %v2832 = vpack.c.b16 %v2788, %v2784
    %v2833 = vpack.c.b16 %v2789, %v2785
    %v2834 = vpack.c.b16 %v2790, %v2786
    %v2835 = vpack.c.b16 %v2795, %v2791
    %v2836 = vpack.c.b16 %v2796, %v2792
    %v2837 = vpack.c.b16 %v2797, %v2793
    %v2838 = vpack.c.b16 %v2798, %v2794
    %v2839 = vpack.c.b16 %v2803, %v2799
    %v2840 = vpack.c.b16 %v2804, %v2800
    %v2841 = vpack.c.b16 %v2805, %v2801
    %v2842 = vpack.c.b16 %v2806, %v2802
    %v2843 = vpack.c.b16 %v2811, %v2807
    %v2844 = vpack.c.b16 %v2812, %v2808
    %v2845 = vpack.c.b16 %v2813, %v2809
    %v2846 = vpack.c.b16 %v2814, %v2810
    %2879 = vmatprep.subr.bf16.mxu0 %v2816
    %2880 = vmatpush1.bf16.msra.mxu0 %v2815
    %2881 = vmatprep.subr.bf16.mxu0 %v2820
    %2882 = vmatpush1.bf16.msra.mxu0 %v2819
    %2883 = vmatprep.subr.bf16.mxu0 %v2824
    %2884 = vmatpush1.bf16.msra.mxu0 %v2823
    %2885 = vmatprep.subr.bf16.mxu0 %v2828
    %2886 = vmatpush1.bf16.msra.mxu0 %v2827
    %2887 = vmatprep.subr.bf16.mxu0 %v2832
    %2888 = vmatpush1.bf16.msra.mxu0 %v2831
    %2889 = vmatprep.subr.bf16.mxu0 %v2836
    %2890 = vmatpush1.bf16.msra.mxu0 %v2835
    %2891 = vmatprep.subr.bf16.mxu0 %v2840
    %2892 = vmatpush1.bf16.msra.mxu0 %v2839
    %2893 = vmatprep.subr.bf16.mxu0 %v2844
    %2894 = vmatpush1.bf16.msra.mxu0 %v2843
    %2895 = vmatprep.subr.bf16.mxu0 0
    %2896 = vmatpush1.bf16.msra.mxu0 0
    %2897 = vmatprep.subr.bf16.mxu0 0
    %2898 = vmatpush1.bf16.msra.mxu0 0
    %2899 = vmatprep.subr.bf16.mxu0 0
    %2900 = vmatpush1.bf16.msra.mxu0 0
    %2901 = vmatprep.subr.bf16.mxu0 0
    %2902 = vmatpush1.bf16.msra.mxu0 0
    %2903 = vmatprep.subr.bf16.mxu0 0
    %2904 = vmatpush1.bf16.msra.mxu0 0
    %2905 = vmatprep.subr.bf16.mxu0 0
    %2906 = vmatpush1.bf16.msra.mxu0 0
    %2907 = vmatprep.subr.bf16.mxu0 0
    %2908 = vmatpush1.bf16.msra.mxu0 0
    %2909 = vmatprep.subr.bf16.mxu0 0
    %2910 = vmatpush1.bf16.msra.mxu0 0
    %2911 = vmatprep.mubr.bf16.mxu0 0
    %2912 = vmatmul.mubr.bf16.gmra.mrb[0].mxu0 %v2686
    %v2913 = vpop.f32.mrb[0].mxu0
    %v2914 = vadd.f32 0.0, %v2913
    %v2915 = vpop.f32.mrb[0].mxu0
    %v2916 = vadd.f32 0.0, %v2915
    %v2917 = vpop.f32.mrb[0].mxu0
    %v2918 = vpop.f32.mrb[0].mxu0
    %2919 = vdwg.mxu0
    %2920 = vmatprep.subr.bf16.mxu0 %v2818
    %2921 = vmatpush1.bf16.msra.mxu0 %v2817
    %2922 = vmatprep.subr.bf16.mxu0 %v2822
    %2923 = vmatpush1.bf16.msra.mxu0 %v2821
    %2924 = vmatprep.subr.bf16.mxu0 %v2826
    %2925 = vmatpush1.bf16.msra.mxu0 %v2825
    %2926 = vmatprep.subr.bf16.mxu0 %v2830
    %2927 = vmatpush1.bf16.msra.mxu0 %v2829
    %2928 = vmatprep.subr.bf16.mxu0 %v2834
    %2929 = vmatpush1.bf16.msra.mxu0 %v2833
    %2930 = vmatprep.subr.bf16.mxu0 %v2838
    %2931 = vmatpush1.bf16.msra.mxu0 %v2837
    %2932 = vmatprep.subr.bf16.mxu0 %v2842
    %2933 = vmatpush1.bf16.msra.mxu0 %v2841
    %2934 = vmatprep.subr.bf16.mxu0 %v2846
    %2935 = vmatpush1.bf16.msra.mxu0 %v2845
    %2936 = vmatprep.subr.bf16.mxu0 0
    %2937 = vmatpush1.bf16.msra.mxu0 0
    %2938 = vmatprep.subr.bf16.mxu0 0
    %2939 = vmatpush1.bf16.msra.mxu0 0
    %2940 = vmatprep.subr.bf16.mxu0 0
    %2941 = vmatpush1.bf16.msra.mxu0 0
    %2942 = vmatprep.subr.bf16.mxu0 0
    %2943 = vmatpush1.bf16.msra.mxu0 0
    %2944 = vmatprep.subr.bf16.mxu0 0
    %2945 = vmatpush1.bf16.msra.mxu0 0
    %2946 = vmatprep.subr.bf16.mxu0 0
    %2947 = vmatpush1.bf16.msra.mxu0 0
    %2948 = vmatprep.subr.bf16.mxu0 0
    %2949 = vmatpush1.bf16.msra.mxu0 0
    %2950 = vmatprep.subr.bf16.mxu0 0
    %2951 = vmatpush1.bf16.msra.mxu0 0
    %2952 = vmatprep.mubr.bf16.mxu0 0
    %2953 = vmatmul.mubr.bf16.gmra.mrb[0].mxu0 %v2686
    %v2954 = vpop.f32.mrb[0].mxu0
    %v2955 = vadd.f32 0.0, %v2954
    %v2956 = vpop.f32.mrb[0].mxu0
    %v2957 = vadd.f32 0.0, %v2956
    %v2958 = vpop.f32.mrb[0].mxu0
    %v2959 = vpop.f32.mrb[0].mxu0
    %2960 = vdwg.mxu0
    %v2961 = vadd.f32 %v2681, %v2914
    %v2962 = vadd.f32 %v2682, %v2916
    %v2963 = vadd.f32 %v2683, %v2955
    %v2964 = vadd.f32 %v2684, %v2957
    %v2965 = vxor.u32 %v2961, 2147483648
    %v2966 = vmul.f32 %v2965, 1.442695
    %v2967 = vpow.pop %v2966
    %v2968 = vadd.f32 %v2967, 1.0
    %v2969 = vrcp.pop %v2968
    %v2970 = vmul.f32 1.0, %v2969
    %v2971 = vxor.u32 %v2962, 2147483648
    %v2972 = vmul.f32 %v2971, 1.442695
    %v2973 = vpow.pop %v2972
    %v2974 = vadd.f32 %v2973, 1.0
    %v2975 = vrcp.pop %v2974
    %v2976 = vmul.f32 1.0, %v2975
    %v2977 = vtanh.pop %v2963
    %v2978 = vxor.u32 %v2964, 2147483648
    %v2979 = vmul.f32 %v2978, 1.442695
    %v2980 = vpow.pop %v2979
    %v2981 = vadd.f32 %v2980, 1.0
    %v2982 = vrcp.pop %v2981
    %v2983 = vmul.f32 1.0, %v2982
    %v2984 = vld [vmem:[#allocation5] sm:$0xff]
    %v2985 = vmul.f32 %v2976, %v2984
    %v2986 = vmul.f32 %v2970, %v2977
    %v2987 = vadd.f32 %v2985, %v2986
    %v2988 = vtanh.pop %v2987
    %v2989 = vmul.f32 %v2983, %v2988
    %2990 = vst [vmem:[#allocation5] sm:$0xff] %v2987
    %2991 = vst [vmem:[#allocation4] sm:$0xff] %v2989
    %2992 = vst [vmem:[#allocation3 + $0x38] sm:$0xff] %v2989
    %v2993 = vld [vmem:[#allocation3] sm:$0xff]
    %v2994 = vld [vmem:[#allocation3 + $0x8] sm:$0xff]
    %v2995 = vld [vmem:[#allocation3 + $0x10] sm:$0xff]
    %v2996 = vld [vmem:[#allocation3 + $0x18] sm:$0xff]
    %v2997 = vld [vmem:[#allocation3 + $0x20] sm:$0xff]
    %v2998 = vld [vmem:[#allocation3 + $0x28] sm:$0xff]
    %v2999 = vld [vmem:[#allocation3 + $0x30] sm:$0xff]
    %v3000 = vld [vmem:[#allocation3 + $0x38] sm:$0xff]
    %v3001 = vpack.c.bf16 %v2994, %v2993
    %v3002 = vpack.c.bf16 %v2996, %v2995
    %v3003 = vpack.c.bf16 %v2998, %v2997
    %v3004 = vpack.c.bf16 %v3000, %v2999
    %s3005 = scalar_lea.vmem [#allocation6], 256
    %v3006 = vld [vmem:[%s3005] sm:$0xff]
    %v3007 = vld [vmem:[%s3005 + $0x8] sm:$0xff]
    %v3008 = vld [vmem:[%s3005 + $0x10] sm:$0xff]
    %v3009 = vld [vmem:[%s3005 + $0x18] sm:$0xff]
    %v3010 = vld [vmem:[%s3005 + $0x20] sm:$0xff]
    %v3011 = vld [vmem:[%s3005 + $0x28] sm:$0xff]
    %v3012 = vld [vmem:[%s3005 + $0x30] sm:$0xff]
    %v3013 = vld [vmem:[%s3005 + $0x38] sm:$0xff]
    %v3014 = vld [vmem:[%s3005 + $0x40] sm:$0xff]
    %v3015 = vld [vmem:[%s3005 + $0x48] sm:$0xff]
    %v3016 = vld [vmem:[%s3005 + $0x50] sm:$0xff]
    %v3017 = vld [vmem:[%s3005 + $0x58] sm:$0xff]
    %v3018 = vld [vmem:[%s3005 + $0x60] sm:$0xff]
    %v3019 = vld [vmem:[%s3005 + $0x68] sm:$0xff]
    %v3020 = vld [vmem:[%s3005 + $0x70] sm:$0xff]
    %v3021 = vld [vmem:[%s3005 + $0x78] sm:$0xff]
    %v3022 = vld [vmem:[%s3005 + $0x80] sm:$0xff]
    %v3023 = vld [vmem:[%s3005 + $0x88] sm:$0xff]
    %v3024 = vld [vmem:[%s3005 + $0x90] sm:$0xff]
    %v3025 = vld [vmem:[%s3005 + $0x98] sm:$0xff]
    %v3026 = vld [vmem:[%s3005 + $0xa0] sm:$0xff]
    %v3027 = vld [vmem:[%s3005 + $0xa8] sm:$0xff]
    %v3028 = vld [vmem:[%s3005 + $0xb0] sm:$0xff]
    %v3029 = vld [vmem:[%s3005 + $0xb8] sm:$0xff]
    %v3030 = vld [vmem:[%s3005 + $0xc0] sm:$0xff]
    %v3031 = vld [vmem:[%s3005 + $0xc8] sm:$0xff]
    %v3032 = vld [vmem:[%s3005 + $0xd0] sm:$0xff]
    %v3033 = vld [vmem:[%s3005 + $0xd8] sm:$0xff]
    %v3034 = vld [vmem:[%s3005 + $0xe0] sm:$0xff]
    %v3035 = vld [vmem:[%s3005 + $0xe8] sm:$0xff]
    %v3036 = vld [vmem:[%s3005 + $0xf0] sm:$0xff]
    %v3037 = vld [vmem:[%s3005 + $0xf8] sm:$0xff]
    %s3038 = scalar_lea.vmem %s3, 4
    %v3039 = vld [vmem:[%s3038] sm:$0xf]
    %v3041 = vlaneseq
    %v3042 = vshrl.u32 %v3041, 7
    %v3043 = vsub.s32 0, %v3042
    %v3044 = vrot.slane %v3039, %v3043
    %v3045 = vlaneseq
    %v3046 = vshrl.u32 %v3045, 7
    %v3047 = vsub.s32 1, %v3046
    %v3048 = vrot.slane %v3039, %v3047
    %v3049 = vlaneseq
    %v3050 = vshrl.u32 %v3049, 7
    %v3051 = vsub.s32 2, %v3050
    %v3052 = vrot.slane %v3039, %v3051
    %v3053 = vlaneseq
    %v3054 = vshrl.u32 %v3053, 7
    %v3055 = vsub.s32 3, %v3054
    %v3056 = vrot.slane %v3039, %v3055
    %v3093 = vunpack.c.l.b16 %v3006
    %v3094 = vunpack.c.h.b16 %v3006
    %v3095 = vunpack.c.l.b16 %v3007
    %v3096 = vunpack.c.h.b16 %v3007
    %v3097 = vunpack.c.l.b16 %v3008
    %v3098 = vunpack.c.h.b16 %v3008
    %v3099 = vunpack.c.l.b16 %v3009
    %v3100 = vunpack.c.h.b16 %v3009
    %v3101 = vunpack.c.l.b16 %v3010
    %v3102 = vunpack.c.h.b16 %v3010
    %v3103 = vunpack.c.l.b16 %v3011
    %v3104 = vunpack.c.h.b16 %v3011
    %v3105 = vunpack.c.l.b16 %v3012
    %v3106 = vunpack.c.h.b16 %v3012
    %v3107 = vunpack.c.l.b16 %v3013
    %v3108 = vunpack.c.h.b16 %v3013
    %v3109 = vunpack.c.l.b16 %v3014
    %v3110 = vunpack.c.h.b16 %v3014
    %v3111 = vunpack.c.l.b16 %v3015
    %v3112 = vunpack.c.h.b16 %v3015
    %v3113 = vunpack.c.l.b16 %v3016
    %v3114 = vunpack.c.h.b16 %v3016
    %v3115 = vunpack.c.l.b16 %v3017
    %v3116 = vunpack.c.h.b16 %v3017
    %v3117 = vunpack.c.l.b16 %v3018
    %v3118 = vunpack.c.h.b16 %v3018
    %v3119 = vunpack.c.l.b16 %v3019
    %v3120 = vunpack.c.h.b16 %v3019
    %v3121 = vunpack.c.l.b16 %v3020
    %v3122 = vunpack.c.h.b16 %v3020
    %v3123 = vunpack.c.l.b16 %v3021
    %v3124 = vunpack.c.h.b16 %v3021
    %v3125 = vunpack.c.l.b16 %v3022
    %v3126 = vunpack.c.h.b16 %v3022
    %v3127 = vunpack.c.l.b16 %v3023
    %v3128 = vunpack.c.h.b16 %v3023
    %v3129 = vunpack.c.l.b16 %v3024
    %v3130 = vunpack.c.h.b16 %v3024
    %v3131 = vunpack.c.l.b16 %v3025
    %v3132 = vunpack.c.h.b16 %v3025
    %v3133 = vunpack.c.l.b16 %v3026
    %v3134 = vunpack.c.h.b16 %v3026
    %v3135 = vunpack.c.l.b16 %v3027
    %v3136 = vunpack.c.h.b16 %v3027
    %v3137 = vunpack.c.l.b16 %v3028
    %v3138 = vunpack.c.h.b16 %v3028
    %v3139 = vunpack.c.l.b16 %v3029
    %v3140 = vunpack.c.h.b16 %v3029
    %v3141 = vunpack.c.l.b16 %v3030
    %v3142 = vunpack.c.h.b16 %v3030
    %v3143 = vunpack.c.l.b16 %v3031
    %v3144 = vunpack.c.h.b16 %v3031
    %v3145 = vunpack.c.l.b16 %v3032
    %v3146 = vunpack.c.h.b16 %v3032
    %v3147 = vunpack.c.l.b16 %v3033
    %v3148 = vunpack.c.h.b16 %v3033
    %v3149 = vunpack.c.l.b16 %v3034
    %v3150 = vunpack.c.h.b16 %v3034
    %v3151 = vunpack.c.l.b16 %v3035
    %v3152 = vunpack.c.h.b16 %v3035
    %v3153 = vunpack.c.l.b16 %v3036
    %v3154 = vunpack.c.h.b16 %v3036
    %v3155 = vunpack.c.l.b16 %v3037
    %v3156 = vunpack.c.h.b16 %v3037
    %v3157 = vpack.c.b16 %v3097, %v3093
    %v3158 = vpack.c.b16 %v3098, %v3094
    %v3159 = vpack.c.b16 %v3099, %v3095
    %v3160 = vpack.c.b16 %v3100, %v3096
    %v3161 = vpack.c.b16 %v3105, %v3101
    %v3162 = vpack.c.b16 %v3106, %v3102
    %v3163 = vpack.c.b16 %v3107, %v3103
    %v3164 = vpack.c.b16 %v3108, %v3104
    %v3165 = vpack.c.b16 %v3113, %v3109
    %v3166 = vpack.c.b16 %v3114, %v3110
    %v3167 = vpack.c.b16 %v3115, %v3111
    %v3168 = vpack.c.b16 %v3116, %v3112
    %v3169 = vpack.c.b16 %v3121, %v3117
    %v3170 = vpack.c.b16 %v3122, %v3118
    %v3171 = vpack.c.b16 %v3123, %v3119
    %v3172 = vpack.c.b16 %v3124, %v3120
    %v3173 = vpack.c.b16 %v3129, %v3125
    %v3174 = vpack.c.b16 %v3130, %v3126
    %v3175 = vpack.c.b16 %v3131, %v3127
    %v3176 = vpack.c.b16 %v3132, %v3128
    %v3177 = vpack.c.b16 %v3137, %v3133
    %v3178 = vpack.c.b16 %v3138, %v3134
    %v3179 = vpack.c.b16 %v3139, %v3135
    %v3180 = vpack.c.b16 %v3140, %v3136
    %v3181 = vpack.c.b16 %v3145, %v3141
    %v3182 = vpack.c.b16 %v3146, %v3142
    %v3183 = vpack.c.b16 %v3147, %v3143
    %v3184 = vpack.c.b16 %v3148, %v3144
    %v3185 = vpack.c.b16 %v3153, %v3149
    %v3186 = vpack.c.b16 %v3154, %v3150
    %v3187 = vpack.c.b16 %v3155, %v3151
    %v3188 = vpack.c.b16 %v3156, %v3152
    %3221 = vmatprep.subr.bf16.mxu0 %v3158
    %3222 = vmatpush1.bf16.msra.mxu0 %v3157
    %3223 = vmatprep.subr.bf16.mxu0 %v3162
    %3224 = vmatpush1.bf16.msra.mxu0 %v3161
    %3225 = vmatprep.subr.bf16.mxu0 %v3166
    %3226 = vmatpush1.bf16.msra.mxu0 %v3165
    %3227 = vmatprep.subr.bf16.mxu0 %v3170
    %3228 = vmatpush1.bf16.msra.mxu0 %v3169
    %3229 = vmatprep.subr.bf16.mxu0 %v3174
    %3230 = vmatpush1.bf16.msra.mxu0 %v3173
    %3231 = vmatprep.subr.bf16.mxu0 %v3178
    %3232 = vmatpush1.bf16.msra.mxu0 %v3177
    %3233 = vmatprep.subr.bf16.mxu0 %v3182
    %3234 = vmatpush1.bf16.msra.mxu0 %v3181
    %3235 = vmatprep.subr.bf16.mxu0 %v3186
    %3236 = vmatpush1.bf16.msra.mxu0 %v3185
    %3237 = vmatprep.subr.bf16.mxu0 0
    %3238 = vmatpush1.bf16.msra.mxu0 0
    %3239 = vmatprep.subr.bf16.mxu0 0
    %3240 = vmatpush1.bf16.msra.mxu0 0
    %3241 = vmatprep.subr.bf16.mxu0 0
    %3242 = vmatpush1.bf16.msra.mxu0 0
    %3243 = vmatprep.subr.bf16.mxu0 0
    %3244 = vmatpush1.bf16.msra.mxu0 0
    %3245 = vmatprep.subr.bf16.mxu0 0
    %3246 = vmatpush1.bf16.msra.mxu0 0
    %3247 = vmatprep.subr.bf16.mxu0 0
    %3248 = vmatpush1.bf16.msra.mxu0 0
    %3249 = vmatprep.subr.bf16.mxu0 0
    %3250 = vmatpush1.bf16.msra.mxu0 0
    %3251 = vmatprep.subr.bf16.mxu0 0
    %3252 = vmatpush1.bf16.msra.mxu0 0
    %3253 = vmatprep.mubr.bf16.mxu0 0
    %3254 = vmatmul.mubr.bf16.gmra.mrb[0].mxu0 %v3001
    %v3255 = vpop.f32.mrb[0].mxu0
    %v3256 = vadd.f32 %v3044, %v3255
    %v3257 = vpop.f32.mrb[0].mxu0
    %v3258 = vadd.f32 %v3048, %v3257
    %v3259 = vpop.f32.mrb[0].mxu0
    %v3260 = vadd.f32 %v3044, %v3259
    %v3261 = vpop.f32.mrb[0].mxu0
    %v3262 = vadd.f32 %v3048, %v3261
    %3263 = vmatprep.mubr.bf16.mxu0 0
    %3264 = vmatmul.mubr.bf16.gmra.mrb[0].mxu0 %v3002
    %v3265 = vpop.f32.mrb[0].mxu0
    %v3266 = vadd.f32 %v3044, %v3265
    %v3267 = vpop.f32.mrb[0].mxu0
    %v3268 = vadd.f32 %v3048, %v3267
    %v3269 = vpop.f32.mrb[0].mxu0
    %v3270 = vadd.f32 %v3044, %v3269
    %v3271 = vpop.f32.mrb[0].mxu0
    %v3272 = vadd.f32 %v3048, %v3271
    %3273 = vmatprep.mubr.bf16.mxu0 0
    %3274 = vmatmul.mubr.bf16.gmra.mrb[0].mxu0 %v3003
    %v3275 = vpop.f32.mrb[0].mxu0
    %v3276 = vadd.f32 %v3044, %v3275
    %v3277 = vpop.f32.mrb[0].mxu0
    %v3278 = vadd.f32 %v3048, %v3277
    %v3279 = vpop.f32.mrb[0].mxu0
    %v3280 = vadd.f32 %v3044, %v3279
    %v3281 = vpop.f32.mrb[0].mxu0
    %v3282 = vadd.f32 %v3048, %v3281
    %3283 = vmatprep.mubr.bf16.mxu0 0
    %3284 = vmatmul.mubr.bf16.gmra.mrb[0].mxu0 %v3004
    %v3285 = vpop.f32.mrb[0].mxu0
    %v3286 = vadd.f32 %v3044, %v3285
    %v3287 = vpop.f32.mrb[0].mxu0
    %v3288 = vadd.f32 %v3048, %v3287
    %v3289 = vpop.f32.mrb[0].mxu0
    %v3290 = vadd.f32 %v3044, %v3289
    %v3291 = vpop.f32.mrb[0].mxu0
    %v3292 = vadd.f32 %v3048, %v3291
    %3293 = vdwg.mxu0
    %3294 = vmatprep.subr.bf16.mxu0 %v3160
    %3295 = vmatpush1.bf16.msra.mxu0 %v3159
    %3296 = vmatprep.subr.bf16.mxu0 %v3164
    %3297 = vmatpush1.bf16.msra.mxu0 %v3163
    %3298 = vmatprep.subr.bf16.mxu0 %v3168
    %3299 = vmatpush1.bf16.msra.mxu0 %v3167
    %3300 = vmatprep.subr.bf16.mxu0 %v3172
    %3301 = vmatpush1.bf16.msra.mxu0 %v3171
    %3302 = vmatprep.subr.bf16.mxu0 %v3176
    %3303 = vmatpush1.bf16.msra.mxu0 %v3175
    %3304 = vmatprep.subr.bf16.mxu0 %v3180
    %3305 = vmatpush1.bf16.msra.mxu0 %v3179
    %3306 = vmatprep.subr.bf16.mxu0 %v3184
    %3307 = vmatpush1.bf16.msra.mxu0 %v3183
    %3308 = vmatprep.subr.bf16.mxu0 %v3188
    %3309 = vmatpush1.bf16.msra.mxu0 %v3187
    %3310 = vmatprep.subr.bf16.mxu0 0
    %3311 = vmatpush1.bf16.msra.mxu0 0
    %3312 = vmatprep.subr.bf16.mxu0 0
    %3313 = vmatpush1.bf16.msra.mxu0 0
    %3314 = vmatprep.subr.bf16.mxu0 0
    %3315 = vmatpush1.bf16.msra.mxu0 0
    %3316 = vmatprep.subr.bf16.mxu0 0
    %3317 = vmatpush1.bf16.msra.mxu0 0
    %3318 = vmatprep.subr.bf16.mxu0 0
    %3319 = vmatpush1.bf16.msra.mxu0 0
    %3320 = vmatprep.subr.bf16.mxu0 0
    %3321 = vmatpush1.bf16.msra.mxu0 0
    %3322 = vmatprep.subr.bf16.mxu0 0
    %3323 = vmatpush1.bf16.msra.mxu0 0
    %3324 = vmatprep.subr.bf16.mxu0 0
    %3325 = vmatpush1.bf16.msra.mxu0 0
    %3326 = vmatprep.mubr.bf16.mxu0 0
    %3327 = vmatmul.mubr.bf16.gmra.mrb[0].mxu0 %v3001
    %v3328 = vpop.f32.mrb[0].mxu0
    %v3329 = vadd.f32 %v3052, %v3328
    %v3330 = vpop.f32.mrb[0].mxu0
    %v3331 = vadd.f32 %v3056, %v3330
    %v3332 = vpop.f32.mrb[0].mxu0
    %v3333 = vadd.f32 %v3052, %v3332
    %v3334 = vpop.f32.mrb[0].mxu0
    %v3335 = vadd.f32 %v3056, %v3334
    %3336 = vmatprep.mubr.bf16.mxu0 0
    %3337 = vmatmul.mubr.bf16.gmra.mrb[0].mxu0 %v3002
    %v3338 = vpop.f32.mrb[0].mxu0
    %v3339 = vadd.f32 %v3052, %v3338
    %v3340 = vpop.f32.mrb[0].mxu0
    %v3341 = vadd.f32 %v3056, %v3340
    %v3342 = vpop.f32.mrb[0].mxu0
    %v3343 = vadd.f32 %v3052, %v3342
    %v3344 = vpop.f32.mrb[0].mxu0
    %v3345 = vadd.f32 %v3056, %v3344
    %3346 = vmatprep.mubr.bf16.mxu0 0
    %3347 = vmatmul.mubr.bf16.gmra.mrb[0].mxu0 %v3003
    %v3348 = vpop.f32.mrb[0].mxu0
    %v3349 = vadd.f32 %v3052, %v3348
    %v3350 = vpop.f32.mrb[0].mxu0
    %v3351 = vadd.f32 %v3056, %v3350
    %v3352 = vpop.f32.mrb[0].mxu0
    %v3353 = vadd.f32 %v3052, %v3352
    %v3354 = vpop.f32.mrb[0].mxu0
    %v3355 = vadd.f32 %v3056, %v3354
    %3356 = vmatprep.mubr.bf16.mxu0 0
    %3357 = vmatmul.mubr.bf16.gmra.mrb[0].mxu0 %v3004
    %v3358 = vpop.f32.mrb[0].mxu0
    %v3359 = vadd.f32 %v3052, %v3358
    %v3360 = vpop.f32.mrb[0].mxu0
    %v3361 = vadd.f32 %v3056, %v3360
    %v3362 = vpop.f32.mrb[0].mxu0
    %v3363 = vadd.f32 %v3052, %v3362
    %v3364 = vpop.f32.mrb[0].mxu0
    %v3365 = vadd.f32 %v3056, %v3364
    %3366 = vdwg.mxu0
    %3367 = vst [vmem:[#allocation2] sm:$0xff] %v3256
    %3368 = vst [vmem:[#allocation2 + $0x8] sm:$0xff] %v3258
    %3369 = vst [vmem:[#allocation2 + $0x10] sm:$0xff] %v3329
    %3370 = vst [vmem:[#allocation2 + $0x18] sm:$0xff] %v3331
    %3371 = vst [vmem:[#allocation2 + $0x20] sm:$0xff] %v3260
    %3372 = vst [vmem:[#allocation2 + $0x28] sm:$0xff] %v3262
    %3373 = vst [vmem:[#allocation2 + $0x30] sm:$0xff] %v3333
    %3374 = vst [vmem:[#allocation2 + $0x38] sm:$0xff] %v3335
    %3375 = vst [vmem:[#allocation2 + $0x40] sm:$0xff] %v3266
    %3376 = vst [vmem:[#allocation2 + $0x48] sm:$0xff] %v3268
    %3377 = vst [vmem:[#allocation2 + $0x50] sm:$0xff] %v3339
    %3378 = vst [vmem:[#allocation2 + $0x58] sm:$0xff] %v3341
    %3379 = vst [vmem:[#allocation2 + $0x60] sm:$0xff] %v3270
    %3380 = vst [vmem:[#allocation2 + $0x68] sm:$0xff] %v3272
    %3381 = vst [vmem:[#allocation2 + $0x70] sm:$0xff] %v3343
    %3382 = vst [vmem:[#allocation2 + $0x78] sm:$0xff] %v3345
    %3383 = vst [vmem:[#allocation2 + $0x80] sm:$0xff] %v3276
    %3384 = vst [vmem:[#allocation2 + $0x88] sm:$0xff] %v3278
    %3385 = vst [vmem:[#allocation2 + $0x90] sm:$0xff] %v3349
    %3386 = vst [vmem:[#allocation2 + $0x98] sm:$0xff] %v3351
    %3387 = vst [vmem:[#allocation2 + $0xa0] sm:$0xff] %v3280
    %3388 = vst [vmem:[#allocation2 + $0xa8] sm:$0xff] %v3282
    %3389 = vst [vmem:[#allocation2 + $0xb0] sm:$0xff] %v3353
    %3390 = vst [vmem:[#allocation2 + $0xb8] sm:$0xff] %v3355
    %3391 = vst [vmem:[#allocation2 + $0xc0] sm:$0xff] %v3286
    %3392 = vst [vmem:[#allocation2 + $0xc8] sm:$0xff] %v3288
    %3393 = vst [vmem:[#allocation2 + $0xd0] sm:$0xff] %v3359
    %3394 = vst [vmem:[#allocation2 + $0xd8] sm:$0xff] %v3361
    %3395 = vst [vmem:[#allocation2 + $0xe0] sm:$0xff] %v3290
    %3396 = vst [vmem:[#allocation2 + $0xe8] sm:$0xff] %v3292
    %3397 = vst [vmem:[#allocation2 + $0xf0] sm:$0xff] %v3363
    %3398 = vst [vmem:[#allocation2 + $0xf8] sm:$0xff] %v3365
    %3399 = vst [vmem:[#allocation4] sm:$0xff] 0.0
    %3400 = vst [vmem:[#allocation5] sm:$0xff] 0.0
    %v3401 = vld [vmem:[#allocation2] sm:$0xff]
    %v3402 = vld [vmem:[#allocation2 + $0x8] sm:$0xff]
    %v3403 = vld [vmem:[#allocation2 + $0x10] sm:$0xff]
    %v3404 = vld [vmem:[#allocation2 + $0x18] sm:$0xff]
    %v3405 = vld [vmem:[#allocation4] sm:$0xff]
    %v3406 = vpack.c.bf16 %v3405, %v3405
    %s3407 = scalar_lea.vmem [#allocation8], 256
    %v3408 = vld [vmem:[%s3407] sm:$0xff]
    %v3409 = vld [vmem:[%s3407 + $0x8] sm:$0xff]
    %v3410 = vld [vmem:[%s3407 + $0x10] sm:$0xff]
    %v3411 = vld [vmem:[%s3407 + $0x18] sm:$0xff]
    %v3412 = vld [vmem:[%s3407 + $0x20] sm:$0xff]
    %v3413 = vld [vmem:[%s3407 + $0x28] sm:$0xff]
    %v3414 = vld [vmem:[%s3407 + $0x30] sm:$0xff]
    %v3415 = vld [vmem:[%s3407 + $0x38] sm:$0xff]
    %v3416 = vld [vmem:[%s3407 + $0x40] sm:$0xff]
    %v3417 = vld [vmem:[%s3407 + $0x48] sm:$0xff]
    %v3418 = vld [vmem:[%s3407 + $0x50] sm:$0xff]
    %v3419 = vld [vmem:[%s3407 + $0x58] sm:$0xff]
    %v3420 = vld [vmem:[%s3407 + $0x60] sm:$0xff]
    %v3421 = vld [vmem:[%s3407 + $0x68] sm:$0xff]
    %v3422 = vld [vmem:[%s3407 + $0x70] sm:$0xff]
    %v3423 = vld [vmem:[%s3407 + $0x78] sm:$0xff]
    %v3424 = vld [vmem:[%s3407 + $0x80] sm:$0xff]
    %v3425 = vld [vmem:[%s3407 + $0x88] sm:$0xff]
    %v3426 = vld [vmem:[%s3407 + $0x90] sm:$0xff]
    %v3427 = vld [vmem:[%s3407 + $0x98] sm:$0xff]
    %v3428 = vld [vmem:[%s3407 + $0xa0] sm:$0xff]
    %v3429 = vld [vmem:[%s3407 + $0xa8] sm:$0xff]
    %v3430 = vld [vmem:[%s3407 + $0xb0] sm:$0xff]
    %v3431 = vld [vmem:[%s3407 + $0xb8] sm:$0xff]
    %v3432 = vld [vmem:[%s3407 + $0xc0] sm:$0xff]
    %v3433 = vld [vmem:[%s3407 + $0xc8] sm:$0xff]
    %v3434 = vld [vmem:[%s3407 + $0xd0] sm:$0xff]
    %v3435 = vld [vmem:[%s3407 + $0xd8] sm:$0xff]
    %v3436 = vld [vmem:[%s3407 + $0xe0] sm:$0xff]
    %v3437 = vld [vmem:[%s3407 + $0xe8] sm:$0xff]
    %v3438 = vld [vmem:[%s3407 + $0xf0] sm:$0xff]
    %v3439 = vld [vmem:[%s3407 + $0xf8] sm:$0xff]
    %v3472 = vunpack.c.l.b16 %v3408
    %v3473 = vunpack.c.h.b16 %v3408
    %v3474 = vunpack.c.l.b16 %v3409
    %v3475 = vunpack.c.h.b16 %v3409
    %v3476 = vunpack.c.l.b16 %v3410
    %v3477 = vunpack.c.h.b16 %v3410
    %v3478 = vunpack.c.l.b16 %v3411
    %v3479 = vunpack.c.h.b16 %v3411
    %v3480 = vunpack.c.l.b16 %v3412
    %v3481 = vunpack.c.h.b16 %v3412
    %v3482 = vunpack.c.l.b16 %v3413
    %v3483 = vunpack.c.h.b16 %v3413
    %v3484 = vunpack.c.l.b16 %v3414
    %v3485 = vunpack.c.h.b16 %v3414
    %v3486 = vunpack.c.l.b16 %v3415
    %v3487 = vunpack.c.h.b16 %v3415
    %v3488 = vunpack.c.l.b16 %v3416
    %v3489 = vunpack.c.h.b16 %v3416
    %v3490 = vunpack.c.l.b16 %v3417
    %v3491 = vunpack.c.h.b16 %v3417
    %v3492 = vunpack.c.l.b16 %v3418
    %v3493 = vunpack.c.h.b16 %v3418
    %v3494 = vunpack.c.l.b16 %v3419
    %v3495 = vunpack.c.h.b16 %v3419
    %v3496 = vunpack.c.l.b16 %v3420
    %v3497 = vunpack.c.h.b16 %v3420
    %v3498 = vunpack.c.l.b16 %v3421
    %v3499 = vunpack.c.h.b16 %v3421
    %v3500 = vunpack.c.l.b16 %v3422
    %v3501 = vunpack.c.h.b16 %v3422
    %v3502 = vunpack.c.l.b16 %v3423
    %v3503 = vunpack.c.h.b16 %v3423
    %v3504 = vunpack.c.l.b16 %v3424
    %v3505 = vunpack.c.h.b16 %v3424
    %v3506 = vunpack.c.l.b16 %v3425
    %v3507 = vunpack.c.h.b16 %v3425
    %v3508 = vunpack.c.l.b16 %v3426
    %v3509 = vunpack.c.h.b16 %v3426
    %v3510 = vunpack.c.l.b16 %v3427
    %v3511 = vunpack.c.h.b16 %v3427
    %v3512 = vunpack.c.l.b16 %v3428
    %v3513 = vunpack.c.h.b16 %v3428
    %v3514 = vunpack.c.l.b16 %v3429
    %v3515 = vunpack.c.h.b16 %v3429
    %v3516 = vunpack.c.l.b16 %v3430
    %v3517 = vunpack.c.h.b16 %v3430
    %v3518 = vunpack.c.l.b16 %v3431
    %v3519 = vunpack.c.h.b16 %v3431
    %v3520 = vunpack.c.l.b16 %v3432
    %v3521 = vunpack.c.h.b16 %v3432
    %v3522 = vunpack.c.l.b16 %v3433
    %v3523 = vunpack.c.h.b16 %v3433
    %v3524 = vunpack.c.l.b16 %v3434
    %v3525 = vunpack.c.h.b16 %v3434
    %v3526 = vunpack.c.l.b16 %v3435
    %v3527 = vunpack.c.h.b16 %v3435
    %v3528 = vunpack.c.l.b16 %v3436
    %v3529 = vunpack.c.h.b16 %v3436
    %v3530 = vunpack.c.l.b16 %v3437
    %v3531 = vunpack.c.h.b16 %v3437
    %v3532 = vunpack.c.l.b16 %v3438
    %v3533 = vunpack.c.h.b16 %v3438
    %v3534 = vunpack.c.l.b16 %v3439
    %v3535 = vunpack.c.h.b16 %v3439
    %v3536 = vpack.c.b16 %v3476, %v3472
    %v3537 = vpack.c.b16 %v3477, %v3473
    %v3538 = vpack.c.b16 %v3478, %v3474
    %v3539 = vpack.c.b16 %v3479, %v3475
    %v3540 = vpack.c.b16 %v3484, %v3480
    %v3541 = vpack.c.b16 %v3485, %v3481
    %v3542 = vpack.c.b16 %v3486, %v3482
    %v3543 = vpack.c.b16 %v3487, %v3483
    %v3544 = vpack.c.b16 %v3492, %v3488
    %v3545 = vpack.c.b16 %v3493, %v3489
    %v3546 = vpack.c.b16 %v3494, %v3490
    %v3547 = vpack.c.b16 %v3495, %v3491
    %v3548 = vpack.c.b16 %v3500, %v3496
    %v3549 = vpack.c.b16 %v3501, %v3497
    %v3550 = vpack.c.b16 %v3502, %v3498
    %v3551 = vpack.c.b16 %v3503, %v3499
    %v3552 = vpack.c.b16 %v3508, %v3504
    %v3553 = vpack.c.b16 %v3509, %v3505
    %v3554 = vpack.c.b16 %v3510, %v3506
    %v3555 = vpack.c.b16 %v3511, %v3507
    %v3556 = vpack.c.b16 %v3516, %v3512
    %v3557 = vpack.c.b16 %v3517, %v3513
    %v3558 = vpack.c.b16 %v3518, %v3514
    %v3559 = vpack.c.b16 %v3519, %v3515
    %v3560 = vpack.c.b16 %v3524, %v3520
    %v3561 = vpack.c.b16 %v3525, %v3521
    %v3562 = vpack.c.b16 %v3526, %v3522
    %v3563 = vpack.c.b16 %v3527, %v3523
    %v3564 = vpack.c.b16 %v3532, %v3528
    %v3565 = vpack.c.b16 %v3533, %v3529
    %v3566 = vpack.c.b16 %v3534, %v3530
    %v3567 = vpack.c.b16 %v3535, %v3531
    %3600 = vmatprep.subr.bf16.mxu0 %v3537
    %3601 = vmatpush1.bf16.msra.mxu0 %v3536
    %3602 = vmatprep.subr.bf16.mxu0 %v3541
    %3603 = vmatpush1.bf16.msra.mxu0 %v3540
    %3604 = vmatprep.subr.bf16.mxu0 %v3545
    %3605 = vmatpush1.bf16.msra.mxu0 %v3544
    %3606 = vmatprep.subr.bf16.mxu0 %v3549
    %3607 = vmatpush1.bf16.msra.mxu0 %v3548
    %3608 = vmatprep.subr.bf16.mxu0 %v3553
    %3609 = vmatpush1.bf16.msra.mxu0 %v3552
    %3610 = vmatprep.subr.bf16.mxu0 %v3557
    %3611 = vmatpush1.bf16.msra.mxu0 %v3556
    %3612 = vmatprep.subr.bf16.mxu0 %v3561
    %3613 = vmatpush1.bf16.msra.mxu0 %v3560
    %3614 = vmatprep.subr.bf16.mxu0 %v3565
    %3615 = vmatpush1.bf16.msra.mxu0 %v3564
    %3616 = vmatprep.subr.bf16.mxu0 0
    %3617 = vmatpush1.bf16.msra.mxu0 0
    %3618 = vmatprep.subr.bf16.mxu0 0
    %3619 = vmatpush1.bf16.msra.mxu0 0
    %3620 = vmatprep.subr.bf16.mxu0 0
    %3621 = vmatpush1.bf16.msra.mxu0 0
    %3622 = vmatprep.subr.bf16.mxu0 0
    %3623 = vmatpush1.bf16.msra.mxu0 0
    %3624 = vmatprep.subr.bf16.mxu0 0
    %3625 = vmatpush1.bf16.msra.mxu0 0
    %3626 = vmatprep.subr.bf16.mxu0 0
    %3627 = vmatpush1.bf16.msra.mxu0 0
    %3628 = vmatprep.subr.bf16.mxu0 0
    %3629 = vmatpush1.bf16.msra.mxu0 0
    %3630 = vmatprep.subr.bf16.mxu0 0
    %3631 = vmatpush1.bf16.msra.mxu0 0
    %3632 = vmatprep.mubr.bf16.mxu0 0
    %3633 = vmatmul.mubr.bf16.gmra.mrb[0].mxu0 %v3406
    %v3634 = vpop.f32.mrb[0].mxu0
    %v3635 = vadd.f32 0.0, %v3634
    %v3636 = vpop.f32.mrb[0].mxu0
    %v3637 = vadd.f32 0.0, %v3636
    %v3638 = vpop.f32.mrb[0].mxu0
    %v3639 = vpop.f32.mrb[0].mxu0
    %3640 = vdwg.mxu0
    %3641 = vmatprep.subr.bf16.mxu0 %v3539
    %3642 = vmatpush1.bf16.msra.mxu0 %v3538
    %3643 = vmatprep.subr.bf16.mxu0 %v3543
    %3644 = vmatpush1.bf16.msra.mxu0 %v3542
    %3645 = vmatprep.subr.bf16.mxu0 %v3547
    %3646 = vmatpush1.bf16.msra.mxu0 %v3546
    %3647 = vmatprep.subr.bf16.mxu0 %v3551
    %3648 = vmatpush1.bf16.msra.mxu0 %v3550
    %3649 = vmatprep.subr.bf16.mxu0 %v3555
    %3650 = vmatpush1.bf16.msra.mxu0 %v3554
    %3651 = vmatprep.subr.bf16.mxu0 %v3559
    %3652 = vmatpush1.bf16.msra.mxu0 %v3558
    %3653 = vmatprep.subr.bf16.mxu0 %v3563
    %3654 = vmatpush1.bf16.msra.mxu0 %v3562
    %3655 = vmatprep.subr.bf16.mxu0 %v3567
    %3656 = vmatpush1.bf16.msra.mxu0 %v3566
    %3657 = vmatprep.subr.bf16.mxu0 0
    %3658 = vmatpush1.bf16.msra.mxu0 0
    %3659 = vmatprep.subr.bf16.mxu0 0
    %3660 = vmatpush1.bf16.msra.mxu0 0
    %3661 = vmatprep.subr.bf16.mxu0 0
    %3662 = vmatpush1.bf16.msra.mxu0 0
    %3663 = vmatprep.subr.bf16.mxu0 0
    %3664 = vmatpush1.bf16.msra.mxu0 0
    %3665 = vmatprep.subr.bf16.mxu0 0
    %3666 = vmatpush1.bf16.msra.mxu0 0
    %3667 = vmatprep.subr.bf16.mxu0 0
    %3668 = vmatpush1.bf16.msra.mxu0 0
    %3669 = vmatprep.subr.bf16.mxu0 0
    %3670 = vmatpush1.bf16.msra.mxu0 0
    %3671 = vmatprep.subr.bf16.mxu0 0
    %3672 = vmatpush1.bf16.msra.mxu0 0
    %3673 = vmatprep.mubr.bf16.mxu0 0
    %3674 = vmatmul.mubr.bf16.gmra.mrb[0].mxu0 %v3406
    %v3675 = vpop.f32.mrb[0].mxu0
    %v3676 = vadd.f32 0.0, %v3675
    %v3677 = vpop.f32.mrb[0].mxu0
    %v3678 = vadd.f32 0.0, %v3677
    %v3679 = vpop.f32.mrb[0].mxu0
    %v3680 = vpop.f32.mrb[0].mxu0
    %3681 = vdwg.mxu0
    %v3682 = vadd.f32 %v3401, %v3635
    %v3683 = vadd.f32 %v3402, %v3637
    %v3684 = vadd.f32 %v3403, %v3676
    %v3685 = vadd.f32 %v3404, %v3678
    %v3686 = vxor.u32 %v3682, 2147483648
    %v3687 = vmul.f32 %v3686, 1.442695
    %v3688 = vpow.pop %v3687
    %v3689 = vadd.f32 %v3688, 1.0
    %v3690 = vrcp.pop %v3689
    %v3691 = vmul.f32 1.0, %v3690
    %v3692 = vxor.u32 %v3683, 2147483648
    %v3693 = vmul.f32 %v3692, 1.442695
    %v3694 = vpow.pop %v3693
    %v3695 = vadd.f32 %v3694, 1.0
    %v3696 = vrcp.pop %v3695
    %v3697 = vmul.f32 1.0, %v3696
    %v3698 = vtanh.pop %v3684
    %v3699 = vxor.u32 %v3685, 2147483648
    %v3700 = vmul.f32 %v3699, 1.442695
    %v3701 = vpow.pop %v3700
    %v3702 = vadd.f32 %v3701, 1.0
    %v3703 = vrcp.pop %v3702
    %v3704 = vmul.f32 1.0, %v3703
    %v3705 = vld [vmem:[#allocation5] sm:$0xff]
    %v3706 = vmul.f32 %v3697, %v3705
    %v3707 = vmul.f32 %v3691, %v3698
    %v3708 = vadd.f32 %v3706, %v3707
    %v3709 = vtanh.pop %v3708
    %v3710 = vmul.f32 %v3704, %v3709
    %3711 = vst [vmem:[#allocation5] sm:$0xff] %v3708
    %3712 = vst [vmem:[#allocation4] sm:$0xff] %v3710
    %v3713 = vld [vmem:[#allocation2 + $0x20] sm:$0xff]
    %v3714 = vld [vmem:[#allocation2 + $0x28] sm:$0xff]
    %v3715 = vld [vmem:[#allocation2 + $0x30] sm:$0xff]
    %v3716 = vld [vmem:[#allocation2 + $0x38] sm:$0xff]
    %v3717 = vld [vmem:[#allocation4] sm:$0xff]
    %v3718 = vpack.c.bf16 %v3717, %v3717
    %v3719 = vld [vmem:[%s3407] sm:$0xff]
    %v3720 = vld [vmem:[%s3407 + $0x8] sm:$0xff]
    %v3721 = vld [vmem:[%s3407 + $0x10] sm:$0xff]
    %v3722 = vld [vmem:[%s3407 + $0x18] sm:$0xff]
    %v3723 = vld [vmem:[%s3407 + $0x20] sm:$0xff]
    %v3724 = vld [vmem:[%s3407 + $0x28] sm:$0xff]
    %v3725 = vld [vmem:[%s3407 + $0x30] sm:$0xff]
    %v3726 = vld [vmem:[%s3407 + $0x38] sm:$0xff]
    %v3727 = vld [vmem:[%s3407 + $0x40] sm:$0xff]
    %v3728 = vld [vmem:[%s3407 + $0x48] sm:$0xff]
    %v3729 = vld [vmem:[%s3407 + $0x50] sm:$0xff]
    %v3730 = vld [vmem:[%s3407 + $0x58] sm:$0xff]
    %v3731 = vld [vmem:[%s3407 + $0x60] sm:$0xff]
    %v3732 = vld [vmem:[%s3407 + $0x68] sm:$0xff]
    %v3733 = vld [vmem:[%s3407 + $0x70] sm:$0xff]
    %v3734 = vld [vmem:[%s3407 + $0x78] sm:$0xff]
    %v3735 = vld [vmem:[%s3407 + $0x80] sm:$0xff]
    %v3736 = vld [vmem:[%s3407 + $0x88] sm:$0xff]
    %v3737 = vld [vmem:[%s3407 + $0x90] sm:$0xff]
    %v3738 = vld [vmem:[%s3407 + $0x98] sm:$0xff]
    %v3739 = vld [vmem:[%s3407 + $0xa0] sm:$0xff]
    %v3740 = vld [vmem:[%s3407 + $0xa8] sm:$0xff]
    %v3741 = vld [vmem:[%s3407 + $0xb0] sm:$0xff]
    %v3742 = vld [vmem:[%s3407 + $0xb8] sm:$0xff]
    %v3743 = vld [vmem:[%s3407 + $0xc0] sm:$0xff]
    %v3744 = vld [vmem:[%s3407 + $0xc8] sm:$0xff]
    %v3745 = vld [vmem:[%s3407 + $0xd0] sm:$0xff]
    %v3746 = vld [vmem:[%s3407 + $0xd8] sm:$0xff]
    %v3747 = vld [vmem:[%s3407 + $0xe0] sm:$0xff]
    %v3748 = vld [vmem:[%s3407 + $0xe8] sm:$0xff]
    %v3749 = vld [vmem:[%s3407 + $0xf0] sm:$0xff]
    %v3750 = vld [vmem:[%s3407 + $0xf8] sm:$0xff]
    %v3783 = vunpack.c.l.b16 %v3719
    %v3784 = vunpack.c.h.b16 %v3719
    %v3785 = vunpack.c.l.b16 %v3720
    %v3786 = vunpack.c.h.b16 %v3720
    %v3787 = vunpack.c.l.b16 %v3721
    %v3788 = vunpack.c.h.b16 %v3721
    %v3789 = vunpack.c.l.b16 %v3722
    %v3790 = vunpack.c.h.b16 %v3722
    %v3791 = vunpack.c.l.b16 %v3723
    %v3792 = vunpack.c.h.b16 %v3723
    %v3793 = vunpack.c.l.b16 %v3724
    %v3794 = vunpack.c.h.b16 %v3724
    %v3795 = vunpack.c.l.b16 %v3725
    %v3796 = vunpack.c.h.b16 %v3725
    %v3797 = vunpack.c.l.b16 %v3726
    %v3798 = vunpack.c.h.b16 %v3726
    %v3799 = vunpack.c.l.b16 %v3727
    %v3800 = vunpack.c.h.b16 %v3727
    %v3801 = vunpack.c.l.b16 %v3728
    %v3802 = vunpack.c.h.b16 %v3728
    %v3803 = vunpack.c.l.b16 %v3729
    %v3804 = vunpack.c.h.b16 %v3729
    %v3805 = vunpack.c.l.b16 %v3730
    %v3806 = vunpack.c.h.b16 %v3730
    %v3807 = vunpack.c.l.b16 %v3731
    %v3808 = vunpack.c.h.b16 %v3731
    %v3809 = vunpack.c.l.b16 %v3732
    %v3810 = vunpack.c.h.b16 %v3732
    %v3811 = vunpack.c.l.b16 %v3733
    %v3812 = vunpack.c.h.b16 %v3733
    %v3813 = vunpack.c.l.b16 %v3734
    %v3814 = vunpack.c.h.b16 %v3734
    %v3815 = vunpack.c.l.b16 %v3735
    %v3816 = vunpack.c.h.b16 %v3735
    %v3817 = vunpack.c.l.b16 %v3736
    %v3818 = vunpack.c.h.b16 %v3736
    %v3819 = vunpack.c.l.b16 %v3737
    %v3820 = vunpack.c.h.b16 %v3737
    %v3821 = vunpack.c.l.b16 %v3738
    %v3822 = vunpack.c.h.b16 %v3738
    %v3823 = vunpack.c.l.b16 %v3739
    %v3824 = vunpack.c.h.b16 %v3739
    %v3825 = vunpack.c.l.b16 %v3740
    %v3826 = vunpack.c.h.b16 %v3740
    %v3827 = vunpack.c.l.b16 %v3741
    %v3828 = vunpack.c.h.b16 %v3741
    %v3829 = vunpack.c.l.b16 %v3742
    %v3830 = vunpack.c.h.b16 %v3742
    %v3831 = vunpack.c.l.b16 %v3743
    %v3832 = vunpack.c.h.b16 %v3743
    %v3833 = vunpack.c.l.b16 %v3744
    %v3834 = vunpack.c.h.b16 %v3744
    %v3835 = vunpack.c.l.b16 %v3745
    %v3836 = vunpack.c.h.b16 %v3745
    %v3837 = vunpack.c.l.b16 %v3746
    %v3838 = vunpack.c.h.b16 %v3746
    %v3839 = vunpack.c.l.b16 %v3747
    %v3840 = vunpack.c.h.b16 %v3747
    %v3841 = vunpack.c.l.b16 %v3748
    %v3842 = vunpack.c.h.b16 %v3748
    %v3843 = vunpack.c.l.b16 %v3749
    %v3844 = vunpack.c.h.b16 %v3749
    %v3845 = vunpack.c.l.b16 %v3750
    %v3846 = vunpack.c.h.b16 %v3750
    %v3847 = vpack.c.b16 %v3787, %v3783
    %v3848 = vpack.c.b16 %v3788, %v3784
    %v3849 = vpack.c.b16 %v3789, %v3785
    %v3850 = vpack.c.b16 %v3790, %v3786
    %v3851 = vpack.c.b16 %v3795, %v3791
    %v3852 = vpack.c.b16 %v3796, %v3792
    %v3853 = vpack.c.b16 %v3797, %v3793
    %v3854 = vpack.c.b16 %v3798, %v3794
    %v3855 = vpack.c.b16 %v3803, %v3799
    %v3856 = vpack.c.b16 %v3804, %v3800
    %v3857 = vpack.c.b16 %v3805, %v3801
    %v3858 = vpack.c.b16 %v3806, %v3802
    %v3859 = vpack.c.b16 %v3811, %v3807
    %v3860 = vpack.c.b16 %v3812, %v3808
    %v3861 = vpack.c.b16 %v3813, %v3809
    %v3862 = vpack.c.b16 %v3814, %v3810
    %v3863 = vpack.c.b16 %v3819, %v3815
    %v3864 = vpack.c.b16 %v3820, %v3816
    %v3865 = vpack.c.b16 %v3821, %v3817
    %v3866 = vpack.c.b16 %v3822, %v3818
    %v3867 = vpack.c.b16 %v3827, %v3823
    %v3868 = vpack.c.b16 %v3828, %v3824
    %v3869 = vpack.c.b16 %v3829, %v3825
    %v3870 = vpack.c.b16 %v3830, %v3826
    %v3871 = vpack.c.b16 %v3835, %v3831
    %v3872 = vpack.c.b16 %v3836, %v3832
    %v3873 = vpack.c.b16 %v3837, %v3833
    %v3874 = vpack.c.b16 %v3838, %v3834
    %v3875 = vpack.c.b16 %v3843, %v3839
    %v3876 = vpack.c.b16 %v3844, %v3840
    %v3877 = vpack.c.b16 %v3845, %v3841
    %v3878 = vpack.c.b16 %v3846, %v3842
    %3911 = vmatprep.subr.bf16.mxu0 %v3848
    %3912 = vmatpush1.bf16.msra.mxu0 %v3847
    %3913 = vmatprep.subr.bf16.mxu0 %v3852
    %3914 = vmatpush1.bf16.msra.mxu0 %v3851
    %3915 = vmatprep.subr.bf16.mxu0 %v3856
    %3916 = vmatpush1.bf16.msra.mxu0 %v3855
    %3917 = vmatprep.subr.bf16.mxu0 %v3860
    %3918 = vmatpush1.bf16.msra.mxu0 %v3859
    %3919 = vmatprep.subr.bf16.mxu0 %v3864
    %3920 = vmatpush1.bf16.msra.mxu0 %v3863
    %3921 = vmatprep.subr.bf16.mxu0 %v3868
    %3922 = vmatpush1.bf16.msra.mxu0 %v3867
    %3923 = vmatprep.subr.bf16.mxu0 %v3872
    %3924 = vmatpush1.bf16.msra.mxu0 %v3871
    %3925 = vmatprep.subr.bf16.mxu0 %v3876
    %3926 = vmatpush1.bf16.msra.mxu0 %v3875
    %3927 = vmatprep.subr.bf16.mxu0 0
    %3928 = vmatpush1.bf16.msra.mxu0 0
    %3929 = vmatprep.subr.bf16.mxu0 0
    %3930 = vmatpush1.bf16.msra.mxu0 0
    %3931 = vmatprep.subr.bf16.mxu0 0
    %3932 = vmatpush1.bf16.msra.mxu0 0
    %3933 = vmatprep.subr.bf16.mxu0 0
    %3934 = vmatpush1.bf16.msra.mxu0 0
    %3935 = vmatprep.subr.bf16.mxu0 0
    %3936 = vmatpush1.bf16.msra.mxu0 0
    %3937 = vmatprep.subr.bf16.mxu0 0
    %3938 = vmatpush1.bf16.msra.mxu0 0
    %3939 = vmatprep.subr.bf16.mxu0 0
    %3940 = vmatpush1.bf16.msra.mxu0 0
    %3941 = vmatprep.subr.bf16.mxu0 0
    %3942 = vmatpush1.bf16.msra.mxu0 0
    %3943 = vmatprep.mubr.bf16.mxu0 0
    %3944 = vmatmul.mubr.bf16.gmra.mrb[0].mxu0 %v3718
    %v3945 = vpop.f32.mrb[0].mxu0
    %v3946 = vadd.f32 0.0, %v3945
    %v3947 = vpop.f32.mrb[0].mxu0
    %v3948 = vadd.f32 0.0, %v3947
    %v3949 = vpop.f32.mrb[0].mxu0
    %v3950 = vpop.f32.mrb[0].mxu0
    %3951 = vdwg.mxu0
    %3952 = vmatprep.subr.bf16.mxu0 %v3850
    %3953 = vmatpush1.bf16.msra.mxu0 %v3849
    %3954 = vmatprep.subr.bf16.mxu0 %v3854
    %3955 = vmatpush1.bf16.msra.mxu0 %v3853
    %3956 = vmatprep.subr.bf16.mxu0 %v3858
    %3957 = vmatpush1.bf16.msra.mxu0 %v3857
    %3958 = vmatprep.subr.bf16.mxu0 %v3862
    %3959 = vmatpush1.bf16.msra.mxu0 %v3861
    %3960 = vmatprep.subr.bf16.mxu0 %v3866
    %3961 = vmatpush1.bf16.msra.mxu0 %v3865
    %3962 = vmatprep.subr.bf16.mxu0 %v3870
    %3963 = vmatpush1.bf16.msra.mxu0 %v3869
    %3964 = vmatprep.subr.bf16.mxu0 %v3874
    %3965 = vmatpush1.bf16.msra.mxu0 %v3873
    %3966 = vmatprep.subr.bf16.mxu0 %v3878
    %3967 = vmatpush1.bf16.msra.mxu0 %v3877
    %3968 = vmatprep.subr.bf16.mxu0 0
    %3969 = vmatpush1.bf16.msra.mxu0 0
    %3970 = vmatprep.subr.bf16.mxu0 0
    %3971 = vmatpush1.bf16.msra.mxu0 0
    %3972 = vmatprep.subr.bf16.mxu0 0
    %3973 = vmatpush1.bf16.msra.mxu0 0
    %3974 = vmatprep.subr.bf16.mxu0 0
    %3975 = vmatpush1.bf16.msra.mxu0 0
    %3976 = vmatprep.subr.bf16.mxu0 0
    %3977 = vmatpush1.bf16.msra.mxu0 0
    %3978 = vmatprep.subr.bf16.mxu0 0
    %3979 = vmatpush1.bf16.msra.mxu0 0
    %3980 = vmatprep.subr.bf16.mxu0 0
    %3981 = vmatpush1.bf16.msra.mxu0 0
    %3982 = vmatprep.subr.bf16.mxu0 0
    %3983 = vmatpush1.bf16.msra.mxu0 0
    %3984 = vmatprep.mubr.bf16.mxu0 0
    %3985 = vmatmul.mubr.bf16.gmra.mrb[0].mxu0 %v3718
    %v3986 = vpop.f32.mrb[0].mxu0
    %v3987 = vadd.f32 0.0, %v3986
    %v3988 = vpop.f32.mrb[0].mxu0
    %v3989 = vadd.f32 0.0, %v3988
    %v3990 = vpop.f32.mrb[0].mxu0
    %v3991 = vpop.f32.mrb[0].mxu0
    %3992 = vdwg.mxu0
    %v3993 = vadd.f32 %v3713, %v3946
    %v3994 = vadd.f32 %v3714, %v3948
    %v3995 = vadd.f32 %v3715, %v3987
    %v3996 = vadd.f32 %v3716, %v3989
    %v3997 = vxor.u32 %v3993, 2147483648
    %v3998 = vmul.f32 %v3997, 1.442695
    %v3999 = vpow.pop %v3998
    %v4000 = vadd.f32 %v3999, 1.0
    %v4001 = vrcp.pop %v4000
    %v4002 = vmul.f32 1.0, %v4001
    %v4003 = vxor.u32 %v3994, 2147483648
    %v4004 = vmul.f32 %v4003, 1.442695
    %v4005 = vpow.pop %v4004
    %v4006 = vadd.f32 %v4005, 1.0
    %v4007 = vrcp.pop %v4006
    %v4008 = vmul.f32 1.0, %v4007
    %v4009 = vtanh.pop %v3995
    %v4010 = vxor.u32 %v3996, 2147483648
    %v4011 = vmul.f32 %v4010, 1.442695
    %v4012 = vpow.pop %v4011
    %v4013 = vadd.f32 %v4012, 1.0
    %v4014 = vrcp.pop %v4013
    %v4015 = vmul.f32 1.0, %v4014
    %v4016 = vld [vmem:[#allocation5] sm:$0xff]
    %v4017 = vmul.f32 %v4008, %v4016
    %v4018 = vmul.f32 %v4002, %v4009
    %v4019 = vadd.f32 %v4017, %v4018
    %v4020 = vtanh.pop %v4019
    %v4021 = vmul.f32 %v4015, %v4020
    %4022 = vst [vmem:[#allocation5] sm:$0xff] %v4019
    %4023 = vst [vmem:[#allocation4] sm:$0xff] %v4021
    %v4024 = vld [vmem:[#allocation2 + $0x40] sm:$0xff]
    %v4025 = vld [vmem:[#allocation2 + $0x48] sm:$0xff]
    %v4026 = vld [vmem:[#allocation2 + $0x50] sm:$0xff]
    %v4027 = vld [vmem:[#allocation2 + $0x58] sm:$0xff]
    %v4028 = vld [vmem:[#allocation4] sm:$0xff]
    %v4029 = vpack.c.bf16 %v4028, %v4028
    %v4030 = vld [vmem:[%s3407] sm:$0xff]
    %v4031 = vld [vmem:[%s3407 + $0x8] sm:$0xff]
    %v4032 = vld [vmem:[%s3407 + $0x10] sm:$0xff]
    %v4033 = vld [vmem:[%s3407 + $0x18] sm:$0xff]
    %v4034 = vld [vmem:[%s3407 + $0x20] sm:$0xff]
    %v4035 = vld [vmem:[%s3407 + $0x28] sm:$0xff]
    %v4036 = vld [vmem:[%s3407 + $0x30] sm:$0xff]
    %v4037 = vld [vmem:[%s3407 + $0x38] sm:$0xff]
    %v4038 = vld [vmem:[%s3407 + $0x40] sm:$0xff]
    %v4039 = vld [vmem:[%s3407 + $0x48] sm:$0xff]
    %v4040 = vld [vmem:[%s3407 + $0x50] sm:$0xff]
    %v4041 = vld [vmem:[%s3407 + $0x58] sm:$0xff]
    %v4042 = vld [vmem:[%s3407 + $0x60] sm:$0xff]
    %v4043 = vld [vmem:[%s3407 + $0x68] sm:$0xff]
    %v4044 = vld [vmem:[%s3407 + $0x70] sm:$0xff]
    %v4045 = vld [vmem:[%s3407 + $0x78] sm:$0xff]
    %v4046 = vld [vmem:[%s3407 + $0x80] sm:$0xff]
    %v4047 = vld [vmem:[%s3407 + $0x88] sm:$0xff]
    %v4048 = vld [vmem:[%s3407 + $0x90] sm:$0xff]
    %v4049 = vld [vmem:[%s3407 + $0x98] sm:$0xff]
    %v4050 = vld [vmem:[%s3407 + $0xa0] sm:$0xff]
    %v4051 = vld [vmem:[%s3407 + $0xa8] sm:$0xff]
    %v4052 = vld [vmem:[%s3407 + $0xb0] sm:$0xff]
    %v4053 = vld [vmem:[%s3407 + $0xb8] sm:$0xff]
    %v4054 = vld [vmem:[%s3407 + $0xc0] sm:$0xff]
    %v4055 = vld [vmem:[%s3407 + $0xc8] sm:$0xff]
    %v4056 = vld [vmem:[%s3407 + $0xd0] sm:$0xff]
    %v4057 = vld [vmem:[%s3407 + $0xd8] sm:$0xff]
    %v4058 = vld [vmem:[%s3407 + $0xe0] sm:$0xff]
    %v4059 = vld [vmem:[%s3407 + $0xe8] sm:$0xff]
    %v4060 = vld [vmem:[%s3407 + $0xf0] sm:$0xff]
    %v4061 = vld [vmem:[%s3407 + $0xf8] sm:$0xff]
    %v4094 = vunpack.c.l.b16 %v4030
    %v4095 = vunpack.c.h.b16 %v4030
    %v4096 = vunpack.c.l.b16 %v4031
    %v4097 = vunpack.c.h.b16 %v4031
    %v4098 = vunpack.c.l.b16 %v4032
    %v4099 = vunpack.c.h.b16 %v4032
    %v4100 = vunpack.c.l.b16 %v4033
    %v4101 = vunpack.c.h.b16 %v4033
    %v4102 = vunpack.c.l.b16 %v4034
    %v4103 = vunpack.c.h.b16 %v4034
    %v4104 = vunpack.c.l.b16 %v4035
    %v4105 = vunpack.c.h.b16 %v4035
    %v4106 = vunpack.c.l.b16 %v4036
    %v4107 = vunpack.c.h.b16 %v4036
    %v4108 = vunpack.c.l.b16 %v4037
    %v4109 = vunpack.c.h.b16 %v4037
    %v4110 = vunpack.c.l.b16 %v4038
    %v4111 = vunpack.c.h.b16 %v4038
    %v4112 = vunpack.c.l.b16 %v4039
    %v4113 = vunpack.c.h.b16 %v4039
    %v4114 = vunpack.c.l.b16 %v4040
    %v4115 = vunpack.c.h.b16 %v4040
    %v4116 = vunpack.c.l.b16 %v4041
    %v4117 = vunpack.c.h.b16 %v4041
    %v4118 = vunpack.c.l.b16 %v4042
    %v4119 = vunpack.c.h.b16 %v4042
    %v4120 = vunpack.c.l.b16 %v4043
    %v4121 = vunpack.c.h.b16 %v4043
    %v4122 = vunpack.c.l.b16 %v4044
    %v4123 = vunpack.c.h.b16 %v4044
    %v4124 = vunpack.c.l.b16 %v4045
    %v4125 = vunpack.c.h.b16 %v4045
    %v4126 = vunpack.c.l.b16 %v4046
    %v4127 = vunpack.c.h.b16 %v4046
    %v4128 = vunpack.c.l.b16 %v4047
    %v4129 = vunpack.c.h.b16 %v4047
    %v4130 = vunpack.c.l.b16 %v4048
    %v4131 = vunpack.c.h.b16 %v4048
    %v4132 = vunpack.c.l.b16 %v4049
    %v4133 = vunpack.c.h.b16 %v4049
    %v4134 = vunpack.c.l.b16 %v4050
    %v4135 = vunpack.c.h.b16 %v4050
    %v4136 = vunpack.c.l.b16 %v4051
    %v4137 = vunpack.c.h.b16 %v4051
    %v4138 = vunpack.c.l.b16 %v4052
    %v4139 = vunpack.c.h.b16 %v4052
    %v4140 = vunpack.c.l.b16 %v4053
    %v4141 = vunpack.c.h.b16 %v4053
    %v4142 = vunpack.c.l.b16 %v4054
    %v4143 = vunpack.c.h.b16 %v4054
    %v4144 = vunpack.c.l.b16 %v4055
    %v4145 = vunpack.c.h.b16 %v4055
    %v4146 = vunpack.c.l.b16 %v4056
    %v4147 = vunpack.c.h.b16 %v4056
    %v4148 = vunpack.c.l.b16 %v4057
    %v4149 = vunpack.c.h.b16 %v4057
    %v4150 = vunpack.c.l.b16 %v4058
    %v4151 = vunpack.c.h.b16 %v4058
    %v4152 = vunpack.c.l.b16 %v4059
    %v4153 = vunpack.c.h.b16 %v4059
    %v4154 = vunpack.c.l.b16 %v4060
    %v4155 = vunpack.c.h.b16 %v4060
    %v4156 = vunpack.c.l.b16 %v4061
    %v4157 = vunpack.c.h.b16 %v4061
    %v4158 = vpack.c.b16 %v4098, %v4094
    %v4159 = vpack.c.b16 %v4099, %v4095
    %v4160 = vpack.c.b16 %v4100, %v4096
    %v4161 = vpack.c.b16 %v4101, %v4097
    %v4162 = vpack.c.b16 %v4106, %v4102
    %v4163 = vpack.c.b16 %v4107, %v4103
    %v4164 = vpack.c.b16 %v4108, %v4104
    %v4165 = vpack.c.b16 %v4109, %v4105
    %v4166 = vpack.c.b16 %v4114, %v4110
    %v4167 = vpack.c.b16 %v4115, %v4111
    %v4168 = vpack.c.b16 %v4116, %v4112
    %v4169 = vpack.c.b16 %v4117, %v4113
    %v4170 = vpack.c.b16 %v4122, %v4118
    %v4171 = vpack.c.b16 %v4123, %v4119
    %v4172 = vpack.c.b16 %v4124, %v4120
    %v4173 = vpack.c.b16 %v4125, %v4121
    %v4174 = vpack.c.b16 %v4130, %v4126
    %v4175 = vpack.c.b16 %v4131, %v4127
    %v4176 = vpack.c.b16 %v4132, %v4128
    %v4177 = vpack.c.b16 %v4133, %v4129
    %v4178 = vpack.c.b16 %v4138, %v4134
    %v4179 = vpack.c.b16 %v4139, %v4135
    %v4180 = vpack.c.b16 %v4140, %v4136
    %v4181 = vpack.c.b16 %v4141, %v4137
    %v4182 = vpack.c.b16 %v4146, %v4142
    %v4183 = vpack.c.b16 %v4147, %v4143
    %v4184 = vpack.c.b16 %v4148, %v4144
    %v4185 = vpack.c.b16 %v4149, %v4145
    %v4186 = vpack.c.b16 %v4154, %v4150
    %v4187 = vpack.c.b16 %v4155, %v4151
    %v4188 = vpack.c.b16 %v4156, %v4152
    %v4189 = vpack.c.b16 %v4157, %v4153
    %4222 = vmatprep.subr.bf16.mxu0 %v4159
    %4223 = vmatpush1.bf16.msra.mxu0 %v4158
    %4224 = vmatprep.subr.bf16.mxu0 %v4163
    %4225 = vmatpush1.bf16.msra.mxu0 %v4162
    %4226 = vmatprep.subr.bf16.mxu0 %v4167
    %4227 = vmatpush1.bf16.msra.mxu0 %v4166
    %4228 = vmatprep.subr.bf16.mxu0 %v4171
    %4229 = vmatpush1.bf16.msra.mxu0 %v4170
    %4230 = vmatprep.subr.bf16.mxu0 %v4175
    %4231 = vmatpush1.bf16.msra.mxu0 %v4174
    %4232 = vmatprep.subr.bf16.mxu0 %v4179
    %4233 = vmatpush1.bf16.msra.mxu0 %v4178
    %4234 = vmatprep.subr.bf16.mxu0 %v4183
    %4235 = vmatpush1.bf16.msra.mxu0 %v4182
    %4236 = vmatprep.subr.bf16.mxu0 %v4187
    %4237 = vmatpush1.bf16.msra.mxu0 %v4186
    %4238 = vmatprep.subr.bf16.mxu0 0
    %4239 = vmatpush1.bf16.msra.mxu0 0
    %4240 = vmatprep.subr.bf16.mxu0 0
    %4241 = vmatpush1.bf16.msra.mxu0 0
    %4242 = vmatprep.subr.bf16.mxu0 0
    %4243 = vmatpush1.bf16.msra.mxu0 0
    %4244 = vmatprep.subr.bf16.mxu0 0
    %4245 = vmatpush1.bf16.msra.mxu0 0
    %4246 = vmatprep.subr.bf16.mxu0 0
    %4247 = vmatpush1.bf16.msra.mxu0 0
    %4248 = vmatprep.subr.bf16.mxu0 0
    %4249 = vmatpush1.bf16.msra.mxu0 0
    %4250 = vmatprep.subr.bf16.mxu0 0
    %4251 = vmatpush1.bf16.msra.mxu0 0
    %4252 = vmatprep.subr.bf16.mxu0 0
    %4253 = vmatpush1.bf16.msra.mxu0 0
    %4254 = vmatprep.mubr.bf16.mxu0 0
    %4255 = vmatmul.mubr.bf16.gmra.mrb[0].mxu0 %v4029
    %v4256 = vpop.f32.mrb[0].mxu0
    %v4257 = vadd.f32 0.0, %v4256
    %v4258 = vpop.f32.mrb[0].mxu0
    %v4259 = vadd.f32 0.0, %v4258
    %v4260 = vpop.f32.mrb[0].mxu0
    %v4261 = vpop.f32.mrb[0].mxu0
    %4262 = vdwg.mxu0
    %4263 = vmatprep.subr.bf16.mxu0 %v4161
    %4264 = vmatpush1.bf16.msra.mxu0 %v4160
    %4265 = vmatprep.subr.bf16.mxu0 %v4165
    %4266 = vmatpush1.bf16.msra.mxu0 %v4164
    %4267 = vmatprep.subr.bf16.mxu0 %v4169
    %4268 = vmatpush1.bf16.msra.mxu0 %v4168
    %4269 = vmatprep.subr.bf16.mxu0 %v4173
    %4270 = vmatpush1.bf16.msra.mxu0 %v4172
    %4271 = vmatprep.subr.bf16.mxu0 %v4177
    %4272 = vmatpush1.bf16.msra.mxu0 %v4176
    %4273 = vmatprep.subr.bf16.mxu0 %v4181
    %4274 = vmatpush1.bf16.msra.mxu0 %v4180
    %4275 = vmatprep.subr.bf16.mxu0 %v4185
    %4276 = vmatpush1.bf16.msra.mxu0 %v4184
    %4277 = vmatprep.subr.bf16.mxu0 %v4189
    %4278 = vmatpush1.bf16.msra.mxu0 %v4188
    %4279 = vmatprep.subr.bf16.mxu0 0
    %4280 = vmatpush1.bf16.msra.mxu0 0
    %4281 = vmatprep.subr.bf16.mxu0 0
    %4282 = vmatpush1.bf16.msra.mxu0 0
    %4283 = vmatprep.subr.bf16.mxu0 0
    %4284 = vmatpush1.bf16.msra.mxu0 0
    %4285 = vmatprep.subr.bf16.mxu0 0
    %4286 = vmatpush1.bf16.msra.mxu0 0
    %4287 = vmatprep.subr.bf16.mxu0 0
    %4288 = vmatpush1.bf16.msra.mxu0 0
    %4289 = vmatprep.subr.bf16.mxu0 0
    %4290 = vmatpush1.bf16.msra.mxu0 0
    %4291 = vmatprep.subr.bf16.mxu0 0
    %4292 = vmatpush1.bf16.msra.mxu0 0
    %4293 = vmatprep.subr.bf16.mxu0 0
    %4294 = vmatpush1.bf16.msra.mxu0 0
    %4295 = vmatprep.mubr.bf16.mxu0 0
    %4296 = vmatmul.mubr.bf16.gmra.mrb[0].mxu0 %v4029
    %v4297 = vpop.f32.mrb[0].mxu0
    %v4298 = vadd.f32 0.0, %v4297
    %v4299 = vpop.f32.mrb[0].mxu0
    %v4300 = vadd.f32 0.0, %v4299
    %v4301 = vpop.f32.mrb[0].mxu0
    %v4302 = vpop.f32.mrb[0].mxu0
    %4303 = vdwg.mxu0
    %v4304 = vadd.f32 %v4024, %v4257
    %v4305 = vadd.f32 %v4025, %v4259
    %v4306 = vadd.f32 %v4026, %v4298
    %v4307 = vadd.f32 %v4027, %v4300
    %v4308 = vxor.u32 %v4304, 2147483648
    %v4309 = vmul.f32 %v4308, 1.442695
    %v4310 = vpow.pop %v4309
    %v4311 = vadd.f32 %v4310, 1.0
    %v4312 = vrcp.pop %v4311
    %v4313 = vmul.f32 1.0, %v4312
    %v4314 = vxor.u32 %v4305, 2147483648
    %v4315 = vmul.f32 %v4314, 1.442695
    %v4316 = vpow.pop %v4315
    %v4317 = vadd.f32 %v4316, 1.0
    %v4318 = vrcp.pop %v4317
    %v4319 = vmul.f32 1.0, %v4318
    %v4320 = vtanh.pop %v4306
    %v4321 = vxor.u32 %v4307, 2147483648
    %v4322 = vmul.f32 %v4321, 1.442695
    %v4323 = vpow.pop %v4322
    %v4324 = vadd.f32 %v4323, 1.0
    %v4325 = vrcp.pop %v4324
    %v4326 = vmul.f32 1.0, %v4325
    %v4327 = vld [vmem:[#allocation5] sm:$0xff]
    %v4328 = vmul.f32 %v4319, %v4327
    %v4329 = vmul.f32 %v4313, %v4320
    %v4330 = vadd.f32 %v4328, %v4329
    %v4331 = vtanh.pop %v4330
    %v4332 = vmul.f32 %v4326, %v4331
    %4333 = vst [vmem:[#allocation5] sm:$0xff] %v4330
    %4334 = vst [vmem:[#allocation4] sm:$0xff] %v4332
    %v4335 = vld [vmem:[#allocation2 + $0x60] sm:$0xff]
    %v4336 = vld [vmem:[#allocation2 + $0x68] sm:$0xff]
    %v4337 = vld [vmem:[#allocation2 + $0x70] sm:$0xff]
    %v4338 = vld [vmem:[#allocation2 + $0x78] sm:$0xff]
    %v4339 = vld [vmem:[#allocation4] sm:$0xff]
    %v4340 = vpack.c.bf16 %v4339, %v4339
    %v4341 = vld [vmem:[%s3407] sm:$0xff]
    %v4342 = vld [vmem:[%s3407 + $0x8] sm:$0xff]
    %v4343 = vld [vmem:[%s3407 + $0x10] sm:$0xff]
    %v4344 = vld [vmem:[%s3407 + $0x18] sm:$0xff]
    %v4345 = vld [vmem:[%s3407 + $0x20] sm:$0xff]
    %v4346 = vld [vmem:[%s3407 + $0x28] sm:$0xff]
    %v4347 = vld [vmem:[%s3407 + $0x30] sm:$0xff]
    %v4348 = vld [vmem:[%s3407 + $0x38] sm:$0xff]
    %v4349 = vld [vmem:[%s3407 + $0x40] sm:$0xff]
    %v4350 = vld [vmem:[%s3407 + $0x48] sm:$0xff]
    %v4351 = vld [vmem:[%s3407 + $0x50] sm:$0xff]
    %v4352 = vld [vmem:[%s3407 + $0x58] sm:$0xff]
    %v4353 = vld [vmem:[%s3407 + $0x60] sm:$0xff]
    %v4354 = vld [vmem:[%s3407 + $0x68] sm:$0xff]
    %v4355 = vld [vmem:[%s3407 + $0x70] sm:$0xff]
    %v4356 = vld [vmem:[%s3407 + $0x78] sm:$0xff]
    %v4357 = vld [vmem:[%s3407 + $0x80] sm:$0xff]
    %v4358 = vld [vmem:[%s3407 + $0x88] sm:$0xff]
    %v4359 = vld [vmem:[%s3407 + $0x90] sm:$0xff]
    %v4360 = vld [vmem:[%s3407 + $0x98] sm:$0xff]
    %v4361 = vld [vmem:[%s3407 + $0xa0] sm:$0xff]
    %v4362 = vld [vmem:[%s3407 + $0xa8] sm:$0xff]
    %v4363 = vld [vmem:[%s3407 + $0xb0] sm:$0xff]
    %v4364 = vld [vmem:[%s3407 + $0xb8] sm:$0xff]
    %v4365 = vld [vmem:[%s3407 + $0xc0] sm:$0xff]
    %v4366 = vld [vmem:[%s3407 + $0xc8] sm:$0xff]
    %v4367 = vld [vmem:[%s3407 + $0xd0] sm:$0xff]
    %v4368 = vld [vmem:[%s3407 + $0xd8] sm:$0xff]
    %v4369 = vld [vmem:[%s3407 + $0xe0] sm:$0xff]
    %v4370 = vld [vmem:[%s3407 + $0xe8] sm:$0xff]
    %v4371 = vld [vmem:[%s3407 + $0xf0] sm:$0xff]
    %v4372 = vld [vmem:[%s3407 + $0xf8] sm:$0xff]
    %v4405 = vunpack.c.l.b16 %v4341
    %v4406 = vunpack.c.h.b16 %v4341
    %v4407 = vunpack.c.l.b16 %v4342
    %v4408 = vunpack.c.h.b16 %v4342
    %v4409 = vunpack.c.l.b16 %v4343
    %v4410 = vunpack.c.h.b16 %v4343
    %v4411 = vunpack.c.l.b16 %v4344
    %v4412 = vunpack.c.h.b16 %v4344
    %v4413 = vunpack.c.l.b16 %v4345
    %v4414 = vunpack.c.h.b16 %v4345
    %v4415 = vunpack.c.l.b16 %v4346
    %v4416 = vunpack.c.h.b16 %v4346
    %v4417 = vunpack.c.l.b16 %v4347
    %v4418 = vunpack.c.h.b16 %v4347
    %v4419 = vunpack.c.l.b16 %v4348
    %v4420 = vunpack.c.h.b16 %v4348
    %v4421 = vunpack.c.l.b16 %v4349
    %v4422 = vunpack.c.h.b16 %v4349
    %v4423 = vunpack.c.l.b16 %v4350
    %v4424 = vunpack.c.h.b16 %v4350
    %v4425 = vunpack.c.l.b16 %v4351
    %v4426 = vunpack.c.h.b16 %v4351
    %v4427 = vunpack.c.l.b16 %v4352
    %v4428 = vunpack.c.h.b16 %v4352
    %v4429 = vunpack.c.l.b16 %v4353
    %v4430 = vunpack.c.h.b16 %v4353
    %v4431 = vunpack.c.l.b16 %v4354
    %v4432 = vunpack.c.h.b16 %v4354
    %v4433 = vunpack.c.l.b16 %v4355
    %v4434 = vunpack.c.h.b16 %v4355
    %v4435 = vunpack.c.l.b16 %v4356
    %v4436 = vunpack.c.h.b16 %v4356
    %v4437 = vunpack.c.l.b16 %v4357
    %v4438 = vunpack.c.h.b16 %v4357
    %v4439 = vunpack.c.l.b16 %v4358
    %v4440 = vunpack.c.h.b16 %v4358
    %v4441 = vunpack.c.l.b16 %v4359
    %v4442 = vunpack.c.h.b16 %v4359
    %v4443 = vunpack.c.l.b16 %v4360
    %v4444 = vunpack.c.h.b16 %v4360
    %v4445 = vunpack.c.l.b16 %v4361
    %v4446 = vunpack.c.h.b16 %v4361
    %v4447 = vunpack.c.l.b16 %v4362
    %v4448 = vunpack.c.h.b16 %v4362
    %v4449 = vunpack.c.l.b16 %v4363
    %v4450 = vunpack.c.h.b16 %v4363
    %v4451 = vunpack.c.l.b16 %v4364
    %v4452 = vunpack.c.h.b16 %v4364
    %v4453 = vunpack.c.l.b16 %v4365
    %v4454 = vunpack.c.h.b16 %v4365
    %v4455 = vunpack.c.l.b16 %v4366
    %v4456 = vunpack.c.h.b16 %v4366
    %v4457 = vunpack.c.l.b16 %v4367
    %v4458 = vunpack.c.h.b16 %v4367
    %v4459 = vunpack.c.l.b16 %v4368
    %v4460 = vunpack.c.h.b16 %v4368
    %v4461 = vunpack.c.l.b16 %v4369
    %v4462 = vunpack.c.h.b16 %v4369
    %v4463 = vunpack.c.l.b16 %v4370
    %v4464 = vunpack.c.h.b16 %v4370
    %v4465 = vunpack.c.l.b16 %v4371
    %v4466 = vunpack.c.h.b16 %v4371
    %v4467 = vunpack.c.l.b16 %v4372
    %v4468 = vunpack.c.h.b16 %v4372
    %v4469 = vpack.c.b16 %v4409, %v4405
    %v4470 = vpack.c.b16 %v4410, %v4406
    %v4471 = vpack.c.b16 %v4411, %v4407
    %v4472 = vpack.c.b16 %v4412, %v4408
    %v4473 = vpack.c.b16 %v4417, %v4413
    %v4474 = vpack.c.b16 %v4418, %v4414
    %v4475 = vpack.c.b16 %v4419, %v4415
    %v4476 = vpack.c.b16 %v4420, %v4416
    %v4477 = vpack.c.b16 %v4425, %v4421
    %v4478 = vpack.c.b16 %v4426, %v4422
    %v4479 = vpack.c.b16 %v4427, %v4423
    %v4480 = vpack.c.b16 %v4428, %v4424
    %v4481 = vpack.c.b16 %v4433, %v4429
    %v4482 = vpack.c.b16 %v4434, %v4430
    %v4483 = vpack.c.b16 %v4435, %v4431
    %v4484 = vpack.c.b16 %v4436, %v4432
    %v4485 = vpack.c.b16 %v4441, %v4437
    %v4486 = vpack.c.b16 %v4442, %v4438
    %v4487 = vpack.c.b16 %v4443, %v4439
    %v4488 = vpack.c.b16 %v4444, %v4440
    %v4489 = vpack.c.b16 %v4449, %v4445
    %v4490 = vpack.c.b16 %v4450, %v4446
    %v4491 = vpack.c.b16 %v4451, %v4447
    %v4492 = vpack.c.b16 %v4452, %v4448
    %v4493 = vpack.c.b16 %v4457, %v4453
    %v4494 = vpack.c.b16 %v4458, %v4454
    %v4495 = vpack.c.b16 %v4459, %v4455
    %v4496 = vpack.c.b16 %v4460, %v4456
    %v4497 = vpack.c.b16 %v4465, %v4461
    %v4498 = vpack.c.b16 %v4466, %v4462
    %v4499 = vpack.c.b16 %v4467, %v4463
    %v4500 = vpack.c.b16 %v4468, %v4464
    %4533 = vmatprep.subr.bf16.mxu0 %v4470
    %4534 = vmatpush1.bf16.msra.mxu0 %v4469
    %4535 = vmatprep.subr.bf16.mxu0 %v4474
    %4536 = vmatpush1.bf16.msra.mxu0 %v4473
    %4537 = vmatprep.subr.bf16.mxu0 %v4478
    %4538 = vmatpush1.bf16.msra.mxu0 %v4477
    %4539 = vmatprep.subr.bf16.mxu0 %v4482
    %4540 = vmatpush1.bf16.msra.mxu0 %v4481
    %4541 = vmatprep.subr.bf16.mxu0 %v4486
    %4542 = vmatpush1.bf16.msra.mxu0 %v4485
    %4543 = vmatprep.subr.bf16.mxu0 %v4490
    %4544 = vmatpush1.bf16.msra.mxu0 %v4489
    %4545 = vmatprep.subr.bf16.mxu0 %v4494
    %4546 = vmatpush1.bf16.msra.mxu0 %v4493
    %4547 = vmatprep.subr.bf16.mxu0 %v4498
    %4548 = vmatpush1.bf16.msra.mxu0 %v4497
    %4549 = vmatprep.subr.bf16.mxu0 0
    %4550 = vmatpush1.bf16.msra.mxu0 0
    %4551 = vmatprep.subr.bf16.mxu0 0
    %4552 = vmatpush1.bf16.msra.mxu0 0
    %4553 = vmatprep.subr.bf16.mxu0 0
    %4554 = vmatpush1.bf16.msra.mxu0 0
    %4555 = vmatprep.subr.bf16.mxu0 0
    %4556 = vmatpush1.bf16.msra.mxu0 0
    %4557 = vmatprep.subr.bf16.mxu0 0
    %4558 = vmatpush1.bf16.msra.mxu0 0
    %4559 = vmatprep.subr.bf16.mxu0 0
    %4560 = vmatpush1.bf16.msra.mxu0 0
    %4561 = vmatprep.subr.bf16.mxu0 0
    %4562 = vmatpush1.bf16.msra.mxu0 0
    %4563 = vmatprep.subr.bf16.mxu0 0
    %4564 = vmatpush1.bf16.msra.mxu0 0
    %4565 = vmatprep.mubr.bf16.mxu0 0
    %4566 = vmatmul.mubr.bf16.gmra.mrb[0].mxu0 %v4340
    %v4567 = vpop.f32.mrb[0].mxu0
    %v4568 = vadd.f32 0.0, %v4567
    %v4569 = vpop.f32.mrb[0].mxu0
    %v4570 = vadd.f32 0.0, %v4569
    %v4571 = vpop.f32.mrb[0].mxu0
    %v4572 = vpop.f32.mrb[0].mxu0
    %4573 = vdwg.mxu0
    %4574 = vmatprep.subr.bf16.mxu0 %v4472
    %4575 = vmatpush1.bf16.msra.mxu0 %v4471
    %4576 = vmatprep.subr.bf16.mxu0 %v4476
    %4577 = vmatpush1.bf16.msra.mxu0 %v4475
    %4578 = vmatprep.subr.bf16.mxu0 %v4480
    %4579 = vmatpush1.bf16.msra.mxu0 %v4479
    %4580 = vmatprep.subr.bf16.mxu0 %v4484
    %4581 = vmatpush1.bf16.msra.mxu0 %v4483
    %4582 = vmatprep.subr.bf16.mxu0 %v4488
    %4583 = vmatpush1.bf16.msra.mxu0 %v4487
    %4584 = vmatprep.subr.bf16.mxu0 %v4492
    %4585 = vmatpush1.bf16.msra.mxu0 %v4491
    %4586 = vmatprep.subr.bf16.mxu0 %v4496
    %4587 = vmatpush1.bf16.msra.mxu0 %v4495
    %4588 = vmatprep.subr.bf16.mxu0 %v4500
    %4589 = vmatpush1.bf16.msra.mxu0 %v4499
    %4590 = vmatprep.subr.bf16.mxu0 0
    %4591 = vmatpush1.bf16.msra.mxu0 0
    %4592 = vmatprep.subr.bf16.mxu0 0
    %4593 = vmatpush1.bf16.msra.mxu0 0
    %4594 = vmatprep.subr.bf16.mxu0 0
    %4595 = vmatpush1.bf16.msra.mxu0 0
    %4596 = vmatprep.subr.bf16.mxu0 0
    %4597 = vmatpush1.bf16.msra.mxu0 0
    %4598 = vmatprep.subr.bf16.mxu0 0
    %4599 = vmatpush1.bf16.msra.mxu0 0
    %4600 = vmatprep.subr.bf16.mxu0 0
    %4601 = vmatpush1.bf16.msra.mxu0 0
    %4602 = vmatprep.subr.bf16.mxu0 0
    %4603 = vmatpush1.bf16.msra.mxu0 0
    %4604 = vmatprep.subr.bf16.mxu0 0
    %4605 = vmatpush1.bf16.msra.mxu0 0
    %4606 = vmatprep.mubr.bf16.mxu0 0
    %4607 = vmatmul.mubr.bf16.gmra.mrb[0].mxu0 %v4340
    %v4608 = vpop.f32.mrb[0].mxu0
    %v4609 = vadd.f32 0.0, %v4608
    %v4610 = vpop.f32.mrb[0].mxu0
    %v4611 = vadd.f32 0.0, %v4610
    %v4612 = vpop.f32.mrb[0].mxu0
    %v4613 = vpop.f32.mrb[0].mxu0
    %4614 = vdwg.mxu0
    %v4615 = vadd.f32 %v4335, %v4568
    %v4616 = vadd.f32 %v4336, %v4570
    %v4617 = vadd.f32 %v4337, %v4609
    %v4618 = vadd.f32 %v4338, %v4611
    %v4619 = vxor.u32 %v4615, 2147483648
    %v4620 = vmul.f32 %v4619, 1.442695
    %v4621 = vpow.pop %v4620
    %v4622 = vadd.f32 %v4621, 1.0
    %v4623 = vrcp.pop %v4622
    %v4624 = vmul.f32 1.0, %v4623
    %v4625 = vxor.u32 %v4616, 2147483648
    %v4626 = vmul.f32 %v4625, 1.442695
    %v4627 = vpow.pop %v4626
    %v4628 = vadd.f32 %v4627, 1.0
    %v4629 = vrcp.pop %v4628
    %v4630 = vmul.f32 1.0, %v4629
    %v4631 = vtanh.pop %v4617
    %v4632 = vxor.u32 %v4618, 2147483648
    %v4633 = vmul.f32 %v4632, 1.442695
    %v4634 = vpow.pop %v4633
    %v4635 = vadd.f32 %v4634, 1.0
    %v4636 = vrcp.pop %v4635
    %v4637 = vmul.f32 1.0, %v4636
    %v4638 = vld [vmem:[#allocation5] sm:$0xff]
    %v4639 = vmul.f32 %v4630, %v4638
    %v4640 = vmul.f32 %v4624, %v4631
    %v4641 = vadd.f32 %v4639, %v4640
    %v4642 = vtanh.pop %v4641
    %v4643 = vmul.f32 %v4637, %v4642
    %4644 = vst [vmem:[#allocation5] sm:$0xff] %v4641
    %4645 = vst [vmem:[#allocation4] sm:$0xff] %v4643
    %v4646 = vld [vmem:[#allocation2 + $0x80] sm:$0xff]
    %v4647 = vld [vmem:[#allocation2 + $0x88] sm:$0xff]
    %v4648 = vld [vmem:[#allocation2 + $0x90] sm:$0xff]
    %v4649 = vld [vmem:[#allocation2 + $0x98] sm:$0xff]
    %v4650 = vld [vmem:[#allocation4] sm:$0xff]
    %v4651 = vpack.c.bf16 %v4650, %v4650
    %v4652 = vld [vmem:[%s3407] sm:$0xff]
    %v4653 = vld [vmem:[%s3407 + $0x8] sm:$0xff]
    %v4654 = vld [vmem:[%s3407 + $0x10] sm:$0xff]
    %v4655 = vld [vmem:[%s3407 + $0x18] sm:$0xff]
    %v4656 = vld [vmem:[%s3407 + $0x20] sm:$0xff]
    %v4657 = vld [vmem:[%s3407 + $0x28] sm:$0xff]
    %v4658 = vld [vmem:[%s3407 + $0x30] sm:$0xff]
    %v4659 = vld [vmem:[%s3407 + $0x38] sm:$0xff]
    %v4660 = vld [vmem:[%s3407 + $0x40] sm:$0xff]
    %v4661 = vld [vmem:[%s3407 + $0x48] sm:$0xff]
    %v4662 = vld [vmem:[%s3407 + $0x50] sm:$0xff]
    %v4663 = vld [vmem:[%s3407 + $0x58] sm:$0xff]
    %v4664 = vld [vmem:[%s3407 + $0x60] sm:$0xff]
    %v4665 = vld [vmem:[%s3407 + $0x68] sm:$0xff]
    %v4666 = vld [vmem:[%s3407 + $0x70] sm:$0xff]
    %v4667 = vld [vmem:[%s3407 + $0x78] sm:$0xff]
    %v4668 = vld [vmem:[%s3407 + $0x80] sm:$0xff]
    %v4669 = vld [vmem:[%s3407 + $0x88] sm:$0xff]
    %v4670 = vld [vmem:[%s3407 + $0x90] sm:$0xff]
    %v4671 = vld [vmem:[%s3407 + $0x98] sm:$0xff]
    %v4672 = vld [vmem:[%s3407 + $0xa0] sm:$0xff]
    %v4673 = vld [vmem:[%s3407 + $0xa8] sm:$0xff]
    %v4674 = vld [vmem:[%s3407 + $0xb0] sm:$0xff]
    %v4675 = vld [vmem:[%s3407 + $0xb8] sm:$0xff]
    %v4676 = vld [vmem:[%s3407 + $0xc0] sm:$0xff]
    %v4677 = vld [vmem:[%s3407 + $0xc8] sm:$0xff]
    %v4678 = vld [vmem:[%s3407 + $0xd0] sm:$0xff]
    %v4679 = vld [vmem:[%s3407 + $0xd8] sm:$0xff]
    %v4680 = vld [vmem:[%s3407 + $0xe0] sm:$0xff]
    %v4681 = vld [vmem:[%s3407 + $0xe8] sm:$0xff]
    %v4682 = vld [vmem:[%s3407 + $0xf0] sm:$0xff]
    %v4683 = vld [vmem:[%s3407 + $0xf8] sm:$0xff]
    %v4716 = vunpack.c.l.b16 %v4652
    %v4717 = vunpack.c.h.b16 %v4652
    %v4718 = vunpack.c.l.b16 %v4653
    %v4719 = vunpack.c.h.b16 %v4653
    %v4720 = vunpack.c.l.b16 %v4654
    %v4721 = vunpack.c.h.b16 %v4654
    %v4722 = vunpack.c.l.b16 %v4655
    %v4723 = vunpack.c.h.b16 %v4655
    %v4724 = vunpack.c.l.b16 %v4656
    %v4725 = vunpack.c.h.b16 %v4656
    %v4726 = vunpack.c.l.b16 %v4657
    %v4727 = vunpack.c.h.b16 %v4657
    %v4728 = vunpack.c.l.b16 %v4658
    %v4729 = vunpack.c.h.b16 %v4658
    %v4730 = vunpack.c.l.b16 %v4659
    %v4731 = vunpack.c.h.b16 %v4659
    %v4732 = vunpack.c.l.b16 %v4660
    %v4733 = vunpack.c.h.b16 %v4660
    %v4734 = vunpack.c.l.b16 %v4661
    %v4735 = vunpack.c.h.b16 %v4661
    %v4736 = vunpack.c.l.b16 %v4662
    %v4737 = vunpack.c.h.b16 %v4662
    %v4738 = vunpack.c.l.b16 %v4663
    %v4739 = vunpack.c.h.b16 %v4663
    %v4740 = vunpack.c.l.b16 %v4664
    %v4741 = vunpack.c.h.b16 %v4664
    %v4742 = vunpack.c.l.b16 %v4665
    %v4743 = vunpack.c.h.b16 %v4665
    %v4744 = vunpack.c.l.b16 %v4666
    %v4745 = vunpack.c.h.b16 %v4666
    %v4746 = vunpack.c.l.b16 %v4667
    %v4747 = vunpack.c.h.b16 %v4667
    %v4748 = vunpack.c.l.b16 %v4668
    %v4749 = vunpack.c.h.b16 %v4668
    %v4750 = vunpack.c.l.b16 %v4669
    %v4751 = vunpack.c.h.b16 %v4669
    %v4752 = vunpack.c.l.b16 %v4670
    %v4753 = vunpack.c.h.b16 %v4670
    %v4754 = vunpack.c.l.b16 %v4671
    %v4755 = vunpack.c.h.b16 %v4671
    %v4756 = vunpack.c.l.b16 %v4672
    %v4757 = vunpack.c.h.b16 %v4672
    %v4758 = vunpack.c.l.b16 %v4673
    %v4759 = vunpack.c.h.b16 %v4673
    %v4760 = vunpack.c.l.b16 %v4674
    %v4761 = vunpack.c.h.b16 %v4674
    %v4762 = vunpack.c.l.b16 %v4675
    %v4763 = vunpack.c.h.b16 %v4675
    %v4764 = vunpack.c.l.b16 %v4676
    %v4765 = vunpack.c.h.b16 %v4676
    %v4766 = vunpack.c.l.b16 %v4677
    %v4767 = vunpack.c.h.b16 %v4677
    %v4768 = vunpack.c.l.b16 %v4678
    %v4769 = vunpack.c.h.b16 %v4678
    %v4770 = vunpack.c.l.b16 %v4679
    %v4771 = vunpack.c.h.b16 %v4679
    %v4772 = vunpack.c.l.b16 %v4680
    %v4773 = vunpack.c.h.b16 %v4680
    %v4774 = vunpack.c.l.b16 %v4681
    %v4775 = vunpack.c.h.b16 %v4681
    %v4776 = vunpack.c.l.b16 %v4682
    %v4777 = vunpack.c.h.b16 %v4682
    %v4778 = vunpack.c.l.b16 %v4683
    %v4779 = vunpack.c.h.b16 %v4683
    %v4780 = vpack.c.b16 %v4720, %v4716
    %v4781 = vpack.c.b16 %v4721, %v4717
    %v4782 = vpack.c.b16 %v4722, %v4718
    %v4783 = vpack.c.b16 %v4723, %v4719
    %v4784 = vpack.c.b16 %v4728, %v4724
    %v4785 = vpack.c.b16 %v4729, %v4725
    %v4786 = vpack.c.b16 %v4730, %v4726
    %v4787 = vpack.c.b16 %v4731, %v4727
    %v4788 = vpack.c.b16 %v4736, %v4732
    %v4789 = vpack.c.b16 %v4737, %v4733
    %v4790 = vpack.c.b16 %v4738, %v4734
    %v4791 = vpack.c.b16 %v4739, %v4735
    %v4792 = vpack.c.b16 %v4744, %v4740
    %v4793 = vpack.c.b16 %v4745, %v4741
    %v4794 = vpack.c.b16 %v4746, %v4742
    %v4795 = vpack.c.b16 %v4747, %v4743
    %v4796 = vpack.c.b16 %v4752, %v4748
    %v4797 = vpack.c.b16 %v4753, %v4749
    %v4798 = vpack.c.b16 %v4754, %v4750
    %v4799 = vpack.c.b16 %v4755, %v4751
    %v4800 = vpack.c.b16 %v4760, %v4756
    %v4801 = vpack.c.b16 %v4761, %v4757
    %v4802 = vpack.c.b16 %v4762, %v4758
    %v4803 = vpack.c.b16 %v4763, %v4759
    %v4804 = vpack.c.b16 %v4768, %v4764
    %v4805 = vpack.c.b16 %v4769, %v4765
    %v4806 = vpack.c.b16 %v4770, %v4766
    %v4807 = vpack.c.b16 %v4771, %v4767
    %v4808 = vpack.c.b16 %v4776, %v4772
    %v4809 = vpack.c.b16 %v4777, %v4773
    %v4810 = vpack.c.b16 %v4778, %v4774
    %v4811 = vpack.c.b16 %v4779, %v4775
    %4844 = vmatprep.subr.bf16.mxu0 %v4781
    %4845 = vmatpush1.bf16.msra.mxu0 %v4780
    %4846 = vmatprep.subr.bf16.mxu0 %v4785
    %4847 = vmatpush1.bf16.msra.mxu0 %v4784
    %4848 = vmatprep.subr.bf16.mxu0 %v4789
    %4849 = vmatpush1.bf16.msra.mxu0 %v4788
    %4850 = vmatprep.subr.bf16.mxu0 %v4793
    %4851 = vmatpush1.bf16.msra.mxu0 %v4792
    %4852 = vmatprep.subr.bf16.mxu0 %v4797
    %4853 = vmatpush1.bf16.msra.mxu0 %v4796
    %4854 = vmatprep.subr.bf16.mxu0 %v4801
    %4855 = vmatpush1.bf16.msra.mxu0 %v4800
    %4856 = vmatprep.subr.bf16.mxu0 %v4805
    %4857 = vmatpush1.bf16.msra.mxu0 %v4804
    %4858 = vmatprep.subr.bf16.mxu0 %v4809
    %4859 = vmatpush1.bf16.msra.mxu0 %v4808
    %4860 = vmatprep.subr.bf16.mxu0 0
    %4861 = vmatpush1.bf16.msra.mxu0 0
    %4862 = vmatprep.subr.bf16.mxu0 0
    %4863 = vmatpush1.bf16.msra.mxu0 0
    %4864 = vmatprep.subr.bf16.mxu0 0
    %4865 = vmatpush1.bf16.msra.mxu0 0
    %4866 = vmatprep.subr.bf16.mxu0 0
    %4867 = vmatpush1.bf16.msra.mxu0 0
    %4868 = vmatprep.subr.bf16.mxu0 0
    %4869 = vmatpush1.bf16.msra.mxu0 0
    %4870 = vmatprep.subr.bf16.mxu0 0
    %4871 = vmatpush1.bf16.msra.mxu0 0
    %4872 = vmatprep.subr.bf16.mxu0 0
    %4873 = vmatpush1.bf16.msra.mxu0 0
    %4874 = vmatprep.subr.bf16.mxu0 0
    %4875 = vmatpush1.bf16.msra.mxu0 0
    %4876 = vmatprep.mubr.bf16.mxu0 0
    %4877 = vmatmul.mubr.bf16.gmra.mrb[0].mxu0 %v4651
    %v4878 = vpop.f32.mrb[0].mxu0
    %v4879 = vadd.f32 0.0, %v4878
    %v4880 = vpop.f32.mrb[0].mxu0
    %v4881 = vadd.f32 0.0, %v4880
    %v4882 = vpop.f32.mrb[0].mxu0
    %v4883 = vpop.f32.mrb[0].mxu0
    %4884 = vdwg.mxu0
    %4885 = vmatprep.subr.bf16.mxu0 %v4783
    %4886 = vmatpush1.bf16.msra.mxu0 %v4782
    %4887 = vmatprep.subr.bf16.mxu0 %v4787
    %4888 = vmatpush1.bf16.msra.mxu0 %v4786
    %4889 = vmatprep.subr.bf16.mxu0 %v4791
    %4890 = vmatpush1.bf16.msra.mxu0 %v4790
    %4891 = vmatprep.subr.bf16.mxu0 %v4795
    %4892 = vmatpush1.bf16.msra.mxu0 %v4794
    %4893 = vmatprep.subr.bf16.mxu0 %v4799
    %4894 = vmatpush1.bf16.msra.mxu0 %v4798
    %4895 = vmatprep.subr.bf16.mxu0 %v4803
    %4896 = vmatpush1.bf16.msra.mxu0 %v4802
    %4897 = vmatprep.subr.bf16.mxu0 %v4807
    %4898 = vmatpush1.bf16.msra.mxu0 %v4806
    %4899 = vmatprep.subr.bf16.mxu0 %v4811
    %4900 = vmatpush1.bf16.msra.mxu0 %v4810
    %4901 = vmatprep.subr.bf16.mxu0 0
    %4902 = vmatpush1.bf16.msra.mxu0 0
    %4903 = vmatprep.subr.bf16.mxu0 0
    %4904 = vmatpush1.bf16.msra.mxu0 0
    %4905 = vmatprep.subr.bf16.mxu0 0
    %4906 = vmatpush1.bf16.msra.mxu0 0
    %4907 = vmatprep.subr.bf16.mxu0 0
    %4908 = vmatpush1.bf16.msra.mxu0 0
    %4909 = vmatprep.subr.bf16.mxu0 0
    %4910 = vmatpush1.bf16.msra.mxu0 0
    %4911 = vmatprep.subr.bf16.mxu0 0
    %4912 = vmatpush1.bf16.msra.mxu0 0
    %4913 = vmatprep.subr.bf16.mxu0 0
    %4914 = vmatpush1.bf16.msra.mxu0 0
    %4915 = vmatprep.subr.bf16.mxu0 0
    %4916 = vmatpush1.bf16.msra.mxu0 0
    %4917 = vmatprep.mubr.bf16.mxu0 0
    %4918 = vmatmul.mubr.bf16.gmra.mrb[0].mxu0 %v4651
    %v4919 = vpop.f32.mrb[0].mxu0
    %v4920 = vadd.f32 0.0, %v4919
    %v4921 = vpop.f32.mrb[0].mxu0
    %v4922 = vadd.f32 0.0, %v4921
    %v4923 = vpop.f32.mrb[0].mxu0
    %v4924 = vpop.f32.mrb[0].mxu0
    %4925 = vdwg.mxu0
    %v4926 = vadd.f32 %v4646, %v4879
    %v4927 = vadd.f32 %v4647, %v4881
    %v4928 = vadd.f32 %v4648, %v4920
    %v4929 = vadd.f32 %v4649, %v4922
    %v4930 = vxor.u32 %v4926, 2147483648
    %v4931 = vmul.f32 %v4930, 1.442695
    %v4932 = vpow.pop %v4931
    %v4933 = vadd.f32 %v4932, 1.0
    %v4934 = vrcp.pop %v4933
    %v4935 = vmul.f32 1.0, %v4934
    %v4936 = vxor.u32 %v4927, 2147483648
    %v4937 = vmul.f32 %v4936, 1.442695
    %v4938 = vpow.pop %v4937
    %v4939 = vadd.f32 %v4938, 1.0
    %v4940 = vrcp.pop %v4939
    %v4941 = vmul.f32 1.0, %v4940
    %v4942 = vtanh.pop %v4928
    %v4943 = vxor.u32 %v4929, 2147483648
    %v4944 = vmul.f32 %v4943, 1.442695
    %v4945 = vpow.pop %v4944
    %v4946 = vadd.f32 %v4945, 1.0
    %v4947 = vrcp.pop %v4946
    %v4948 = vmul.f32 1.0, %v4947
    %v4949 = vld [vmem:[#allocation5] sm:$0xff]
    %v4950 = vmul.f32 %v4941, %v4949
    %v4951 = vmul.f32 %v4935, %v4942
    %v4952 = vadd.f32 %v4950, %v4951
    %v4953 = vtanh.pop %v4952
    %v4954 = vmul.f32 %v4948, %v4953
    %4955 = vst [vmem:[#allocation5] sm:$0xff] %v4952
    %4956 = vst [vmem:[#allocation4] sm:$0xff] %v4954
    %v4957 = vld [vmem:[#allocation2 + $0xa0] sm:$0xff]
    %v4958 = vld [vmem:[#allocation2 + $0xa8] sm:$0xff]
    %v4959 = vld [vmem:[#allocation2 + $0xb0] sm:$0xff]
    %v4960 = vld [vmem:[#allocation2 + $0xb8] sm:$0xff]
    %v4961 = vld [vmem:[#allocation4] sm:$0xff]
    %v4962 = vpack.c.bf16 %v4961, %v4961
    %v4963 = vld [vmem:[%s3407] sm:$0xff]
    %v4964 = vld [vmem:[%s3407 + $0x8] sm:$0xff]
    %v4965 = vld [vmem:[%s3407 + $0x10] sm:$0xff]
    %v4966 = vld [vmem:[%s3407 + $0x18] sm:$0xff]
    %v4967 = vld [vmem:[%s3407 + $0x20] sm:$0xff]
    %v4968 = vld [vmem:[%s3407 + $0x28] sm:$0xff]
    %v4969 = vld [vmem:[%s3407 + $0x30] sm:$0xff]
    %v4970 = vld [vmem:[%s3407 + $0x38] sm:$0xff]
    %v4971 = vld [vmem:[%s3407 + $0x40] sm:$0xff]
    %v4972 = vld [vmem:[%s3407 + $0x48] sm:$0xff]
    %v4973 = vld [vmem:[%s3407 + $0x50] sm:$0xff]
    %v4974 = vld [vmem:[%s3407 + $0x58] sm:$0xff]
    %v4975 = vld [vmem:[%s3407 + $0x60] sm:$0xff]
    %v4976 = vld [vmem:[%s3407 + $0x68] sm:$0xff]
    %v4977 = vld [vmem:[%s3407 + $0x70] sm:$0xff]
    %v4978 = vld [vmem:[%s3407 + $0x78] sm:$0xff]
    %v4979 = vld [vmem:[%s3407 + $0x80] sm:$0xff]
    %v4980 = vld [vmem:[%s3407 + $0x88] sm:$0xff]
    %v4981 = vld [vmem:[%s3407 + $0x90] sm:$0xff]
    %v4982 = vld [vmem:[%s3407 + $0x98] sm:$0xff]
    %v4983 = vld [vmem:[%s3407 + $0xa0] sm:$0xff]
    %v4984 = vld [vmem:[%s3407 + $0xa8] sm:$0xff]
    %v4985 = vld [vmem:[%s3407 + $0xb0] sm:$0xff]
    %v4986 = vld [vmem:[%s3407 + $0xb8] sm:$0xff]
    %v4987 = vld [vmem:[%s3407 + $0xc0] sm:$0xff]
    %v4988 = vld [vmem:[%s3407 + $0xc8] sm:$0xff]
    %v4989 = vld [vmem:[%s3407 + $0xd0] sm:$0xff]
    %v4990 = vld [vmem:[%s3407 + $0xd8] sm:$0xff]
    %v4991 = vld [vmem:[%s3407 + $0xe0] sm:$0xff]
    %v4992 = vld [vmem:[%s3407 + $0xe8] sm:$0xff]
    %v4993 = vld [vmem:[%s3407 + $0xf0] sm:$0xff]
    %v4994 = vld [vmem:[%s3407 + $0xf8] sm:$0xff]
    %v5027 = vunpack.c.l.b16 %v4963
    %v5028 = vunpack.c.h.b16 %v4963
    %v5029 = vunpack.c.l.b16 %v4964
    %v5030 = vunpack.c.h.b16 %v4964
    %v5031 = vunpack.c.l.b16 %v4965
    %v5032 = vunpack.c.h.b16 %v4965
    %v5033 = vunpack.c.l.b16 %v4966
    %v5034 = vunpack.c.h.b16 %v4966
    %v5035 = vunpack.c.l.b16 %v4967
    %v5036 = vunpack.c.h.b16 %v4967
    %v5037 = vunpack.c.l.b16 %v4968
    %v5038 = vunpack.c.h.b16 %v4968
    %v5039 = vunpack.c.l.b16 %v4969
    %v5040 = vunpack.c.h.b16 %v4969
    %v5041 = vunpack.c.l.b16 %v4970
    %v5042 = vunpack.c.h.b16 %v4970
    %v5043 = vunpack.c.l.b16 %v4971
    %v5044 = vunpack.c.h.b16 %v4971
    %v5045 = vunpack.c.l.b16 %v4972
    %v5046 = vunpack.c.h.b16 %v4972
    %v5047 = vunpack.c.l.b16 %v4973
    %v5048 = vunpack.c.h.b16 %v4973
    %v5049 = vunpack.c.l.b16 %v4974
    %v5050 = vunpack.c.h.b16 %v4974
    %v5051 = vunpack.c.l.b16 %v4975
    %v5052 = vunpack.c.h.b16 %v4975
    %v5053 = vunpack.c.l.b16 %v4976
    %v5054 = vunpack.c.h.b16 %v4976
    %v5055 = vunpack.c.l.b16 %v4977
    %v5056 = vunpack.c.h.b16 %v4977
    %v5057 = vunpack.c.l.b16 %v4978
    %v5058 = vunpack.c.h.b16 %v4978
    %v5059 = vunpack.c.l.b16 %v4979
    %v5060 = vunpack.c.h.b16 %v4979
    %v5061 = vunpack.c.l.b16 %v4980
    %v5062 = vunpack.c.h.b16 %v4980
    %v5063 = vunpack.c.l.b16 %v4981
    %v5064 = vunpack.c.h.b16 %v4981
    %v5065 = vunpack.c.l.b16 %v4982
    %v5066 = vunpack.c.h.b16 %v4982
    %v5067 = vunpack.c.l.b16 %v4983
    %v5068 = vunpack.c.h.b16 %v4983
    %v5069 = vunpack.c.l.b16 %v4984
    %v5070 = vunpack.c.h.b16 %v4984
    %v5071 = vunpack.c.l.b16 %v4985
    %v5072 = vunpack.c.h.b16 %v4985
    %v5073 = vunpack.c.l.b16 %v4986
    %v5074 = vunpack.c.h.b16 %v4986
    %v5075 = vunpack.c.l.b16 %v4987
    %v5076 = vunpack.c.h.b16 %v4987
    %v5077 = vunpack.c.l.b16 %v4988
    %v5078 = vunpack.c.h.b16 %v4988
    %v5079 = vunpack.c.l.b16 %v4989
    %v5080 = vunpack.c.h.b16 %v4989
    %v5081 = vunpack.c.l.b16 %v4990
    %v5082 = vunpack.c.h.b16 %v4990
    %v5083 = vunpack.c.l.b16 %v4991
    %v5084 = vunpack.c.h.b16 %v4991
    %v5085 = vunpack.c.l.b16 %v4992
    %v5086 = vunpack.c.h.b16 %v4992
    %v5087 = vunpack.c.l.b16 %v4993
    %v5088 = vunpack.c.h.b16 %v4993
    %v5089 = vunpack.c.l.b16 %v4994
    %v5090 = vunpack.c.h.b16 %v4994
    %v5091 = vpack.c.b16 %v5031, %v5027
    %v5092 = vpack.c.b16 %v5032, %v5028
    %v5093 = vpack.c.b16 %v5033, %v5029
    %v5094 = vpack.c.b16 %v5034, %v5030
    %v5095 = vpack.c.b16 %v5039, %v5035
    %v5096 = vpack.c.b16 %v5040, %v5036
    %v5097 = vpack.c.b16 %v5041, %v5037
    %v5098 = vpack.c.b16 %v5042, %v5038
    %v5099 = vpack.c.b16 %v5047, %v5043
    %v5100 = vpack.c.b16 %v5048, %v5044
    %v5101 = vpack.c.b16 %v5049, %v5045
    %v5102 = vpack.c.b16 %v5050, %v5046
    %v5103 = vpack.c.b16 %v5055, %v5051
    %v5104 = vpack.c.b16 %v5056, %v5052
    %v5105 = vpack.c.b16 %v5057, %v5053
    %v5106 = vpack.c.b16 %v5058, %v5054
    %v5107 = vpack.c.b16 %v5063, %v5059
    %v5108 = vpack.c.b16 %v5064, %v5060
    %v5109 = vpack.c.b16 %v5065, %v5061
    %v5110 = vpack.c.b16 %v5066, %v5062
    %v5111 = vpack.c.b16 %v5071, %v5067
    %v5112 = vpack.c.b16 %v5072, %v5068
    %v5113 = vpack.c.b16 %v5073, %v5069
    %v5114 = vpack.c.b16 %v5074, %v5070
    %v5115 = vpack.c.b16 %v5079, %v5075
    %v5116 = vpack.c.b16 %v5080, %v5076
    %v5117 = vpack.c.b16 %v5081, %v5077
    %v5118 = vpack.c.b16 %v5082, %v5078
    %v5119 = vpack.c.b16 %v5087, %v5083
    %v5120 = vpack.c.b16 %v5088, %v5084
    %v5121 = vpack.c.b16 %v5089, %v5085
    %v5122 = vpack.c.b16 %v5090, %v5086
    %5155 = vmatprep.subr.bf16.mxu0 %v5092
    %5156 = vmatpush1.bf16.msra.mxu0 %v5091
    %5157 = vmatprep.subr.bf16.mxu0 %v5096
    %5158 = vmatpush1.bf16.msra.mxu0 %v5095
    %5159 = vmatprep.subr.bf16.mxu0 %v5100
    %5160 = vmatpush1.bf16.msra.mxu0 %v5099
    %5161 = vmatprep.subr.bf16.mxu0 %v5104
    %5162 = vmatpush1.bf16.msra.mxu0 %v5103
    %5163 = vmatprep.subr.bf16.mxu0 %v5108
    %5164 = vmatpush1.bf16.msra.mxu0 %v5107
    %5165 = vmatprep.subr.bf16.mxu0 %v5112
    %5166 = vmatpush1.bf16.msra.mxu0 %v5111
    %5167 = vmatprep.subr.bf16.mxu0 %v5116
    %5168 = vmatpush1.bf16.msra.mxu0 %v5115
    %5169 = vmatprep.subr.bf16.mxu0 %v5120
    %5170 = vmatpush1.bf16.msra.mxu0 %v5119
    %5171 = vmatprep.subr.bf16.mxu0 0
    %5172 = vmatpush1.bf16.msra.mxu0 0
    %5173 = vmatprep.subr.bf16.mxu0 0
    %5174 = vmatpush1.bf16.msra.mxu0 0
    %5175 = vmatprep.subr.bf16.mxu0 0
    %5176 = vmatpush1.bf16.msra.mxu0 0
    %5177 = vmatprep.subr.bf16.mxu0 0
    %5178 = vmatpush1.bf16.msra.mxu0 0
    %5179 = vmatprep.subr.bf16.mxu0 0
    %5180 = vmatpush1.bf16.msra.mxu0 0
    %5181 = vmatprep.subr.bf16.mxu0 0
    %5182 = vmatpush1.bf16.msra.mxu0 0
    %5183 = vmatprep.subr.bf16.mxu0 0
    %5184 = vmatpush1.bf16.msra.mxu0 0
    %5185 = vmatprep.subr.bf16.mxu0 0
    %5186 = vmatpush1.bf16.msra.mxu0 0
    %5187 = vmatprep.mubr.bf16.mxu0 0
    %5188 = vmatmul.mubr.bf16.gmra.mrb[0].mxu0 %v4962
    %v5189 = vpop.f32.mrb[0].mxu0
    %v5190 = vadd.f32 0.0, %v5189
    %v5191 = vpop.f32.mrb[0].mxu0
    %v5192 = vadd.f32 0.0, %v5191
    %v5193 = vpop.f32.mrb[0].mxu0
    %v5194 = vpop.f32.mrb[0].mxu0
    %5195 = vdwg.mxu0
    %5196 = vmatprep.subr.bf16.mxu0 %v5094
    %5197 = vmatpush1.bf16.msra.mxu0 %v5093
    %5198 = vmatprep.subr.bf16.mxu0 %v5098
    %5199 = vmatpush1.bf16.msra.mxu0 %v5097
    %5200 = vmatprep.subr.bf16.mxu0 %v5102
    %5201 = vmatpush1.bf16.msra.mxu0 %v5101
    %5202 = vmatprep.subr.bf16.mxu0 %v5106
    %5203 = vmatpush1.bf16.msra.mxu0 %v5105
    %5204 = vmatprep.subr.bf16.mxu0 %v5110
    %5205 = vmatpush1.bf16.msra.mxu0 %v5109
    %5206 = vmatprep.subr.bf16.mxu0 %v5114
    %5207 = vmatpush1.bf16.msra.mxu0 %v5113
    %5208 = vmatprep.subr.bf16.mxu0 %v5118
    %5209 = vmatpush1.bf16.msra.mxu0 %v5117
    %5210 = vmatprep.subr.bf16.mxu0 %v5122
    %5211 = vmatpush1.bf16.msra.mxu0 %v5121
    %5212 = vmatprep.subr.bf16.mxu0 0
    %5213 = vmatpush1.bf16.msra.mxu0 0
    %5214 = vmatprep.subr.bf16.mxu0 0
    %5215 = vmatpush1.bf16.msra.mxu0 0
    %5216 = vmatprep.subr.bf16.mxu0 0
    %5217 = vmatpush1.bf16.msra.mxu0 0
    %5218 = vmatprep.subr.bf16.mxu0 0
    %5219 = vmatpush1.bf16.msra.mxu0 0
    %5220 = vmatprep.subr.bf16.mxu0 0
    %5221 = vmatpush1.bf16.msra.mxu0 0
    %5222 = vmatprep.subr.bf16.mxu0 0
    %5223 = vmatpush1.bf16.msra.mxu0 0
    %5224 = vmatprep.subr.bf16.mxu0 0
    %5225 = vmatpush1.bf16.msra.mxu0 0
    %5226 = vmatprep.subr.bf16.mxu0 0
    %5227 = vmatpush1.bf16.msra.mxu0 0
    %5228 = vmatprep.mubr.bf16.mxu0 0
    %5229 = vmatmul.mubr.bf16.gmra.mrb[0].mxu0 %v4962
    %v5230 = vpop.f32.mrb[0].mxu0
    %v5231 = vadd.f32 0.0, %v5230
    %v5232 = vpop.f32.mrb[0].mxu0
    %v5233 = vadd.f32 0.0, %v5232
    %v5234 = vpop.f32.mrb[0].mxu0
    %v5235 = vpop.f32.mrb[0].mxu0
    %5236 = vdwg.mxu0
    %v5237 = vadd.f32 %v4957, %v5190
    %v5238 = vadd.f32 %v4958, %v5192
    %v5239 = vadd.f32 %v4959, %v5231
    %v5240 = vadd.f32 %v4960, %v5233
    %v5241 = vxor.u32 %v5237, 2147483648
    %v5242 = vmul.f32 %v5241, 1.442695
    %v5243 = vpow.pop %v5242
    %v5244 = vadd.f32 %v5243, 1.0
    %v5245 = vrcp.pop %v5244
    %v5246 = vmul.f32 1.0, %v5245
    %v5247 = vxor.u32 %v5238, 2147483648
    %v5248 = vmul.f32 %v5247, 1.442695
    %v5249 = vpow.pop %v5248
    %v5250 = vadd.f32 %v5249, 1.0
    %v5251 = vrcp.pop %v5250
    %v5252 = vmul.f32 1.0, %v5251
    %v5253 = vtanh.pop %v5239
    %v5254 = vxor.u32 %v5240, 2147483648
    %v5255 = vmul.f32 %v5254, 1.442695
    %v5256 = vpow.pop %v5255
    %v5257 = vadd.f32 %v5256, 1.0
    %v5258 = vrcp.pop %v5257
    %v5259 = vmul.f32 1.0, %v5258
    %v5260 = vld [vmem:[#allocation5] sm:$0xff]
    %v5261 = vmul.f32 %v5252, %v5260
    %v5262 = vmul.f32 %v5246, %v5253
    %v5263 = vadd.f32 %v5261, %v5262
    %v5264 = vtanh.pop %v5263
    %v5265 = vmul.f32 %v5259, %v5264
    %5266 = vst [vmem:[#allocation5] sm:$0xff] %v5263
    %5267 = vst [vmem:[#allocation4] sm:$0xff] %v5265
    %v5268 = vld [vmem:[#allocation2 + $0xc0] sm:$0xff]
    %v5269 = vld [vmem:[#allocation2 + $0xc8] sm:$0xff]
    %v5270 = vld [vmem:[#allocation2 + $0xd0] sm:$0xff]
    %v5271 = vld [vmem:[#allocation2 + $0xd8] sm:$0xff]
    %v5272 = vld [vmem:[#allocation4] sm:$0xff]
    %v5273 = vpack.c.bf16 %v5272, %v5272
    %v5274 = vld [vmem:[%s3407] sm:$0xff]
    %v5275 = vld [vmem:[%s3407 + $0x8] sm:$0xff]
    %v5276 = vld [vmem:[%s3407 + $0x10] sm:$0xff]
    %v5277 = vld [vmem:[%s3407 + $0x18] sm:$0xff]
    %v5278 = vld [vmem:[%s3407 + $0x20] sm:$0xff]
    %v5279 = vld [vmem:[%s3407 + $0x28] sm:$0xff]
    %v5280 = vld [vmem:[%s3407 + $0x30] sm:$0xff]
    %v5281 = vld [vmem:[%s3407 + $0x38] sm:$0xff]
    %v5282 = vld [vmem:[%s3407 + $0x40] sm:$0xff]
    %v5283 = vld [vmem:[%s3407 + $0x48] sm:$0xff]
    %v5284 = vld [vmem:[%s3407 + $0x50] sm:$0xff]
    %v5285 = vld [vmem:[%s3407 + $0x58] sm:$0xff]
    %v5286 = vld [vmem:[%s3407 + $0x60] sm:$0xff]
    %v5287 = vld [vmem:[%s3407 + $0x68] sm:$0xff]
    %v5288 = vld [vmem:[%s3407 + $0x70] sm:$0xff]
    %v5289 = vld [vmem:[%s3407 + $0x78] sm:$0xff]
    %v5290 = vld [vmem:[%s3407 + $0x80] sm:$0xff]
    %v5291 = vld [vmem:[%s3407 + $0x88] sm:$0xff]
    %v5292 = vld [vmem:[%s3407 + $0x90] sm:$0xff]
    %v5293 = vld [vmem:[%s3407 + $0x98] sm:$0xff]
    %v5294 = vld [vmem:[%s3407 + $0xa0] sm:$0xff]
    %v5295 = vld [vmem:[%s3407 + $0xa8] sm:$0xff]
    %v5296 = vld [vmem:[%s3407 + $0xb0] sm:$0xff]
    %v5297 = vld [vmem:[%s3407 + $0xb8] sm:$0xff]
    %v5298 = vld [vmem:[%s3407 + $0xc0] sm:$0xff]
    %v5299 = vld [vmem:[%s3407 + $0xc8] sm:$0xff]
    %v5300 = vld [vmem:[%s3407 + $0xd0] sm:$0xff]
    %v5301 = vld [vmem:[%s3407 + $0xd8] sm:$0xff]
    %v5302 = vld [vmem:[%s3407 + $0xe0] sm:$0xff]
    %v5303 = vld [vmem:[%s3407 + $0xe8] sm:$0xff]
    %v5304 = vld [vmem:[%s3407 + $0xf0] sm:$0xff]
    %v5305 = vld [vmem:[%s3407 + $0xf8] sm:$0xff]
    %v5338 = vunpack.c.l.b16 %v5274
    %v5339 = vunpack.c.h.b16 %v5274
    %v5340 = vunpack.c.l.b16 %v5275
    %v5341 = vunpack.c.h.b16 %v5275
    %v5342 = vunpack.c.l.b16 %v5276
    %v5343 = vunpack.c.h.b16 %v5276
    %v5344 = vunpack.c.l.b16 %v5277
    %v5345 = vunpack.c.h.b16 %v5277
    %v5346 = vunpack.c.l.b16 %v5278
    %v5347 = vunpack.c.h.b16 %v5278
    %v5348 = vunpack.c.l.b16 %v5279
    %v5349 = vunpack.c.h.b16 %v5279
    %v5350 = vunpack.c.l.b16 %v5280
    %v5351 = vunpack.c.h.b16 %v5280
    %v5352 = vunpack.c.l.b16 %v5281
    %v5353 = vunpack.c.h.b16 %v5281
    %v5354 = vunpack.c.l.b16 %v5282
    %v5355 = vunpack.c.h.b16 %v5282
    %v5356 = vunpack.c.l.b16 %v5283
    %v5357 = vunpack.c.h.b16 %v5283
    %v5358 = vunpack.c.l.b16 %v5284
    %v5359 = vunpack.c.h.b16 %v5284
    %v5360 = vunpack.c.l.b16 %v5285
    %v5361 = vunpack.c.h.b16 %v5285
    %v5362 = vunpack.c.l.b16 %v5286
    %v5363 = vunpack.c.h.b16 %v5286
    %v5364 = vunpack.c.l.b16 %v5287
    %v5365 = vunpack.c.h.b16 %v5287
    %v5366 = vunpack.c.l.b16 %v5288
    %v5367 = vunpack.c.h.b16 %v5288
    %v5368 = vunpack.c.l.b16 %v5289
    %v5369 = vunpack.c.h.b16 %v5289
    %v5370 = vunpack.c.l.b16 %v5290
    %v5371 = vunpack.c.h.b16 %v5290
    %v5372 = vunpack.c.l.b16 %v5291
    %v5373 = vunpack.c.h.b16 %v5291
    %v5374 = vunpack.c.l.b16 %v5292
    %v5375 = vunpack.c.h.b16 %v5292
    %v5376 = vunpack.c.l.b16 %v5293
    %v5377 = vunpack.c.h.b16 %v5293
    %v5378 = vunpack.c.l.b16 %v5294
    %v5379 = vunpack.c.h.b16 %v5294
    %v5380 = vunpack.c.l.b16 %v5295
    %v5381 = vunpack.c.h.b16 %v5295
    %v5382 = vunpack.c.l.b16 %v5296
    %v5383 = vunpack.c.h.b16 %v5296
    %v5384 = vunpack.c.l.b16 %v5297
    %v5385 = vunpack.c.h.b16 %v5297
    %v5386 = vunpack.c.l.b16 %v5298
    %v5387 = vunpack.c.h.b16 %v5298
    %v5388 = vunpack.c.l.b16 %v5299
    %v5389 = vunpack.c.h.b16 %v5299
    %v5390 = vunpack.c.l.b16 %v5300
    %v5391 = vunpack.c.h.b16 %v5300
    %v5392 = vunpack.c.l.b16 %v5301
    %v5393 = vunpack.c.h.b16 %v5301
    %v5394 = vunpack.c.l.b16 %v5302
    %v5395 = vunpack.c.h.b16 %v5302
    %v5396 = vunpack.c.l.b16 %v5303
    %v5397 = vunpack.c.h.b16 %v5303
    %v5398 = vunpack.c.l.b16 %v5304
    %v5399 = vunpack.c.h.b16 %v5304
    %v5400 = vunpack.c.l.b16 %v5305
    %v5401 = vunpack.c.h.b16 %v5305
    %v5402 = vpack.c.b16 %v5342, %v5338
    %v5403 = vpack.c.b16 %v5343, %v5339
    %v5404 = vpack.c.b16 %v5344, %v5340
    %v5405 = vpack.c.b16 %v5345, %v5341
    %v5406 = vpack.c.b16 %v5350, %v5346
    %v5407 = vpack.c.b16 %v5351, %v5347
    %v5408 = vpack.c.b16 %v5352, %v5348
    %v5409 = vpack.c.b16 %v5353, %v5349
    %v5410 = vpack.c.b16 %v5358, %v5354
    %v5411 = vpack.c.b16 %v5359, %v5355
    %v5412 = vpack.c.b16 %v5360, %v5356
    %v5413 = vpack.c.b16 %v5361, %v5357
    %v5414 = vpack.c.b16 %v5366, %v5362
    %v5415 = vpack.c.b16 %v5367, %v5363
    %v5416 = vpack.c.b16 %v5368, %v5364
    %v5417 = vpack.c.b16 %v5369, %v5365
    %v5418 = vpack.c.b16 %v5374, %v5370
    %v5419 = vpack.c.b16 %v5375, %v5371
    %v5420 = vpack.c.b16 %v5376, %v5372
    %v5421 = vpack.c.b16 %v5377, %v5373
    %v5422 = vpack.c.b16 %v5382, %v5378
    %v5423 = vpack.c.b16 %v5383, %v5379
    %v5424 = vpack.c.b16 %v5384, %v5380
    %v5425 = vpack.c.b16 %v5385, %v5381
    %v5426 = vpack.c.b16 %v5390, %v5386
    %v5427 = vpack.c.b16 %v5391, %v5387
    %v5428 = vpack.c.b16 %v5392, %v5388
    %v5429 = vpack.c.b16 %v5393, %v5389
    %v5430 = vpack.c.b16 %v5398, %v5394
    %v5431 = vpack.c.b16 %v5399, %v5395
    %v5432 = vpack.c.b16 %v5400, %v5396
    %v5433 = vpack.c.b16 %v5401, %v5397
    %5466 = vmatprep.subr.bf16.mxu0 %v5403
    %5467 = vmatpush1.bf16.msra.mxu0 %v5402
    %5468 = vmatprep.subr.bf16.mxu0 %v5407
    %5469 = vmatpush1.bf16.msra.mxu0 %v5406
    %5470 = vmatprep.subr.bf16.mxu0 %v5411
    %5471 = vmatpush1.bf16.msra.mxu0 %v5410
    %5472 = vmatprep.subr.bf16.mxu0 %v5415
    %5473 = vmatpush1.bf16.msra.mxu0 %v5414
    %5474 = vmatprep.subr.bf16.mxu0 %v5419
    %5475 = vmatpush1.bf16.msra.mxu0 %v5418
    %5476 = vmatprep.subr.bf16.mxu0 %v5423
    %5477 = vmatpush1.bf16.msra.mxu0 %v5422
    %5478 = vmatprep.subr.bf16.mxu0 %v5427
    %5479 = vmatpush1.bf16.msra.mxu0 %v5426
    %5480 = vmatprep.subr.bf16.mxu0 %v5431
    %5481 = vmatpush1.bf16.msra.mxu0 %v5430
    %5482 = vmatprep.subr.bf16.mxu0 0
    %5483 = vmatpush1.bf16.msra.mxu0 0
    %5484 = vmatprep.subr.bf16.mxu0 0
    %5485 = vmatpush1.bf16.msra.mxu0 0
    %5486 = vmatprep.subr.bf16.mxu0 0
    %5487 = vmatpush1.bf16.msra.mxu0 0
    %5488 = vmatprep.subr.bf16.mxu0 0
    %5489 = vmatpush1.bf16.msra.mxu0 0
    %5490 = vmatprep.subr.bf16.mxu0 0
    %5491 = vmatpush1.bf16.msra.mxu0 0
    %5492 = vmatprep.subr.bf16.mxu0 0
    %5493 = vmatpush1.bf16.msra.mxu0 0
    %5494 = vmatprep.subr.bf16.mxu0 0
    %5495 = vmatpush1.bf16.msra.mxu0 0
    %5496 = vmatprep.subr.bf16.mxu0 0
    %5497 = vmatpush1.bf16.msra.mxu0 0
    %5498 = vmatprep.mubr.bf16.mxu0 0
    %5499 = vmatmul.mubr.bf16.gmra.mrb[0].mxu0 %v5273
    %v5500 = vpop.f32.mrb[0].mxu0
    %v5501 = vadd.f32 0.0, %v5500
    %v5502 = vpop.f32.mrb[0].mxu0
    %v5503 = vadd.f32 0.0, %v5502
    %v5504 = vpop.f32.mrb[0].mxu0
    %v5505 = vpop.f32.mrb[0].mxu0
    %5506 = vdwg.mxu0
    %5507 = vmatprep.subr.bf16.mxu0 %v5405
    %5508 = vmatpush1.bf16.msra.mxu0 %v5404
    %5509 = vmatprep.subr.bf16.mxu0 %v5409
    %5510 = vmatpush1.bf16.msra.mxu0 %v5408
    %5511 = vmatprep.subr.bf16.mxu0 %v5413
    %5512 = vmatpush1.bf16.msra.mxu0 %v5412
    %5513 = vmatprep.subr.bf16.mxu0 %v5417
    %5514 = vmatpush1.bf16.msra.mxu0 %v5416
    %5515 = vmatprep.subr.bf16.mxu0 %v5421
    %5516 = vmatpush1.bf16.msra.mxu0 %v5420
    %5517 = vmatprep.subr.bf16.mxu0 %v5425
    %5518 = vmatpush1.bf16.msra.mxu0 %v5424
    %5519 = vmatprep.subr.bf16.mxu0 %v5429
    %5520 = vmatpush1.bf16.msra.mxu0 %v5428
    %5521 = vmatprep.subr.bf16.mxu0 %v5433
    %5522 = vmatpush1.bf16.msra.mxu0 %v5432
    %5523 = vmatprep.subr.bf16.mxu0 0
    %5524 = vmatpush1.bf16.msra.mxu0 0
    %5525 = vmatprep.subr.bf16.mxu0 0
    %5526 = vmatpush1.bf16.msra.mxu0 0
    %5527 = vmatprep.subr.bf16.mxu0 0
    %5528 = vmatpush1.bf16.msra.mxu0 0
    %5529 = vmatprep.subr.bf16.mxu0 0
    %5530 = vmatpush1.bf16.msra.mxu0 0
    %5531 = vmatprep.subr.bf16.mxu0 0
    %5532 = vmatpush1.bf16.msra.mxu0 0
    %5533 = vmatprep.subr.bf16.mxu0 0
    %5534 = vmatpush1.bf16.msra.mxu0 0
    %5535 = vmatprep.subr.bf16.mxu0 0
    %5536 = vmatpush1.bf16.msra.mxu0 0
    %5537 = vmatprep.subr.bf16.mxu0 0
    %5538 = vmatpush1.bf16.msra.mxu0 0
    %5539 = vmatprep.mubr.bf16.mxu0 0
    %5540 = vmatmul.mubr.bf16.gmra.mrb[0].mxu0 %v5273
    %v5541 = vpop.f32.mrb[0].mxu0
    %v5542 = vadd.f32 0.0, %v5541
    %v5543 = vpop.f32.mrb[0].mxu0
    %v5544 = vadd.f32 0.0, %v5543
    %v5545 = vpop.f32.mrb[0].mxu0
    %v5546 = vpop.f32.mrb[0].mxu0
    %5547 = vdwg.mxu0
    %v5548 = vadd.f32 %v5268, %v5501
    %v5549 = vadd.f32 %v5269, %v5503
    %v5550 = vadd.f32 %v5270, %v5542
    %v5551 = vadd.f32 %v5271, %v5544
    %v5552 = vxor.u32 %v5548, 2147483648
    %v5553 = vmul.f32 %v5552, 1.442695
    %v5554 = vpow.pop %v5553
    %v5555 = vadd.f32 %v5554, 1.0
    %v5556 = vrcp.pop %v5555
    %v5557 = vmul.f32 1.0, %v5556
    %v5558 = vxor.u32 %v5549, 2147483648
    %v5559 = vmul.f32 %v5558, 1.442695
    %v5560 = vpow.pop %v5559
    %v5561 = vadd.f32 %v5560, 1.0
    %v5562 = vrcp.pop %v5561
    %v5563 = vmul.f32 1.0, %v5562
    %v5564 = vtanh.pop %v5550
    %v5565 = vxor.u32 %v5551, 2147483648
    %v5566 = vmul.f32 %v5565, 1.442695
    %v5567 = vpow.pop %v5566
    %v5568 = vadd.f32 %v5567, 1.0
    %v5569 = vrcp.pop %v5568
    %v5570 = vmul.f32 1.0, %v5569
    %v5571 = vld [vmem:[#allocation5] sm:$0xff]
    %v5572 = vmul.f32 %v5563, %v5571
    %v5573 = vmul.f32 %v5557, %v5564
    %v5574 = vadd.f32 %v5572, %v5573
    %v5575 = vtanh.pop %v5574
    %v5576 = vmul.f32 %v5570, %v5575
    %5577 = vst [vmem:[#allocation5] sm:$0xff] %v5574
    %5578 = vst [vmem:[#allocation4] sm:$0xff] %v5576
    %v5579 = vld [vmem:[#allocation2 + $0xe0] sm:$0xff]
    %v5580 = vld [vmem:[#allocation2 + $0xe8] sm:$0xff]
    %v5581 = vld [vmem:[#allocation2 + $0xf0] sm:$0xff]
    %v5582 = vld [vmem:[#allocation2 + $0xf8] sm:$0xff]
    %v5583 = vld [vmem:[#allocation4] sm:$0xff]
    %v5584 = vpack.c.bf16 %v5583, %v5583
    %v5585 = vld [vmem:[%s3407] sm:$0xff]
    %v5586 = vld [vmem:[%s3407 + $0x8] sm:$0xff]
    %v5587 = vld [vmem:[%s3407 + $0x10] sm:$0xff]
    %v5588 = vld [vmem:[%s3407 + $0x18] sm:$0xff]
    %v5589 = vld [vmem:[%s3407 + $0x20] sm:$0xff]
    %v5590 = vld [vmem:[%s3407 + $0x28] sm:$0xff]
    %v5591 = vld [vmem:[%s3407 + $0x30] sm:$0xff]
    %v5592 = vld [vmem:[%s3407 + $0x38] sm:$0xff]
    %v5593 = vld [vmem:[%s3407 + $0x40] sm:$0xff]
    %v5594 = vld [vmem:[%s3407 + $0x48] sm:$0xff]
    %v5595 = vld [vmem:[%s3407 + $0x50] sm:$0xff]
    %v5596 = vld [vmem:[%s3407 + $0x58] sm:$0xff]
    %v5597 = vld [vmem:[%s3407 + $0x60] sm:$0xff]
    %v5598 = vld [vmem:[%s3407 + $0x68] sm:$0xff]
    %v5599 = vld [vmem:[%s3407 + $0x70] sm:$0xff]
    %v5600 = vld [vmem:[%s3407 + $0x78] sm:$0xff]
    %v5601 = vld [vmem:[%s3407 + $0x80] sm:$0xff]
    %v5602 = vld [vmem:[%s3407 + $0x88] sm:$0xff]
    %v5603 = vld [vmem:[%s3407 + $0x90] sm:$0xff]
    %v5604 = vld [vmem:[%s3407 + $0x98] sm:$0xff]
    %v5605 = vld [vmem:[%s3407 + $0xa0] sm:$0xff]
    %v5606 = vld [vmem:[%s3407 + $0xa8] sm:$0xff]
    %v5607 = vld [vmem:[%s3407 + $0xb0] sm:$0xff]
    %v5608 = vld [vmem:[%s3407 + $0xb8] sm:$0xff]
    %v5609 = vld [vmem:[%s3407 + $0xc0] sm:$0xff]
    %v5610 = vld [vmem:[%s3407 + $0xc8] sm:$0xff]
    %v5611 = vld [vmem:[%s3407 + $0xd0] sm:$0xff]
    %v5612 = vld [vmem:[%s3407 + $0xd8] sm:$0xff]
    %v5613 = vld [vmem:[%s3407 + $0xe0] sm:$0xff]
    %v5614 = vld [vmem:[%s3407 + $0xe8] sm:$0xff]
    %v5615 = vld [vmem:[%s3407 + $0xf0] sm:$0xff]
    %v5616 = vld [vmem:[%s3407 + $0xf8] sm:$0xff]
    %v5649 = vunpack.c.l.b16 %v5585
    %v5650 = vunpack.c.h.b16 %v5585
    %v5651 = vunpack.c.l.b16 %v5586
    %v5652 = vunpack.c.h.b16 %v5586
    %v5653 = vunpack.c.l.b16 %v5587
    %v5654 = vunpack.c.h.b16 %v5587
    %v5655 = vunpack.c.l.b16 %v5588
    %v5656 = vunpack.c.h.b16 %v5588
    %v5657 = vunpack.c.l.b16 %v5589
    %v5658 = vunpack.c.h.b16 %v5589
    %v5659 = vunpack.c.l.b16 %v5590
    %v5660 = vunpack.c.h.b16 %v5590
    %v5661 = vunpack.c.l.b16 %v5591
    %v5662 = vunpack.c.h.b16 %v5591
    %v5663 = vunpack.c.l.b16 %v5592
    %v5664 = vunpack.c.h.b16 %v5592
    %v5665 = vunpack.c.l.b16 %v5593
    %v5666 = vunpack.c.h.b16 %v5593
    %v5667 = vunpack.c.l.b16 %v5594
    %v5668 = vunpack.c.h.b16 %v5594
    %v5669 = vunpack.c.l.b16 %v5595
    %v5670 = vunpack.c.h.b16 %v5595
    %v5671 = vunpack.c.l.b16 %v5596
    %v5672 = vunpack.c.h.b16 %v5596
    %v5673 = vunpack.c.l.b16 %v5597
    %v5674 = vunpack.c.h.b16 %v5597
    %v5675 = vunpack.c.l.b16 %v5598
    %v5676 = vunpack.c.h.b16 %v5598
    %v5677 = vunpack.c.l.b16 %v5599
    %v5678 = vunpack.c.h.b16 %v5599
    %v5679 = vunpack.c.l.b16 %v5600
    %v5680 = vunpack.c.h.b16 %v5600
    %v5681 = vunpack.c.l.b16 %v5601
    %v5682 = vunpack.c.h.b16 %v5601
    %v5683 = vunpack.c.l.b16 %v5602
    %v5684 = vunpack.c.h.b16 %v5602
    %v5685 = vunpack.c.l.b16 %v5603
    %v5686 = vunpack.c.h.b16 %v5603
    %v5687 = vunpack.c.l.b16 %v5604
    %v5688 = vunpack.c.h.b16 %v5604
    %v5689 = vunpack.c.l.b16 %v5605
    %v5690 = vunpack.c.h.b16 %v5605
    %v5691 = vunpack.c.l.b16 %v5606
    %v5692 = vunpack.c.h.b16 %v5606
    %v5693 = vunpack.c.l.b16 %v5607
    %v5694 = vunpack.c.h.b16 %v5607
    %v5695 = vunpack.c.l.b16 %v5608
    %v5696 = vunpack.c.h.b16 %v5608
    %v5697 = vunpack.c.l.b16 %v5609
    %v5698 = vunpack.c.h.b16 %v5609
    %v5699 = vunpack.c.l.b16 %v5610
    %v5700 = vunpack.c.h.b16 %v5610
    %v5701 = vunpack.c.l.b16 %v5611
    %v5702 = vunpack.c.h.b16 %v5611
    %v5703 = vunpack.c.l.b16 %v5612
    %v5704 = vunpack.c.h.b16 %v5612
    %v5705 = vunpack.c.l.b16 %v5613
    %v5706 = vunpack.c.h.b16 %v5613
    %v5707 = vunpack.c.l.b16 %v5614
    %v5708 = vunpack.c.h.b16 %v5614
    %v5709 = vunpack.c.l.b16 %v5615
    %v5710 = vunpack.c.h.b16 %v5615
    %v5711 = vunpack.c.l.b16 %v5616
    %v5712 = vunpack.c.h.b16 %v5616
    %v5713 = vpack.c.b16 %v5653, %v5649
    %v5714 = vpack.c.b16 %v5654, %v5650
    %v5715 = vpack.c.b16 %v5655, %v5651
    %v5716 = vpack.c.b16 %v5656, %v5652
    %v5717 = vpack.c.b16 %v5661, %v5657
    %v5718 = vpack.c.b16 %v5662, %v5658
    %v5719 = vpack.c.b16 %v5663, %v5659
    %v5720 = vpack.c.b16 %v5664, %v5660
    %v5721 = vpack.c.b16 %v5669, %v5665
    %v5722 = vpack.c.b16 %v5670, %v5666
    %v5723 = vpack.c.b16 %v5671, %v5667
    %v5724 = vpack.c.b16 %v5672, %v5668
    %v5725 = vpack.c.b16 %v5677, %v5673
    %v5726 = vpack.c.b16 %v5678, %v5674
    %v5727 = vpack.c.b16 %v5679, %v5675
    %v5728 = vpack.c.b16 %v5680, %v5676
    %v5729 = vpack.c.b16 %v5685, %v5681
    %v5730 = vpack.c.b16 %v5686, %v5682
    %v5731 = vpack.c.b16 %v5687, %v5683
    %v5732 = vpack.c.b16 %v5688, %v5684
    %v5733 = vpack.c.b16 %v5693, %v5689
    %v5734 = vpack.c.b16 %v5694, %v5690
    %v5735 = vpack.c.b16 %v5695, %v5691
    %v5736 = vpack.c.b16 %v5696, %v5692
    %v5737 = vpack.c.b16 %v5701, %v5697
    %v5738 = vpack.c.b16 %v5702, %v5698
    %v5739 = vpack.c.b16 %v5703, %v5699
    %v5740 = vpack.c.b16 %v5704, %v5700
    %v5741 = vpack.c.b16 %v5709, %v5705
    %v5742 = vpack.c.b16 %v5710, %v5706
    %v5743 = vpack.c.b16 %v5711, %v5707
    %v5744 = vpack.c.b16 %v5712, %v5708
    %5777 = vmatprep.subr.bf16.mxu0 %v5714
    %5778 = vmatpush1.bf16.msra.mxu0 %v5713
    %5779 = vmatprep.subr.bf16.mxu0 %v5718
    %5780 = vmatpush1.bf16.msra.mxu0 %v5717
    %5781 = vmatprep.subr.bf16.mxu0 %v5722
    %5782 = vmatpush1.bf16.msra.mxu0 %v5721
    %5783 = vmatprep.subr.bf16.mxu0 %v5726
    %5784 = vmatpush1.bf16.msra.mxu0 %v5725
    %5785 = vmatprep.subr.bf16.mxu0 %v5730
    %5786 = vmatpush1.bf16.msra.mxu0 %v5729
    %5787 = vmatprep.subr.bf16.mxu0 %v5734
    %5788 = vmatpush1.bf16.msra.mxu0 %v5733
    %5789 = vmatprep.subr.bf16.mxu0 %v5738
    %5790 = vmatpush1.bf16.msra.mxu0 %v5737
    %5791 = vmatprep.subr.bf16.mxu0 %v5742
    %5792 = vmatpush1.bf16.msra.mxu0 %v5741
    %5793 = vmatprep.subr.bf16.mxu0 0
    %5794 = vmatpush1.bf16.msra.mxu0 0
    %5795 = vmatprep.subr.bf16.mxu0 0
    %5796 = vmatpush1.bf16.msra.mxu0 0
    %5797 = vmatprep.subr.bf16.mxu0 0
    %5798 = vmatpush1.bf16.msra.mxu0 0
    %5799 = vmatprep.subr.bf16.mxu0 0
    %5800 = vmatpush1.bf16.msra.mxu0 0
    %5801 = vmatprep.subr.bf16.mxu0 0
    %5802 = vmatpush1.bf16.msra.mxu0 0
    %5803 = vmatprep.subr.bf16.mxu0 0
    %5804 = vmatpush1.bf16.msra.mxu0 0
    %5805 = vmatprep.subr.bf16.mxu0 0
    %5806 = vmatpush1.bf16.msra.mxu0 0
    %5807 = vmatprep.subr.bf16.mxu0 0
    %5808 = vmatpush1.bf16.msra.mxu0 0
    %5809 = vmatprep.mubr.bf16.mxu0 0
    %5810 = vmatmul.mubr.bf16.gmra.mrb[0].mxu0 %v5584
    %v5811 = vpop.f32.mrb[0].mxu0
    %v5812 = vadd.f32 0.0, %v5811
    %v5813 = vpop.f32.mrb[0].mxu0
    %v5814 = vadd.f32 0.0, %v5813
    %v5815 = vpop.f32.mrb[0].mxu0
    %v5816 = vpop.f32.mrb[0].mxu0
    %5817 = vdwg.mxu0
    %5818 = vmatprep.subr.bf16.mxu0 %v5716
    %5819 = vmatpush1.bf16.msra.mxu0 %v5715
    %5820 = vmatprep.subr.bf16.mxu0 %v5720
    %5821 = vmatpush1.bf16.msra.mxu0 %v5719
    %5822 = vmatprep.subr.bf16.mxu0 %v5724
    %5823 = vmatpush1.bf16.msra.mxu0 %v5723
    %5824 = vmatprep.subr.bf16.mxu0 %v5728
    %5825 = vmatpush1.bf16.msra.mxu0 %v5727
    %5826 = vmatprep.subr.bf16.mxu0 %v5732
    %5827 = vmatpush1.bf16.msra.mxu0 %v5731
    %5828 = vmatprep.subr.bf16.mxu0 %v5736
    %5829 = vmatpush1.bf16.msra.mxu0 %v5735
    %5830 = vmatprep.subr.bf16.mxu0 %v5740
    %5831 = vmatpush1.bf16.msra.mxu0 %v5739
    %5832 = vmatprep.subr.bf16.mxu0 %v5744
    %5833 = vmatpush1.bf16.msra.mxu0 %v5743
    %5834 = vmatprep.subr.bf16.mxu0 0
    %5835 = vmatpush1.bf16.msra.mxu0 0
    %5836 = vmatprep.subr.bf16.mxu0 0
    %5837 = vmatpush1.bf16.msra.mxu0 0
    %5838 = vmatprep.subr.bf16.mxu0 0
    %5839 = vmatpush1.bf16.msra.mxu0 0
    %5840 = vmatprep.subr.bf16.mxu0 0
    %5841 = vmatpush1.bf16.msra.mxu0 0
    %5842 = vmatprep.subr.bf16.mxu0 0
    %5843 = vmatpush1.bf16.msra.mxu0 0
    %5844 = vmatprep.subr.bf16.mxu0 0
    %5845 = vmatpush1.bf16.msra.mxu0 0
    %5846 = vmatprep.subr.bf16.mxu0 0
    %5847 = vmatpush1.bf16.msra.mxu0 0
    %5848 = vmatprep.subr.bf16.mxu0 0
    %5849 = vmatpush1.bf16.msra.mxu0 0
    %5850 = vmatprep.mubr.bf16.mxu0 0
    %5851 = vmatmul.mubr.bf16.gmra.mrb[0].mxu0 %v5584
    %v5852 = vpop.f32.mrb[0].mxu0
    %v5853 = vadd.f32 0.0, %v5852
    %v5854 = vpop.f32.mrb[0].mxu0
    %v5855 = vadd.f32 0.0, %v5854
    %v5856 = vpop.f32.mrb[0].mxu0
    %v5857 = vpop.f32.mrb[0].mxu0
    %5858 = vdwg.mxu0
    %v5859 = vadd.f32 %v5579, %v5812
    %v5860 = vadd.f32 %v5580, %v5814
    %v5861 = vadd.f32 %v5581, %v5853
    %v5862 = vadd.f32 %v5582, %v5855
    %v5863 = vxor.u32 %v5859, 2147483648
    %v5864 = vmul.f32 %v5863, 1.442695
    %v5865 = vpow.pop %v5864
    %v5866 = vadd.f32 %v5865, 1.0
    %v5867 = vrcp.pop %v5866
    %v5868 = vmul.f32 1.0, %v5867
    %v5869 = vxor.u32 %v5860, 2147483648
    %v5870 = vmul.f32 %v5869, 1.442695
    %v5871 = vpow.pop %v5870
    %v5872 = vadd.f32 %v5871, 1.0
    %v5873 = vrcp.pop %v5872
    %v5874 = vmul.f32 1.0, %v5873
    %v5875 = vtanh.pop %v5861
    %v5876 = vxor.u32 %v5862, 2147483648
    %v5877 = vmul.f32 %v5876, 1.442695
    %v5878 = vpow.pop %v5877
    %v5879 = vadd.f32 %v5878, 1.0
    %v5880 = vrcp.pop %v5879
    %v5881 = vmul.f32 1.0, %v5880
    %v5882 = vld [vmem:[#allocation5] sm:$0xff]
    %v5883 = vmul.f32 %v5874, %v5882
    %v5884 = vmul.f32 %v5868, %v5875
    %v5885 = vadd.f32 %v5883, %v5884
    %v5886 = vtanh.pop %v5885
    %v5887 = vmul.f32 %v5881, %v5886
    %5888 = vst [vmem:[#allocation5] sm:$0xff] %v5885
    %5889 = vst [vmem:[#allocation4] sm:$0xff] %v5887
    %v5890 = vld [vmem:[#allocation4] sm:$0xff]
    %v5891 = vpack.c.bf16 %v5890, %v5890
    %v5892 = vld [vmem:[%s4] sm:$0xf]
    %v5893 = vld [vmem:[%s4 + $0x4] sm:$0xf]
    %v5894 = vld [vmem:[%s4 + $0x8] sm:$0xf]
    %v5895 = vld [vmem:[%s4 + $0xc] sm:$0xf]
    %v5896 = vld [vmem:[%s4 + $0x10] sm:$0xf]
    %v5897 = vld [vmem:[%s4 + $0x14] sm:$0xf]
    %v5898 = vld [vmem:[%s4 + $0x18] sm:$0xf]
    %v5899 = vld [vmem:[%s4 + $0x1c] sm:$0xf]
    %v5900 = vld [vmem:[%s4 + $0x20] sm:$0xf]
    %v5901 = vld [vmem:[%s4 + $0x24] sm:$0xf]
    %v5902 = vld [vmem:[%s4 + $0x28] sm:$0xf]
    %v5903 = vld [vmem:[%s4 + $0x2c] sm:$0xf]
    %v5904 = vld [vmem:[%s4 + $0x30] sm:$0xf]
    %v5905 = vld [vmem:[%s4 + $0x34] sm:$0xf]
    %v5906 = vld [vmem:[%s4 + $0x38] sm:$0xf]
    %v5907 = vld [vmem:[%s4 + $0x3c] sm:$0xf]
    %v5908 = vld [vmem:[%s5] sm:$0x1]
    %v5910 = vlaneseq
    %v5911 = vshrl.u32 %v5910, 7
    %v5912 = vsub.s32 0, %v5911
    %v5913 = vrot.slane %v5908, %v5912
    %v5931 = vunpack.c.l.b16 %v5892
    %v5932 = vunpack.c.l.b16 %v5893
    %v5933 = vunpack.c.l.b16 %v5894
    %v5934 = vunpack.c.l.b16 %v5895
    %v5935 = vunpack.c.l.b16 %v5896
    %v5936 = vunpack.c.l.b16 %v5897
    %v5937 = vunpack.c.l.b16 %v5898
    %v5938 = vunpack.c.l.b16 %v5899
    %v5939 = vunpack.c.l.b16 %v5900
    %v5940 = vunpack.c.l.b16 %v5901
    %v5941 = vunpack.c.l.b16 %v5902
    %v5942 = vunpack.c.l.b16 %v5903
    %v5943 = vunpack.c.l.b16 %v5904
    %v5944 = vunpack.c.l.b16 %v5905
    %v5945 = vunpack.c.l.b16 %v5906
    %v5946 = vunpack.c.l.b16 %v5907
    %v5947 = vpack.c.b16 %v5932, %v5931
    %v5948 = vpack.c.b16 %v5934, %v5933
    %v5949 = vpack.c.b16 %v5936, %v5935
    %v5950 = vpack.c.b16 %v5938, %v5937
    %v5951 = vpack.c.b16 %v5940, %v5939
    %v5952 = vpack.c.b16 %v5942, %v5941
    %v5953 = vpack.c.b16 %v5944, %v5943
    %v5954 = vpack.c.b16 %v5946, %v5945
    %5963 = vmatprep.subr.bf16.mxu0 0
    %5964 = vmatpush1.bf16.msra.mxu0 %v5947
    %5965 = vmatprep.subr.bf16.mxu0 0
    %5966 = vmatpush1.bf16.msra.mxu0 %v5948
    %5967 = vmatprep.subr.bf16.mxu0 0
    %5968 = vmatpush1.bf16.msra.mxu0 %v5949
    %5969 = vmatprep.subr.bf16.mxu0 0
    %5970 = vmatpush1.bf16.msra.mxu0 %v5950
    %5971 = vmatprep.subr.bf16.mxu0 0
    %5972 = vmatpush1.bf16.msra.mxu0 %v5951
    %5973 = vmatprep.subr.bf16.mxu0 0
    %5974 = vmatpush1.bf16.msra.mxu0 %v5952
    %5975 = vmatprep.subr.bf16.mxu0 0
    %5976 = vmatpush1.bf16.msra.mxu0 %v5953
    %5977 = vmatprep.subr.bf16.mxu0 0
    %5978 = vmatpush1.bf16.msra.mxu0 %v5954
    %5979 = vmatprep.subr.bf16.mxu0 0
    %5980 = vmatpush1.bf16.msra.mxu0 0
    %5981 = vmatprep.subr.bf16.mxu0 0
    %5982 = vmatpush1.bf16.msra.mxu0 0
    %5983 = vmatprep.subr.bf16.mxu0 0
    %5984 = vmatpush1.bf16.msra.mxu0 0
    %5985 = vmatprep.subr.bf16.mxu0 0
    %5986 = vmatpush1.bf16.msra.mxu0 0
    %5987 = vmatprep.subr.bf16.mxu0 0
    %5988 = vmatpush1.bf16.msra.mxu0 0
    %5989 = vmatprep.subr.bf16.mxu0 0
    %5990 = vmatpush1.bf16.msra.mxu0 0
    %5991 = vmatprep.subr.bf16.mxu0 0
    %5992 = vmatpush1.bf16.msra.mxu0 0
    %5993 = vmatprep.subr.bf16.mxu0 0
    %5994 = vmatpush1.bf16.msra.mxu0 0
    %5995 = vmatprep.mubr.bf16.mxu0 0
    %5996 = vmatmul.mubr.bf16.gmra.mrb[0].mxu0 %v5891
    %v5997 = vpop.f32.mrb[0].mxu0
    %v5998 = vadd.f32 %v5913, %v5997
    %v5999 = vpop.f32.mrb[0].mxu0
    %v6000 = vpop.f32.mrb[0].mxu0
    %v6001 = vpop.f32.mrb[0].mxu0
    %6002 = vdwg.mxu0
    %v6003 = vmax.f32 %v5998, 0.0
    %v6004 = vpack.c.bf16 %v6003, %v6003
    %v6005 = vld [vmem:[#allocation10] sm:$0xf]
    %v6006 = vld [vmem:[#allocation10 + $0x4] sm:$0xf]
    %v6007 = vld [vmem:[#allocation10 + $0x8] sm:$0xf]
    %v6008 = vld [vmem:[#allocation10 + $0xc] sm:$0xf]
    %v6009 = vld [vmem:[#allocation10 + $0x10] sm:$0xf]
    %v6010 = vld [vmem:[#allocation10 + $0x14] sm:$0xf]
    %v6011 = vld [vmem:[#allocation10 + $0x18] sm:$0xf]
    %v6012 = vld [vmem:[#allocation10 + $0x1c] sm:$0xf]
    %v6013 = vld [vmem:[#allocation10 + $0x20] sm:$0xf]
    %v6014 = vld [vmem:[#allocation10 + $0x24] sm:$0xf]
    %v6015 = vld [vmem:[#allocation10 + $0x28] sm:$0xf]
    %v6016 = vld [vmem:[#allocation10 + $0x2c] sm:$0xf]
    %v6017 = vld [vmem:[#allocation10 + $0x30] sm:$0xf]
    %v6018 = vld [vmem:[#allocation10 + $0x34] sm:$0xf]
    %v6019 = vld [vmem:[#allocation10 + $0x38] sm:$0xf]
    %v6020 = vld [vmem:[#allocation10 + $0x3c] sm:$0xf]
    %v6021 = vld [vmem:[%s7] sm:$0x1]
    %v6023 = vlaneseq
    %v6024 = vshrl.u32 %v6023, 7
    %v6025 = vsub.s32 0, %v6024
    %v6026 = vrot.slane %v6021, %v6025
    %v6044 = vunpack.c.l.b16 %v6005
    %v6045 = vunpack.c.l.b16 %v6006
    %v6046 = vunpack.c.l.b16 %v6007
    %v6047 = vunpack.c.l.b16 %v6008
    %v6048 = vunpack.c.l.b16 %v6009
    %v6049 = vunpack.c.l.b16 %v6010
    %v6050 = vunpack.c.l.b16 %v6011
    %v6051 = vunpack.c.l.b16 %v6012
    %v6052 = vunpack.c.l.b16 %v6013
    %v6053 = vunpack.c.l.b16 %v6014
    %v6054 = vunpack.c.l.b16 %v6015
    %v6055 = vunpack.c.l.b16 %v6016
    %v6056 = vunpack.c.l.b16 %v6017
    %v6057 = vunpack.c.l.b16 %v6018
    %v6058 = vunpack.c.l.b16 %v6019
    %v6059 = vunpack.c.l.b16 %v6020
    %v6060 = vpack.c.b16 %v6045, %v6044
    %v6061 = vpack.c.b16 %v6047, %v6046
    %v6062 = vpack.c.b16 %v6049, %v6048
    %v6063 = vpack.c.b16 %v6051, %v6050
    %v6064 = vpack.c.b16 %v6053, %v6052
    %v6065 = vpack.c.b16 %v6055, %v6054
    %v6066 = vpack.c.b16 %v6057, %v6056
    %v6067 = vpack.c.b16 %v6059, %v6058
    %6076 = vmatprep.subr.bf16.mxu0 0
    %6077 = vmatpush1.bf16.msra.mxu0 %v6060
    %6078 = vmatprep.subr.bf16.mxu0 0
    %6079 = vmatpush1.bf16.msra.mxu0 %v6061
    %6080 = vmatprep.subr.bf16.mxu0 0
    %6081 = vmatpush1.bf16.msra.mxu0 %v6062
    %6082 = vmatprep.subr.bf16.mxu0 0
    %6083 = vmatpush1.bf16.msra.mxu0 %v6063
    %6084 = vmatprep.subr.bf16.mxu0 0
    %6085 = vmatpush1.bf16.msra.mxu0 %v6064
    %6086 = vmatprep.subr.bf16.mxu0 0
    %6087 = vmatpush1.bf16.msra.mxu0 %v6065
    %6088 = vmatprep.subr.bf16.mxu0 0
    %6089 = vmatpush1.bf16.msra.mxu0 %v6066
    %6090 = vmatprep.subr.bf16.mxu0 0
    %6091 = vmatpush1.bf16.msra.mxu0 %v6067
    %6092 = vmatprep.subr.bf16.mxu0 0
    %6093 = vmatpush1.bf16.msra.mxu0 0
    %6094 = vmatprep.subr.bf16.mxu0 0
    %6095 = vmatpush1.bf16.msra.mxu0 0
    %6096 = vmatprep.subr.bf16.mxu0 0
    %6097 = vmatpush1.bf16.msra.mxu0 0
    %6098 = vmatprep.subr.bf16.mxu0 0
    %6099 = vmatpush1.bf16.msra.mxu0 0
    %6100 = vmatprep.subr.bf16.mxu0 0
    %6101 = vmatpush1.bf16.msra.mxu0 0
    %6102 = vmatprep.subr.bf16.mxu0 0
    %6103 = vmatpush1.bf16.msra.mxu0 0
    %6104 = vmatprep.subr.bf16.mxu0 0
    %6105 = vmatpush1.bf16.msra.mxu0 0
    %6106 = vmatprep.subr.bf16.mxu0 0
    %6107 = vmatpush1.bf16.msra.mxu0 0
    %6108 = vmatprep.mubr.bf16.mxu0 0
    %6109 = vmatmul.mubr.bf16.gmra.mrb[0].mxu0 %v6004
    %v6110 = vpop.f32.mrb[0].mxu0
    %v6111 = vadd.f32 %v6026, %v6110
    %v6112 = vpop.f32.mrb[0].mxu0
    %v6113 = vpop.f32.mrb[0].mxu0
    %v6114 = vpop.f32.mrb[0].mxu0
    %6115 = vdwg.mxu0
    %6116 = vst [vmem:[%s8] sm:$0xff] %v6111
    // Predicated region
    $region46: #{lstm_model_forward.1} parent=1 // pred_check
      _
    $region47: #{lstm_model_forward.1} parent=1 // pred_check_branch
      %6118 = sbr.rel (0) target = $region49
    $region48: #{lstm_model_forward.1} parent=1 // pred_region
      _
    $region49: #{lstm_model_forward.1} parent=1 // pred_fallthru
      _
    // Predicated region
    $region50: #{lstm_model_forward.1} parent=1 // pred_check
      _
    $region51: #{lstm_model_forward.1} parent=1 // pred_check_branch
      %6120 = sbr.rel (0) target = $region53
    $region52: #{lstm_model_forward.1} parent=1 // pred_region
      _
    $region53: #{lstm_model_forward.1} parent=1 // pred_fallthru
      _
    %6121 = vsyncpa [#allocation7], 1
    %6122 = vsyncpa [#allocation9], 1

</llo_original>
